<compile_context>
chip_gen: v5e
topology: v5e:2x2
jax: 0.10.0
libtpu: 0.0.40
codegen_flags: <defaults>
</compile_context>

<pallas_src>
import math

import jax
import jax.numpy as jnp
from jax import lax
from jax.experimental import pallas as pl
from jax.experimental.pallas import tpu as pltpu


_INV_SQRT2 = 1.0 / math.sqrt(2.0)


def _gelu_exact(v):
    # PyTorch nn.GELU() default: exact erf-based GELU.
    return 0.5 * v * (1.0 + lax.erf(v * _INV_SQRT2))


def _gelu_tanh(v):
    # tanh approximation -> transcendental goes to the EUP slot (perf option on
    # v6e/v7x); slight deviation from the module's exact erf GELU.
    return jax.nn.gelu(v, approximate=True)


def _layernorm(v, gamma, beta, eps=1e-5):
    # Single-pass variance: mean(v^2) - mean(v)^2 (saves one full-tile sub+mul
    # per LayerNorm; rsqrt runs on the EUP).
    mu = jnp.mean(v, axis=-1, keepdims=True)
    ms = jnp.mean(v * v, axis=-1, keepdims=True)
    var = ms - mu * mu
    return (v - mu) * lax.rsqrt(var + eps) * gamma + beta


def _make_kernel(use_tanh_gelu):
    gelu = _gelu_tanh if use_tanh_gelu else _gelu_exact

    def kernel(slot_ref, isext_ref,                        # scalar prefetch (SMEM)
               x_ref, posb_ref, g1_ref, be1_ref, wqkv_ref,
               g2_ref, be2_ref, w1_ref, b1_ref, w2_ref, b2_ref,
               out_ref,
               x_acc):
        del slot_ref                                       # used only by index maps
        d = pl.program_id(1)

        # Load the input row-tile into the resident accumulator once per tile.
        @pl.when(d == 0)
        def _():
            x_acc[...] = x_ref[...]

        x = x_acc[...]                                     # (rt, E) f32

        # --- PreNorm + SEBlock + residual ---------------------------------
        h = _layernorm(x, g1_ref[0], be1_ref[0])
        qkv = jnp.dot(h.astype(jnp.bfloat16), wqkv_ref[0],
                      preferred_element_type=jnp.float32)
        qkv = qkv + posb_ref[0]                            # folded pos_emb + qkv bias
        x1 = h * qkv + x                                   # SE multiply, residual

        # --- PreNorm + FeedForward + residual ------------------------------
        g = _layernorm(x1, g2_ref[0], be2_ref[0])
        hid = gelu(jnp.dot(g.astype(jnp.bfloat16), w1_ref[0],
                           preferred_element_type=jnp.float32) + b1_ref[0])
        hid = hid.astype(jnp.bfloat16)                     # largest temp: keep bf16
        ff = gelu(jnp.dot(hid, w2_ref[0],
                          preferred_element_type=jnp.float32) + b2_ref[0])

        x_new = ff + x1
        x_acc[...] = x_new

        # Only extract layers materialize to HBM (last write into their slot).
        @pl.when(isext_ref[d] == 1)
        def _():
            out_ref[0] = x_new.astype(out_ref.dtype)

    return kernel


def _vmem_bytes_estimate(rt, E, H):
    """Rough per-core VMEM footprint for one grid step (double buffers included)."""
    wts   = 2 * 2 * (E * E + 2 * E * H)      # bf16 Wqkv/W1/W2, double-buffered
    posb  = 2 * rt * E * 2                   # bf16 pos+bias block, double-buffered
    xin   = 2 * rt * E * 4                   # f32 input block, double-buffered
    outb  = 2 * rt * E * 4                   # f32 output block, double-buffered
    acc   = rt * E * 4                       # resident activation scratch
    hid   = rt * H * 4 + rt * H * 2          # f32 GELU temp + bf16 copy
    other = 6 * rt * E * 4                   # LN / residual / SE temps headroom
    small = 4 * (4 * E + 2 * H) * 4
    return wts + posb + xin + outb + acc + hid + other + small


def _pick_row_tile(R, S, E, H, target_rows=256, vmem_budget=48 * 1024 * 1024):
    """Row tile: divides R, aligned to S (divisor or multiple), multiple of 8.

    Prefer the smallest tile that still reaches `target_rows` (fills a 256-wide
    MXU pass while keeping >= 2 'parallel' tiles for v7x's two TensorCores when
    R allows); otherwise the largest tile that fits the VMEM budget.
    """
    cands = [rt for rt in range(8, R + 1, 8)
             if R % rt == 0 and (rt % S == 0 or S % rt == 0)]
    assert cands, "need B*S and S to be multiples of 8"
    fitting = [rt for rt in cands if _vmem_bytes_estimate(rt, E, H) <= vmem_budget]
    if not fitting:
        fitting = cands[:1]
    at_target = [rt for rt in fitting if rt >= target_rows]
    return min(at_target) if at_target else max(fitting)


def transformer_block_forward(x, layer_params, extract_layers, *,
                              row_tile=None, use_tanh_gelu=False):
    """Returns the list of extracted intermediate activations (like the nn.Module).

    TODO(synk): dropout is p=0 in this module configuration -> identity; nonzero
    dropout is not implemented.
    """
    B, S, E = x.shape
    depth = len(layer_params)
    H = layer_params[0]["w1"].shape[1]                       # expansion * E
    R = B * S

    # Output-slot invariant (see out_specs below): extract layers must be
    # sorted, unique, non-empty, and within [1, depth], so that each output
    # slot's LAST grid step along the depth axis is exactly its extract layer.
    extract = sorted(set(int(e) for e in extract_layers))
    K = len(extract)
    assert K > 0, "extract_layers must be non-empty"
    assert all(1 <= e <= depth for e in extract), "extract layer out of range"

    rt = row_tile if row_tile is not None else _pick_row_tile(R, S, E, H)
    assert R % rt == 0 and rt % 8 == 0 and (rt % S == 0 or S % rt == 0)
    n_row_tiles = R // rt

    f32, bf16 = jnp.float32, jnp.bfloat16

    # Per-layer params stacked along a leading depth axis.  Matmul weights and
    # the folded (pos_embedding + qkv_bias) slab go to bf16 (halves their DMA).
    posb = jnp.stack([p["pos"] + p["bqkv"] for p in layer_params]).astype(bf16)  # (D,S,E)
    g1   = jnp.stack([p["g1"]  for p in layer_params])                           # (D,1,E)
    be1  = jnp.stack([p["be1"] for p in layer_params])
    g2   = jnp.stack([p["g2"]  for p in layer_params])
    be2  = jnp.stack([p["be2"] for p in layer_params])
    b1   = jnp.stack([p["bb1"] for p in layer_params])                           # (D,1,H)
    b2   = jnp.stack([p["bb2"] for p in layer_params])                           # (D,1,E)
    wqkv = jnp.stack([p["wqkv"] for p in layer_params]).astype(bf16)             # (D,E,E)
    w1   = jnp.stack([p["w1"]   for p in layer_params]).astype(bf16)             # (D,E,H)
    w2   = jnp.stack([p["w2"]   for p in layer_params]).astype(bf16)             # (D,H,E)

    # Positional slab aligned to the row tile (rows are batch-major, so a tile
    # covering whole sequences just sees the pos slab tiled; a sub-sequence tile
    # indexes the matching position block).
    if rt % S == 0:
        posb_arr = jnp.tile(posb, (1, rt // S, 1))                               # (D,rt,E)
        posb_map = lambda r, d, slot, ext: (d, 0, 0)
    else:                                                                        # S % rt == 0
        posb_arr = posb                                                          # (D,S,E)
        bps = S // rt
        posb_map = lambda r, d, slot, ext: (d, r % bps, 0)

    # Scalar-prefetch tables: layer -> output slot, and "is extract layer" flag.
    slot = jnp.array([min(sum(e < d + 1 for e in extract), K - 1)
                      for d in range(depth)], jnp.int32)
    isext = jnp.array([1 if (d + 1) in extract else 0 for d in range(depth)],
                      jnp.int32)

    per_layer = lambda r, d, slot, ext: (d, 0, 0)
    in_specs = [
        pl.BlockSpec((rt, E), lambda r, d, slot, ext: (r, 0)),   # x rows (DMA once per r)
        pl.BlockSpec((1, rt, E), posb_map),                      # pos_emb + qkv bias (bf16)
        pl.BlockSpec((1, 1, E), per_layer),                      # LN1 gamma
        pl.BlockSpec((1, 1, E), per_layer),                      # LN1 beta
        pl.BlockSpec((1, E, E), per_layer),                      # Wqkv (bf16)
        pl.BlockSpec((1, 1, E), per_layer),                      # LN2 gamma
        pl.BlockSpec((1, 1, E), per_layer),                      # LN2 beta
        pl.BlockSpec((1, E, H), per_layer),                      # W1 (bf16)
        pl.BlockSpec((1, 1, H), per_layer),                      # b1
        pl.BlockSpec((1, H, E), per_layer),                      # W2 (bf16)
        pl.BlockSpec((1, 1, E), per_layer),                      # b2
    ]
    # Data-dependent output slot; intermediate (non-extract) layers skip the
    # write, so when Pallas writes a slot's buffer back (on slot change / grid
    # end) it still holds that slot's extract-layer activation.
    out_spec = pl.BlockSpec((1, rt, E), lambda r, d, slot, ext: (slot[d], r, 0))

    vmem_limit = int(min(max(2 * _vmem_bytes_estimate(rt, E, H), 32 * 1024 * 1024),
                         56 * 1024 * 1024))
    cost = pl.CostEstimate(
        flops=2 * depth * R * E * (E + 2 * H),
        transcendentals=depth * R * (H + E),
        bytes_accessed=(R * E * 4 + K * R * E * 4
                        + n_row_tiles * depth * 2 * (E * E + 2 * E * H)
                        + n_row_tiles * depth * rt * E * 2))

    out = pl.pallas_call(
        _make_kernel(use_tanh_gelu),
        out_shape=jax.ShapeDtypeStruct((K, R, E), f32),
        grid_spec=pltpu.PrefetchScalarGridSpec(
            num_scalar_prefetch=2,
            grid=(n_row_tiles, depth),
            in_specs=in_specs,
            out_specs=out_spec,
            scratch_shapes=[pltpu.VMEM((rt, E), f32)],
        ),
        compiler_params=pltpu.CompilerParams(
            dimension_semantics=("parallel", "arbitrary"),
            vmem_limit_bytes=vmem_limit),
        cost_estimate=cost,
    )(slot, isext, x.reshape(R, E), posb_arr, g1, be1, wqkv,
      g2, be2, w1, b1, w2, b2)

    return [out[k].reshape(B, S, E) for k in range(K)]


# ---------------- deterministic parameter construction ----------------

def init_params(key, depth, emb, seq, expansion=4):
    params = []
    for _ in range(depth):
        key, k1, k2, k3, k4, k5 = jax.random.split(key, 6)
        scale = 0.02
        params.append({
            "g1":   jnp.ones((1, emb), jnp.float32),
            "be1":  jnp.zeros((1, emb), jnp.float32),
            "wqkv": scale * jax.random.normal(k1, (emb, emb), jnp.float32),
            # The module inits pos_embeddings / biases to zeros; small random
            # values here exercise the pos/bias data path in the correctness test.
            "bqkv": scale * jax.random.normal(k4, (1, emb), jnp.float32),
            "pos":  scale * jax.random.normal(k5, (seq, emb), jnp.float32),
            "g2":   jnp.ones((1, emb), jnp.float32),
            "be2":  jnp.zeros((1, emb), jnp.float32),
            "w1":   scale * jax.random.normal(k2, (emb, expansion * emb), jnp.float32),
            "bb1":  jnp.zeros((1, expansion * emb), jnp.float32),
            "w2":   scale * jax.random.normal(k3, (expansion * emb, emb), jnp.float32),
            "bb2":  jnp.zeros((1, emb), jnp.float32),
        })
    return params


# ---------------- pure-JAX reference for verification ----------------

def _ref_layer(x, p, gelu):
    # Matches the kernel's numerics: bf16 MXU operands, f32 accumulation and
    # f32 elementwise math, bf16 FF hidden, bf16 folded pos+bias.
    wqkv = p["wqkv"].astype(jnp.bfloat16)
    w1 = p["w1"].astype(jnp.bfloat16)
    w2 = p["w2"].astype(jnp.bfloat16)
    posb = (p["pos"] + p["bqkv"]).astype(jnp.bfloat16)
    h = _layernorm(x, p["g1"][0], p["be1"][0])
    qkv = jnp.dot(h.astype(jnp.bfloat16), wqkv,
                  preferred_element_type=jnp.float32) + posb
    x1 = h * qkv + x
    g = _layernorm(x1, p["g2"][0], p["be2"][0])
    hid = gelu(jnp.dot(g.astype(jnp.bfloat16), w1,
                       preferred_element_type=jnp.float32) + p["bb1"][0])
    hid = hid.astype(jnp.bfloat16)
    ff = gelu(jnp.dot(hid, w2, preferred_element_type=jnp.float32) + p["bb2"][0])
    return ff + x1


def ref_forward(x, layer_params, extract_layers, use_tanh_gelu=False):
    gelu = _gelu_tanh if use_tanh_gelu else _gelu_exact
    extract = sorted(set(extract_layers))
    outs = []
    for cnt, p in enumerate(layer_params):
        x = _ref_layer(x, p, gelu)
        if cnt + 1 in extract:
            outs.append(x)
    return outs


if __name__ == "__main__":
    # Small shapes consistent with the module's forward: (B, n_patches, emb_size).
    # E = 128 keeps every slab lane-dense (multiple of 128), scaled down from 768.
    B, S, E = 2, 64, 128
    depth = 4
    extract_layers = [2, 4]

    key = jax.random.PRNGKey(0)
    key, kx = jax.random.split(key)
    x = jax.random.normal(kx, (B, S, E), jnp.float32)
    params = init_params(key, depth, E, S)

    outs = transformer_block_forward(x, params, extract_layers)
    outs = [jax.block_until_ready(o) for o in outs]

    refs = ref_forward(x, params, extract_layers)
    for o, r in zip(outs, refs):
        assert o.shape == (B, S, E)
        err = float(jnp.max(jnp.abs(o - r)))
        assert jnp.allclose(o, r, rtol=1e-2, atol=1e-2), err

    print("KERNEL_OK")
</pallas_src>

<mosaic_0001>
module attributes {stable_mosaic.version = 11 : i64} {
  func.func @kernel(%arg0: i32, %arg1: i32, %arg2: memref<4xi32, #tpu.memory_space<smem>>, %arg3: memref<4xi32, #tpu.memory_space<smem>>, %arg4: memref<128x128xf32, #tpu.memory_space<vmem>>, %arg5: memref<1x128x128xbf16, #tpu.memory_space<vmem>>, %arg6: memref<1x1x128xf32, #tpu.memory_space<vmem>>, %arg7: memref<1x1x128xf32, #tpu.memory_space<vmem>>, %arg8: memref<1x128x128xbf16, #tpu.memory_space<vmem>>, %arg9: memref<1x1x128xf32, #tpu.memory_space<vmem>>, %arg10: memref<1x1x128xf32, #tpu.memory_space<vmem>>, %arg11: memref<1x128x512xbf16, #tpu.memory_space<vmem>>, %arg12: memref<1x1x512xf32, #tpu.memory_space<vmem>>, %arg13: memref<1x512x128xbf16, #tpu.memory_space<vmem>>, %arg14: memref<1x1x128xf32, #tpu.memory_space<vmem>>, %arg15: memref<1x128x128xf32, #tpu.memory_space<vmem>>, %arg16: memref<128x128xf32, #tpu.memory_space<vmem>>) attributes {dimension_semantics = [#tpu.dimension_semantics<parallel>, #tpu.dimension_semantics<arbitrary>], iteration_bounds = array<i64: 1, 4>, scalar_prefetch = 2 : i64, scratch_operands = 1 : i64, tpu.core_type = #tpu.core_type<tc>, window_params = [{transform_indices = @transform_0, window_bounds = array<i64: 128, 128>}, {transform_indices = @transform_1, window_bounds = array<i64: 1, 128, 128>}, {transform_indices = @transform_2, window_bounds = array<i64: 1, 1, 128>}, {transform_indices = @transform_3, window_bounds = array<i64: 1, 1, 128>}, {transform_indices = @transform_4, window_bounds = array<i64: 1, 128, 128>}, {transform_indices = @transform_5, window_bounds = array<i64: 1, 1, 128>}, {transform_indices = @transform_6, window_bounds = array<i64: 1, 1, 128>}, {transform_indices = @transform_7, window_bounds = array<i64: 1, 128, 512>}, {transform_indices = @transform_8, window_bounds = array<i64: 1, 1, 512>}, {transform_indices = @transform_9, window_bounds = array<i64: 1, 512, 128>}, {transform_indices = @transform_10, window_bounds = array<i64: 1, 1, 128>}, {transform_indices = @transform_11, window_bounds = array<i64: 1, 128, 128>}]} {
    %c0_i32 = arith.constant 0 : i32
    %0 = arith.cmpi eq, %arg1, %c0_i32 : i32
    %1 = arith.extui %0 : i1 to i32
    %c0_i32_0 = arith.constant 0 : i32
    %2 = arith.cmpi ne, %1, %c0_i32_0 : i32
    scf.if %2 {
      %c0_53 = arith.constant 0 : index
      %c0_54 = arith.constant 0 : index
      %105 = vector.load %arg4[%c0_53, %c0_54] : memref<128x128xf32, #tpu.memory_space<vmem>>, vector<128x128xf32>
      %c0_55 = arith.constant 0 : index
      %c0_56 = arith.constant 0 : index
      %106 = vector.load %arg16[%c0_55, %c0_56] : memref<128x128xf32, #tpu.memory_space<vmem>>, vector<128x128xf32>
      tpu.vector_store %arg16[%c0_55, %c0_56], %105 {strides = array<i32>} : memref<128x128xf32, #tpu.memory_space<vmem>>, vector<128x128xf32>,
    } else {
    }
    %c0 = arith.constant 0 : index
    %c0_1 = arith.constant 0 : index
    %3 = vector.load %arg16[%c0, %c0_1] : memref<128x128xf32, #tpu.memory_space<vmem>>, vector<128x128xf32>
    %c0_2 = arith.constant 0 : index
    %c0_3 = arith.constant 0 : index
    %c0_4 = arith.constant 0 : index
    %4 = vector.load %arg6[%c0_2, %c0_3, %c0_4] : memref<1x1x128xf32, #tpu.memory_space<vmem>>, vector<1x1x128xf32>
    %5 = vector.shape_cast %4 : vector<1x1x128xf32> to vector<1x128xf32>
    %c0_5 = arith.constant 0 : index
    %c0_6 = arith.constant 0 : index
    %c0_7 = arith.constant 0 : index
    %6 = vector.load %arg7[%c0_5, %c0_6, %c0_7] : memref<1x1x128xf32, #tpu.memory_space<vmem>>, vector<1x1x128xf32>
    %7 = vector.shape_cast %6 : vector<1x1x128xf32> to vector<1x128xf32>
    %cst = arith.constant dense<0.000000e+00> : vector<128xf32>
    %8 = vector.multi_reduction <add>, %3, %cst [1] : vector<128x128xf32> to vector<128xf32>
    %9 = vector.shape_cast %8 : vector<128xf32> to vector<128x1xf32>
    %cst_8 = arith.constant 1.280000e+02 : f32
    %10 = vector.broadcast %cst_8 : f32 to vector<128x1xf32>
    %11 = arith.divf %9, %10 : vector<128x1xf32>
    %12 = arith.mulf %3, %3 : vector<128x128xf32>
    %cst_9 = arith.constant dense<0.000000e+00> : vector<128xf32>
    %13 = vector.multi_reduction <add>, %12, %cst_9 [1] : vector<128x128xf32> to vector<128xf32>
    %14 = vector.shape_cast %13 : vector<128xf32> to vector<128x1xf32>
    %cst_10 = arith.constant 1.280000e+02 : f32
    %15 = vector.broadcast %cst_10 : f32 to vector<128x1xf32>
    %16 = arith.divf %14, %15 : vector<128x1xf32>
    %17 = arith.mulf %11, %11 : vector<128x1xf32>
    %18 = arith.subf %16, %17 : vector<128x1xf32>
    %19 = vector.broadcast %11 : vector<128x1xf32> to vector<128x128xf32>
    %20 = arith.subf %3, %19 : vector<128x128xf32>
    %cst_11 = arith.constant 9.99999974E-6 : f32
    %21 = vector.broadcast %cst_11 : f32 to vector<128x1xf32>
    %22 = arith.addf %18, %21 : vector<128x1xf32>
    %23 = math.rsqrt %22 : vector<128x1xf32>
    %24 = vector.broadcast %23 : vector<128x1xf32> to vector<128x128xf32>
    %25 = arith.mulf %20, %24 : vector<128x128xf32>
    %26 = vector.broadcast %5 : vector<1x128xf32> to vector<128x128xf32>
    %27 = arith.mulf %25, %26 : vector<128x128xf32>
    %28 = vector.broadcast %7 : vector<1x128xf32> to vector<128x128xf32>
    %29 = arith.addf %27, %28 : vector<128x128xf32>
    %30 = arith.truncf %29 : vector<128x128xf32> to vector<128x128xbf16>
    %c0_12 = arith.constant 0 : index
    %c0_13 = arith.constant 0 : index
    %c0_14 = arith.constant 0 : index
    %31 = vector.load %arg8[%c0_12, %c0_13, %c0_14] : memref<1x128x128xbf16, #tpu.memory_space<vmem>>, vector<1x128x128xbf16>
    %32 = vector.shape_cast %31 : vector<1x128x128xbf16> to vector<128x128xbf16>
    %cst_15 = arith.constant dense<0.000000e+00> : vector<128x128xf32>
    %33 = tpu.matmul %30, %32, %cst_15 {dimension_numbers = #tpu.dot_dimension_numbers<[1], [0], [0], [1], [0, 0, 1, 1], [], []>} : vector<128x128xbf16>, vector<128x128xbf16>, vector<128x128xf32> -> vector<128x128xf32>
    %c0_16 = arith.constant 0 : index
    %c0_17 = arith.constant 0 : index
    %c0_18 = arith.constant 0 : index
    %34 = vector.load %arg5[%c0_16, %c0_17, %c0_18] : memref<1x128x128xbf16, #tpu.memory_space<vmem>>, vector<1x128x128xbf16>
    %35 = vector.shape_cast %34 : vector<1x128x128xbf16> to vector<128x128xbf16>
    %36 = arith.extf %35 : vector<128x128xbf16> to vector<128x128xf32>
    %37 = arith.addf %33, %36 : vector<128x128xf32>
    %38 = arith.mulf %29, %37 : vector<128x128xf32>
    %39 = arith.addf %38, %3 : vector<128x128xf32>
    %c0_19 = arith.constant 0 : index
    %c0_20 = arith.constant 0 : index
    %c0_21 = arith.constant 0 : index
    %40 = vector.load %arg9[%c0_19, %c0_20, %c0_21] : memref<1x1x128xf32, #tpu.memory_space<vmem>>, vector<1x1x128xf32>
    %41 = vector.shape_cast %40 : vector<1x1x128xf32> to vector<1x128xf32>
    %c0_22 = arith.constant 0 : index
    %c0_23 = arith.constant 0 : index
    %c0_24 = arith.constant 0 : index
    %42 = vector.load %arg10[%c0_22, %c0_23, %c0_24] : memref<1x1x128xf32, #tpu.memory_space<vmem>>, vector<1x1x128xf32>
    %43 = vector.shape_cast %42 : vector<1x1x128xf32> to vector<1x128xf32>
    %cst_25 = arith.constant dense<0.000000e+00> : vector<128xf32>
    %44 = vector.multi_reduction <add>, %39, %cst_25 [1] : vector<128x128xf32> to vector<128xf32>
    %45 = vector.shape_cast %44 : vector<128xf32> to vector<128x1xf32>
    %cst_26 = arith.constant 1.280000e+02 : f32
    %46 = vector.broadcast %cst_26 : f32 to vector<128x1xf32>
    %47 = arith.divf %45, %46 : vector<128x1xf32>
    %48 = arith.mulf %39, %39 : vector<128x128xf32>
    %cst_27 = arith.constant dense<0.000000e+00> : vector<128xf32>
    %49 = vector.multi_reduction <add>, %48, %cst_27 [1] : vector<128x128xf32> to vector<128xf32>
    %50 = vector.shape_cast %49 : vector<128xf32> to vector<128x1xf32>
    %cst_28 = arith.constant 1.280000e+02 : f32
    %51 = vector.broadcast %cst_28 : f32 to vector<128x1xf32>
    %52 = arith.divf %50, %51 : vector<128x1xf32>
    %53 = arith.mulf %47, %47 : vector<128x1xf32>
    %54 = arith.subf %52, %53 : vector<128x1xf32>
    %55 = vector.broadcast %47 : vector<128x1xf32> to vector<128x128xf32>
    %56 = arith.subf %39, %55 : vector<128x128xf32>
    %cst_29 = arith.constant 9.99999974E-6 : f32
    %57 = vector.broadcast %cst_29 : f32 to vector<128x1xf32>
    %58 = arith.addf %54, %57 : vector<128x1xf32>
    %59 = math.rsqrt %58 : vector<128x1xf32>
    %60 = vector.broadcast %59 : vector<128x1xf32> to vector<128x128xf32>
    %61 = arith.mulf %56, %60 : vector<128x128xf32>
    %62 = vector.broadcast %41 : vector<1x128xf32> to vector<128x128xf32>
    %63 = arith.mulf %61, %62 : vector<128x128xf32>
    %64 = vector.broadcast %43 : vector<1x128xf32> to vector<128x128xf32>
    %65 = arith.addf %63, %64 : vector<128x128xf32>
    %66 = arith.truncf %65 : vector<128x128xf32> to vector<128x128xbf16>
    %c0_30 = arith.constant 0 : index
    %c0_31 = arith.constant 0 : index
    %c0_32 = arith.constant 0 : index
    %67 = vector.load %arg11[%c0_30, %c0_31, %c0_32] : memref<1x128x512xbf16, #tpu.memory_space<vmem>>, vector<1x128x512xbf16>
    %68 = vector.shape_cast %67 : vector<1x128x512xbf16> to vector<128x512xbf16>
    %cst_33 = arith.constant dense<0.000000e+00> : vector<128x512xf32>
    %69 = tpu.matmul %66, %68, %cst_33 {dimension_numbers = #tpu.dot_dimension_numbers<[1], [0], [0], [1], [0, 0, 1, 1], [], []>} : vector<128x128xbf16>, vector<128x512xbf16>, vector<128x512xf32> -> vector<128x512xf32>
    %c0_34 = arith.constant 0 : index
    %c0_35 = arith.constant 0 : index
    %c0_36 = arith.constant 0 : index
    %70 = vector.load %arg12[%c0_34, %c0_35, %c0_36] : memref<1x1x512xf32, #tpu.memory_space<vmem>>, vector<1x1x512xf32>
    %71 = vector.shape_cast %70 : vector<1x1x512xf32> to vector<1x512xf32>
    %72 = vector.broadcast %71 : vector<1x512xf32> to vector<128x512xf32>
    %73 = arith.addf %69, %72 : vector<128x512xf32>
    %cst_37 = arith.constant 5.000000e-01 : f32
    %74 = vector.broadcast %cst_37 : f32 to vector<128x512xf32>
    %75 = arith.mulf %74, %73 : vector<128x512xf32>
    %cst_38 = arith.constant 0.707106769 : f32
    %76 = vector.broadcast %cst_38 : f32 to vector<128x512xf32>
    %77 = arith.mulf %73, %76 : vector<128x512xf32>
    %78 = math.erf %77 : vector<128x512xf32>
    %cst_39 = arith.constant 1.000000e+00 : f32
    %79 = vector.broadcast %cst_39 : f32 to vector<128x512xf32>
    %80 = arith.addf %79, %78 : vector<128x512xf32>
    %81 = arith.mulf %75, %80 : vector<128x512xf32>
    %82 = arith.truncf %81 : vector<128x512xf32> to vector<128x512xbf16>
    %c0_40 = arith.constant 0 : index
    %c0_41 = arith.constant 0 : index
    %c0_42 = arith.constant 0 : index
    %83 = vector.load %arg13[%c0_40, %c0_41, %c0_42] : memref<1x512x128xbf16, #tpu.memory_space<vmem>>, vector<1x512x128xbf16>
    %84 = vector.shape_cast %83 : vector<1x512x128xbf16> to vector<512x128xbf16>
    %cst_43 = arith.constant dense<0.000000e+00> : vector<128x128xf32>
    %85 = tpu.matmul %82, %84, %cst_43 {dimension_numbers = #tpu.dot_dimension_numbers<[1], [0], [0], [1], [0, 0, 1, 1], [], []>} : vector<128x512xbf16>, vector<512x128xbf16>, vector<128x128xf32> -> vector<128x128xf32>
    %c0_44 = arith.constant 0 : index
    %c0_45 = arith.constant 0 : index
    %c0_46 = arith.constant 0 : index
    %86 = vector.load %arg14[%c0_44, %c0_45, %c0_46] : memref<1x1x128xf32, #tpu.memory_space<vmem>>, vector<1x1x128xf32>
    %87 = vector.shape_cast %86 : vector<1x1x128xf32> to vector<1x128xf32>
    %88 = vector.broadcast %87 : vector<1x128xf32> to vector<128x128xf32>
    %89 = arith.addf %85, %88 : vector<128x128xf32>
    %cst_47 = arith.constant 5.000000e-01 : f32
    %90 = vector.broadcast %cst_47 : f32 to vector<128x128xf32>
    %91 = arith.mulf %90, %89 : vector<128x128xf32>
    %cst_48 = arith.constant 0.707106769 : f32
    %92 = vector.broadcast %cst_48 : f32 to vector<128x128xf32>
    %93 = arith.mulf %89, %92 : vector<128x128xf32>
    %94 = math.erf %93 : vector<128x128xf32>
    %cst_49 = arith.constant 1.000000e+00 : f32
    %95 = vector.broadcast %cst_49 : f32 to vector<128x128xf32>
    %96 = arith.addf %95, %94 : vector<128x128xf32>
    %97 = arith.mulf %91, %96 : vector<128x128xf32>
    %98 = arith.addf %97, %39 : vector<128x128xf32>
    %c0_50 = arith.constant 0 : index
    %c0_51 = arith.constant 0 : index
    %99 = vector.load %arg16[%c0_50, %c0_51] : memref<128x128xf32, #tpu.memory_space<vmem>>, vector<128x128xf32>
    tpu.vector_store %arg16[%c0_50, %c0_51], %98 {strides = array<i32>} : memref<128x128xf32, #tpu.memory_space<vmem>>, vector<128x128xf32>,
    %100 = arith.index_cast %arg1 : i32 to index
    %101 = memref.load %arg3[%100] : memref<4xi32, #tpu.memory_space<smem>>
    %c1_i32 = arith.constant 1 : i32
    %102 = arith.cmpi eq, %101, %c1_i32 : i32
    %103 = arith.extui %102 : i1 to i32
    %c0_i32_52 = arith.constant 0 : i32
    %104 = arith.cmpi ne, %103, %c0_i32_52 : i32
    scf.if %104 {
      %c0_53 = arith.constant 0 : index
      %c0_54 = arith.constant 0 : index
      %c0_55 = arith.constant 0 : index
      %105 = vector.load %arg15[%c0_53, %c0_54, %c0_55] : memref<1x128x128xf32, #tpu.memory_space<vmem>>, vector<1x128x128xf32>
      %106 = vector.shape_cast %105 : vector<1x128x128xf32> to vector<128x128xf32>
      %107 = vector.shape_cast %98 : vector<128x128xf32> to vector<1x128x128xf32>
      tpu.vector_store %arg15[%c0_53, %c0_54, %c0_55], %107 {strides = array<i32>} : memref<1x128x128xf32, #tpu.memory_space<vmem>>, vector<1x128x128xf32>,
    } else {
    }
    return
  }
  func.func @transform_0(%arg0: i32, %arg1: i32, %arg2: memref<4xi32, #tpu.memory_space<smem>>, %arg3: memref<4xi32, #tpu.memory_space<smem>>) -> (i32, i32) {
    %c0_i32 = arith.constant 0 : i32
    %c0_i32_0 = arith.constant 0 : i32
    return %arg0, %c0_i32 : i32, i32
  }
  func.func @transform_1(%arg0: i32, %arg1: i32, %arg2: memref<4xi32, #tpu.memory_space<smem>>, %arg3: memref<4xi32, #tpu.memory_space<smem>>) -> (i32, i32, i32) {
    %c0_i32 = arith.constant 0 : i32
    %c0_i32_0 = arith.constant 0 : i32
    %c0_i32_1 = arith.constant 0 : i32
    return %arg1, %c0_i32, %c0_i32_0 : i32, i32, i32
  }
  func.func @transform_2(%arg0: i32, %arg1: i32, %arg2: memref<4xi32, #tpu.memory_space<smem>>, %arg3: memref<4xi32, #tpu.memory_space<smem>>) -> (i32, i32, i32) {
    %c0_i32 = arith.constant 0 : i32
    %c0_i32_0 = arith.constant 0 : i32
    %c0_i32_1 = arith.constant 0 : i32
    return %arg1, %c0_i32, %c0_i32_0 : i32, i32, i32
  }
  func.func @transform_3(%arg0: i32, %arg1: i32, %arg2: memref<4xi32, #tpu.memory_space<smem>>, %arg3: memref<4xi32, #tpu.memory_space<smem>>) -> (i32, i32, i32) {
    %c0_i32 = arith.constant 0 : i32
    %c0_i32_0 = arith.constant 0 : i32
    %c0_i32_1 = arith.constant 0 : i32
    return %arg1, %c0_i32, %c0_i32_0 : i32, i32, i32
  }
  func.func @transform_4(%arg0: i32, %arg1: i32, %arg2: memref<4xi32, #tpu.memory_space<smem>>, %arg3: memref<4xi32, #tpu.memory_space<smem>>) -> (i32, i32, i32) {
    %c0_i32 = arith.constant 0 : i32
    %c0_i32_0 = arith.constant 0 : i32
    %c0_i32_1 = arith.constant 0 : i32
    return %arg1, %c0_i32, %c0_i32_0 : i32, i32, i32
  }
  func.func @transform_5(%arg0: i32, %arg1: i32, %arg2: memref<4xi32, #tpu.memory_space<smem>>, %arg3: memref<4xi32, #tpu.memory_space<smem>>) -> (i32, i32, i32) {
    %c0_i32 = arith.constant 0 : i32
    %c0_i32_0 = arith.constant 0 : i32
    %c0_i32_1 = arith.constant 0 : i32
    return %arg1, %c0_i32, %c0_i32_0 : i32, i32, i32
  }
  func.func @transform_6(%arg0: i32, %arg1: i32, %arg2: memref<4xi32, #tpu.memory_space<smem>>, %arg3: memref<4xi32, #tpu.memory_space<smem>>) -> (i32, i32, i32) {
    %c0_i32 = arith.constant 0 : i32
    %c0_i32_0 = arith.constant 0 : i32
    %c0_i32_1 = arith.constant 0 : i32
    return %arg1, %c0_i32, %c0_i32_0 : i32, i32, i32
  }
  func.func @transform_7(%arg0: i32, %arg1: i32, %arg2: memref<4xi32, #tpu.memory_space<smem>>, %arg3: memref<4xi32, #tpu.memory_space<smem>>) -> (i32, i32, i32) {
    %c0_i32 = arith.constant 0 : i32
    %c0_i32_0 = arith.constant 0 : i32
    %c0_i32_1 = arith.constant 0 : i32
    return %arg1, %c0_i32, %c0_i32_0 : i32, i32, i32
  }
  func.func @transform_8(%arg0: i32, %arg1: i32, %arg2: memref<4xi32, #tpu.memory_space<smem>>, %arg3: memref<4xi32, #tpu.memory_space<smem>>) -> (i32, i32, i32) {
    %c0_i32 = arith.constant 0 : i32
    %c0_i32_0 = arith.constant 0 : i32
    %c0_i32_1 = arith.constant 0 : i32
    return %arg1, %c0_i32, %c0_i32_0 : i32, i32, i32
  }
  func.func @transform_9(%arg0: i32, %arg1: i32, %arg2: memref<4xi32, #tpu.memory_space<smem>>, %arg3: memref<4xi32, #tpu.memory_space<smem>>) -> (i32, i32, i32) {
    %c0_i32 = arith.constant 0 : i32
    %c0_i32_0 = arith.constant 0 : i32
    %c0_i32_1 = arith.constant 0 : i32
    return %arg1, %c0_i32, %c0_i32_0 : i32, i32, i32
  }
  func.func @transform_10(%arg0: i32, %arg1: i32, %arg2: memref<4xi32, #tpu.memory_space<smem>>, %arg3: memref<4xi32, #tpu.memory_space<smem>>) -> (i32, i32, i32) {
    %c0_i32 = arith.constant 0 : i32
    %c0_i32_0 = arith.constant 0 : i32
    %c0_i32_1 = arith.constant 0 : i32
    return %arg1, %c0_i32, %c0_i32_0 : i32, i32, i32
  }
  func.func @transform_11(%arg0: i32, %arg1: i32, %arg2: memref<4xi32, #tpu.memory_space<smem>>, %arg3: memref<4xi32, #tpu.memory_space<smem>>) -> (i32, i32, i32) {
    %0 = arith.index_cast %arg1 : i32 to index
    %1 = memref.load %arg2[%0] : memref<4xi32, #tpu.memory_space<smem>>
    %c0_i32 = arith.constant 0 : i32
    %c0_i32_0 = arith.constant 0 : i32
    return %1, %arg0, %c0_i32 : i32, i32, i32
  }
}

</mosaic_0001>

<llo_original>
// kernel: tpu_custom_call.1
$region0: #{tpu_custom_call.1}
  #allocation0 [shape = 'u32[]', space=smem, size = 0x4, offset = 0x4, fixed_abs, tag = 'smem constant byte address 0x4 - core index']
  #allocation1 [shape = 'u32[72,128]{1,0:T(1,128)}', space=vmem, size = 0x9000, scoped, tag = 'internal scratch']
  #allocation2 [shape = 'f32[128,128]{1,0:T(8,128)}', space=vmem, size = 0x10000, scoped, tag = 'scratch operand']
  #allocation3 [shape = 's32[1]{0}', space=sflag, size = 0x4, scoped, tag = 'scoped memory for tpu_custom_call.1']
  #allocation4 [shape = 'u8[512]{0}', space=smem, size = 0x200, scoped, tag = 'prefetched SMEM operand 0']
  #allocation5 [shape = 'u8[512]{0}', space=smem, size = 0x200, scoped, tag = 'prefetched SMEM operand 1']
  %s0 = inlined_call_operand.hbm [shape: s32[4], index: 0, kind: input, shape index: {}]
  %s1 = inlined_call_operand.hbm [shape: s32[4], index: 1, kind: input, shape index: {}]
  %s2 = inlined_call_operand.hbm [shape: f32[128,128], index: 2, kind: input, shape index: {}]
  %s3 = inlined_call_operand.hbm [shape: bf16[4,128,128], index: 3, kind: input, shape index: {}]
  %s4 = inlined_call_operand.hbm [shape: f32[4,1,128], index: 4, kind: input, shape index: {}]
  %s5 = inlined_call_operand.vmem [shape: f32[4,1,128], index: 5, kind: input, shape index: {}]
  %s6 = inlined_call_operand.hbm [shape: bf16[4,128,128], index: 6, kind: input, shape index: {}]
  %s7 = inlined_call_operand.hbm [shape: f32[4,1,128], index: 7, kind: input, shape index: {}]
  %s8 = inlined_call_operand.hbm [shape: f32[4,1,128], index: 8, kind: input, shape index: {}]
  %s9 = inlined_call_operand.hbm [shape: bf16[4,128,512], index: 9, kind: input, shape index: {}]
  %s10 = inlined_call_operand.hbm [shape: f32[4,1,512], index: 10, kind: input, shape index: {}]
  %s11 = inlined_call_operand.hbm [shape: bf16[4,512,128], index: 11, kind: input, shape index: {}]
  %s12 = inlined_call_operand.vmem [shape: f32[4,1,128], index: 12, kind: input, shape index: {}]
  %s13 = inlined_call_operand.hbm [shape: f32[2,128,128], index: 13, kind: output, shape index: {}]
  %s14 = sld [smem:[#allocation0]]
  $region121: #{tpu_custom_call.1} parent=0
    _
  %s16 = ssub.s32 1, %s14
  %s17 = scalar_select 0, %s16, %s14
  %s19 = sshll.u32 %s0, 4
  %s20 = int_to_ptr.hbm [resolvable:$true] %s19
  %22 = dma.hbm_to_smem %s20, 16, [#allocation4], [#allocation3]
  %s24 = sshll.u32 %s1, 4
  %s25 = int_to_ptr.hbm [resolvable:$true] %s24
  %27 = dma.hbm_to_smem %s25, 16, [#allocation5], [#allocation3]
  %29 = dma.done [#allocation3], 32
  %30 = sfence
  $region1: #{tpu_custom_call.1} parent=0
    #allocation6 [shape = 'u8[65536]{0}', space=vmem, size = 0x10000, scoped, tag = 'input window, operand 2, single buffered']
    #allocation7 [shape = 's32[2]{0}', space=sflag, size = 0x8, scoped, tag = 'scoped memory for tpu_custom_call.1']
    #allocation8 [shape = 's32[2]{0}', space=sflag, size = 0x8, scoped, tag = 'scoped memory for tpu_custom_call.1']
    #allocation9 [shape = 'u8[65536]{0}', space=vmem, size = 0x10000, scoped, tag = 'input window, operand 3']
    #allocation10 [shape = 's32[2]{0}', space=sflag, size = 0x8, scoped, tag = 'scoped memory for tpu_custom_call.1']
    #allocation11 [shape = 'u8[1024]{0}', space=vmem, size = 0x400, scoped, tag = 'input window, operand 4']
    #allocation12 [shape = 'u8[65536]{0}', space=vmem, size = 0x10000, scoped, tag = 'input window, operand 6']
    #allocation13 [shape = 's32[2]{0}', space=sflag, size = 0x8, scoped, tag = 'scoped memory for tpu_custom_call.1']
    #allocation14 [shape = 'u8[1024]{0}', space=vmem, size = 0x400, scoped, tag = 'input window, operand 7']
    #allocation15 [shape = 'u8[1024]{0}', space=vmem, size = 0x400, scoped, tag = 'input window, operand 8']
    #allocation16 [shape = 's32[2]{0}', space=sflag, size = 0x8, scoped, tag = 'scoped memory for tpu_custom_call.1']
    #allocation17 [shape = 'u8[262144]{0}', space=vmem, size = 0x40000, scoped, tag = 'input window, operand 9']
    #allocation18 [shape = 'u8[4096]{0}', space=vmem, size = 0x1000, scoped, tag = 'input window, operand 10']
    #allocation19 [shape = 's32[2]{0}', space=sflag, size = 0x8, scoped, tag = 'scoped memory for tpu_custom_call.1']
    #allocation20 [shape = 'u8[262144]{0}', space=vmem, size = 0x40000, scoped, tag = 'input window, operand 11']
    #allocation21 [shape = 'u8[131072]{0}', space=vmem, size = 0x20000, scoped, tag = 'output window, operand 0']
    %31 = vsyncpa [#allocation7], 0
    %32 = vsyncpa [#allocation10], 0
    %s33 = scalar_lea.sflag [#allocation10], 1
    %34 = vsyncpa %s33, 0
    %35 = vsyncpa [#allocation13], 0
    %s36 = scalar_lea.sflag [#allocation13], 1
    %37 = vsyncpa %s36, 0
    %38 = vsyncpa [#allocation16], 0
    %s39 = scalar_lea.sflag [#allocation16], 1
    %40 = vsyncpa %s39, 0
    %41 = vsyncpa [#allocation19], 0
    %s42 = scalar_lea.sflag [#allocation19], 1
    %43 = vsyncpa %s42, 0
    %44 = vsyncpa [#allocation8], 0
    %s45 = scalar_lea.sflag [#allocation8], 1
    %46 = vsyncpa %s45, 0
    loop: start=0, step=1, limit=6
    $region2: #{tpu_custom_call.1} parent=1 // loop_pre_header
      _
    $region3: #{tpu_custom_call.1} parent=1 // loop_header
      %s48 = sphi 0, %s52
      %p49 = scmp.ge.s32.totalorder %s48, 6
      %s55 = sphi 0, %s67
      %s56 = sphi 0, %s63
      %s57 = sphi 0, %s55
      %s58 = sphi 0, %s56
      %s59 = sphi 0, %s57
      %s60 = sphi 0, %s58
      %s70 = sphi 0, %s72
      %s73 = sphi 0, %s70
      %s74 = sphi 0, %s73
      %s90 = sphi 0, %s74
      %s96 = sphi 0, %s98
      %s99 = sphi 0, %s96
      %s100 = sphi 0, %s99
      %s116 = sphi 0, %s100
      %s122 = sphi 0, %s124
      %s125 = sphi 0, %s122
      %s126 = sphi 0, %s125
      %s142 = sphi 0, %s126
      %s148 = sphi 0, %s150
      %s151 = sphi 0, %s148
      %s152 = sphi 0, %s151
      %s168 = sphi 0, %s152
      %s174 = sphi 0, %s176
      %s177 = sphi 0, %s174
      %s178 = sphi 0, %s177
      %s194 = sphi 0, %s178
      %s200 = sphi 0, %s202
      %s203 = sphi 0, %s200
      %s204 = sphi 0, %s203
      %s220 = sphi 0, %s204
      %s226 = sphi 0, %s228
      %s229 = sphi 0, %s226
      %s230 = sphi 0, %s229
      %s246 = sphi 0, %s230
      %s252 = sphi 0, %s254
      %s255 = sphi 0, %s252
      %s256 = sphi 0, %s255
      %s272 = sphi 0, %s256
      %s278 = sphi 0, %s280
      %s281 = sphi 0, %s278
      %s282 = sphi 0, %s281
      %s298 = sphi 0, %s282
      %s304 = sphi 0, %s306
      %s307 = sphi 0, %s304
      %s308 = sphi 0, %s307
      %s324 = sphi 0, %s308
      %s330 = sphi 0, %s332
      %s333 = sphi 0, %s330
      %s334 = sphi 0, %s333
      %s350 = sphi 0, %s334
      %s360 = sphi 0, %s362
      %s363 = sphi 0, %s360
      %s364 = sphi 0, %s363
      %s380 = sphi 0, %s364
    $region4: #{tpu_custom_call.1} parent=1 // loop_header_branch
      %51 = sbr.rel (%p49) target = $region8
    $region5: #{tpu_custom_call.1} parent=1 // loop_body
      %s53 = ssub.s32 %s48, 1
      %s54 = ssub.s32 %s48, 2
      %s61 = sadd.s32 1, %s56
      %p62 = scmp.ge.s32.totalorder %s61, 4
      %s63 = scalar_select %p62, 0, %s61
      %s64 = sadd.s32 1, %s55
      %s65 = scalar_select %p62, %s64, %s55
      %p66 = scmp.ge.s32.totalorder %s65, 1
      %s67 = scalar_select %p66, 0, %s65
      %s68 = ssub.s32 %s55, %s67
      %p69 = scmp.eq.s32.totalorder %s68, 0
      %s71 = sadd.s32 %s70, 1
      %s72 = scalar_select %p69, %s70, %s71
      %p75 = pneg %p69
      %p76 = scmp.eq.s32.totalorder %s48, 3
      %p77 = por %p75, %p76
      %p78 = scmp.ne.s32.totalorder %s70, %s73
      %p79 = scmp.eq.s32.totalorder %s48, 0
      %p80 = por %p78, %p79
      %p81 = scmp.ne.s32.totalorder %s70, %s73
      %p82 = scmp.eq.s32.totalorder %s53, 3
      %p83 = por %p81, %p82
      %p84 = scmp.ne.s32.totalorder %s73, %s74
      %p85 = scmp.eq.s32.totalorder %s53, 0
      %p86 = por %p84, %p85
      %p87 = scmp.ne.s32.totalorder %s73, %s74
      %p88 = scmp.eq.s32.totalorder %s54, 3
      %p89 = por %p87, %p88
      %p91 = scmp.ne.s32.totalorder %s74, %s90
      %p92 = scmp.eq.s32.totalorder %s54, 0
      %p93 = por %p91, %p92
      %s94 = ssub.s32 %s56, %s63
      %p95 = scmp.eq.s32.totalorder %s94, 0
      %s97 = sadd.s32 %s96, 1
      %s98 = scalar_select %p95, %s96, %s97
      %p101 = pneg %p95
      %p102 = scmp.eq.s32.totalorder %s48, 3
      %p103 = por %p101, %p102
      %p104 = scmp.ne.s32.totalorder %s96, %s99
      %p105 = scmp.eq.s32.totalorder %s48, 0
      %p106 = por %p104, %p105
      %p107 = scmp.ne.s32.totalorder %s96, %s99
      %p108 = scmp.eq.s32.totalorder %s53, 3
      %p109 = por %p107, %p108
      %p110 = scmp.ne.s32.totalorder %s99, %s100
      %p111 = scmp.eq.s32.totalorder %s53, 0
      %p112 = por %p110, %p111
      %p113 = scmp.ne.s32.totalorder %s99, %s100
      %p114 = scmp.eq.s32.totalorder %s54, 3
      %p115 = por %p113, %p114
      %p117 = scmp.ne.s32.totalorder %s100, %s116
      %p118 = scmp.eq.s32.totalorder %s54, 0
      %p119 = por %p117, %p118
      %s120 = ssub.s32 %s56, %s63
      %p121 = scmp.eq.s32.totalorder %s120, 0
      %s123 = sadd.s32 %s122, 1
      %s124 = scalar_select %p121, %s122, %s123
      %p127 = pneg %p121
      %p128 = scmp.eq.s32.totalorder %s48, 3
      %p129 = por %p127, %p128
      %p130 = scmp.ne.s32.totalorder %s122, %s125
      %p131 = scmp.eq.s32.totalorder %s48, 0
      %p132 = por %p130, %p131
      %p133 = scmp.ne.s32.totalorder %s122, %s125
      %p134 = scmp.eq.s32.totalorder %s53, 3
      %p135 = por %p133, %p134
      %p136 = scmp.ne.s32.totalorder %s125, %s126
      %p137 = scmp.eq.s32.totalorder %s53, 0
      %p138 = por %p136, %p137
      %p139 = scmp.ne.s32.totalorder %s125, %s126
      %p140 = scmp.eq.s32.totalorder %s54, 3
      %p141 = por %p139, %p140
      %p143 = scmp.ne.s32.totalorder %s126, %s142
      %p144 = scmp.eq.s32.totalorder %s54, 0
      %p145 = por %p143, %p144
      %s146 = ssub.s32 %s56, %s63
      %p147 = scmp.eq.s32.totalorder %s146, 0
      %s149 = sadd.s32 %s148, 1
      %s150 = scalar_select %p147, %s148, %s149
      %p153 = pneg %p147
      %p154 = scmp.eq.s32.totalorder %s48, 3
      %p155 = por %p153, %p154
      %p156 = scmp.ne.s32.totalorder %s148, %s151
      %p157 = scmp.eq.s32.totalorder %s48, 0
      %p158 = por %p156, %p157
      %p159 = scmp.ne.s32.totalorder %s148, %s151
      %p160 = scmp.eq.s32.totalorder %s53, 3
      %p161 = por %p159, %p160
      %p162 = scmp.ne.s32.totalorder %s151, %s152
      %p163 = scmp.eq.s32.totalorder %s53, 0
      %p164 = por %p162, %p163
      %p165 = scmp.ne.s32.totalorder %s151, %s152
      %p166 = scmp.eq.s32.totalorder %s54, 3
      %p167 = por %p165, %p166
      %p169 = scmp.ne.s32.totalorder %s152, %s168
      %p170 = scmp.eq.s32.totalorder %s54, 0
      %p171 = por %p169, %p170
      %s172 = ssub.s32 %s56, %s63
      %p173 = scmp.eq.s32.totalorder %s172, 0
      %s175 = sadd.s32 %s174, 1
      %s176 = scalar_select %p173, %s174, %s175
      %p179 = pneg %p173
      %p180 = scmp.eq.s32.totalorder %s48, 3
      %p181 = por %p179, %p180
      %p182 = scmp.ne.s32.totalorder %s174, %s177
      %p183 = scmp.eq.s32.totalorder %s48, 0
      %p184 = por %p182, %p183
      %p185 = scmp.ne.s32.totalorder %s174, %s177
      %p186 = scmp.eq.s32.totalorder %s53, 3
      %p187 = por %p185, %p186
      %p188 = scmp.ne.s32.totalorder %s177, %s178
      %p189 = scmp.eq.s32.totalorder %s53, 0
      %p190 = por %p188, %p189
      %p191 = scmp.ne.s32.totalorder %s177, %s178
      %p192 = scmp.eq.s32.totalorder %s54, 3
      %p193 = por %p191, %p192
      %p195 = scmp.ne.s32.totalorder %s178, %s194
      %p196 = scmp.eq.s32.totalorder %s54, 0
      %p197 = por %p195, %p196
      %s198 = ssub.s32 %s56, %s63
      %p199 = scmp.eq.s32.totalorder %s198, 0
      %s201 = sadd.s32 %s200, 1
      %s202 = scalar_select %p199, %s200, %s201
      %p205 = pneg %p199
      %p206 = scmp.eq.s32.totalorder %s48, 3
      %p207 = por %p205, %p206
      %p208 = scmp.ne.s32.totalorder %s200, %s203
      %p209 = scmp.eq.s32.totalorder %s48, 0
      %p210 = por %p208, %p209
      %p211 = scmp.ne.s32.totalorder %s200, %s203
      %p212 = scmp.eq.s32.totalorder %s53, 3
      %p213 = por %p211, %p212
      %p214 = scmp.ne.s32.totalorder %s203, %s204
      %p215 = scmp.eq.s32.totalorder %s53, 0
      %p216 = por %p214, %p215
      %p217 = scmp.ne.s32.totalorder %s203, %s204
      %p218 = scmp.eq.s32.totalorder %s54, 3
      %p219 = por %p217, %p218
      %p221 = scmp.ne.s32.totalorder %s204, %s220
      %p222 = scmp.eq.s32.totalorder %s54, 0
      %p223 = por %p221, %p222
      %s224 = ssub.s32 %s56, %s63
      %p225 = scmp.eq.s32.totalorder %s224, 0
      %s227 = sadd.s32 %s226, 1
      %s228 = scalar_select %p225, %s226, %s227
      %p231 = pneg %p225
      %p232 = scmp.eq.s32.totalorder %s48, 3
      %p233 = por %p231, %p232
      %p234 = scmp.ne.s32.totalorder %s226, %s229
      %p235 = scmp.eq.s32.totalorder %s48, 0
      %p236 = por %p234, %p235
      %p237 = scmp.ne.s32.totalorder %s226, %s229
      %p238 = scmp.eq.s32.totalorder %s53, 3
      %p239 = por %p237, %p238
      %p240 = scmp.ne.s32.totalorder %s229, %s230
      %p241 = scmp.eq.s32.totalorder %s53, 0
      %p242 = por %p240, %p241
      %p243 = scmp.ne.s32.totalorder %s229, %s230
      %p244 = scmp.eq.s32.totalorder %s54, 3
      %p245 = por %p243, %p244
      %p247 = scmp.ne.s32.totalorder %s230, %s246
      %p248 = scmp.eq.s32.totalorder %s54, 0
      %p249 = por %p247, %p248
      %s250 = ssub.s32 %s56, %s63
      %p251 = scmp.eq.s32.totalorder %s250, 0
      %s253 = sadd.s32 %s252, 1
      %s254 = scalar_select %p251, %s252, %s253
      %p257 = pneg %p251
      %p258 = scmp.eq.s32.totalorder %s48, 3
      %p259 = por %p257, %p258
      %p260 = scmp.ne.s32.totalorder %s252, %s255
      %p261 = scmp.eq.s32.totalorder %s48, 0
      %p262 = por %p260, %p261
      %p263 = scmp.ne.s32.totalorder %s252, %s255
      %p264 = scmp.eq.s32.totalorder %s53, 3
      %p265 = por %p263, %p264
      %p266 = scmp.ne.s32.totalorder %s255, %s256
      %p267 = scmp.eq.s32.totalorder %s53, 0
      %p268 = por %p266, %p267
      %p269 = scmp.ne.s32.totalorder %s255, %s256
      %p270 = scmp.eq.s32.totalorder %s54, 3
      %p271 = por %p269, %p270
      %p273 = scmp.ne.s32.totalorder %s256, %s272
      %p274 = scmp.eq.s32.totalorder %s54, 0
      %p275 = por %p273, %p274
      %s276 = ssub.s32 %s56, %s63
      %p277 = scmp.eq.s32.totalorder %s276, 0
      %s279 = sadd.s32 %s278, 1
      %s280 = scalar_select %p277, %s278, %s279
      %p283 = pneg %p277
      %p284 = scmp.eq.s32.totalorder %s48, 3
      %p285 = por %p283, %p284
      %p286 = scmp.ne.s32.totalorder %s278, %s281
      %p287 = scmp.eq.s32.totalorder %s48, 0
      %p288 = por %p286, %p287
      %p289 = scmp.ne.s32.totalorder %s278, %s281
      %p290 = scmp.eq.s32.totalorder %s53, 3
      %p291 = por %p289, %p290
      %p292 = scmp.ne.s32.totalorder %s281, %s282
      %p293 = scmp.eq.s32.totalorder %s53, 0
      %p294 = por %p292, %p293
      %p295 = scmp.ne.s32.totalorder %s281, %s282
      %p296 = scmp.eq.s32.totalorder %s54, 3
      %p297 = por %p295, %p296
      %p299 = scmp.ne.s32.totalorder %s282, %s298
      %p300 = scmp.eq.s32.totalorder %s54, 0
      %p301 = por %p299, %p300
      %s302 = ssub.s32 %s56, %s63
      %p303 = scmp.eq.s32.totalorder %s302, 0
      %s305 = sadd.s32 %s304, 1
      %s306 = scalar_select %p303, %s304, %s305
      %p309 = pneg %p303
      %p310 = scmp.eq.s32.totalorder %s48, 3
      %p311 = por %p309, %p310
      %p312 = scmp.ne.s32.totalorder %s304, %s307
      %p313 = scmp.eq.s32.totalorder %s48, 0
      %p314 = por %p312, %p313
      %p315 = scmp.ne.s32.totalorder %s304, %s307
      %p316 = scmp.eq.s32.totalorder %s53, 3
      %p317 = por %p315, %p316
      %p318 = scmp.ne.s32.totalorder %s307, %s308
      %p319 = scmp.eq.s32.totalorder %s53, 0
      %p320 = por %p318, %p319
      %p321 = scmp.ne.s32.totalorder %s307, %s308
      %p322 = scmp.eq.s32.totalorder %s54, 3
      %p323 = por %p321, %p322
      %p325 = scmp.ne.s32.totalorder %s308, %s324
      %p326 = scmp.eq.s32.totalorder %s54, 0
      %p327 = por %p325, %p326
      %s328 = ssub.s32 %s56, %s63
      %p329 = scmp.eq.s32.totalorder %s328, 0
      %s331 = sadd.s32 %s330, 1
      %s332 = scalar_select %p329, %s330, %s331
      %p335 = pneg %p329
      %p336 = scmp.eq.s32.totalorder %s48, 3
      %p337 = por %p335, %p336
      %p338 = scmp.ne.s32.totalorder %s330, %s333
      %p339 = scmp.eq.s32.totalorder %s48, 0
      %p340 = por %p338, %p339
      %p341 = scmp.ne.s32.totalorder %s330, %s333
      %p342 = scmp.eq.s32.totalorder %s53, 3
      %p343 = por %p341, %p342
      %p344 = scmp.ne.s32.totalorder %s333, %s334
      %p345 = scmp.eq.s32.totalorder %s53, 0
      %p346 = por %p344, %p345
      %p347 = scmp.ne.s32.totalorder %s333, %s334
      %p348 = scmp.eq.s32.totalorder %s54, 3
      %p349 = por %p347, %p348
      %p351 = scmp.ne.s32.totalorder %s334, %s350
      %p352 = scmp.eq.s32.totalorder %s54, 0
      %p353 = por %p351, %p352
      %s354 = sld [smem:[#allocation4 + %s56]]
      %s355 = sld [smem:[#allocation4 + %s63]]
      %s356 = ssub.s32 %s354, %s355
      %s357 = ssub.s32 %s55, %s67
      %s358 = sor.u32 %s356, %s357
      %p359 = scmp.eq.s32.totalorder %s358, 0
      %s361 = sadd.s32 %s360, 1
      %s362 = scalar_select %p359, %s360, %s361
      %p365 = pneg %p359
      %p366 = scmp.eq.s32.totalorder %s48, 3
      %p367 = por %p365, %p366
      %p368 = scmp.ne.s32.totalorder %s360, %s363
      %p369 = scmp.eq.s32.totalorder %s48, 0
      %p370 = por %p368, %p369
      %p371 = scmp.ne.s32.totalorder %s360, %s363
      %p372 = scmp.eq.s32.totalorder %s53, 3
      %p373 = por %p371, %p372
      %p374 = scmp.ne.s32.totalorder %s363, %s364
      %p375 = scmp.eq.s32.totalorder %s53, 0
      %p376 = por %p374, %p375
      %p377 = scmp.ne.s32.totalorder %s363, %s364
      %p378 = scmp.eq.s32.totalorder %s54, 3
      %p379 = por %p377, %p378
      %p381 = scmp.ne.s32.totalorder %s364, %s380
      %p382 = scmp.eq.s32.totalorder %s54, 0
      %p383 = por %p381, %p382
      %p384 = scmp.le.s32.totalorder 1, %s48
      %p385 = scmp.lt.s32.totalorder %s48, 5
      %p386 = pnand %p384, %p385
      %p387 = pneg %p386
      // Predicated region
      $region9: #{tpu_custom_call.1} parent=5 // pred_check
        _
      $region10: #{tpu_custom_call.1} parent=5 // pred_check_branch
        %389 = sbr.rel (%p386) target = $region12
      $region11: #{tpu_custom_call.1} parent=5 // pred_region
        %s390 = ssub.s32 %s48, 1
        // Predicated region
        $region13: #{tpu_custom_call.1} parent=11 // pred_check
          %p391 = pneg %p86
        $region14: #{tpu_custom_call.1} parent=11 // pred_check_branch
          %393 = sbr.rel (%p391) target = $region16
        $region15: #{tpu_custom_call.1} parent=11 // pred_region
          %s394 = smul.u32 16, %s57
          %396 = vsyncadd [#allocation7], 0
          %s397 = smul.addr %s394, 8
          %s398 = scalar_lea.hbm %s2, %s397
          %s399 = sshll.u32 %s398, 4
          %s400 = int_to_ptr.hbm [resolvable:$true] %s399
          %s401 = sshll.u32 [#allocation6], 4
          %s402 = int_to_ptr.vmem [resolvable:$true] %s401
          %407 = dma.hbm_to_vmem [thread:$0]  %s400, 2048, %s402, [#allocation7], 128, 128, 8
        $region16: #{tpu_custom_call.1} parent=11 // pred_fallthru
          _
      $region12: #{tpu_custom_call.1} parent=5 // pred_fallthru
        _
      %p408 = scmp.lt.s32.totalorder %s48, 4
      // Predicated region
      $region17: #{tpu_custom_call.1} parent=5 // pred_check
        %p409 = pneg %p408
      $region18: #{tpu_custom_call.1} parent=5 // pred_check_branch
        %411 = sbr.rel (%p409) target = $region20
      $region19: #{tpu_custom_call.1} parent=5 // pred_region
        // Predicated region
        $region21: #{tpu_custom_call.1} parent=19 // pred_check
          %p412 = pneg %p106
        $region22: #{tpu_custom_call.1} parent=19 // pred_check_branch
          %414 = sbr.rel (%p412) target = $region24
        $region23: #{tpu_custom_call.1} parent=19 // pred_region
          %s415 = sand.u32 %s48, 1
          %s416 = scalar_lea.sflag [#allocation10], %s415
          %s417 = sand.u32 %s96, 1
          %s418 = smul.addr %s417, 64
          %s419 = scalar_lea.vmem [#allocation9], %s418
          %421 = vsyncadd %s416, 0
          %s422 = smul.addr %s56, 16
          %s423 = smul.addr %s422, 4
          %s424 = scalar_lea.hbm %s3, %s423
          %s425 = sshll.u32 %s424, 4
          %s426 = int_to_ptr.hbm [resolvable:$true] %s425
          %s427 = sshll.u32 %s419, 4
          %s428 = int_to_ptr.vmem [resolvable:$true] %s427
          %433 = dma.hbm_to_vmem [thread:$0]  %s426, 1024, %s428, %s416, 64, 64, 4
        $region24: #{tpu_custom_call.1} parent=19 // pred_fallthru
          _
        // Predicated region
        $region25: #{tpu_custom_call.1} parent=19 // pred_check
          %p434 = pneg %p132
        $region26: #{tpu_custom_call.1} parent=19 // pred_check_branch
          %436 = sbr.rel (%p434) target = $region28
        $region27: #{tpu_custom_call.1} parent=19 // pred_region
          %s437 = sand.u32 %s48, 1
          %s438 = scalar_lea.sflag [#allocation10], %s437
          %s439 = sand.u32 %s122, 1
          %s440 = scalar_lea.vmem [#allocation11], %s439
          %442 = vsyncadd %s438, 0
          %s443 = scalar_lea.hbm %s4, %s56
          %s445 = sshll.u32 %s443, 4
          %s446 = int_to_ptr.hbm [resolvable:$true] %s445
          %s447 = sshll.u32 %s440, 4
          %s448 = int_to_ptr.vmem [resolvable:$true] %s447
          %450 = dma.hbm_to_vmem [thread:$0]  %s446, 16, %s448, %s438
        $region28: #{tpu_custom_call.1} parent=19 // pred_fallthru
          _
        // Predicated region
        $region29: #{tpu_custom_call.1} parent=19 // pred_check
          %p451 = pneg %p158
        $region30: #{tpu_custom_call.1} parent=19 // pred_check_branch
          %453 = sbr.rel (%p451) target = $region32
        $region31: #{tpu_custom_call.1} parent=19 // pred_region
          %p454 = scmp.lt.s32.totalorder %s56, 3
          %s455 = scalar_select %p454, %s56, 3
          %s456 = scalar_lea.vmem %s5, %s455
        $region32: #{tpu_custom_call.1} parent=19 // pred_fallthru
          _
        // Predicated region
        $region33: #{tpu_custom_call.1} parent=19 // pred_check
          %p457 = pneg %p184
        $region34: #{tpu_custom_call.1} parent=19 // pred_check_branch
          %459 = sbr.rel (%p457) target = $region36
        $region35: #{tpu_custom_call.1} parent=19 // pred_region
          %s460 = sand.u32 %s48, 1
          %s461 = scalar_lea.sflag [#allocation13], %s460
          %s462 = sand.u32 %s174, 1
          %s463 = smul.addr %s462, 64
          %s464 = scalar_lea.vmem [#allocation12], %s463
          %466 = vsyncadd %s461, 0
          %s467 = smul.addr %s56, 16
          %s468 = smul.addr %s467, 4
          %s469 = scalar_lea.hbm %s6, %s468
          %s470 = sshll.u32 %s469, 4
          %s471 = int_to_ptr.hbm [resolvable:$true] %s470
          %s472 = sshll.u32 %s464, 4
          %s473 = int_to_ptr.vmem [resolvable:$true] %s472
          %478 = dma.hbm_to_vmem [thread:$0]  %s471, 1024, %s473, %s461, 64, 64, 4
        $region36: #{tpu_custom_call.1} parent=19 // pred_fallthru
          _
        // Predicated region
        $region37: #{tpu_custom_call.1} parent=19 // pred_check
          %p479 = pneg %p210
        $region38: #{tpu_custom_call.1} parent=19 // pred_check_branch
          %481 = sbr.rel (%p479) target = $region40
        $region39: #{tpu_custom_call.1} parent=19 // pred_region
          %s482 = sand.u32 %s48, 1
          %s483 = scalar_lea.sflag [#allocation13], %s482
          %s484 = sand.u32 %s200, 1
          %s485 = scalar_lea.vmem [#allocation14], %s484
          %487 = vsyncadd %s483, 0
          %s488 = scalar_lea.hbm %s7, %s56
          %s490 = sshll.u32 %s488, 4
          %s491 = int_to_ptr.hbm [resolvable:$true] %s490
          %s492 = sshll.u32 %s485, 4
          %s493 = int_to_ptr.vmem [resolvable:$true] %s492
          %495 = dma.hbm_to_vmem [thread:$0]  %s491, 16, %s493, %s483
        $region40: #{tpu_custom_call.1} parent=19 // pred_fallthru
          _
        // Predicated region
        $region41: #{tpu_custom_call.1} parent=19 // pred_check
          %p496 = pneg %p236
        $region42: #{tpu_custom_call.1} parent=19 // pred_check_branch
          %498 = sbr.rel (%p496) target = $region44
        $region43: #{tpu_custom_call.1} parent=19 // pred_region
          %s499 = sand.u32 %s48, 1
          %s500 = scalar_lea.sflag [#allocation16], %s499
          %s501 = sand.u32 %s226, 1
          %s502 = scalar_lea.vmem [#allocation15], %s501
          %504 = vsyncadd %s500, 0
          %s505 = scalar_lea.hbm %s8, %s56
          %s507 = sshll.u32 %s505, 4
          %s508 = int_to_ptr.hbm [resolvable:$true] %s507
          %s509 = sshll.u32 %s502, 4
          %s510 = int_to_ptr.vmem [resolvable:$true] %s509
          %512 = dma.hbm_to_vmem [thread:$0]  %s508, 16, %s510, %s500
        $region44: #{tpu_custom_call.1} parent=19 // pred_fallthru
          _
        // Predicated region
        $region45: #{tpu_custom_call.1} parent=19 // pred_check
          %p513 = pneg %p262
        $region46: #{tpu_custom_call.1} parent=19 // pred_check_branch
          %515 = sbr.rel (%p513) target = $region48
        $region47: #{tpu_custom_call.1} parent=19 // pred_region
          %s516 = sand.u32 %s48, 1
          %s517 = scalar_lea.sflag [#allocation16], %s516
          %s518 = sand.u32 %s252, 1
          %s519 = smul.addr %s518, 256
          %s520 = scalar_lea.vmem [#allocation17], %s519
          %522 = vsyncadd %s517, 0
          %s523 = smul.addr %s56, 64
          %s524 = smul.addr %s523, 4
          %s525 = scalar_lea.hbm %s9, %s524
          %s526 = sshll.u32 %s525, 4
          %s527 = int_to_ptr.hbm [resolvable:$true] %s526
          %s528 = sshll.u32 %s520, 4
          %s529 = int_to_ptr.vmem [resolvable:$true] %s528
          %534 = dma.hbm_to_vmem [thread:$0]  %s527, 4096, %s529, %s517, 256, 256, 16
        $region48: #{tpu_custom_call.1} parent=19 // pred_fallthru
          _
        // Predicated region
        $region49: #{tpu_custom_call.1} parent=19 // pred_check
          %p535 = pneg %p288
        $region50: #{tpu_custom_call.1} parent=19 // pred_check_branch
          %537 = sbr.rel (%p535) target = $region52
        $region51: #{tpu_custom_call.1} parent=19 // pred_region
          %s538 = sand.u32 %s48, 1
          %s539 = scalar_lea.sflag [#allocation19], %s538
          %s540 = sand.u32 %s278, 1
          %s541 = smul.addr %s540, 4
          %s542 = scalar_lea.vmem [#allocation18], %s541
          %544 = vsyncadd %s539, 0
          %s545 = smul.addr %s56, 4
          %s546 = scalar_lea.hbm %s10, %s545
          %s548 = sshll.u32 %s546, 4
          %s549 = int_to_ptr.hbm [resolvable:$true] %s548
          %s550 = sshll.u32 %s542, 4
          %s551 = int_to_ptr.vmem [resolvable:$true] %s550
          %553 = dma.hbm_to_vmem [thread:$0]  %s549, 64, %s551, %s539
        $region52: #{tpu_custom_call.1} parent=19 // pred_fallthru
          _
        // Predicated region
        $region53: #{tpu_custom_call.1} parent=19 // pred_check
          %p554 = pneg %p314
        $region54: #{tpu_custom_call.1} parent=19 // pred_check_branch
          %556 = sbr.rel (%p554) target = $region56
        $region55: #{tpu_custom_call.1} parent=19 // pred_region
          %s557 = sand.u32 %s48, 1
          %s558 = scalar_lea.sflag [#allocation19], %s557
          %s559 = sand.u32 %s304, 1
          %s560 = smul.addr %s559, 256
          %s561 = scalar_lea.vmem [#allocation20], %s560
          %563 = vsyncadd %s558, 0
          %s564 = smul.addr %s56, 64
          %s565 = smul.addr %s564, 4
          %s566 = scalar_lea.hbm %s11, %s565
          %s567 = sshll.u32 %s566, 4
          %s568 = int_to_ptr.hbm [resolvable:$true] %s567
          %s569 = sshll.u32 %s561, 4
          %s570 = int_to_ptr.vmem [resolvable:$true] %s569
          %575 = dma.hbm_to_vmem [thread:$0]  %s568, 4096, %s570, %s558, 64, 64, 4
        $region56: #{tpu_custom_call.1} parent=19 // pred_fallthru
          _
        // Predicated region
        $region57: #{tpu_custom_call.1} parent=19 // pred_check
          %p576 = pneg %p340
        $region58: #{tpu_custom_call.1} parent=19 // pred_check_branch
          %578 = sbr.rel (%p576) target = $region60
        $region59: #{tpu_custom_call.1} parent=19 // pred_region
          %p579 = scmp.lt.s32.totalorder %s56, 3
          %s580 = scalar_select %p579, %s56, 3
          %s581 = scalar_lea.vmem %s12, %s580
        $region60: #{tpu_custom_call.1} parent=19 // pred_fallthru
          _
      $region20: #{tpu_custom_call.1} parent=5 // pred_fallthru
        _
      %p582 = scmp.le.s32.totalorder 1, %s48
      %p583 = scmp.lt.s32.totalorder %s48, 5
      %p584 = pnand %p582, %p583
      %p585 = pneg %p584
      // Predicated region
      $region61: #{tpu_custom_call.1} parent=5 // pred_check
        _
      $region62: #{tpu_custom_call.1} parent=5 // pred_check_branch
        %587 = sbr.rel (%p584) target = $region64
      $region63: #{tpu_custom_call.1} parent=5 // pred_region
        %s588 = ssub.s32 %s48, 1
        // Predicated region
        $region65: #{tpu_custom_call.1} parent=63 // pred_check
          %p589 = pneg %p86
        $region66: #{tpu_custom_call.1} parent=63 // pred_check_branch
          %591 = sbr.rel (%p589) target = $region68
        $region67: #{tpu_custom_call.1} parent=63 // pred_region
          %593 = dma.done [#allocation7], 2048
        $region68: #{tpu_custom_call.1} parent=63 // pred_fallthru
          _
        %s594 = sand.u32 %s53, 1
        %s595 = scalar_lea.sflag [#allocation10], %s594
        %s596 = sand.u32 %s99, 1
        %s597 = smul.addr %s596, 64
        %s598 = scalar_lea.vmem [#allocation9], %s597
        // Predicated region
        $region69: #{tpu_custom_call.1} parent=63 // pred_check
          %p599 = pneg %p112
        $region70: #{tpu_custom_call.1} parent=63 // pred_check_branch
          %601 = sbr.rel (%p599) target = $region72
        $region71: #{tpu_custom_call.1} parent=63 // pred_region
          %603 = dma.done %s595, 1024
        $region72: #{tpu_custom_call.1} parent=63 // pred_fallthru
          _
        %s604 = sand.u32 %s53, 1
        %s605 = scalar_lea.sflag [#allocation10], %s604
        %s606 = sand.u32 %s125, 1
        %s607 = scalar_lea.vmem [#allocation11], %s606
        // Predicated region
        $region73: #{tpu_custom_call.1} parent=63 // pred_check
          %p608 = pneg %p138
        $region74: #{tpu_custom_call.1} parent=63 // pred_check_branch
          %610 = sbr.rel (%p608) target = $region76
        $region75: #{tpu_custom_call.1} parent=63 // pred_region
          %612 = dma.done %s605, 16
        $region76: #{tpu_custom_call.1} parent=63 // pred_fallthru
          _
        %s613 = sand.u32 %s53, 1
        %s614 = scalar_lea.sflag [#allocation13], %s613
        %s615 = sand.u32 %s177, 1
        %s616 = smul.addr %s615, 64
        %s617 = scalar_lea.vmem [#allocation12], %s616
        // Predicated region
        $region77: #{tpu_custom_call.1} parent=63 // pred_check
          %p618 = pneg %p190
        $region78: #{tpu_custom_call.1} parent=63 // pred_check_branch
          %620 = sbr.rel (%p618) target = $region80
        $region79: #{tpu_custom_call.1} parent=63 // pred_region
          %622 = dma.done %s614, 1024
        $region80: #{tpu_custom_call.1} parent=63 // pred_fallthru
          _
        %s623 = sand.u32 %s53, 1
        %s624 = scalar_lea.sflag [#allocation13], %s623
        %s625 = sand.u32 %s203, 1
        %s626 = scalar_lea.vmem [#allocation14], %s625
        // Predicated region
        $region81: #{tpu_custom_call.1} parent=63 // pred_check
          %p627 = pneg %p216
        $region82: #{tpu_custom_call.1} parent=63 // pred_check_branch
          %629 = sbr.rel (%p627) target = $region84
        $region83: #{tpu_custom_call.1} parent=63 // pred_region
          %631 = dma.done %s624, 16
        $region84: #{tpu_custom_call.1} parent=63 // pred_fallthru
          _
        %s632 = sand.u32 %s53, 1
        %s633 = scalar_lea.sflag [#allocation16], %s632
        %s634 = sand.u32 %s229, 1
        %s635 = scalar_lea.vmem [#allocation15], %s634
        // Predicated region
        $region85: #{tpu_custom_call.1} parent=63 // pred_check
          %p636 = pneg %p242
        $region86: #{tpu_custom_call.1} parent=63 // pred_check_branch
          %638 = sbr.rel (%p636) target = $region88
        $region87: #{tpu_custom_call.1} parent=63 // pred_region
          %640 = dma.done %s633, 16
        $region88: #{tpu_custom_call.1} parent=63 // pred_fallthru
          _
        %s641 = sand.u32 %s53, 1
        %s642 = scalar_lea.sflag [#allocation16], %s641
        %s643 = sand.u32 %s255, 1
        %s644 = smul.addr %s643, 256
        %s645 = scalar_lea.vmem [#allocation17], %s644
        // Predicated region
        $region89: #{tpu_custom_call.1} parent=63 // pred_check
          %p646 = pneg %p268
        $region90: #{tpu_custom_call.1} parent=63 // pred_check_branch
          %648 = sbr.rel (%p646) target = $region92
        $region91: #{tpu_custom_call.1} parent=63 // pred_region
          %650 = dma.done %s642, 4096
        $region92: #{tpu_custom_call.1} parent=63 // pred_fallthru
          _
        %s651 = sand.u32 %s53, 1
        %s652 = scalar_lea.sflag [#allocation19], %s651
        %s653 = sand.u32 %s281, 1
        %s654 = smul.addr %s653, 4
        %s655 = scalar_lea.vmem [#allocation18], %s654
        // Predicated region
        $region93: #{tpu_custom_call.1} parent=63 // pred_check
          %p656 = pneg %p294
        $region94: #{tpu_custom_call.1} parent=63 // pred_check_branch
          %658 = sbr.rel (%p656) target = $region96
        $region95: #{tpu_custom_call.1} parent=63 // pred_region
          %660 = dma.done %s652, 64
        $region96: #{tpu_custom_call.1} parent=63 // pred_fallthru
          _
        %s661 = sand.u32 %s53, 1
        %s662 = scalar_lea.sflag [#allocation19], %s661
        %s663 = sand.u32 %s307, 1
        %s664 = smul.addr %s663, 256
        %s665 = scalar_lea.vmem [#allocation20], %s664
        // Predicated region
        $region97: #{tpu_custom_call.1} parent=63 // pred_check
          %p666 = pneg %p320
        $region98: #{tpu_custom_call.1} parent=63 // pred_check_branch
          %668 = sbr.rel (%p666) target = $region100
        $region99: #{tpu_custom_call.1} parent=63 // pred_region
          %670 = dma.done %s662, 4096
        $region100: #{tpu_custom_call.1} parent=63 // pred_fallthru
          _
        %p671 = pneg %p86
        %p672 = pneg %p83
        %s673 = sand.u32 %s53, 1
        %s674 = scalar_lea.sflag [#allocation10], %s673
        %s675 = sand.u32 %s99, 1
        %s676 = smul.addr %s675, 64
        %s677 = scalar_lea.vmem [#allocation9], %s676
        %p678 = pneg %p112
        %p679 = pneg %p109
        %s680 = sand.u32 %s53, 1
        %s681 = scalar_lea.sflag [#allocation10], %s680
        %s682 = sand.u32 %s125, 1
        %s683 = scalar_lea.vmem [#allocation11], %s682
        %p684 = pneg %p138
        %p685 = pneg %p135
        %p686 = scmp.lt.s32.totalorder %s58, 3
        %s687 = scalar_select %p686, %s58, 3
        %s688 = scalar_lea.vmem %s5, %s687
        %p689 = pneg %p164
        %p690 = pneg %p161
        %s691 = sand.u32 %s53, 1
        %s692 = scalar_lea.sflag [#allocation13], %s691
        %s693 = sand.u32 %s177, 1
        %s694 = smul.addr %s693, 64
        %s695 = scalar_lea.vmem [#allocation12], %s694
        %p696 = pneg %p190
        %p697 = pneg %p187
        %s698 = sand.u32 %s53, 1
        %s699 = scalar_lea.sflag [#allocation13], %s698
        %s700 = sand.u32 %s203, 1
        %s701 = scalar_lea.vmem [#allocation14], %s700
        %p702 = pneg %p216
        %p703 = pneg %p213
        %s704 = sand.u32 %s53, 1
        %s705 = scalar_lea.sflag [#allocation16], %s704
        %s706 = sand.u32 %s229, 1
        %s707 = scalar_lea.vmem [#allocation15], %s706
        %p708 = pneg %p242
        %p709 = pneg %p239
        %s710 = sand.u32 %s53, 1
        %s711 = scalar_lea.sflag [#allocation16], %s710
        %s712 = sand.u32 %s255, 1
        %s713 = smul.addr %s712, 256
        %s714 = scalar_lea.vmem [#allocation17], %s713
        %p715 = pneg %p268
        %p716 = pneg %p265
        %s717 = sand.u32 %s53, 1
        %s718 = scalar_lea.sflag [#allocation19], %s717
        %s719 = sand.u32 %s281, 1
        %s720 = smul.addr %s719, 4
        %s721 = scalar_lea.vmem [#allocation18], %s720
        %p722 = pneg %p294
        %p723 = pneg %p291
        %s724 = sand.u32 %s53, 1
        %s725 = scalar_lea.sflag [#allocation19], %s724
        %s726 = sand.u32 %s307, 1
        %s727 = smul.addr %s726, 256
        %s728 = scalar_lea.vmem [#allocation20], %s727
        %p729 = pneg %p320
        %p730 = pneg %p317
        %p731 = scmp.lt.s32.totalorder %s58, 3
        %s732 = scalar_select %p731, %s58, 3
        %s733 = scalar_lea.vmem %s12, %s732
        %p734 = pneg %p346
        %p735 = pneg %p343
        %p736 = pneg %p376
        %p737 = pneg %p373
        %s738 = sand.u32 %s363, 1
        %s739 = scalar_lea.sflag [#allocation8], %s738
        %s740 = sand.u32 %s363, 1
        %s741 = smul.addr %s740, 128
        %s742 = scalar_lea.vmem [#allocation21], %s741
        %s743 = smul.u32 16, %s57
        %p744 = scmp.lt.s32.totalorder %s58, 3
        %s745 = scalar_select %p744, %s58, 3
        %s746 = scalar_lea.vmem %s5, %s745
        %p747 = scmp.lt.s32.totalorder %s58, 3
        %s748 = scalar_select %p747, %s58, 3
        %s749 = scalar_lea.vmem %s12, %s748
        %s750 = sld [smem:[#allocation4 + %s58]]
        %s751 = smul.u32 16, %s57
        %p752 = scmp.eq.s32.totalorder %s58, 0
        // Predicated region
        $region101: #{tpu_custom_call.1} parent=63 // pred_check
          %p753 = pneg %p752
        $region102: #{tpu_custom_call.1} parent=63 // pred_check_branch
          %755 = sbr.rel (%p753) target = $region104
        $region103: #{tpu_custom_call.1} parent=63 // pred_region
          %v756 = vld [vmem:[#allocation6] sm:$0xff]
          %v757 = vld [vmem:[#allocation6 + $0x8] sm:$0xff]
          %v758 = vld [vmem:[#allocation6 + $0x10] sm:$0xff]
          %v759 = vld [vmem:[#allocation6 + $0x18] sm:$0xff]
          %v760 = vld [vmem:[#allocation6 + $0x20] sm:$0xff]
          %v761 = vld [vmem:[#allocation6 + $0x28] sm:$0xff]
          %v762 = vld [vmem:[#allocation6 + $0x30] sm:$0xff]
          %v763 = vld [vmem:[#allocation6 + $0x38] sm:$0xff]
          %v764 = vld [vmem:[#allocation6 + $0x40] sm:$0xff]
          %v765 = vld [vmem:[#allocation6 + $0x48] sm:$0xff]
          %v766 = vld [vmem:[#allocation6 + $0x50] sm:$0xff]
          %v767 = vld [vmem:[#allocation6 + $0x58] sm:$0xff]
          %v768 = vld [vmem:[#allocation6 + $0x60] sm:$0xff]
          %v769 = vld [vmem:[#allocation6 + $0x68] sm:$0xff]
          %v770 = vld [vmem:[#allocation6 + $0x70] sm:$0xff]
          %v771 = vld [vmem:[#allocation6 + $0x78] sm:$0xff]
          %772 = vst [vmem:[#allocation2] sm:$0xff] %v756
          %773 = vst [vmem:[#allocation2 + $0x8] sm:$0xff] %v757
          %774 = vst [vmem:[#allocation2 + $0x10] sm:$0xff] %v758
          %775 = vst [vmem:[#allocation2 + $0x18] sm:$0xff] %v759
          %776 = vst [vmem:[#allocation2 + $0x20] sm:$0xff] %v760
          %777 = vst [vmem:[#allocation2 + $0x28] sm:$0xff] %v761
          %778 = vst [vmem:[#allocation2 + $0x30] sm:$0xff] %v762
          %779 = vst [vmem:[#allocation2 + $0x38] sm:$0xff] %v763
          %780 = vst [vmem:[#allocation2 + $0x40] sm:$0xff] %v764
          %781 = vst [vmem:[#allocation2 + $0x48] sm:$0xff] %v765
          %782 = vst [vmem:[#allocation2 + $0x50] sm:$0xff] %v766
          %783 = vst [vmem:[#allocation2 + $0x58] sm:$0xff] %v767
          %784 = vst [vmem:[#allocation2 + $0x60] sm:$0xff] %v768
          %785 = vst [vmem:[#allocation2 + $0x68] sm:$0xff] %v769
          %786 = vst [vmem:[#allocation2 + $0x70] sm:$0xff] %v770
          %787 = vst [vmem:[#allocation2 + $0x78] sm:$0xff] %v771
        $region104: #{tpu_custom_call.1} parent=63 // pred_fallthru
          _
        %v788 = vld [vmem:[#allocation2] sm:$0xff]
        %v789 = vld [vmem:[#allocation2 + $0x8] sm:$0xff]
        %v790 = vld [vmem:[#allocation2 + $0x10] sm:$0xff]
        %v791 = vld [vmem:[#allocation2 + $0x18] sm:$0xff]
        %v792 = vld [vmem:[#allocation2 + $0x20] sm:$0xff]
        %v793 = vld [vmem:[#allocation2 + $0x28] sm:$0xff]
        %v794 = vld [vmem:[#allocation2 + $0x30] sm:$0xff]
        %v795 = vld [vmem:[#allocation2 + $0x38] sm:$0xff]
        %v796 = vld [vmem:[#allocation2 + $0x40] sm:$0xff]
        %v797 = vld [vmem:[#allocation2 + $0x48] sm:$0xff]
        %v798 = vld [vmem:[#allocation2 + $0x50] sm:$0xff]
        %v799 = vld [vmem:[#allocation2 + $0x58] sm:$0xff]
        %v800 = vld [vmem:[#allocation2 + $0x60] sm:$0xff]
        %v801 = vld [vmem:[#allocation2 + $0x68] sm:$0xff]
        %v802 = vld [vmem:[#allocation2 + $0x70] sm:$0xff]
        %v803 = vld [vmem:[#allocation2 + $0x78] sm:$0xff]
        %v804 = vld [vmem:[%s607] sm:$0x1]
        %v805 = vld [vmem:[%s746] sm:$0x1]
        %806 = vadd.xlane.f32.xlu0 %v788
        %v807 = vpop.xlane.xlu0 %806
        %808 = vadd.xlane.f32.xlu0 %v789
        %v809 = vpop.xlane.xlu0 %808
        %810 = vadd.xlane.f32.xlu0 %v790
        %v811 = vpop.xlane.xlu0 %810
        %812 = vadd.xlane.f32.xlu0 %v791
        %v813 = vpop.xlane.xlu0 %812
        %814 = vadd.xlane.f32.xlu0 %v792
        %v815 = vpop.xlane.xlu0 %814
        %816 = vadd.xlane.f32.xlu0 %v793
        %v817 = vpop.xlane.xlu0 %816
        %818 = vadd.xlane.f32.xlu0 %v794
        %v819 = vpop.xlane.xlu0 %818
        %820 = vadd.xlane.f32.xlu0 %v795
        %v821 = vpop.xlane.xlu0 %820
        %822 = vadd.xlane.f32.xlu0 %v796
        %v823 = vpop.xlane.xlu0 %822
        %824 = vadd.xlane.f32.xlu0 %v797
        %v825 = vpop.xlane.xlu0 %824
        %826 = vadd.xlane.f32.xlu0 %v798
        %v827 = vpop.xlane.xlu0 %826
        %828 = vadd.xlane.f32.xlu0 %v799
        %v829 = vpop.xlane.xlu0 %828
        %830 = vadd.xlane.f32.xlu0 %v800
        %v831 = vpop.xlane.xlu0 %830
        %832 = vadd.xlane.f32.xlu0 %v801
        %v833 = vpop.xlane.xlu0 %832
        %834 = vadd.xlane.f32.xlu0 %v802
        %v835 = vpop.xlane.xlu0 %834
        %836 = vadd.xlane.f32.xlu0 %v803
        %v837 = vpop.xlane.xlu0 %836
        %v838 = vrcp.pop 128.0
        %v839 = vmul.f32 128.0, %v838
        %v840 = vsub.f32 1.0, %v839
        %v841 = vmul.f32 %v838, %v840
        %v842 = vadd.f32 %v838, %v841
        %vm843 = vweird.f32 %v838
        %v844 = vsel %vm843, %v838, %v842
        %v845 = vmul.f32 %v807, %v844
        %v846 = vmul.f32 %v809, %v844
        %v847 = vmul.f32 %v811, %v844
        %v848 = vmul.f32 %v813, %v844
        %v849 = vmul.f32 %v815, %v844
        %v850 = vmul.f32 %v817, %v844
        %v851 = vmul.f32 %v819, %v844
        %v852 = vmul.f32 %v821, %v844
        %v853 = vmul.f32 %v823, %v844
        %v854 = vmul.f32 %v825, %v844
        %v855 = vmul.f32 %v827, %v844
        %v856 = vmul.f32 %v829, %v844
        %v857 = vmul.f32 %v831, %v844
        %v858 = vmul.f32 %v833, %v844
        %v859 = vmul.f32 %v835, %v844
        %v860 = vmul.f32 %v837, %v844
        %v861 = vmul.f32 %v788, %v788
        %v862 = vmul.f32 %v789, %v789
        %v863 = vmul.f32 %v790, %v790
        %v864 = vmul.f32 %v791, %v791
        %v865 = vmul.f32 %v792, %v792
        %v866 = vmul.f32 %v793, %v793
        %v867 = vmul.f32 %v794, %v794
        %v868 = vmul.f32 %v795, %v795
        %v869 = vmul.f32 %v796, %v796
        %v870 = vmul.f32 %v797, %v797
        %v871 = vmul.f32 %v798, %v798
        %v872 = vmul.f32 %v799, %v799
        %v873 = vmul.f32 %v800, %v800
        %v874 = vmul.f32 %v801, %v801
        %v875 = vmul.f32 %v802, %v802
        %v876 = vmul.f32 %v803, %v803
        %877 = vadd.xlane.f32.xlu0 %v861
        %v878 = vpop.xlane.xlu0 %877
        %879 = vadd.xlane.f32.xlu0 %v862
        %v880 = vpop.xlane.xlu0 %879
        %881 = vadd.xlane.f32.xlu0 %v863
        %v882 = vpop.xlane.xlu0 %881
        %883 = vadd.xlane.f32.xlu0 %v864
        %v884 = vpop.xlane.xlu0 %883
        %885 = vadd.xlane.f32.xlu0 %v865
        %v886 = vpop.xlane.xlu0 %885
        %887 = vadd.xlane.f32.xlu0 %v866
        %v888 = vpop.xlane.xlu0 %887
        %889 = vadd.xlane.f32.xlu0 %v867
        %v890 = vpop.xlane.xlu0 %889
        %891 = vadd.xlane.f32.xlu0 %v868
        %v892 = vpop.xlane.xlu0 %891
        %893 = vadd.xlane.f32.xlu0 %v869
        %v894 = vpop.xlane.xlu0 %893
        %895 = vadd.xlane.f32.xlu0 %v870
        %v896 = vpop.xlane.xlu0 %895
        %897 = vadd.xlane.f32.xlu0 %v871
        %v898 = vpop.xlane.xlu0 %897
        %899 = vadd.xlane.f32.xlu0 %v872
        %v900 = vpop.xlane.xlu0 %899
        %901 = vadd.xlane.f32.xlu0 %v873
        %v902 = vpop.xlane.xlu0 %901
        %903 = vadd.xlane.f32.xlu0 %v874
        %v904 = vpop.xlane.xlu0 %903
        %905 = vadd.xlane.f32.xlu0 %v875
        %v906 = vpop.xlane.xlu0 %905
        %907 = vadd.xlane.f32.xlu0 %v876
        %v908 = vpop.xlane.xlu0 %907
        %v909 = vmul.f32 %v878, %v844
        %v910 = vmul.f32 %v880, %v844
        %v911 = vmul.f32 %v882, %v844
        %v912 = vmul.f32 %v884, %v844
        %v913 = vmul.f32 %v886, %v844
        %v914 = vmul.f32 %v888, %v844
        %v915 = vmul.f32 %v890, %v844
        %v916 = vmul.f32 %v892, %v844
        %v917 = vmul.f32 %v894, %v844
        %v918 = vmul.f32 %v896, %v844
        %v919 = vmul.f32 %v898, %v844
        %v920 = vmul.f32 %v900, %v844
        %v921 = vmul.f32 %v902, %v844
        %v922 = vmul.f32 %v904, %v844
        %v923 = vmul.f32 %v906, %v844
        %v924 = vmul.f32 %v908, %v844
        %v925 = vmul.f32 %v845, %v845
        %v926 = vmul.f32 %v846, %v846
        %v927 = vmul.f32 %v847, %v847
        %v928 = vmul.f32 %v848, %v848
        %v929 = vmul.f32 %v849, %v849
        %v930 = vmul.f32 %v850, %v850
        %v931 = vmul.f32 %v851, %v851
        %v932 = vmul.f32 %v852, %v852
        %v933 = vmul.f32 %v853, %v853
        %v934 = vmul.f32 %v854, %v854
        %v935 = vmul.f32 %v855, %v855
        %v936 = vmul.f32 %v856, %v856
        %v937 = vmul.f32 %v857, %v857
        %v938 = vmul.f32 %v858, %v858
        %v939 = vmul.f32 %v859, %v859
        %v940 = vmul.f32 %v860, %v860
        %v941 = vsub.f32 %v909, %v925
        %v942 = vsub.f32 %v910, %v926
        %v943 = vsub.f32 %v911, %v927
        %v944 = vsub.f32 %v912, %v928
        %v945 = vsub.f32 %v913, %v929
        %v946 = vsub.f32 %v914, %v930
        %v947 = vsub.f32 %v915, %v931
        %v948 = vsub.f32 %v916, %v932
        %v949 = vsub.f32 %v917, %v933
        %v950 = vsub.f32 %v918, %v934
        %v951 = vsub.f32 %v919, %v935
        %v952 = vsub.f32 %v920, %v936
        %v953 = vsub.f32 %v921, %v937
        %v954 = vsub.f32 %v922, %v938
        %v955 = vsub.f32 %v923, %v939
        %v956 = vsub.f32 %v924, %v940
        %v957 = vsub.f32 %v788, %v845
        %v958 = vsub.f32 %v789, %v846
        %v959 = vsub.f32 %v790, %v847
        %v960 = vsub.f32 %v791, %v848
        %v961 = vsub.f32 %v792, %v849
        %v962 = vsub.f32 %v793, %v850
        %v963 = vsub.f32 %v794, %v851
        %v964 = vsub.f32 %v795, %v852
        %v965 = vsub.f32 %v796, %v853
        %v966 = vsub.f32 %v797, %v854
        %v967 = vsub.f32 %v798, %v855
        %v968 = vsub.f32 %v799, %v856
        %v969 = vsub.f32 %v800, %v857
        %v970 = vsub.f32 %v801, %v858
        %v971 = vsub.f32 %v802, %v859
        %v972 = vsub.f32 %v803, %v860
        %v973 = vadd.f32 %v941, 1e-05
        %v974 = vadd.f32 %v942, 1e-05
        %v975 = vadd.f32 %v943, 1e-05
        %v976 = vadd.f32 %v944, 1e-05
        %v977 = vadd.f32 %v945, 1e-05
        %v978 = vadd.f32 %v946, 1e-05
        %v979 = vadd.f32 %v947, 1e-05
        %v980 = vadd.f32 %v948, 1e-05
        %v981 = vadd.f32 %v949, 1e-05
        %v982 = vadd.f32 %v950, 1e-05
        %v983 = vadd.f32 %v951, 1e-05
        %v984 = vadd.f32 %v952, 1e-05
        %v985 = vadd.f32 %v953, 1e-05
        %v986 = vadd.f32 %v954, 1e-05
        %v987 = vadd.f32 %v955, 1e-05
        %v988 = vadd.f32 %v956, 1e-05
        %v989 = vrsqrt.pop %v973
        %v990 = vmul.f32 %v989, %v973
        %v991 = vmul.f32 %v990, %v989
        %v992 = vmul.f32 0.5, %v991
        %v993 = vsub.f32 1.5, %v992
        %v994 = vmul.f32 %v989, %v993
        %vm995 = vweird.f32 %v973
        %vm996 = vweird.f32 %v989
        %vm997 = vmor %vm995, %vm996
        %v998 = vsel %vm997, %v989, %v994
        %v999 = vrsqrt.pop %v974
        %v1000 = vmul.f32 %v999, %v974
        %v1001 = vmul.f32 %v1000, %v999
        %v1002 = vmul.f32 0.5, %v1001
        %v1003 = vsub.f32 1.5, %v1002
        %v1004 = vmul.f32 %v999, %v1003
        %vm1005 = vweird.f32 %v974
        %vm1006 = vweird.f32 %v999
        %vm1007 = vmor %vm1005, %vm1006
        %v1008 = vsel %vm1007, %v999, %v1004
        %v1009 = vrsqrt.pop %v975
        %v1010 = vmul.f32 %v1009, %v975
        %v1011 = vmul.f32 %v1010, %v1009
        %v1012 = vmul.f32 0.5, %v1011
        %v1013 = vsub.f32 1.5, %v1012
        %v1014 = vmul.f32 %v1009, %v1013
        %vm1015 = vweird.f32 %v975
        %vm1016 = vweird.f32 %v1009
        %vm1017 = vmor %vm1015, %vm1016
        %v1018 = vsel %vm1017, %v1009, %v1014
        %v1019 = vrsqrt.pop %v976
        %v1020 = vmul.f32 %v1019, %v976
        %v1021 = vmul.f32 %v1020, %v1019
        %v1022 = vmul.f32 0.5, %v1021
        %v1023 = vsub.f32 1.5, %v1022
        %v1024 = vmul.f32 %v1019, %v1023
        %vm1025 = vweird.f32 %v976
        %vm1026 = vweird.f32 %v1019
        %vm1027 = vmor %vm1025, %vm1026
        %v1028 = vsel %vm1027, %v1019, %v1024
        %v1029 = vrsqrt.pop %v977
        %v1030 = vmul.f32 %v1029, %v977
        %v1031 = vmul.f32 %v1030, %v1029
        %v1032 = vmul.f32 0.5, %v1031
        %v1033 = vsub.f32 1.5, %v1032
        %v1034 = vmul.f32 %v1029, %v1033
        %vm1035 = vweird.f32 %v977
        %vm1036 = vweird.f32 %v1029
        %vm1037 = vmor %vm1035, %vm1036
        %v1038 = vsel %vm1037, %v1029, %v1034
        %v1039 = vrsqrt.pop %v978
        %v1040 = vmul.f32 %v1039, %v978
        %v1041 = vmul.f32 %v1040, %v1039
        %v1042 = vmul.f32 0.5, %v1041
        %v1043 = vsub.f32 1.5, %v1042
        %v1044 = vmul.f32 %v1039, %v1043
        %vm1045 = vweird.f32 %v978
        %vm1046 = vweird.f32 %v1039
        %vm1047 = vmor %vm1045, %vm1046
        %v1048 = vsel %vm1047, %v1039, %v1044
        %v1049 = vrsqrt.pop %v979
        %v1050 = vmul.f32 %v1049, %v979
        %v1051 = vmul.f32 %v1050, %v1049
        %v1052 = vmul.f32 0.5, %v1051
        %v1053 = vsub.f32 1.5, %v1052
        %v1054 = vmul.f32 %v1049, %v1053
        %vm1055 = vweird.f32 %v979
        %vm1056 = vweird.f32 %v1049
        %vm1057 = vmor %vm1055, %vm1056
        %v1058 = vsel %vm1057, %v1049, %v1054
        %v1059 = vrsqrt.pop %v980
        %v1060 = vmul.f32 %v1059, %v980
        %v1061 = vmul.f32 %v1060, %v1059
        %v1062 = vmul.f32 0.5, %v1061
        %v1063 = vsub.f32 1.5, %v1062
        %v1064 = vmul.f32 %v1059, %v1063
        %vm1065 = vweird.f32 %v980
        %vm1066 = vweird.f32 %v1059
        %vm1067 = vmor %vm1065, %vm1066
        %v1068 = vsel %vm1067, %v1059, %v1064
        %v1069 = vrsqrt.pop %v981
        %v1070 = vmul.f32 %v1069, %v981
        %v1071 = vmul.f32 %v1070, %v1069
        %v1072 = vmul.f32 0.5, %v1071
        %v1073 = vsub.f32 1.5, %v1072
        %v1074 = vmul.f32 %v1069, %v1073
        %vm1075 = vweird.f32 %v981
        %vm1076 = vweird.f32 %v1069
        %vm1077 = vmor %vm1075, %vm1076
        %v1078 = vsel %vm1077, %v1069, %v1074
        %v1079 = vrsqrt.pop %v982
        %v1080 = vmul.f32 %v1079, %v982
        %v1081 = vmul.f32 %v1080, %v1079
        %v1082 = vmul.f32 0.5, %v1081
        %v1083 = vsub.f32 1.5, %v1082
        %v1084 = vmul.f32 %v1079, %v1083
        %vm1085 = vweird.f32 %v982
        %vm1086 = vweird.f32 %v1079
        %vm1087 = vmor %vm1085, %vm1086
        %v1088 = vsel %vm1087, %v1079, %v1084
        %v1089 = vrsqrt.pop %v983
        %v1090 = vmul.f32 %v1089, %v983
        %v1091 = vmul.f32 %v1090, %v1089
        %v1092 = vmul.f32 0.5, %v1091
        %v1093 = vsub.f32 1.5, %v1092
        %v1094 = vmul.f32 %v1089, %v1093
        %vm1095 = vweird.f32 %v983
        %vm1096 = vweird.f32 %v1089
        %vm1097 = vmor %vm1095, %vm1096
        %v1098 = vsel %vm1097, %v1089, %v1094
        %v1099 = vrsqrt.pop %v984
        %v1100 = vmul.f32 %v1099, %v984
        %v1101 = vmul.f32 %v1100, %v1099
        %v1102 = vmul.f32 0.5, %v1101
        %v1103 = vsub.f32 1.5, %v1102
        %v1104 = vmul.f32 %v1099, %v1103
        %vm1105 = vweird.f32 %v984
        %vm1106 = vweird.f32 %v1099
        %vm1107 = vmor %vm1105, %vm1106
        %v1108 = vsel %vm1107, %v1099, %v1104
        %v1109 = vrsqrt.pop %v985
        %v1110 = vmul.f32 %v1109, %v985
        %v1111 = vmul.f32 %v1110, %v1109
        %v1112 = vmul.f32 0.5, %v1111
        %v1113 = vsub.f32 1.5, %v1112
        %v1114 = vmul.f32 %v1109, %v1113
        %vm1115 = vweird.f32 %v985
        %vm1116 = vweird.f32 %v1109
        %vm1117 = vmor %vm1115, %vm1116
        %v1118 = vsel %vm1117, %v1109, %v1114
        %v1119 = vrsqrt.pop %v986
        %v1120 = vmul.f32 %v1119, %v986
        %v1121 = vmul.f32 %v1120, %v1119
        %v1122 = vmul.f32 0.5, %v1121
        %v1123 = vsub.f32 1.5, %v1122
        %v1124 = vmul.f32 %v1119, %v1123
        %vm1125 = vweird.f32 %v986
        %vm1126 = vweird.f32 %v1119
        %vm1127 = vmor %vm1125, %vm1126
        %v1128 = vsel %vm1127, %v1119, %v1124
        %v1129 = vrsqrt.pop %v987
        %v1130 = vmul.f32 %v1129, %v987
        %v1131 = vmul.f32 %v1130, %v1129
        %v1132 = vmul.f32 0.5, %v1131
        %v1133 = vsub.f32 1.5, %v1132
        %v1134 = vmul.f32 %v1129, %v1133
        %vm1135 = vweird.f32 %v987
        %vm1136 = vweird.f32 %v1129
        %vm1137 = vmor %vm1135, %vm1136
        %v1138 = vsel %vm1137, %v1129, %v1134
        %v1139 = vrsqrt.pop %v988
        %v1140 = vmul.f32 %v1139, %v988
        %v1141 = vmul.f32 %v1140, %v1139
        %v1142 = vmul.f32 0.5, %v1141
        %v1143 = vsub.f32 1.5, %v1142
        %v1144 = vmul.f32 %v1139, %v1143
        %vm1145 = vweird.f32 %v988
        %vm1146 = vweird.f32 %v1139
        %vm1147 = vmor %vm1145, %vm1146
        %v1148 = vsel %vm1147, %v1139, %v1144
        %v1149 = vmul.f32 %v957, %v998
        %v1150 = vmul.f32 %v958, %v1008
        %v1151 = vmul.f32 %v959, %v1018
        %v1152 = vmul.f32 %v960, %v1028
        %v1153 = vmul.f32 %v961, %v1038
        %v1154 = vmul.f32 %v962, %v1048
        %v1155 = vmul.f32 %v963, %v1058
        %v1156 = vmul.f32 %v964, %v1068
        %v1157 = vmul.f32 %v965, %v1078
        %v1158 = vmul.f32 %v966, %v1088
        %v1159 = vmul.f32 %v967, %v1098
        %v1160 = vmul.f32 %v968, %v1108
        %v1161 = vmul.f32 %v969, %v1118
        %v1162 = vmul.f32 %v970, %v1128
        %v1163 = vmul.f32 %v971, %v1138
        %v1164 = vmul.f32 %v972, %v1148
        %v1166 = vperm.slane %v804, 0
        %v1168 = vmul.f32 %v1149, %v1166
        %v1169 = vmul.f32 %v1150, %v1166
        %v1170 = vmul.f32 %v1151, %v1166
        %v1171 = vmul.f32 %v1152, %v1166
        %v1172 = vmul.f32 %v1153, %v1166
        %v1173 = vmul.f32 %v1154, %v1166
        %v1174 = vmul.f32 %v1155, %v1166
        %v1175 = vmul.f32 %v1156, %v1166
        %v1176 = vmul.f32 %v1157, %v1166
        %v1177 = vmul.f32 %v1158, %v1166
        %v1178 = vmul.f32 %v1159, %v1166
        %v1179 = vmul.f32 %v1160, %v1166
        %v1180 = vmul.f32 %v1161, %v1166
        %v1181 = vmul.f32 %v1162, %v1166
        %v1182 = vmul.f32 %v1163, %v1166
        %v1183 = vmul.f32 %v1164, %v1166
        %v1185 = vperm.slane %v805, 0
        %v1187 = vadd.f32 %v1168, %v1185
        %v1188 = vadd.f32 %v1169, %v1185
        %v1189 = vadd.f32 %v1170, %v1185
        %v1190 = vadd.f32 %v1171, %v1185
        %v1191 = vadd.f32 %v1172, %v1185
        %v1192 = vadd.f32 %v1173, %v1185
        %v1193 = vadd.f32 %v1174, %v1185
        %v1194 = vadd.f32 %v1175, %v1185
        %v1195 = vadd.f32 %v1176, %v1185
        %v1196 = vadd.f32 %v1177, %v1185
        %v1197 = vadd.f32 %v1178, %v1185
        %v1198 = vadd.f32 %v1179, %v1185
        %v1199 = vadd.f32 %v1180, %v1185
        %v1200 = vadd.f32 %v1181, %v1185
        %v1201 = vadd.f32 %v1182, %v1185
        %v1202 = vadd.f32 %v1183, %v1185
        %v1203 = vpack.c.bf16 %v1188, %v1187
        %v1204 = vpack.c.bf16 %v1190, %v1189
        %v1205 = vpack.c.bf16 %v1192, %v1191
        %v1206 = vpack.c.bf16 %v1194, %v1193
        %v1207 = vpack.c.bf16 %v1196, %v1195
        %v1208 = vpack.c.bf16 %v1198, %v1197
        %v1209 = vpack.c.bf16 %v1200, %v1199
        %v1210 = vpack.c.bf16 %v1202, %v1201
        %v1211 = vld [vmem:[%s617] sm:$0xf]
        %v1212 = vld [vmem:[%s617 + $0x4] sm:$0xf]
        %v1213 = vld [vmem:[%s617 + $0x8] sm:$0xf]
        %v1214 = vld [vmem:[%s617 + $0xc] sm:$0xf]
        %v1215 = vld [vmem:[%s617 + $0x10] sm:$0xf]
        %v1216 = vld [vmem:[%s617 + $0x14] sm:$0xf]
        %v1217 = vld [vmem:[%s617 + $0x18] sm:$0xf]
        %v1218 = vld [vmem:[%s617 + $0x1c] sm:$0xf]
        %v1219 = vld [vmem:[%s617 + $0x20] sm:$0xf]
        %v1220 = vld [vmem:[%s617 + $0x24] sm:$0xf]
        %v1221 = vld [vmem:[%s617 + $0x28] sm:$0xf]
        %v1222 = vld [vmem:[%s617 + $0x2c] sm:$0xf]
        %v1223 = vld [vmem:[%s617 + $0x30] sm:$0xf]
        %v1224 = vld [vmem:[%s617 + $0x34] sm:$0xf]
        %v1225 = vld [vmem:[%s617 + $0x38] sm:$0xf]
        %v1226 = vld [vmem:[%s617 + $0x3c] sm:$0xf]
        %v1227 = vld [vmem:[%s598] sm:$0xf]
        %v1228 = vld [vmem:[%s598 + $0x4] sm:$0xf]
        %v1229 = vld [vmem:[%s598 + $0x8] sm:$0xf]
        %v1230 = vld [vmem:[%s598 + $0xc] sm:$0xf]
        %v1231 = vld [vmem:[%s598 + $0x10] sm:$0xf]
        %v1232 = vld [vmem:[%s598 + $0x14] sm:$0xf]
        %v1233 = vld [vmem:[%s598 + $0x18] sm:$0xf]
        %v1234 = vld [vmem:[%s598 + $0x1c] sm:$0xf]
        %v1235 = vld [vmem:[%s598 + $0x20] sm:$0xf]
        %v1236 = vld [vmem:[%s598 + $0x24] sm:$0xf]
        %v1237 = vld [vmem:[%s598 + $0x28] sm:$0xf]
        %v1238 = vld [vmem:[%s598 + $0x2c] sm:$0xf]
        %v1239 = vld [vmem:[%s598 + $0x30] sm:$0xf]
        %v1240 = vld [vmem:[%s598 + $0x34] sm:$0xf]
        %v1241 = vld [vmem:[%s598 + $0x38] sm:$0xf]
        %v1242 = vld [vmem:[%s598 + $0x3c] sm:$0xf]
        %v1243 = vunpack.c.l.bf16 %v1227
        %v1244 = vunpack.c.l.bf16 %v1228
        %v1245 = vunpack.c.l.bf16 %v1229
        %v1246 = vunpack.c.l.bf16 %v1230
        %v1247 = vunpack.c.l.bf16 %v1231
        %v1248 = vunpack.c.l.bf16 %v1232
        %v1249 = vunpack.c.l.bf16 %v1233
        %v1250 = vunpack.c.l.bf16 %v1234
        %v1251 = vunpack.c.l.bf16 %v1235
        %v1252 = vunpack.c.l.bf16 %v1236
        %v1253 = vunpack.c.l.bf16 %v1237
        %v1254 = vunpack.c.l.bf16 %v1238
        %v1255 = vunpack.c.l.bf16 %v1239
        %v1256 = vunpack.c.l.bf16 %v1240
        %v1257 = vunpack.c.l.bf16 %v1241
        %v1258 = vunpack.c.l.bf16 %v1242
        %v1275 = vunpack.c.l.b16 %v1211
        %v1276 = vunpack.c.l.b16 %v1212
        %v1277 = vunpack.c.l.b16 %v1213
        %v1278 = vunpack.c.l.b16 %v1214
        %v1279 = vunpack.c.l.b16 %v1215
        %v1280 = vunpack.c.l.b16 %v1216
        %v1281 = vunpack.c.l.b16 %v1217
        %v1282 = vunpack.c.l.b16 %v1218
        %v1283 = vunpack.c.l.b16 %v1219
        %v1284 = vunpack.c.l.b16 %v1220
        %v1285 = vunpack.c.l.b16 %v1221
        %v1286 = vunpack.c.l.b16 %v1222
        %v1287 = vunpack.c.l.b16 %v1223
        %v1288 = vunpack.c.l.b16 %v1224
        %v1289 = vunpack.c.l.b16 %v1225
        %v1290 = vunpack.c.l.b16 %v1226
        %v1291 = vpack.c.b16 %v1276, %v1275
        %v1292 = vpack.c.b16 %v1278, %v1277
        %v1293 = vpack.c.b16 %v1280, %v1279
        %v1294 = vpack.c.b16 %v1282, %v1281
        %v1295 = vpack.c.b16 %v1284, %v1283
        %v1296 = vpack.c.b16 %v1286, %v1285
        %v1297 = vpack.c.b16 %v1288, %v1287
        %v1298 = vpack.c.b16 %v1290, %v1289
        %1307 = vmatpush.bf16.msra.mxu0 %v1298
        %1308 = vmatpush.bf16.msra.mxu0 %v1297
        %1309 = vmatpush.bf16.msra.mxu0 %v1296
        %1310 = vmatpush.bf16.msra.mxu0 %v1295
        %1311 = vmatpush.bf16.msra.mxu0 %v1294
        %1312 = vmatpush.bf16.msra.mxu0 %v1293
        %1313 = vmatpush.bf16.msra.mxu0 %v1292
        %1314 = vmatpush.bf16.msra.mxu0 %v1291
        %1315 = vmatmul.bf16.gmra.mxu0 %v1203
        %v1316 = vpop.f32.mrf.mxu0
        %v1317 = vadd.f32 %v1243, %v1316
        %v1318 = vpop.f32.mrf.mxu0
        %v1319 = vadd.f32 %v1244, %v1318
        %1320 = vmatmul.bf16.gmra.mxu0 %v1204
        %v1321 = vpop.f32.mrf.mxu0
        %v1322 = vadd.f32 %v1245, %v1321
        %v1323 = vpop.f32.mrf.mxu0
        %v1324 = vadd.f32 %v1246, %v1323
        %1325 = vmatmul.bf16.gmra.mxu0 %v1205
        %v1326 = vpop.f32.mrf.mxu0
        %v1327 = vadd.f32 %v1247, %v1326
        %v1328 = vpop.f32.mrf.mxu0
        %v1329 = vadd.f32 %v1248, %v1328
        %1330 = vmatmul.bf16.gmra.mxu0 %v1206
        %v1331 = vpop.f32.mrf.mxu0
        %v1332 = vadd.f32 %v1249, %v1331
        %v1333 = vpop.f32.mrf.mxu0
        %v1334 = vadd.f32 %v1250, %v1333
        %1335 = vmatmul.bf16.gmra.mxu0 %v1207
        %v1336 = vpop.f32.mrf.mxu0
        %v1337 = vadd.f32 %v1251, %v1336
        %v1338 = vpop.f32.mrf.mxu0
        %v1339 = vadd.f32 %v1252, %v1338
        %1340 = vmatmul.bf16.gmra.mxu0 %v1208
        %v1341 = vpop.f32.mrf.mxu0
        %v1342 = vadd.f32 %v1253, %v1341
        %v1343 = vpop.f32.mrf.mxu0
        %v1344 = vadd.f32 %v1254, %v1343
        %1345 = vmatmul.bf16.gmra.mxu0 %v1209
        %v1346 = vpop.f32.mrf.mxu0
        %v1347 = vadd.f32 %v1255, %v1346
        %v1348 = vpop.f32.mrf.mxu0
        %v1349 = vadd.f32 %v1256, %v1348
        %1350 = vmatmul.bf16.gmra.mxu0 %v1210
        %v1351 = vpop.f32.mrf.mxu0
        %v1352 = vadd.f32 %v1257, %v1351
        %v1353 = vpop.f32.mrf.mxu0
        %v1354 = vadd.f32 %v1258, %v1353
        %1355 = vdwg.mxu0
        %v1356 = vmul.f32 %v1187, %v1317
        %v1357 = vmul.f32 %v1188, %v1319
        %v1358 = vmul.f32 %v1189, %v1322
        %v1359 = vmul.f32 %v1190, %v1324
        %v1360 = vmul.f32 %v1191, %v1327
        %v1361 = vmul.f32 %v1192, %v1329
        %v1362 = vmul.f32 %v1193, %v1332
        %v1363 = vmul.f32 %v1194, %v1334
        %v1364 = vmul.f32 %v1195, %v1337
        %v1365 = vmul.f32 %v1196, %v1339
        %v1366 = vmul.f32 %v1197, %v1342
        %v1367 = vmul.f32 %v1198, %v1344
        %v1368 = vmul.f32 %v1199, %v1347
        %v1369 = vmul.f32 %v1200, %v1349
        %v1370 = vmul.f32 %v1201, %v1352
        %v1371 = vmul.f32 %v1202, %v1354
        %v1372 = vadd.f32 %v1356, %v788
        %v1373 = vadd.f32 %v1357, %v789
        %v1374 = vadd.f32 %v1358, %v790
        %v1375 = vadd.f32 %v1359, %v791
        %v1376 = vadd.f32 %v1360, %v792
        %v1377 = vadd.f32 %v1361, %v793
        %v1378 = vadd.f32 %v1362, %v794
        %v1379 = vadd.f32 %v1363, %v795
        %v1380 = vadd.f32 %v1364, %v796
        %v1381 = vadd.f32 %v1365, %v797
        %v1382 = vadd.f32 %v1366, %v798
        %v1383 = vadd.f32 %v1367, %v799
        %v1384 = vadd.f32 %v1368, %v800
        %v1385 = vadd.f32 %v1369, %v801
        %v1386 = vadd.f32 %v1370, %v802
        %v1387 = vadd.f32 %v1371, %v803
        %v1388 = vld [vmem:[%s626] sm:$0x1]
        %v1389 = vld [vmem:[%s635] sm:$0x1]
        %1390 = vadd.xlane.f32.xlu0 %v1372
        %v1391 = vpop.xlane.xlu0 %1390
        %1392 = vadd.xlane.f32.xlu0 %v1373
        %v1393 = vpop.xlane.xlu0 %1392
        %1394 = vadd.xlane.f32.xlu0 %v1374
        %v1395 = vpop.xlane.xlu0 %1394
        %1396 = vadd.xlane.f32.xlu0 %v1375
        %v1397 = vpop.xlane.xlu0 %1396
        %1398 = vadd.xlane.f32.xlu0 %v1376
        %v1399 = vpop.xlane.xlu0 %1398
        %1400 = vadd.xlane.f32.xlu0 %v1377
        %v1401 = vpop.xlane.xlu0 %1400
        %1402 = vadd.xlane.f32.xlu0 %v1378
        %v1403 = vpop.xlane.xlu0 %1402
        %1404 = vadd.xlane.f32.xlu0 %v1379
        %v1405 = vpop.xlane.xlu0 %1404
        %1406 = vadd.xlane.f32.xlu0 %v1380
        %v1407 = vpop.xlane.xlu0 %1406
        %1408 = vadd.xlane.f32.xlu0 %v1381
        %v1409 = vpop.xlane.xlu0 %1408
        %1410 = vadd.xlane.f32.xlu0 %v1382
        %v1411 = vpop.xlane.xlu0 %1410
        %1412 = vadd.xlane.f32.xlu0 %v1383
        %v1413 = vpop.xlane.xlu0 %1412
        %1414 = vadd.xlane.f32.xlu0 %v1384
        %v1415 = vpop.xlane.xlu0 %1414
        %1416 = vadd.xlane.f32.xlu0 %v1385
        %v1417 = vpop.xlane.xlu0 %1416
        %1418 = vadd.xlane.f32.xlu0 %v1386
        %v1419 = vpop.xlane.xlu0 %1418
        %1420 = vadd.xlane.f32.xlu0 %v1387
        %v1421 = vpop.xlane.xlu0 %1420
        %v1422 = vmul.f32 %v1391, %v844
        %v1423 = vmul.f32 %v1393, %v844
        %v1424 = vmul.f32 %v1395, %v844
        %v1425 = vmul.f32 %v1397, %v844
        %v1426 = vmul.f32 %v1399, %v844
        %v1427 = vmul.f32 %v1401, %v844
        %v1428 = vmul.f32 %v1403, %v844
        %v1429 = vmul.f32 %v1405, %v844
        %v1430 = vmul.f32 %v1407, %v844
        %v1431 = vmul.f32 %v1409, %v844
        %v1432 = vmul.f32 %v1411, %v844
        %v1433 = vmul.f32 %v1413, %v844
        %v1434 = vmul.f32 %v1415, %v844
        %v1435 = vmul.f32 %v1417, %v844
        %v1436 = vmul.f32 %v1419, %v844
        %v1437 = vmul.f32 %v1421, %v844
        %v1438 = vmul.f32 %v1372, %v1372
        %v1439 = vmul.f32 %v1373, %v1373
        %v1440 = vmul.f32 %v1374, %v1374
        %v1441 = vmul.f32 %v1375, %v1375
        %v1442 = vmul.f32 %v1376, %v1376
        %v1443 = vmul.f32 %v1377, %v1377
        %v1444 = vmul.f32 %v1378, %v1378
        %v1445 = vmul.f32 %v1379, %v1379
        %v1446 = vmul.f32 %v1380, %v1380
        %v1447 = vmul.f32 %v1381, %v1381
        %v1448 = vmul.f32 %v1382, %v1382
        %v1449 = vmul.f32 %v1383, %v1383
        %v1450 = vmul.f32 %v1384, %v1384
        %v1451 = vmul.f32 %v1385, %v1385
        %v1452 = vmul.f32 %v1386, %v1386
        %v1453 = vmul.f32 %v1387, %v1387
        %1454 = vadd.xlane.f32.xlu0 %v1438
        %v1455 = vpop.xlane.xlu0 %1454
        %1456 = vadd.xlane.f32.xlu0 %v1439
        %v1457 = vpop.xlane.xlu0 %1456
        %1458 = vadd.xlane.f32.xlu0 %v1440
        %v1459 = vpop.xlane.xlu0 %1458
        %1460 = vadd.xlane.f32.xlu0 %v1441
        %v1461 = vpop.xlane.xlu0 %1460
        %1462 = vadd.xlane.f32.xlu0 %v1442
        %v1463 = vpop.xlane.xlu0 %1462
        %1464 = vadd.xlane.f32.xlu0 %v1443
        %v1465 = vpop.xlane.xlu0 %1464
        %1466 = vadd.xlane.f32.xlu0 %v1444
        %v1467 = vpop.xlane.xlu0 %1466
        %1468 = vadd.xlane.f32.xlu0 %v1445
        %v1469 = vpop.xlane.xlu0 %1468
        %1470 = vadd.xlane.f32.xlu0 %v1446
        %v1471 = vpop.xlane.xlu0 %1470
        %1472 = vadd.xlane.f32.xlu0 %v1447
        %v1473 = vpop.xlane.xlu0 %1472
        %1474 = vadd.xlane.f32.xlu0 %v1448
        %v1475 = vpop.xlane.xlu0 %1474
        %1476 = vadd.xlane.f32.xlu0 %v1449
        %v1477 = vpop.xlane.xlu0 %1476
        %1478 = vadd.xlane.f32.xlu0 %v1450
        %v1479 = vpop.xlane.xlu0 %1478
        %1480 = vadd.xlane.f32.xlu0 %v1451
        %v1481 = vpop.xlane.xlu0 %1480
        %1482 = vadd.xlane.f32.xlu0 %v1452
        %v1483 = vpop.xlane.xlu0 %1482
        %1484 = vadd.xlane.f32.xlu0 %v1453
        %v1485 = vpop.xlane.xlu0 %1484
        %v1486 = vmul.f32 %v1455, %v844
        %v1487 = vmul.f32 %v1457, %v844
        %v1488 = vmul.f32 %v1459, %v844
        %v1489 = vmul.f32 %v1461, %v844
        %v1490 = vmul.f32 %v1463, %v844
        %v1491 = vmul.f32 %v1465, %v844
        %v1492 = vmul.f32 %v1467, %v844
        %v1493 = vmul.f32 %v1469, %v844
        %v1494 = vmul.f32 %v1471, %v844
        %v1495 = vmul.f32 %v1473, %v844
        %v1496 = vmul.f32 %v1475, %v844
        %v1497 = vmul.f32 %v1477, %v844
        %v1498 = vmul.f32 %v1479, %v844
        %v1499 = vmul.f32 %v1481, %v844
        %v1500 = vmul.f32 %v1483, %v844
        %v1501 = vmul.f32 %v1485, %v844
        %v1502 = vmul.f32 %v1422, %v1422
        %v1503 = vmul.f32 %v1423, %v1423
        %v1504 = vmul.f32 %v1424, %v1424
        %v1505 = vmul.f32 %v1425, %v1425
        %v1506 = vmul.f32 %v1426, %v1426
        %v1507 = vmul.f32 %v1427, %v1427
        %v1508 = vmul.f32 %v1428, %v1428
        %v1509 = vmul.f32 %v1429, %v1429
        %v1510 = vmul.f32 %v1430, %v1430
        %v1511 = vmul.f32 %v1431, %v1431
        %v1512 = vmul.f32 %v1432, %v1432
        %v1513 = vmul.f32 %v1433, %v1433
        %v1514 = vmul.f32 %v1434, %v1434
        %v1515 = vmul.f32 %v1435, %v1435
        %v1516 = vmul.f32 %v1436, %v1436
        %v1517 = vmul.f32 %v1437, %v1437
        %v1518 = vsub.f32 %v1486, %v1502
        %v1519 = vsub.f32 %v1487, %v1503
        %v1520 = vsub.f32 %v1488, %v1504
        %v1521 = vsub.f32 %v1489, %v1505
        %v1522 = vsub.f32 %v1490, %v1506
        %v1523 = vsub.f32 %v1491, %v1507
        %v1524 = vsub.f32 %v1492, %v1508
        %v1525 = vsub.f32 %v1493, %v1509
        %v1526 = vsub.f32 %v1494, %v1510
        %v1527 = vsub.f32 %v1495, %v1511
        %v1528 = vsub.f32 %v1496, %v1512
        %v1529 = vsub.f32 %v1497, %v1513
        %v1530 = vsub.f32 %v1498, %v1514
        %v1531 = vsub.f32 %v1499, %v1515
        %v1532 = vsub.f32 %v1500, %v1516
        %v1533 = vsub.f32 %v1501, %v1517
        %v1534 = vsub.f32 %v1372, %v1422
        %v1535 = vsub.f32 %v1373, %v1423
        %v1536 = vsub.f32 %v1374, %v1424
        %v1537 = vsub.f32 %v1375, %v1425
        %v1538 = vsub.f32 %v1376, %v1426
        %v1539 = vsub.f32 %v1377, %v1427
        %v1540 = vsub.f32 %v1378, %v1428
        %v1541 = vsub.f32 %v1379, %v1429
        %v1542 = vsub.f32 %v1380, %v1430
        %v1543 = vsub.f32 %v1381, %v1431
        %v1544 = vsub.f32 %v1382, %v1432
        %v1545 = vsub.f32 %v1383, %v1433
        %v1546 = vsub.f32 %v1384, %v1434
        %v1547 = vsub.f32 %v1385, %v1435
        %v1548 = vsub.f32 %v1386, %v1436
        %v1549 = vsub.f32 %v1387, %v1437
        %v1550 = vadd.f32 %v1518, 1e-05
        %v1551 = vadd.f32 %v1519, 1e-05
        %v1552 = vadd.f32 %v1520, 1e-05
        %v1553 = vadd.f32 %v1521, 1e-05
        %v1554 = vadd.f32 %v1522, 1e-05
        %v1555 = vadd.f32 %v1523, 1e-05
        %v1556 = vadd.f32 %v1524, 1e-05
        %v1557 = vadd.f32 %v1525, 1e-05
        %v1558 = vadd.f32 %v1526, 1e-05
        %v1559 = vadd.f32 %v1527, 1e-05
        %v1560 = vadd.f32 %v1528, 1e-05
        %v1561 = vadd.f32 %v1529, 1e-05
        %v1562 = vadd.f32 %v1530, 1e-05
        %v1563 = vadd.f32 %v1531, 1e-05
        %v1564 = vadd.f32 %v1532, 1e-05
        %v1565 = vadd.f32 %v1533, 1e-05
        %v1566 = vrsqrt.pop %v1550
        %v1567 = vmul.f32 %v1566, %v1550
        %v1568 = vmul.f32 %v1567, %v1566
        %v1569 = vmul.f32 0.5, %v1568
        %v1570 = vsub.f32 1.5, %v1569
        %v1571 = vmul.f32 %v1566, %v1570
        %vm1572 = vweird.f32 %v1550
        %vm1573 = vweird.f32 %v1566
        %vm1574 = vmor %vm1572, %vm1573
        %v1575 = vsel %vm1574, %v1566, %v1571
        %v1576 = vrsqrt.pop %v1551
        %v1577 = vmul.f32 %v1576, %v1551
        %v1578 = vmul.f32 %v1577, %v1576
        %v1579 = vmul.f32 0.5, %v1578
        %v1580 = vsub.f32 1.5, %v1579
        %v1581 = vmul.f32 %v1576, %v1580
        %vm1582 = vweird.f32 %v1551
        %vm1583 = vweird.f32 %v1576
        %vm1584 = vmor %vm1582, %vm1583
        %v1585 = vsel %vm1584, %v1576, %v1581
        %v1586 = vrsqrt.pop %v1552
        %v1587 = vmul.f32 %v1586, %v1552
        %v1588 = vmul.f32 %v1587, %v1586
        %v1589 = vmul.f32 0.5, %v1588
        %v1590 = vsub.f32 1.5, %v1589
        %v1591 = vmul.f32 %v1586, %v1590
        %vm1592 = vweird.f32 %v1552
        %vm1593 = vweird.f32 %v1586
        %vm1594 = vmor %vm1592, %vm1593
        %v1595 = vsel %vm1594, %v1586, %v1591
        %v1596 = vrsqrt.pop %v1553
        %v1597 = vmul.f32 %v1596, %v1553
        %v1598 = vmul.f32 %v1597, %v1596
        %v1599 = vmul.f32 0.5, %v1598
        %v1600 = vsub.f32 1.5, %v1599
        %v1601 = vmul.f32 %v1596, %v1600
        %vm1602 = vweird.f32 %v1553
        %vm1603 = vweird.f32 %v1596
        %vm1604 = vmor %vm1602, %vm1603
        %v1605 = vsel %vm1604, %v1596, %v1601
        %v1606 = vrsqrt.pop %v1554
        %v1607 = vmul.f32 %v1606, %v1554
        %v1608 = vmul.f32 %v1607, %v1606
        %v1609 = vmul.f32 0.5, %v1608
        %v1610 = vsub.f32 1.5, %v1609
        %v1611 = vmul.f32 %v1606, %v1610
        %vm1612 = vweird.f32 %v1554
        %vm1613 = vweird.f32 %v1606
        %vm1614 = vmor %vm1612, %vm1613
        %v1615 = vsel %vm1614, %v1606, %v1611
        %v1616 = vrsqrt.pop %v1555
        %v1617 = vmul.f32 %v1616, %v1555
        %v1618 = vmul.f32 %v1617, %v1616
        %v1619 = vmul.f32 0.5, %v1618
        %v1620 = vsub.f32 1.5, %v1619
        %v1621 = vmul.f32 %v1616, %v1620
        %vm1622 = vweird.f32 %v1555
        %vm1623 = vweird.f32 %v1616
        %vm1624 = vmor %vm1622, %vm1623
        %v1625 = vsel %vm1624, %v1616, %v1621
        %v1626 = vrsqrt.pop %v1556
        %v1627 = vmul.f32 %v1626, %v1556
        %v1628 = vmul.f32 %v1627, %v1626
        %v1629 = vmul.f32 0.5, %v1628
        %v1630 = vsub.f32 1.5, %v1629
        %v1631 = vmul.f32 %v1626, %v1630
        %vm1632 = vweird.f32 %v1556
        %vm1633 = vweird.f32 %v1626
        %vm1634 = vmor %vm1632, %vm1633
        %v1635 = vsel %vm1634, %v1626, %v1631
        %v1636 = vrsqrt.pop %v1557
        %v1637 = vmul.f32 %v1636, %v1557
        %v1638 = vmul.f32 %v1637, %v1636
        %v1639 = vmul.f32 0.5, %v1638
        %v1640 = vsub.f32 1.5, %v1639
        %v1641 = vmul.f32 %v1636, %v1640
        %vm1642 = vweird.f32 %v1557
        %vm1643 = vweird.f32 %v1636
        %vm1644 = vmor %vm1642, %vm1643
        %v1645 = vsel %vm1644, %v1636, %v1641
        %v1646 = vrsqrt.pop %v1558
        %v1647 = vmul.f32 %v1646, %v1558
        %v1648 = vmul.f32 %v1647, %v1646
        %v1649 = vmul.f32 0.5, %v1648
        %v1650 = vsub.f32 1.5, %v1649
        %v1651 = vmul.f32 %v1646, %v1650
        %vm1652 = vweird.f32 %v1558
        %vm1653 = vweird.f32 %v1646
        %vm1654 = vmor %vm1652, %vm1653
        %v1655 = vsel %vm1654, %v1646, %v1651
        %v1656 = vrsqrt.pop %v1559
        %v1657 = vmul.f32 %v1656, %v1559
        %v1658 = vmul.f32 %v1657, %v1656
        %v1659 = vmul.f32 0.5, %v1658
        %v1660 = vsub.f32 1.5, %v1659
        %v1661 = vmul.f32 %v1656, %v1660
        %vm1662 = vweird.f32 %v1559
        %vm1663 = vweird.f32 %v1656
        %vm1664 = vmor %vm1662, %vm1663
        %v1665 = vsel %vm1664, %v1656, %v1661
        %v1666 = vrsqrt.pop %v1560
        %v1667 = vmul.f32 %v1666, %v1560
        %v1668 = vmul.f32 %v1667, %v1666
        %v1669 = vmul.f32 0.5, %v1668
        %v1670 = vsub.f32 1.5, %v1669
        %v1671 = vmul.f32 %v1666, %v1670
        %vm1672 = vweird.f32 %v1560
        %vm1673 = vweird.f32 %v1666
        %vm1674 = vmor %vm1672, %vm1673
        %v1675 = vsel %vm1674, %v1666, %v1671
        %v1676 = vrsqrt.pop %v1561
        %v1677 = vmul.f32 %v1676, %v1561
        %v1678 = vmul.f32 %v1677, %v1676
        %v1679 = vmul.f32 0.5, %v1678
        %v1680 = vsub.f32 1.5, %v1679
        %v1681 = vmul.f32 %v1676, %v1680
        %vm1682 = vweird.f32 %v1561
        %vm1683 = vweird.f32 %v1676
        %vm1684 = vmor %vm1682, %vm1683
        %v1685 = vsel %vm1684, %v1676, %v1681
        %v1686 = vrsqrt.pop %v1562
        %v1687 = vmul.f32 %v1686, %v1562
        %v1688 = vmul.f32 %v1687, %v1686
        %v1689 = vmul.f32 0.5, %v1688
        %v1690 = vsub.f32 1.5, %v1689
        %v1691 = vmul.f32 %v1686, %v1690
        %vm1692 = vweird.f32 %v1562
        %vm1693 = vweird.f32 %v1686
        %vm1694 = vmor %vm1692, %vm1693
        %v1695 = vsel %vm1694, %v1686, %v1691
        %v1696 = vrsqrt.pop %v1563
        %v1697 = vmul.f32 %v1696, %v1563
        %v1698 = vmul.f32 %v1697, %v1696
        %v1699 = vmul.f32 0.5, %v1698
        %v1700 = vsub.f32 1.5, %v1699
        %v1701 = vmul.f32 %v1696, %v1700
        %vm1702 = vweird.f32 %v1563
        %vm1703 = vweird.f32 %v1696
        %vm1704 = vmor %vm1702, %vm1703
        %v1705 = vsel %vm1704, %v1696, %v1701
        %v1706 = vrsqrt.pop %v1564
        %v1707 = vmul.f32 %v1706, %v1564
        %v1708 = vmul.f32 %v1707, %v1706
        %v1709 = vmul.f32 0.5, %v1708
        %v1710 = vsub.f32 1.5, %v1709
        %v1711 = vmul.f32 %v1706, %v1710
        %vm1712 = vweird.f32 %v1564
        %vm1713 = vweird.f32 %v1706
        %vm1714 = vmor %vm1712, %vm1713
        %v1715 = vsel %vm1714, %v1706, %v1711
        %v1716 = vrsqrt.pop %v1565
        %v1717 = vmul.f32 %v1716, %v1565
        %v1718 = vmul.f32 %v1717, %v1716
        %v1719 = vmul.f32 0.5, %v1718
        %v1720 = vsub.f32 1.5, %v1719
        %v1721 = vmul.f32 %v1716, %v1720
        %vm1722 = vweird.f32 %v1565
        %vm1723 = vweird.f32 %v1716
        %vm1724 = vmor %vm1722, %vm1723
        %v1725 = vsel %vm1724, %v1716, %v1721
        %v1726 = vmul.f32 %v1534, %v1575
        %v1727 = vmul.f32 %v1535, %v1585
        %v1728 = vmul.f32 %v1536, %v1595
        %v1729 = vmul.f32 %v1537, %v1605
        %v1730 = vmul.f32 %v1538, %v1615
        %v1731 = vmul.f32 %v1539, %v1625
        %v1732 = vmul.f32 %v1540, %v1635
        %v1733 = vmul.f32 %v1541, %v1645
        %v1734 = vmul.f32 %v1542, %v1655
        %v1735 = vmul.f32 %v1543, %v1665
        %v1736 = vmul.f32 %v1544, %v1675
        %v1737 = vmul.f32 %v1545, %v1685
        %v1738 = vmul.f32 %v1546, %v1695
        %v1739 = vmul.f32 %v1547, %v1705
        %v1740 = vmul.f32 %v1548, %v1715
        %v1741 = vmul.f32 %v1549, %v1725
        %v1743 = vperm.slane %v1388, 0
        %v1745 = vmul.f32 %v1726, %v1743
        %v1746 = vmul.f32 %v1727, %v1743
        %v1747 = vmul.f32 %v1728, %v1743
        %v1748 = vmul.f32 %v1729, %v1743
        %v1749 = vmul.f32 %v1730, %v1743
        %v1750 = vmul.f32 %v1731, %v1743
        %v1751 = vmul.f32 %v1732, %v1743
        %v1752 = vmul.f32 %v1733, %v1743
        %v1753 = vmul.f32 %v1734, %v1743
        %v1754 = vmul.f32 %v1735, %v1743
        %v1755 = vmul.f32 %v1736, %v1743
        %v1756 = vmul.f32 %v1737, %v1743
        %v1757 = vmul.f32 %v1738, %v1743
        %v1758 = vmul.f32 %v1739, %v1743
        %v1759 = vmul.f32 %v1740, %v1743
        %v1760 = vmul.f32 %v1741, %v1743
        %v1762 = vperm.slane %v1389, 0
        %v1764 = vadd.f32 %v1745, %v1762
        %v1765 = vadd.f32 %v1746, %v1762
        %v1766 = vadd.f32 %v1747, %v1762
        %v1767 = vadd.f32 %v1748, %v1762
        %v1768 = vadd.f32 %v1749, %v1762
        %v1769 = vadd.f32 %v1750, %v1762
        %v1770 = vadd.f32 %v1751, %v1762
        %v1771 = vadd.f32 %v1752, %v1762
        %v1772 = vadd.f32 %v1753, %v1762
        %v1773 = vadd.f32 %v1754, %v1762
        %v1774 = vadd.f32 %v1755, %v1762
        %v1775 = vadd.f32 %v1756, %v1762
        %v1776 = vadd.f32 %v1757, %v1762
        %v1777 = vadd.f32 %v1758, %v1762
        %v1778 = vadd.f32 %v1759, %v1762
        %v1779 = vadd.f32 %v1760, %v1762
        %v1780 = vpack.c.bf16 %v1765, %v1764
        %v1781 = vpack.c.bf16 %v1767, %v1766
        %v1782 = vpack.c.bf16 %v1769, %v1768
        %v1783 = vpack.c.bf16 %v1771, %v1770
        %v1784 = vpack.c.bf16 %v1773, %v1772
        %v1785 = vpack.c.bf16 %v1775, %v1774
        %v1786 = vpack.c.bf16 %v1777, %v1776
        %v1787 = vpack.c.bf16 %v1779, %v1778
        %v1788 = vld [vmem:[%s645] sm:$0xff]
        %v1789 = vld [vmem:[%s645 + $0x8] sm:$0xff]
        %v1790 = vld [vmem:[%s645 + $0x10] sm:$0xff]
        %v1791 = vld [vmem:[%s645 + $0x18] sm:$0xff]
        %v1792 = vld [vmem:[%s645 + $0x20] sm:$0xff]
        %v1793 = vld [vmem:[%s645 + $0x28] sm:$0xff]
        %v1794 = vld [vmem:[%s645 + $0x30] sm:$0xff]
        %v1795 = vld [vmem:[%s645 + $0x38] sm:$0xff]
        %v1796 = vld [vmem:[%s645 + $0x40] sm:$0xff]
        %v1797 = vld [vmem:[%s645 + $0x48] sm:$0xff]
        %v1798 = vld [vmem:[%s645 + $0x50] sm:$0xff]
        %v1799 = vld [vmem:[%s645 + $0x58] sm:$0xff]
        %v1800 = vld [vmem:[%s645 + $0x60] sm:$0xff]
        %v1801 = vld [vmem:[%s645 + $0x68] sm:$0xff]
        %v1802 = vld [vmem:[%s645 + $0x70] sm:$0xff]
        %v1803 = vld [vmem:[%s645 + $0x78] sm:$0xff]
        %v1804 = vld [vmem:[%s645 + $0x80] sm:$0xff]
        %v1805 = vld [vmem:[%s645 + $0x88] sm:$0xff]
        %v1806 = vld [vmem:[%s645 + $0x90] sm:$0xff]
        %v1807 = vld [vmem:[%s645 + $0x98] sm:$0xff]
        %v1808 = vld [vmem:[%s645 + $0xa0] sm:$0xff]
        %v1809 = vld [vmem:[%s645 + $0xa8] sm:$0xff]
        %v1810 = vld [vmem:[%s645 + $0xb0] sm:$0xff]
        %v1811 = vld [vmem:[%s645 + $0xb8] sm:$0xff]
        %v1812 = vld [vmem:[%s645 + $0xc0] sm:$0xff]
        %v1813 = vld [vmem:[%s645 + $0xc8] sm:$0xff]
        %v1814 = vld [vmem:[%s645 + $0xd0] sm:$0xff]
        %v1815 = vld [vmem:[%s645 + $0xd8] sm:$0xff]
        %v1816 = vld [vmem:[%s645 + $0xe0] sm:$0xff]
        %v1817 = vld [vmem:[%s645 + $0xe8] sm:$0xff]
        %v1818 = vld [vmem:[%s645 + $0xf0] sm:$0xff]
        %v1819 = vld [vmem:[%s645 + $0xf8] sm:$0xff]
        %v1820 = vld [vmem:[%s655] sm:$0xf]
        %v1822 = vperm.slane %v1820, 0
        %v1823 = vperm.slane %v1820, 1
        %v1824 = vperm.slane %v1820, 2
        %v1825 = vperm.slane %v1820, 3
        %v1862 = vunpack.c.l.b16 %v1788
        %v1863 = vunpack.c.h.b16 %v1788
        %v1864 = vunpack.c.l.b16 %v1789
        %v1865 = vunpack.c.h.b16 %v1789
        %v1866 = vunpack.c.l.b16 %v1790
        %v1867 = vunpack.c.h.b16 %v1790
        %v1868 = vunpack.c.l.b16 %v1791
        %v1869 = vunpack.c.h.b16 %v1791
        %v1870 = vunpack.c.l.b16 %v1792
        %v1871 = vunpack.c.h.b16 %v1792
        %v1872 = vunpack.c.l.b16 %v1793
        %v1873 = vunpack.c.h.b16 %v1793
        %v1874 = vunpack.c.l.b16 %v1794
        %v1875 = vunpack.c.h.b16 %v1794
        %v1876 = vunpack.c.l.b16 %v1795
        %v1877 = vunpack.c.h.b16 %v1795
        %v1878 = vunpack.c.l.b16 %v1796
        %v1879 = vunpack.c.h.b16 %v1796
        %v1880 = vunpack.c.l.b16 %v1797
        %v1881 = vunpack.c.h.b16 %v1797
        %v1882 = vunpack.c.l.b16 %v1798
        %v1883 = vunpack.c.h.b16 %v1798
        %v1884 = vunpack.c.l.b16 %v1799
        %v1885 = vunpack.c.h.b16 %v1799
        %v1886 = vunpack.c.l.b16 %v1800
        %v1887 = vunpack.c.h.b16 %v1800
        %v1888 = vunpack.c.l.b16 %v1801
        %v1889 = vunpack.c.h.b16 %v1801
        %v1890 = vunpack.c.l.b16 %v1802
        %v1891 = vunpack.c.h.b16 %v1802
        %v1892 = vunpack.c.l.b16 %v1803
        %v1893 = vunpack.c.h.b16 %v1803
        %v1894 = vunpack.c.l.b16 %v1804
        %v1895 = vunpack.c.h.b16 %v1804
        %v1896 = vunpack.c.l.b16 %v1805
        %v1897 = vunpack.c.h.b16 %v1805
        %v1898 = vunpack.c.l.b16 %v1806
        %v1899 = vunpack.c.h.b16 %v1806
        %v1900 = vunpack.c.l.b16 %v1807
        %v1901 = vunpack.c.h.b16 %v1807
        %v1902 = vunpack.c.l.b16 %v1808
        %v1903 = vunpack.c.h.b16 %v1808
        %v1904 = vunpack.c.l.b16 %v1809
        %v1905 = vunpack.c.h.b16 %v1809
        %v1906 = vunpack.c.l.b16 %v1810
        %v1907 = vunpack.c.h.b16 %v1810
        %v1908 = vunpack.c.l.b16 %v1811
        %v1909 = vunpack.c.h.b16 %v1811
        %v1910 = vunpack.c.l.b16 %v1812
        %v1911 = vunpack.c.h.b16 %v1812
        %v1912 = vunpack.c.l.b16 %v1813
        %v1913 = vunpack.c.h.b16 %v1813
        %v1914 = vunpack.c.l.b16 %v1814
        %v1915 = vunpack.c.h.b16 %v1814
        %v1916 = vunpack.c.l.b16 %v1815
        %v1917 = vunpack.c.h.b16 %v1815
        %v1918 = vunpack.c.l.b16 %v1816
        %v1919 = vunpack.c.h.b16 %v1816
        %v1920 = vunpack.c.l.b16 %v1817
        %v1921 = vunpack.c.h.b16 %v1817
        %v1922 = vunpack.c.l.b16 %v1818
        %v1923 = vunpack.c.h.b16 %v1818
        %v1924 = vunpack.c.l.b16 %v1819
        %v1925 = vunpack.c.h.b16 %v1819
        %v1926 = vpack.c.b16 %v1866, %v1862
        %v1927 = vpack.c.b16 %v1867, %v1863
        %v1928 = vpack.c.b16 %v1868, %v1864
        %v1929 = vpack.c.b16 %v1869, %v1865
        %v1930 = vpack.c.b16 %v1874, %v1870
        %v1931 = vpack.c.b16 %v1875, %v1871
        %v1932 = vpack.c.b16 %v1876, %v1872
        %v1933 = vpack.c.b16 %v1877, %v1873
        %v1934 = vpack.c.b16 %v1882, %v1878
        %v1935 = vpack.c.b16 %v1883, %v1879
        %v1936 = vpack.c.b16 %v1884, %v1880
        %v1937 = vpack.c.b16 %v1885, %v1881
        %v1938 = vpack.c.b16 %v1890, %v1886
        %v1939 = vpack.c.b16 %v1891, %v1887
        %v1940 = vpack.c.b16 %v1892, %v1888
        %v1941 = vpack.c.b16 %v1893, %v1889
        %v1942 = vpack.c.b16 %v1898, %v1894
        %v1943 = vpack.c.b16 %v1899, %v1895
        %v1944 = vpack.c.b16 %v1900, %v1896
        %v1945 = vpack.c.b16 %v1901, %v1897
        %v1946 = vpack.c.b16 %v1906, %v1902
        %v1947 = vpack.c.b16 %v1907, %v1903
        %v1948 = vpack.c.b16 %v1908, %v1904
        %v1949 = vpack.c.b16 %v1909, %v1905
        %v1950 = vpack.c.b16 %v1914, %v1910
        %v1951 = vpack.c.b16 %v1915, %v1911
        %v1952 = vpack.c.b16 %v1916, %v1912
        %v1953 = vpack.c.b16 %v1917, %v1913
        %v1954 = vpack.c.b16 %v1922, %v1918
        %v1955 = vpack.c.b16 %v1923, %v1919
        %v1956 = vpack.c.b16 %v1924, %v1920
        %v1957 = vpack.c.b16 %v1925, %v1921
        %1990 = vmatpush.bf16.msra.mxu0 %v1954
        %1991 = vmatpush.bf16.msra.mxu0 %v1950
        %1992 = vmatpush.bf16.msra.mxu0 %v1946
        %1993 = vmatpush.bf16.msra.mxu0 %v1942
        %1994 = vmatpush.bf16.msra.mxu0 %v1938
        %1995 = vmatpush.bf16.msra.mxu0 %v1934
        %1996 = vmatpush.bf16.msra.mxu0 %v1930
        %1997 = vmatpush.bf16.msra.mxu0 %v1926
        %1998 = vmatmul.bf16.gmra.mxu0 %v1780
        %v1999 = vpop.f32.mrf.mxu0
        %v2000 = vadd.f32 %v1822, %v1999
        %v2001 = vpop.f32.mrf.mxu0
        %v2002 = vadd.f32 %v1822, %v2001
        %2003 = vmatmul.bf16.gmra.mxu0 %v1781
        %v2004 = vpop.f32.mrf.mxu0
        %v2005 = vadd.f32 %v1822, %v2004
        %v2006 = vpop.f32.mrf.mxu0
        %v2007 = vadd.f32 %v1822, %v2006
        %2008 = vmatmul.bf16.gmra.mxu0 %v1782
        %v2009 = vpop.f32.mrf.mxu0
        %v2010 = vadd.f32 %v1822, %v2009
        %v2011 = vpop.f32.mrf.mxu0
        %v2012 = vadd.f32 %v1822, %v2011
        %2013 = vmatmul.bf16.gmra.mxu0 %v1783
        %v2014 = vpop.f32.mrf.mxu0
        %v2015 = vadd.f32 %v1822, %v2014
        %v2016 = vpop.f32.mrf.mxu0
        %v2017 = vadd.f32 %v1822, %v2016
        %2018 = vmatmul.bf16.gmra.mxu0 %v1784
        %v2019 = vpop.f32.mrf.mxu0
        %v2020 = vadd.f32 %v1822, %v2019
        %v2021 = vpop.f32.mrf.mxu0
        %v2022 = vadd.f32 %v1822, %v2021
        %2023 = vmatmul.bf16.gmra.mxu0 %v1785
        %v2024 = vpop.f32.mrf.mxu0
        %v2025 = vadd.f32 %v1822, %v2024
        %v2026 = vpop.f32.mrf.mxu0
        %v2027 = vadd.f32 %v1822, %v2026
        %2028 = vmatmul.bf16.gmra.mxu0 %v1786
        %v2029 = vpop.f32.mrf.mxu0
        %v2030 = vadd.f32 %v1822, %v2029
        %v2031 = vpop.f32.mrf.mxu0
        %v2032 = vadd.f32 %v1822, %v2031
        %2033 = vmatmul.bf16.gmra.mxu0 %v1787
        %v2034 = vpop.f32.mrf.mxu0
        %v2035 = vadd.f32 %v1822, %v2034
        %v2036 = vpop.f32.mrf.mxu0
        %v2037 = vadd.f32 %v1822, %v2036
        %2038 = vdwg.mxu0
        %2039 = vmatpush.bf16.msra.mxu0 %v1955
        %2040 = vmatpush.bf16.msra.mxu0 %v1951
        %2041 = vmatpush.bf16.msra.mxu0 %v1947
        %2042 = vmatpush.bf16.msra.mxu0 %v1943
        %2043 = vmatpush.bf16.msra.mxu0 %v1939
        %2044 = vmatpush.bf16.msra.mxu0 %v1935
        %2045 = vmatpush.bf16.msra.mxu0 %v1931
        %2046 = vmatpush.bf16.msra.mxu0 %v1927
        %2047 = vmatmul.bf16.gmra.mxu0 %v1780
        %v2048 = vpop.f32.mrf.mxu0
        %v2049 = vadd.f32 %v1823, %v2048
        %v2050 = vpop.f32.mrf.mxu0
        %v2051 = vadd.f32 %v1823, %v2050
        %2052 = vmatmul.bf16.gmra.mxu0 %v1781
        %v2053 = vpop.f32.mrf.mxu0
        %v2054 = vadd.f32 %v1823, %v2053
        %v2055 = vpop.f32.mrf.mxu0
        %v2056 = vadd.f32 %v1823, %v2055
        %2057 = vmatmul.bf16.gmra.mxu0 %v1782
        %v2058 = vpop.f32.mrf.mxu0
        %v2059 = vadd.f32 %v1823, %v2058
        %v2060 = vpop.f32.mrf.mxu0
        %v2061 = vadd.f32 %v1823, %v2060
        %2062 = vmatmul.bf16.gmra.mxu0 %v1783
        %v2063 = vpop.f32.mrf.mxu0
        %v2064 = vadd.f32 %v1823, %v2063
        %v2065 = vpop.f32.mrf.mxu0
        %v2066 = vadd.f32 %v1823, %v2065
        %2067 = vmatmul.bf16.gmra.mxu0 %v1784
        %v2068 = vpop.f32.mrf.mxu0
        %v2069 = vadd.f32 %v1823, %v2068
        %v2070 = vpop.f32.mrf.mxu0
        %v2071 = vadd.f32 %v1823, %v2070
        %2072 = vmatmul.bf16.gmra.mxu0 %v1785
        %v2073 = vpop.f32.mrf.mxu0
        %v2074 = vadd.f32 %v1823, %v2073
        %v2075 = vpop.f32.mrf.mxu0
        %v2076 = vadd.f32 %v1823, %v2075
        %2077 = vmatmul.bf16.gmra.mxu0 %v1786
        %v2078 = vpop.f32.mrf.mxu0
        %v2079 = vadd.f32 %v1823, %v2078
        %v2080 = vpop.f32.mrf.mxu0
        %v2081 = vadd.f32 %v1823, %v2080
        %2082 = vmatmul.bf16.gmra.mxu0 %v1787
        %v2083 = vpop.f32.mrf.mxu0
        %v2084 = vadd.f32 %v1823, %v2083
        %v2085 = vpop.f32.mrf.mxu0
        %v2086 = vadd.f32 %v1823, %v2085
        %2087 = vdwg.mxu0
        %2088 = vmatpush.bf16.msra.mxu0 %v1956
        %2089 = vmatpush.bf16.msra.mxu0 %v1952
        %2090 = vmatpush.bf16.msra.mxu0 %v1948
        %2091 = vmatpush.bf16.msra.mxu0 %v1944
        %2092 = vmatpush.bf16.msra.mxu0 %v1940
        %2093 = vmatpush.bf16.msra.mxu0 %v1936
        %2094 = vmatpush.bf16.msra.mxu0 %v1932
        %2095 = vmatpush.bf16.msra.mxu0 %v1928
        %2096 = vmatmul.bf16.gmra.mxu0 %v1780
        %v2097 = vpop.f32.mrf.mxu0
        %v2098 = vadd.f32 %v1824, %v2097
        %v2099 = vpop.f32.mrf.mxu0
        %v2100 = vadd.f32 %v1824, %v2099
        %2101 = vmatmul.bf16.gmra.mxu0 %v1781
        %v2102 = vpop.f32.mrf.mxu0
        %v2103 = vadd.f32 %v1824, %v2102
        %v2104 = vpop.f32.mrf.mxu0
        %v2105 = vadd.f32 %v1824, %v2104
        %2106 = vmatmul.bf16.gmra.mxu0 %v1782
        %v2107 = vpop.f32.mrf.mxu0
        %v2108 = vadd.f32 %v1824, %v2107
        %v2109 = vpop.f32.mrf.mxu0
        %v2110 = vadd.f32 %v1824, %v2109
        %2111 = vmatmul.bf16.gmra.mxu0 %v1783
        %v2112 = vpop.f32.mrf.mxu0
        %v2113 = vadd.f32 %v1824, %v2112
        %v2114 = vpop.f32.mrf.mxu0
        %v2115 = vadd.f32 %v1824, %v2114
        %2116 = vmatmul.bf16.gmra.mxu0 %v1784
        %v2117 = vpop.f32.mrf.mxu0
        %v2118 = vadd.f32 %v1824, %v2117
        %v2119 = vpop.f32.mrf.mxu0
        %v2120 = vadd.f32 %v1824, %v2119
        %2121 = vmatmul.bf16.gmra.mxu0 %v1785
        %v2122 = vpop.f32.mrf.mxu0
        %v2123 = vadd.f32 %v1824, %v2122
        %v2124 = vpop.f32.mrf.mxu0
        %v2125 = vadd.f32 %v1824, %v2124
        %2126 = vmatmul.bf16.gmra.mxu0 %v1786
        %v2127 = vpop.f32.mrf.mxu0
        %v2128 = vadd.f32 %v1824, %v2127
        %v2129 = vpop.f32.mrf.mxu0
        %v2130 = vadd.f32 %v1824, %v2129
        %2131 = vmatmul.bf16.gmra.mxu0 %v1787
        %v2132 = vpop.f32.mrf.mxu0
        %v2133 = vadd.f32 %v1824, %v2132
        %v2134 = vpop.f32.mrf.mxu0
        %v2135 = vadd.f32 %v1824, %v2134
        %2136 = vdwg.mxu0
        %2137 = vmatpush.bf16.msra.mxu0 %v1957
        %2138 = vmatpush.bf16.msra.mxu0 %v1953
        %2139 = vmatpush.bf16.msra.mxu0 %v1949
        %2140 = vmatpush.bf16.msra.mxu0 %v1945
        %2141 = vmatpush.bf16.msra.mxu0 %v1941
        %2142 = vmatpush.bf16.msra.mxu0 %v1937
        %2143 = vmatpush.bf16.msra.mxu0 %v1933
        %2144 = vmatpush.bf16.msra.mxu0 %v1929
        %2145 = vmatmul.bf16.gmra.mxu0 %v1780
        %v2146 = vpop.f32.mrf.mxu0
        %v2147 = vadd.f32 %v1825, %v2146
        %v2148 = vpop.f32.mrf.mxu0
        %v2149 = vadd.f32 %v1825, %v2148
        %2150 = vmatmul.bf16.gmra.mxu0 %v1781
        %v2151 = vpop.f32.mrf.mxu0
        %v2152 = vadd.f32 %v1825, %v2151
        %v2153 = vpop.f32.mrf.mxu0
        %v2154 = vadd.f32 %v1825, %v2153
        %2155 = vmatmul.bf16.gmra.mxu0 %v1782
        %v2156 = vpop.f32.mrf.mxu0
        %v2157 = vadd.f32 %v1825, %v2156
        %v2158 = vpop.f32.mrf.mxu0
        %v2159 = vadd.f32 %v1825, %v2158
        %2160 = vmatmul.bf16.gmra.mxu0 %v1783
        %v2161 = vpop.f32.mrf.mxu0
        %v2162 = vadd.f32 %v1825, %v2161
        %v2163 = vpop.f32.mrf.mxu0
        %v2164 = vadd.f32 %v1825, %v2163
        %2165 = vmatmul.bf16.gmra.mxu0 %v1784
        %v2166 = vpop.f32.mrf.mxu0
        %v2167 = vadd.f32 %v1825, %v2166
        %v2168 = vpop.f32.mrf.mxu0
        %v2169 = vadd.f32 %v1825, %v2168
        %2170 = vmatmul.bf16.gmra.mxu0 %v1785
        %v2171 = vpop.f32.mrf.mxu0
        %v2172 = vadd.f32 %v1825, %v2171
        %v2173 = vpop.f32.mrf.mxu0
        %v2174 = vadd.f32 %v1825, %v2173
        %2175 = vmatmul.bf16.gmra.mxu0 %v1786
        %v2176 = vpop.f32.mrf.mxu0
        %v2177 = vadd.f32 %v1825, %v2176
        %v2178 = vpop.f32.mrf.mxu0
        %v2179 = vadd.f32 %v1825, %v2178
        %2180 = vmatmul.bf16.gmra.mxu0 %v1787
        %v2181 = vpop.f32.mrf.mxu0
        %v2182 = vadd.f32 %v1825, %v2181
        %v2183 = vpop.f32.mrf.mxu0
        %v2184 = vadd.f32 %v1825, %v2183
        %2185 = vdwg.mxu0
        %v2186 = vmul.f32 %v2000, 0.5
        %v2187 = vmul.f32 %v2049, 0.5
        %v2188 = vmul.f32 %v2098, 0.5
        %v2189 = vmul.f32 %v2147, 0.5
        %v2190 = vmul.f32 %v2002, 0.5
        %v2191 = vmul.f32 %v2051, 0.5
        %v2192 = vmul.f32 %v2100, 0.5
        %v2193 = vmul.f32 %v2149, 0.5
        %v2194 = vmul.f32 %v2005, 0.5
        %v2195 = vmul.f32 %v2054, 0.5
        %v2196 = vmul.f32 %v2103, 0.5
        %v2197 = vmul.f32 %v2152, 0.5
        %v2198 = vmul.f32 %v2007, 0.5
        %v2199 = vmul.f32 %v2056, 0.5
        %v2200 = vmul.f32 %v2105, 0.5
        %v2201 = vmul.f32 %v2154, 0.5
        %v2202 = vmul.f32 %v2010, 0.5
        %v2203 = vmul.f32 %v2059, 0.5
        %v2204 = vmul.f32 %v2108, 0.5
        %v2205 = vmul.f32 %v2157, 0.5
        %v2206 = vmul.f32 %v2012, 0.5
        %v2207 = vmul.f32 %v2061, 0.5
        %v2208 = vmul.f32 %v2110, 0.5
        %v2209 = vmul.f32 %v2159, 0.5
        %v2210 = vmul.f32 %v2015, 0.5
        %v2211 = vmul.f32 %v2064, 0.5
        %v2212 = vmul.f32 %v2113, 0.5
        %v2213 = vmul.f32 %v2162, 0.5
        %v2214 = vmul.f32 %v2017, 0.5
        %v2215 = vmul.f32 %v2066, 0.5
        %v2216 = vmul.f32 %v2115, 0.5
        %v2217 = vmul.f32 %v2164, 0.5
        %v2218 = vmul.f32 %v2020, 0.5
        %v2219 = vmul.f32 %v2069, 0.5
        %v2220 = vmul.f32 %v2118, 0.5
        %v2221 = vmul.f32 %v2167, 0.5
        %v2222 = vmul.f32 %v2022, 0.5
        %v2223 = vmul.f32 %v2071, 0.5
        %v2224 = vmul.f32 %v2120, 0.5
        %v2225 = vmul.f32 %v2169, 0.5
        %v2226 = vmul.f32 %v2025, 0.5
        %v2227 = vmul.f32 %v2074, 0.5
        %v2228 = vmul.f32 %v2123, 0.5
        %v2229 = vmul.f32 %v2172, 0.5
        %v2230 = vmul.f32 %v2027, 0.5
        %v2231 = vmul.f32 %v2076, 0.5
        %v2232 = vmul.f32 %v2125, 0.5
        %v2233 = vmul.f32 %v2174, 0.5
        %v2234 = vmul.f32 %v2030, 0.5
        %v2235 = vmul.f32 %v2079, 0.5
        %v2236 = vmul.f32 %v2128, 0.5
        %v2237 = vmul.f32 %v2177, 0.5
        %v2238 = vmul.f32 %v2032, 0.5
        %v2239 = vmul.f32 %v2081, 0.5
        %v2240 = vmul.f32 %v2130, 0.5
        %v2241 = vmul.f32 %v2179, 0.5
        %v2242 = vmul.f32 %v2035, 0.5
        %v2243 = vmul.f32 %v2084, 0.5
        %v2244 = vmul.f32 %v2133, 0.5
        %v2245 = vmul.f32 %v2182, 0.5
        %v2246 = vmul.f32 %v2037, 0.5
        %v2247 = vmul.f32 %v2086, 0.5
        %v2248 = vmul.f32 %v2135, 0.5
        %v2249 = vmul.f32 %v2184, 0.5
        %v2250 = vmul.f32 %v2000, 0.70710677
        %v2251 = vmul.f32 %v2049, 0.70710677
        %v2252 = vmul.f32 %v2098, 0.70710677
        %v2253 = vmul.f32 %v2147, 0.70710677
        %v2254 = vmul.f32 %v2002, 0.70710677
        %v2255 = vmul.f32 %v2051, 0.70710677
        %v2256 = vmul.f32 %v2100, 0.70710677
        %v2257 = vmul.f32 %v2149, 0.70710677
        %v2258 = vmul.f32 %v2005, 0.70710677
        %v2259 = vmul.f32 %v2054, 0.70710677
        %v2260 = vmul.f32 %v2103, 0.70710677
        %v2261 = vmul.f32 %v2152, 0.70710677
        %v2262 = vmul.f32 %v2007, 0.70710677
        %v2263 = vmul.f32 %v2056, 0.70710677
        %v2264 = vmul.f32 %v2105, 0.70710677
        %v2265 = vmul.f32 %v2154, 0.70710677
        %v2266 = vmul.f32 %v2010, 0.70710677
        %v2267 = vmul.f32 %v2059, 0.70710677
        %v2268 = vmul.f32 %v2108, 0.70710677
        %v2269 = vmul.f32 %v2157, 0.70710677
        %v2270 = vmul.f32 %v2012, 0.70710677
        %v2271 = vmul.f32 %v2061, 0.70710677
        %v2272 = vmul.f32 %v2110, 0.70710677
        %v2273 = vmul.f32 %v2159, 0.70710677
        %v2274 = vmul.f32 %v2015, 0.70710677
        %v2275 = vmul.f32 %v2064, 0.70710677
        %v2276 = vmul.f32 %v2113, 0.70710677
        %v2277 = vmul.f32 %v2162, 0.70710677
        %v2278 = vmul.f32 %v2017, 0.70710677
        %v2279 = vmul.f32 %v2066, 0.70710677
        %v2280 = vmul.f32 %v2115, 0.70710677
        %v2281 = vmul.f32 %v2164, 0.70710677
        %v2282 = vmul.f32 %v2020, 0.70710677
        %v2283 = vmul.f32 %v2069, 0.70710677
        %v2284 = vmul.f32 %v2118, 0.70710677
        %v2285 = vmul.f32 %v2167, 0.70710677
        %v2286 = vmul.f32 %v2022, 0.70710677
        %v2287 = vmul.f32 %v2071, 0.70710677
        %v2288 = vmul.f32 %v2120, 0.70710677
        %v2289 = vmul.f32 %v2169, 0.70710677
        %v2290 = vmul.f32 %v2025, 0.70710677
        %v2291 = vmul.f32 %v2074, 0.70710677
        %v2292 = vmul.f32 %v2123, 0.70710677
        %v2293 = vmul.f32 %v2172, 0.70710677
        %v2294 = vmul.f32 %v2027, 0.70710677
        %v2295 = vmul.f32 %v2076, 0.70710677
        %v2296 = vmul.f32 %v2125, 0.70710677
        %v2297 = vmul.f32 %v2174, 0.70710677
        %v2298 = vmul.f32 %v2030, 0.70710677
        %v2299 = vmul.f32 %v2079, 0.70710677
        %v2300 = vmul.f32 %v2128, 0.70710677
        %v2301 = vmul.f32 %v2177, 0.70710677
        %v2302 = vmul.f32 %v2032, 0.70710677
        %v2303 = vmul.f32 %v2081, 0.70710677
        %v2304 = vmul.f32 %v2130, 0.70710677
        %v2305 = vmul.f32 %v2179, 0.70710677
        %v2306 = vmul.f32 %v2035, 0.70710677
        %v2307 = vmul.f32 %v2084, 0.70710677
        %v2308 = vmul.f32 %v2133, 0.70710677
        %v2309 = vmul.f32 %v2182, 0.70710677
        %v2310 = vmul.f32 %v2037, 0.70710677
        %v2311 = vmul.f32 %v2086, 0.70710677
        %v2312 = vmul.f32 %v2135, 0.70710677
        %v2313 = vmul.f32 %v2184, 0.70710677
        %v2314 = vmul.f32 %v2250, %v2250
        %v2315 = vmin.f32 16.0, %v2314
        %v2316 = vmul.f32 %v2315, 2.1237322e-06
        %v2317 = vadd.f32 %v2316, 0.00028619796
        %v2318 = vmul.f32 %v2315, %v2317
        %v2319 = vadd.f32 %v2318, 0.0036580483
        %v2320 = vmul.f32 %v2315, %v2319
        %v2321 = vadd.f32 %v2320, 0.05243302
        %v2322 = vmul.f32 %v2315, %v2321
        %v2323 = vadd.f32 %v2322, 0.18741608
        %v2324 = vmul.f32 %v2315, %v2323
        %v2325 = vadd.f32 %v2324, 1.1283791
        %v2326 = vmul.f32 %v2250, %v2325
        %v2327 = vmul.f32 %v2315, 3.8918573e-05
        %v2328 = vadd.f32 %v2327, 0.001143296
        %v2329 = vmul.f32 %v2315, %v2328
        %v2330 = vadd.f32 %v2329, 0.014752088
        %v2331 = vmul.f32 %v2315, %v2330
        %v2332 = vadd.f32 %v2331, 0.112945676
        %v2333 = vmul.f32 %v2315, %v2332
        %v2334 = vadd.f32 %v2333, 0.4994258
        %v2335 = vmul.f32 %v2315, %v2334
        %v2336 = vadd.f32 %v2335, 1.0
        %v2337 = vrcp.pop %v2336
        %v2338 = vmul.f32 %v2336, %v2337
        %v2339 = vsub.f32 1.0, %v2338
        %v2340 = vmul.f32 %v2337, %v2339
        %v2341 = vadd.f32 %v2337, %v2340
        %vm2342 = vweird.f32 %v2336
        %vm2343 = vweird.f32 %v2337
        %vm2344 = vmor %vm2342, %vm2343
        %v2345 = vsel %vm2344, %v2337, %v2341
        %v2346 = vand.u32 2147483647, %v2336
        %vm2347 = vcmp.eq.f32.partialorder %v2346, 8.507059e+37
        %v2348 = vand.u32 %v2336, 2147483648
        %v2349 = vor.u32 1.1754944e-38, %v2348
        %v2350 = vsel %vm2347, %v2349, %v2345
        %v2351 = vmul.f32 %v2326, %v2350
        %v2352 = vmin.f32 %v2351, 1.0
        %v2353 = vmax.f32 %v2352, -1.0
        %v2354 = vmul.f32 %v2251, %v2251
        %v2355 = vmin.f32 16.0, %v2354
        %v2356 = vmul.f32 %v2355, 2.1237322e-06
        %v2357 = vadd.f32 %v2356, 0.00028619796
        %v2358 = vmul.f32 %v2355, %v2357
        %v2359 = vadd.f32 %v2358, 0.0036580483
        %v2360 = vmul.f32 %v2355, %v2359
        %v2361 = vadd.f32 %v2360, 0.05243302
        %v2362 = vmul.f32 %v2355, %v2361
        %v2363 = vadd.f32 %v2362, 0.18741608
        %v2364 = vmul.f32 %v2355, %v2363
        %v2365 = vadd.f32 %v2364, 1.1283791
        %v2366 = vmul.f32 %v2251, %v2365
        %v2367 = vmul.f32 %v2355, 3.8918573e-05
        %v2368 = vadd.f32 %v2367, 0.001143296
        %v2369 = vmul.f32 %v2355, %v2368
        %v2370 = vadd.f32 %v2369, 0.014752088
        %v2371 = vmul.f32 %v2355, %v2370
        %v2372 = vadd.f32 %v2371, 0.112945676
        %v2373 = vmul.f32 %v2355, %v2372
        %v2374 = vadd.f32 %v2373, 0.4994258
        %v2375 = vmul.f32 %v2355, %v2374
        %v2376 = vadd.f32 %v2375, 1.0
        %v2377 = vrcp.pop %v2376
        %v2378 = vmul.f32 %v2376, %v2377
        %v2379 = vsub.f32 1.0, %v2378
        %v2380 = vmul.f32 %v2377, %v2379
        %v2381 = vadd.f32 %v2377, %v2380
        %vm2382 = vweird.f32 %v2376
        %vm2383 = vweird.f32 %v2377
        %vm2384 = vmor %vm2382, %vm2383
        %v2385 = vsel %vm2384, %v2377, %v2381
        %v2386 = vand.u32 2147483647, %v2376
        %vm2387 = vcmp.eq.f32.partialorder %v2386, 8.507059e+37
        %v2388 = vand.u32 %v2376, 2147483648
        %v2389 = vor.u32 1.1754944e-38, %v2388
        %v2390 = vsel %vm2387, %v2389, %v2385
        %v2391 = vmul.f32 %v2366, %v2390
        %v2392 = vmin.f32 %v2391, 1.0
        %v2393 = vmax.f32 %v2392, -1.0
        %v2394 = vmul.f32 %v2252, %v2252
        %v2395 = vmin.f32 16.0, %v2394
        %v2396 = vmul.f32 %v2395, 2.1237322e-06
        %v2397 = vadd.f32 %v2396, 0.00028619796
        %v2398 = vmul.f32 %v2395, %v2397
        %v2399 = vadd.f32 %v2398, 0.0036580483
        %v2400 = vmul.f32 %v2395, %v2399
        %v2401 = vadd.f32 %v2400, 0.05243302
        %v2402 = vmul.f32 %v2395, %v2401
        %v2403 = vadd.f32 %v2402, 0.18741608
        %v2404 = vmul.f32 %v2395, %v2403
        %v2405 = vadd.f32 %v2404, 1.1283791
        %v2406 = vmul.f32 %v2252, %v2405
        %v2407 = vmul.f32 %v2395, 3.8918573e-05
        %v2408 = vadd.f32 %v2407, 0.001143296
        %v2409 = vmul.f32 %v2395, %v2408
        %v2410 = vadd.f32 %v2409, 0.014752088
        %v2411 = vmul.f32 %v2395, %v2410
        %v2412 = vadd.f32 %v2411, 0.112945676
        %v2413 = vmul.f32 %v2395, %v2412
        %v2414 = vadd.f32 %v2413, 0.4994258
        %v2415 = vmul.f32 %v2395, %v2414
        %v2416 = vadd.f32 %v2415, 1.0
        %v2417 = vrcp.pop %v2416
        %v2418 = vmul.f32 %v2416, %v2417
        %v2419 = vsub.f32 1.0, %v2418
        %v2420 = vmul.f32 %v2417, %v2419
        %v2421 = vadd.f32 %v2417, %v2420
        %vm2422 = vweird.f32 %v2416
        %vm2423 = vweird.f32 %v2417
        %vm2424 = vmor %vm2422, %vm2423
        %v2425 = vsel %vm2424, %v2417, %v2421
        %v2426 = vand.u32 2147483647, %v2416
        %vm2427 = vcmp.eq.f32.partialorder %v2426, 8.507059e+37
        %v2428 = vand.u32 %v2416, 2147483648
        %v2429 = vor.u32 1.1754944e-38, %v2428
        %v2430 = vsel %vm2427, %v2429, %v2425
        %v2431 = vmul.f32 %v2406, %v2430
        %v2432 = vmin.f32 %v2431, 1.0
        %v2433 = vmax.f32 %v2432, -1.0
        %v2434 = vmul.f32 %v2253, %v2253
        %v2435 = vmin.f32 16.0, %v2434
        %v2436 = vmul.f32 %v2435, 2.1237322e-06
        %v2437 = vadd.f32 %v2436, 0.00028619796
        %v2438 = vmul.f32 %v2435, %v2437
        %v2439 = vadd.f32 %v2438, 0.0036580483
        %v2440 = vmul.f32 %v2435, %v2439
        %v2441 = vadd.f32 %v2440, 0.05243302
        %v2442 = vmul.f32 %v2435, %v2441
        %v2443 = vadd.f32 %v2442, 0.18741608
        %v2444 = vmul.f32 %v2435, %v2443
        %v2445 = vadd.f32 %v2444, 1.1283791
        %v2446 = vmul.f32 %v2253, %v2445
        %v2447 = vmul.f32 %v2435, 3.8918573e-05
        %v2448 = vadd.f32 %v2447, 0.001143296
        %v2449 = vmul.f32 %v2435, %v2448
        %v2450 = vadd.f32 %v2449, 0.014752088
        %v2451 = vmul.f32 %v2435, %v2450
        %v2452 = vadd.f32 %v2451, 0.112945676
        %v2453 = vmul.f32 %v2435, %v2452
        %v2454 = vadd.f32 %v2453, 0.4994258
        %v2455 = vmul.f32 %v2435, %v2454
        %v2456 = vadd.f32 %v2455, 1.0
        %v2457 = vrcp.pop %v2456
        %v2458 = vmul.f32 %v2456, %v2457
        %v2459 = vsub.f32 1.0, %v2458
        %v2460 = vmul.f32 %v2457, %v2459
        %v2461 = vadd.f32 %v2457, %v2460
        %vm2462 = vweird.f32 %v2456
        %vm2463 = vweird.f32 %v2457
        %vm2464 = vmor %vm2462, %vm2463
        %v2465 = vsel %vm2464, %v2457, %v2461
        %v2466 = vand.u32 2147483647, %v2456
        %vm2467 = vcmp.eq.f32.partialorder %v2466, 8.507059e+37
        %v2468 = vand.u32 %v2456, 2147483648
        %v2469 = vor.u32 1.1754944e-38, %v2468
        %v2470 = vsel %vm2467, %v2469, %v2465
        %v2471 = vmul.f32 %v2446, %v2470
        %v2472 = vmin.f32 %v2471, 1.0
        %v2473 = vmax.f32 %v2472, -1.0
        %v2474 = vmul.f32 %v2254, %v2254
        %v2475 = vmin.f32 16.0, %v2474
        %v2476 = vmul.f32 %v2475, 2.1237322e-06
        %v2477 = vadd.f32 %v2476, 0.00028619796
        %v2478 = vmul.f32 %v2475, %v2477
        %v2479 = vadd.f32 %v2478, 0.0036580483
        %v2480 = vmul.f32 %v2475, %v2479
        %v2481 = vadd.f32 %v2480, 0.05243302
        %v2482 = vmul.f32 %v2475, %v2481
        %v2483 = vadd.f32 %v2482, 0.18741608
        %v2484 = vmul.f32 %v2475, %v2483
        %v2485 = vadd.f32 %v2484, 1.1283791
        %v2486 = vmul.f32 %v2254, %v2485
        %v2487 = vmul.f32 %v2475, 3.8918573e-05
        %v2488 = vadd.f32 %v2487, 0.001143296
        %v2489 = vmul.f32 %v2475, %v2488
        %v2490 = vadd.f32 %v2489, 0.014752088
        %v2491 = vmul.f32 %v2475, %v2490
        %v2492 = vadd.f32 %v2491, 0.112945676
        %v2493 = vmul.f32 %v2475, %v2492
        %v2494 = vadd.f32 %v2493, 0.4994258
        %v2495 = vmul.f32 %v2475, %v2494
        %v2496 = vadd.f32 %v2495, 1.0
        %v2497 = vrcp.pop %v2496
        %v2498 = vmul.f32 %v2496, %v2497
        %v2499 = vsub.f32 1.0, %v2498
        %v2500 = vmul.f32 %v2497, %v2499
        %v2501 = vadd.f32 %v2497, %v2500
        %vm2502 = vweird.f32 %v2496
        %vm2503 = vweird.f32 %v2497
        %vm2504 = vmor %vm2502, %vm2503
        %v2505 = vsel %vm2504, %v2497, %v2501
        %v2506 = vand.u32 2147483647, %v2496
        %vm2507 = vcmp.eq.f32.partialorder %v2506, 8.507059e+37
        %v2508 = vand.u32 %v2496, 2147483648
        %v2509 = vor.u32 1.1754944e-38, %v2508
        %v2510 = vsel %vm2507, %v2509, %v2505
        %v2511 = vmul.f32 %v2486, %v2510
        %v2512 = vmin.f32 %v2511, 1.0
        %v2513 = vmax.f32 %v2512, -1.0
        %v2514 = vmul.f32 %v2255, %v2255
        %v2515 = vmin.f32 16.0, %v2514
        %v2516 = vmul.f32 %v2515, 2.1237322e-06
        %v2517 = vadd.f32 %v2516, 0.00028619796
        %v2518 = vmul.f32 %v2515, %v2517
        %v2519 = vadd.f32 %v2518, 0.0036580483
        %v2520 = vmul.f32 %v2515, %v2519
        %v2521 = vadd.f32 %v2520, 0.05243302
        %v2522 = vmul.f32 %v2515, %v2521
        %v2523 = vadd.f32 %v2522, 0.18741608
        %v2524 = vmul.f32 %v2515, %v2523
        %v2525 = vadd.f32 %v2524, 1.1283791
        %v2526 = vmul.f32 %v2255, %v2525
        %v2527 = vmul.f32 %v2515, 3.8918573e-05
        %v2528 = vadd.f32 %v2527, 0.001143296
        %v2529 = vmul.f32 %v2515, %v2528
        %v2530 = vadd.f32 %v2529, 0.014752088
        %v2531 = vmul.f32 %v2515, %v2530
        %v2532 = vadd.f32 %v2531, 0.112945676
        %v2533 = vmul.f32 %v2515, %v2532
        %v2534 = vadd.f32 %v2533, 0.4994258
        %v2535 = vmul.f32 %v2515, %v2534
        %v2536 = vadd.f32 %v2535, 1.0
        %v2537 = vrcp.pop %v2536
        %v2538 = vmul.f32 %v2536, %v2537
        %v2539 = vsub.f32 1.0, %v2538
        %v2540 = vmul.f32 %v2537, %v2539
        %v2541 = vadd.f32 %v2537, %v2540
        %vm2542 = vweird.f32 %v2536
        %vm2543 = vweird.f32 %v2537
        %vm2544 = vmor %vm2542, %vm2543
        %v2545 = vsel %vm2544, %v2537, %v2541
        %v2546 = vand.u32 2147483647, %v2536
        %vm2547 = vcmp.eq.f32.partialorder %v2546, 8.507059e+37
        %v2548 = vand.u32 %v2536, 2147483648
        %v2549 = vor.u32 1.1754944e-38, %v2548
        %v2550 = vsel %vm2547, %v2549, %v2545
        %v2551 = vmul.f32 %v2526, %v2550
        %v2552 = vmin.f32 %v2551, 1.0
        %v2553 = vmax.f32 %v2552, -1.0
        %v2554 = vmul.f32 %v2256, %v2256
        %v2555 = vmin.f32 16.0, %v2554
        %v2556 = vmul.f32 %v2555, 2.1237322e-06
        %v2557 = vadd.f32 %v2556, 0.00028619796
        %v2558 = vmul.f32 %v2555, %v2557
        %v2559 = vadd.f32 %v2558, 0.0036580483
        %v2560 = vmul.f32 %v2555, %v2559
        %v2561 = vadd.f32 %v2560, 0.05243302
        %v2562 = vmul.f32 %v2555, %v2561
        %v2563 = vadd.f32 %v2562, 0.18741608
        %v2564 = vmul.f32 %v2555, %v2563
        %v2565 = vadd.f32 %v2564, 1.1283791
        %v2566 = vmul.f32 %v2256, %v2565
        %v2567 = vmul.f32 %v2555, 3.8918573e-05
        %v2568 = vadd.f32 %v2567, 0.001143296
        %v2569 = vmul.f32 %v2555, %v2568
        %v2570 = vadd.f32 %v2569, 0.014752088
        %v2571 = vmul.f32 %v2555, %v2570
        %v2572 = vadd.f32 %v2571, 0.112945676
        %v2573 = vmul.f32 %v2555, %v2572
        %v2574 = vadd.f32 %v2573, 0.4994258
        %v2575 = vmul.f32 %v2555, %v2574
        %v2576 = vadd.f32 %v2575, 1.0
        %v2577 = vrcp.pop %v2576
        %v2578 = vmul.f32 %v2576, %v2577
        %v2579 = vsub.f32 1.0, %v2578
        %v2580 = vmul.f32 %v2577, %v2579
        %v2581 = vadd.f32 %v2577, %v2580
        %vm2582 = vweird.f32 %v2576
        %vm2583 = vweird.f32 %v2577
        %vm2584 = vmor %vm2582, %vm2583
        %v2585 = vsel %vm2584, %v2577, %v2581
        %v2586 = vand.u32 2147483647, %v2576
        %vm2587 = vcmp.eq.f32.partialorder %v2586, 8.507059e+37
        %v2588 = vand.u32 %v2576, 2147483648
        %v2589 = vor.u32 1.1754944e-38, %v2588
        %v2590 = vsel %vm2587, %v2589, %v2585
        %v2591 = vmul.f32 %v2566, %v2590
        %v2592 = vmin.f32 %v2591, 1.0
        %v2593 = vmax.f32 %v2592, -1.0
        %v2594 = vmul.f32 %v2257, %v2257
        %v2595 = vmin.f32 16.0, %v2594
        %v2596 = vmul.f32 %v2595, 2.1237322e-06
        %v2597 = vadd.f32 %v2596, 0.00028619796
        %v2598 = vmul.f32 %v2595, %v2597
        %v2599 = vadd.f32 %v2598, 0.0036580483
        %v2600 = vmul.f32 %v2595, %v2599
        %v2601 = vadd.f32 %v2600, 0.05243302
        %v2602 = vmul.f32 %v2595, %v2601
        %v2603 = vadd.f32 %v2602, 0.18741608
        %v2604 = vmul.f32 %v2595, %v2603
        %v2605 = vadd.f32 %v2604, 1.1283791
        %v2606 = vmul.f32 %v2257, %v2605
        %v2607 = vmul.f32 %v2595, 3.8918573e-05
        %v2608 = vadd.f32 %v2607, 0.001143296
        %v2609 = vmul.f32 %v2595, %v2608
        %v2610 = vadd.f32 %v2609, 0.014752088
        %v2611 = vmul.f32 %v2595, %v2610
        %v2612 = vadd.f32 %v2611, 0.112945676
        %v2613 = vmul.f32 %v2595, %v2612
        %v2614 = vadd.f32 %v2613, 0.4994258
        %v2615 = vmul.f32 %v2595, %v2614
        %v2616 = vadd.f32 %v2615, 1.0
        %v2617 = vrcp.pop %v2616
        %v2618 = vmul.f32 %v2616, %v2617
        %v2619 = vsub.f32 1.0, %v2618
        %v2620 = vmul.f32 %v2617, %v2619
        %v2621 = vadd.f32 %v2617, %v2620
        %vm2622 = vweird.f32 %v2616
        %vm2623 = vweird.f32 %v2617
        %vm2624 = vmor %vm2622, %vm2623
        %v2625 = vsel %vm2624, %v2617, %v2621
        %v2626 = vand.u32 2147483647, %v2616
        %vm2627 = vcmp.eq.f32.partialorder %v2626, 8.507059e+37
        %v2628 = vand.u32 %v2616, 2147483648
        %v2629 = vor.u32 1.1754944e-38, %v2628
        %v2630 = vsel %vm2627, %v2629, %v2625
        %v2631 = vmul.f32 %v2606, %v2630
        %v2632 = vmin.f32 %v2631, 1.0
        %v2633 = vmax.f32 %v2632, -1.0
        %v2634 = vmul.f32 %v2258, %v2258
        %v2635 = vmin.f32 16.0, %v2634
        %v2636 = vmul.f32 %v2635, 2.1237322e-06
        %v2637 = vadd.f32 %v2636, 0.00028619796
        %v2638 = vmul.f32 %v2635, %v2637
        %v2639 = vadd.f32 %v2638, 0.0036580483
        %v2640 = vmul.f32 %v2635, %v2639
        %v2641 = vadd.f32 %v2640, 0.05243302
        %v2642 = vmul.f32 %v2635, %v2641
        %v2643 = vadd.f32 %v2642, 0.18741608
        %v2644 = vmul.f32 %v2635, %v2643
        %v2645 = vadd.f32 %v2644, 1.1283791
        %v2646 = vmul.f32 %v2258, %v2645
        %v2647 = vmul.f32 %v2635, 3.8918573e-05
        %v2648 = vadd.f32 %v2647, 0.001143296
        %v2649 = vmul.f32 %v2635, %v2648
        %v2650 = vadd.f32 %v2649, 0.014752088
        %v2651 = vmul.f32 %v2635, %v2650
        %v2652 = vadd.f32 %v2651, 0.112945676
        %v2653 = vmul.f32 %v2635, %v2652
        %v2654 = vadd.f32 %v2653, 0.4994258
        %v2655 = vmul.f32 %v2635, %v2654
        %v2656 = vadd.f32 %v2655, 1.0
        %v2657 = vrcp.pop %v2656
        %v2658 = vmul.f32 %v2656, %v2657
        %v2659 = vsub.f32 1.0, %v2658
        %v2660 = vmul.f32 %v2657, %v2659
        %v2661 = vadd.f32 %v2657, %v2660
        %vm2662 = vweird.f32 %v2656
        %vm2663 = vweird.f32 %v2657
        %vm2664 = vmor %vm2662, %vm2663
        %v2665 = vsel %vm2664, %v2657, %v2661
        %v2666 = vand.u32 2147483647, %v2656
        %vm2667 = vcmp.eq.f32.partialorder %v2666, 8.507059e+37
        %v2668 = vand.u32 %v2656, 2147483648
        %v2669 = vor.u32 1.1754944e-38, %v2668
        %v2670 = vsel %vm2667, %v2669, %v2665
        %v2671 = vmul.f32 %v2646, %v2670
        %v2672 = vmin.f32 %v2671, 1.0
        %v2673 = vmax.f32 %v2672, -1.0
        %v2674 = vmul.f32 %v2259, %v2259
        %v2675 = vmin.f32 16.0, %v2674
        %v2676 = vmul.f32 %v2675, 2.1237322e-06
        %v2677 = vadd.f32 %v2676, 0.00028619796
        %v2678 = vmul.f32 %v2675, %v2677
        %v2679 = vadd.f32 %v2678, 0.0036580483
        %v2680 = vmul.f32 %v2675, %v2679
        %v2681 = vadd.f32 %v2680, 0.05243302
        %v2682 = vmul.f32 %v2675, %v2681
        %v2683 = vadd.f32 %v2682, 0.18741608
        %v2684 = vmul.f32 %v2675, %v2683
        %v2685 = vadd.f32 %v2684, 1.1283791
        %v2686 = vmul.f32 %v2259, %v2685
        %v2687 = vmul.f32 %v2675, 3.8918573e-05
        %v2688 = vadd.f32 %v2687, 0.001143296
        %v2689 = vmul.f32 %v2675, %v2688
        %v2690 = vadd.f32 %v2689, 0.014752088
        %v2691 = vmul.f32 %v2675, %v2690
        %v2692 = vadd.f32 %v2691, 0.112945676
        %v2693 = vmul.f32 %v2675, %v2692
        %v2694 = vadd.f32 %v2693, 0.4994258
        %v2695 = vmul.f32 %v2675, %v2694
        %v2696 = vadd.f32 %v2695, 1.0
        %v2697 = vrcp.pop %v2696
        %v2698 = vmul.f32 %v2696, %v2697
        %v2699 = vsub.f32 1.0, %v2698
        %v2700 = vmul.f32 %v2697, %v2699
        %v2701 = vadd.f32 %v2697, %v2700
        %vm2702 = vweird.f32 %v2696
        %vm2703 = vweird.f32 %v2697
        %vm2704 = vmor %vm2702, %vm2703
        %v2705 = vsel %vm2704, %v2697, %v2701
        %v2706 = vand.u32 2147483647, %v2696
        %vm2707 = vcmp.eq.f32.partialorder %v2706, 8.507059e+37
        %v2708 = vand.u32 %v2696, 2147483648
        %v2709 = vor.u32 1.1754944e-38, %v2708
        %v2710 = vsel %vm2707, %v2709, %v2705
        %v2711 = vmul.f32 %v2686, %v2710
        %v2712 = vmin.f32 %v2711, 1.0
        %v2713 = vmax.f32 %v2712, -1.0
        %v2714 = vmul.f32 %v2260, %v2260
        %v2715 = vmin.f32 16.0, %v2714
        %v2716 = vmul.f32 %v2715, 2.1237322e-06
        %v2717 = vadd.f32 %v2716, 0.00028619796
        %v2718 = vmul.f32 %v2715, %v2717
        %v2719 = vadd.f32 %v2718, 0.0036580483
        %v2720 = vmul.f32 %v2715, %v2719
        %v2721 = vadd.f32 %v2720, 0.05243302
        %v2722 = vmul.f32 %v2715, %v2721
        %v2723 = vadd.f32 %v2722, 0.18741608
        %v2724 = vmul.f32 %v2715, %v2723
        %v2725 = vadd.f32 %v2724, 1.1283791
        %v2726 = vmul.f32 %v2260, %v2725
        %v2727 = vmul.f32 %v2715, 3.8918573e-05
        %v2728 = vadd.f32 %v2727, 0.001143296
        %v2729 = vmul.f32 %v2715, %v2728
        %v2730 = vadd.f32 %v2729, 0.014752088
        %v2731 = vmul.f32 %v2715, %v2730
        %v2732 = vadd.f32 %v2731, 0.112945676
        %v2733 = vmul.f32 %v2715, %v2732
        %v2734 = vadd.f32 %v2733, 0.4994258
        %v2735 = vmul.f32 %v2715, %v2734
        %v2736 = vadd.f32 %v2735, 1.0
        %v2737 = vrcp.pop %v2736
        %v2738 = vmul.f32 %v2736, %v2737
        %v2739 = vsub.f32 1.0, %v2738
        %v2740 = vmul.f32 %v2737, %v2739
        %v2741 = vadd.f32 %v2737, %v2740
        %vm2742 = vweird.f32 %v2736
        %vm2743 = vweird.f32 %v2737
        %vm2744 = vmor %vm2742, %vm2743
        %v2745 = vsel %vm2744, %v2737, %v2741
        %v2746 = vand.u32 2147483647, %v2736
        %vm2747 = vcmp.eq.f32.partialorder %v2746, 8.507059e+37
        %v2748 = vand.u32 %v2736, 2147483648
        %v2749 = vor.u32 1.1754944e-38, %v2748
        %v2750 = vsel %vm2747, %v2749, %v2745
        %v2751 = vmul.f32 %v2726, %v2750
        %v2752 = vmin.f32 %v2751, 1.0
        %v2753 = vmax.f32 %v2752, -1.0
        %v2754 = vmul.f32 %v2261, %v2261
        %v2755 = vmin.f32 16.0, %v2754
        %v2756 = vmul.f32 %v2755, 2.1237322e-06
        %v2757 = vadd.f32 %v2756, 0.00028619796
        %v2758 = vmul.f32 %v2755, %v2757
        %v2759 = vadd.f32 %v2758, 0.0036580483
        %v2760 = vmul.f32 %v2755, %v2759
        %v2761 = vadd.f32 %v2760, 0.05243302
        %v2762 = vmul.f32 %v2755, %v2761
        %v2763 = vadd.f32 %v2762, 0.18741608
        %v2764 = vmul.f32 %v2755, %v2763
        %v2765 = vadd.f32 %v2764, 1.1283791
        %v2766 = vmul.f32 %v2261, %v2765
        %v2767 = vmul.f32 %v2755, 3.8918573e-05
        %v2768 = vadd.f32 %v2767, 0.001143296
        %v2769 = vmul.f32 %v2755, %v2768
        %v2770 = vadd.f32 %v2769, 0.014752088
        %v2771 = vmul.f32 %v2755, %v2770
        %v2772 = vadd.f32 %v2771, 0.112945676
        %v2773 = vmul.f32 %v2755, %v2772
        %v2774 = vadd.f32 %v2773, 0.4994258
        %v2775 = vmul.f32 %v2755, %v2774
        %v2776 = vadd.f32 %v2775, 1.0
        %v2777 = vrcp.pop %v2776
        %v2778 = vmul.f32 %v2776, %v2777
        %v2779 = vsub.f32 1.0, %v2778
        %v2780 = vmul.f32 %v2777, %v2779
        %v2781 = vadd.f32 %v2777, %v2780
        %vm2782 = vweird.f32 %v2776
        %vm2783 = vweird.f32 %v2777
        %vm2784 = vmor %vm2782, %vm2783
        %v2785 = vsel %vm2784, %v2777, %v2781
        %v2786 = vand.u32 2147483647, %v2776
        %vm2787 = vcmp.eq.f32.partialorder %v2786, 8.507059e+37
        %v2788 = vand.u32 %v2776, 2147483648
        %v2789 = vor.u32 1.1754944e-38, %v2788
        %v2790 = vsel %vm2787, %v2789, %v2785
        %v2791 = vmul.f32 %v2766, %v2790
        %v2792 = vmin.f32 %v2791, 1.0
        %v2793 = vmax.f32 %v2792, -1.0
        %v2794 = vmul.f32 %v2262, %v2262
        %v2795 = vmin.f32 16.0, %v2794
        %v2796 = vmul.f32 %v2795, 2.1237322e-06
        %v2797 = vadd.f32 %v2796, 0.00028619796
        %v2798 = vmul.f32 %v2795, %v2797
        %v2799 = vadd.f32 %v2798, 0.0036580483
        %v2800 = vmul.f32 %v2795, %v2799
        %v2801 = vadd.f32 %v2800, 0.05243302
        %v2802 = vmul.f32 %v2795, %v2801
        %v2803 = vadd.f32 %v2802, 0.18741608
        %v2804 = vmul.f32 %v2795, %v2803
        %v2805 = vadd.f32 %v2804, 1.1283791
        %v2806 = vmul.f32 %v2262, %v2805
        %v2807 = vmul.f32 %v2795, 3.8918573e-05
        %v2808 = vadd.f32 %v2807, 0.001143296
        %v2809 = vmul.f32 %v2795, %v2808
        %v2810 = vadd.f32 %v2809, 0.014752088
        %v2811 = vmul.f32 %v2795, %v2810
        %v2812 = vadd.f32 %v2811, 0.112945676
        %v2813 = vmul.f32 %v2795, %v2812
        %v2814 = vadd.f32 %v2813, 0.4994258
        %v2815 = vmul.f32 %v2795, %v2814
        %v2816 = vadd.f32 %v2815, 1.0
        %v2817 = vrcp.pop %v2816
        %v2818 = vmul.f32 %v2816, %v2817
        %v2819 = vsub.f32 1.0, %v2818
        %v2820 = vmul.f32 %v2817, %v2819
        %v2821 = vadd.f32 %v2817, %v2820
        %vm2822 = vweird.f32 %v2816
        %vm2823 = vweird.f32 %v2817
        %vm2824 = vmor %vm2822, %vm2823
        %v2825 = vsel %vm2824, %v2817, %v2821
        %v2826 = vand.u32 2147483647, %v2816
        %vm2827 = vcmp.eq.f32.partialorder %v2826, 8.507059e+37
        %v2828 = vand.u32 %v2816, 2147483648
        %v2829 = vor.u32 1.1754944e-38, %v2828
        %v2830 = vsel %vm2827, %v2829, %v2825
        %v2831 = vmul.f32 %v2806, %v2830
        %v2832 = vmin.f32 %v2831, 1.0
        %v2833 = vmax.f32 %v2832, -1.0
        %v2834 = vmul.f32 %v2263, %v2263
        %v2835 = vmin.f32 16.0, %v2834
        %v2836 = vmul.f32 %v2835, 2.1237322e-06
        %v2837 = vadd.f32 %v2836, 0.00028619796
        %v2838 = vmul.f32 %v2835, %v2837
        %v2839 = vadd.f32 %v2838, 0.0036580483
        %v2840 = vmul.f32 %v2835, %v2839
        %v2841 = vadd.f32 %v2840, 0.05243302
        %v2842 = vmul.f32 %v2835, %v2841
        %v2843 = vadd.f32 %v2842, 0.18741608
        %v2844 = vmul.f32 %v2835, %v2843
        %v2845 = vadd.f32 %v2844, 1.1283791
        %v2846 = vmul.f32 %v2263, %v2845
        %v2847 = vmul.f32 %v2835, 3.8918573e-05
        %v2848 = vadd.f32 %v2847, 0.001143296
        %v2849 = vmul.f32 %v2835, %v2848
        %v2850 = vadd.f32 %v2849, 0.014752088
        %v2851 = vmul.f32 %v2835, %v2850
        %v2852 = vadd.f32 %v2851, 0.112945676
        %v2853 = vmul.f32 %v2835, %v2852
        %v2854 = vadd.f32 %v2853, 0.4994258
        %v2855 = vmul.f32 %v2835, %v2854
        %v2856 = vadd.f32 %v2855, 1.0
        %v2857 = vrcp.pop %v2856
        %v2858 = vmul.f32 %v2856, %v2857
        %v2859 = vsub.f32 1.0, %v2858
        %v2860 = vmul.f32 %v2857, %v2859
        %v2861 = vadd.f32 %v2857, %v2860
        %vm2862 = vweird.f32 %v2856
        %vm2863 = vweird.f32 %v2857
        %vm2864 = vmor %vm2862, %vm2863
        %v2865 = vsel %vm2864, %v2857, %v2861
        %v2866 = vand.u32 2147483647, %v2856
        %vm2867 = vcmp.eq.f32.partialorder %v2866, 8.507059e+37
        %v2868 = vand.u32 %v2856, 2147483648
        %v2869 = vor.u32 1.1754944e-38, %v2868
        %v2870 = vsel %vm2867, %v2869, %v2865
        %v2871 = vmul.f32 %v2846, %v2870
        %v2872 = vmin.f32 %v2871, 1.0
        %v2873 = vmax.f32 %v2872, -1.0
        %v2874 = vmul.f32 %v2264, %v2264
        %v2875 = vmin.f32 16.0, %v2874
        %v2876 = vmul.f32 %v2875, 2.1237322e-06
        %v2877 = vadd.f32 %v2876, 0.00028619796
        %v2878 = vmul.f32 %v2875, %v2877
        %v2879 = vadd.f32 %v2878, 0.0036580483
        %v2880 = vmul.f32 %v2875, %v2879
        %v2881 = vadd.f32 %v2880, 0.05243302
        %v2882 = vmul.f32 %v2875, %v2881
        %v2883 = vadd.f32 %v2882, 0.18741608
        %v2884 = vmul.f32 %v2875, %v2883
        %v2885 = vadd.f32 %v2884, 1.1283791
        %v2886 = vmul.f32 %v2264, %v2885
        %v2887 = vmul.f32 %v2875, 3.8918573e-05
        %v2888 = vadd.f32 %v2887, 0.001143296
        %v2889 = vmul.f32 %v2875, %v2888
        %v2890 = vadd.f32 %v2889, 0.014752088
        %v2891 = vmul.f32 %v2875, %v2890
        %v2892 = vadd.f32 %v2891, 0.112945676
        %v2893 = vmul.f32 %v2875, %v2892
        %v2894 = vadd.f32 %v2893, 0.4994258
        %v2895 = vmul.f32 %v2875, %v2894
        %v2896 = vadd.f32 %v2895, 1.0
        %v2897 = vrcp.pop %v2896
        %v2898 = vmul.f32 %v2896, %v2897
        %v2899 = vsub.f32 1.0, %v2898
        %v2900 = vmul.f32 %v2897, %v2899
        %v2901 = vadd.f32 %v2897, %v2900
        %vm2902 = vweird.f32 %v2896
        %vm2903 = vweird.f32 %v2897
        %vm2904 = vmor %vm2902, %vm2903
        %v2905 = vsel %vm2904, %v2897, %v2901
        %v2906 = vand.u32 2147483647, %v2896
        %vm2907 = vcmp.eq.f32.partialorder %v2906, 8.507059e+37
        %v2908 = vand.u32 %v2896, 2147483648
        %v2909 = vor.u32 1.1754944e-38, %v2908
        %v2910 = vsel %vm2907, %v2909, %v2905
        %v2911 = vmul.f32 %v2886, %v2910
        %v2912 = vmin.f32 %v2911, 1.0
        %v2913 = vmax.f32 %v2912, -1.0
        %v2914 = vmul.f32 %v2265, %v2265
        %v2915 = vmin.f32 16.0, %v2914
        %v2916 = vmul.f32 %v2915, 2.1237322e-06
        %v2917 = vadd.f32 %v2916, 0.00028619796
        %v2918 = vmul.f32 %v2915, %v2917
        %v2919 = vadd.f32 %v2918, 0.0036580483
        %v2920 = vmul.f32 %v2915, %v2919
        %v2921 = vadd.f32 %v2920, 0.05243302
        %v2922 = vmul.f32 %v2915, %v2921
        %v2923 = vadd.f32 %v2922, 0.18741608
        %v2924 = vmul.f32 %v2915, %v2923
        %v2925 = vadd.f32 %v2924, 1.1283791
        %v2926 = vmul.f32 %v2265, %v2925
        %v2927 = vmul.f32 %v2915, 3.8918573e-05
        %v2928 = vadd.f32 %v2927, 0.001143296
        %v2929 = vmul.f32 %v2915, %v2928
        %v2930 = vadd.f32 %v2929, 0.014752088
        %v2931 = vmul.f32 %v2915, %v2930
        %v2932 = vadd.f32 %v2931, 0.112945676
        %v2933 = vmul.f32 %v2915, %v2932
        %v2934 = vadd.f32 %v2933, 0.4994258
        %v2935 = vmul.f32 %v2915, %v2934
        %v2936 = vadd.f32 %v2935, 1.0
        %v2937 = vrcp.pop %v2936
        %v2938 = vmul.f32 %v2936, %v2937
        %v2939 = vsub.f32 1.0, %v2938
        %v2940 = vmul.f32 %v2937, %v2939
        %v2941 = vadd.f32 %v2937, %v2940
        %vm2942 = vweird.f32 %v2936
        %vm2943 = vweird.f32 %v2937
        %vm2944 = vmor %vm2942, %vm2943
        %v2945 = vsel %vm2944, %v2937, %v2941
        %v2946 = vand.u32 2147483647, %v2936
        %vm2947 = vcmp.eq.f32.partialorder %v2946, 8.507059e+37
        %v2948 = vand.u32 %v2936, 2147483648
        %v2949 = vor.u32 1.1754944e-38, %v2948
        %v2950 = vsel %vm2947, %v2949, %v2945
        %v2951 = vmul.f32 %v2926, %v2950
        %v2952 = vmin.f32 %v2951, 1.0
        %v2953 = vmax.f32 %v2952, -1.0
        %v2954 = vmul.f32 %v2266, %v2266
        %v2955 = vmin.f32 16.0, %v2954
        %v2956 = vmul.f32 %v2955, 2.1237322e-06
        %v2957 = vadd.f32 %v2956, 0.00028619796
        %v2958 = vmul.f32 %v2955, %v2957
        %v2959 = vadd.f32 %v2958, 0.0036580483
        %v2960 = vmul.f32 %v2955, %v2959
        %v2961 = vadd.f32 %v2960, 0.05243302
        %v2962 = vmul.f32 %v2955, %v2961
        %v2963 = vadd.f32 %v2962, 0.18741608
        %v2964 = vmul.f32 %v2955, %v2963
        %v2965 = vadd.f32 %v2964, 1.1283791
        %v2966 = vmul.f32 %v2266, %v2965
        %v2967 = vmul.f32 %v2955, 3.8918573e-05
        %v2968 = vadd.f32 %v2967, 0.001143296
        %v2969 = vmul.f32 %v2955, %v2968
        %v2970 = vadd.f32 %v2969, 0.014752088
        %v2971 = vmul.f32 %v2955, %v2970
        %v2972 = vadd.f32 %v2971, 0.112945676
        %v2973 = vmul.f32 %v2955, %v2972
        %v2974 = vadd.f32 %v2973, 0.4994258
        %v2975 = vmul.f32 %v2955, %v2974
        %v2976 = vadd.f32 %v2975, 1.0
        %v2977 = vrcp.pop %v2976
        %v2978 = vmul.f32 %v2976, %v2977
        %v2979 = vsub.f32 1.0, %v2978
        %v2980 = vmul.f32 %v2977, %v2979
        %v2981 = vadd.f32 %v2977, %v2980
        %vm2982 = vweird.f32 %v2976
        %vm2983 = vweird.f32 %v2977
        %vm2984 = vmor %vm2982, %vm2983
        %v2985 = vsel %vm2984, %v2977, %v2981
        %v2986 = vand.u32 2147483647, %v2976
        %vm2987 = vcmp.eq.f32.partialorder %v2986, 8.507059e+37
        %v2988 = vand.u32 %v2976, 2147483648
        %v2989 = vor.u32 1.1754944e-38, %v2988
        %v2990 = vsel %vm2987, %v2989, %v2985
        %v2991 = vmul.f32 %v2966, %v2990
        %v2992 = vmin.f32 %v2991, 1.0
        %v2993 = vmax.f32 %v2992, -1.0
        %v2994 = vmul.f32 %v2267, %v2267
        %v2995 = vmin.f32 16.0, %v2994
        %v2996 = vmul.f32 %v2995, 2.1237322e-06
        %v2997 = vadd.f32 %v2996, 0.00028619796
        %v2998 = vmul.f32 %v2995, %v2997
        %v2999 = vadd.f32 %v2998, 0.0036580483
        %v3000 = vmul.f32 %v2995, %v2999
        %v3001 = vadd.f32 %v3000, 0.05243302
        %v3002 = vmul.f32 %v2995, %v3001
        %v3003 = vadd.f32 %v3002, 0.18741608
        %v3004 = vmul.f32 %v2995, %v3003
        %v3005 = vadd.f32 %v3004, 1.1283791
        %v3006 = vmul.f32 %v2267, %v3005
        %v3007 = vmul.f32 %v2995, 3.8918573e-05
        %v3008 = vadd.f32 %v3007, 0.001143296
        %v3009 = vmul.f32 %v2995, %v3008
        %v3010 = vadd.f32 %v3009, 0.014752088
        %v3011 = vmul.f32 %v2995, %v3010
        %v3012 = vadd.f32 %v3011, 0.112945676
        %v3013 = vmul.f32 %v2995, %v3012
        %v3014 = vadd.f32 %v3013, 0.4994258
        %v3015 = vmul.f32 %v2995, %v3014
        %v3016 = vadd.f32 %v3015, 1.0
        %v3017 = vrcp.pop %v3016
        %v3018 = vmul.f32 %v3016, %v3017
        %v3019 = vsub.f32 1.0, %v3018
        %v3020 = vmul.f32 %v3017, %v3019
        %v3021 = vadd.f32 %v3017, %v3020
        %vm3022 = vweird.f32 %v3016
        %vm3023 = vweird.f32 %v3017
        %vm3024 = vmor %vm3022, %vm3023
        %v3025 = vsel %vm3024, %v3017, %v3021
        %v3026 = vand.u32 2147483647, %v3016
        %vm3027 = vcmp.eq.f32.partialorder %v3026, 8.507059e+37
        %v3028 = vand.u32 %v3016, 2147483648
        %v3029 = vor.u32 1.1754944e-38, %v3028
        %v3030 = vsel %vm3027, %v3029, %v3025
        %v3031 = vmul.f32 %v3006, %v3030
        %v3032 = vmin.f32 %v3031, 1.0
        %v3033 = vmax.f32 %v3032, -1.0
        %v3034 = vmul.f32 %v2268, %v2268
        %v3035 = vmin.f32 16.0, %v3034
        %v3036 = vmul.f32 %v3035, 2.1237322e-06
        %v3037 = vadd.f32 %v3036, 0.00028619796
        %v3038 = vmul.f32 %v3035, %v3037
        %v3039 = vadd.f32 %v3038, 0.0036580483
        %v3040 = vmul.f32 %v3035, %v3039
        %v3041 = vadd.f32 %v3040, 0.05243302
        %v3042 = vmul.f32 %v3035, %v3041
        %v3043 = vadd.f32 %v3042, 0.18741608
        %v3044 = vmul.f32 %v3035, %v3043
        %v3045 = vadd.f32 %v3044, 1.1283791
        %v3046 = vmul.f32 %v2268, %v3045
        %v3047 = vmul.f32 %v3035, 3.8918573e-05
        %v3048 = vadd.f32 %v3047, 0.001143296
        %v3049 = vmul.f32 %v3035, %v3048
        %v3050 = vadd.f32 %v3049, 0.014752088
        %v3051 = vmul.f32 %v3035, %v3050
        %v3052 = vadd.f32 %v3051, 0.112945676
        %v3053 = vmul.f32 %v3035, %v3052
        %v3054 = vadd.f32 %v3053, 0.4994258
        %v3055 = vmul.f32 %v3035, %v3054
        %v3056 = vadd.f32 %v3055, 1.0
        %v3057 = vrcp.pop %v3056
        %v3058 = vmul.f32 %v3056, %v3057
        %v3059 = vsub.f32 1.0, %v3058
        %v3060 = vmul.f32 %v3057, %v3059
        %v3061 = vadd.f32 %v3057, %v3060
        %vm3062 = vweird.f32 %v3056
        %vm3063 = vweird.f32 %v3057
        %vm3064 = vmor %vm3062, %vm3063
        %v3065 = vsel %vm3064, %v3057, %v3061
        %v3066 = vand.u32 2147483647, %v3056
        %vm3067 = vcmp.eq.f32.partialorder %v3066, 8.507059e+37
        %v3068 = vand.u32 %v3056, 2147483648
        %v3069 = vor.u32 1.1754944e-38, %v3068
        %v3070 = vsel %vm3067, %v3069, %v3065
        %v3071 = vmul.f32 %v3046, %v3070
        %v3072 = vmin.f32 %v3071, 1.0
        %v3073 = vmax.f32 %v3072, -1.0
        %v3074 = vmul.f32 %v2269, %v2269
        %v3075 = vmin.f32 16.0, %v3074
        %v3076 = vmul.f32 %v3075, 2.1237322e-06
        %v3077 = vadd.f32 %v3076, 0.00028619796
        %v3078 = vmul.f32 %v3075, %v3077
        %v3079 = vadd.f32 %v3078, 0.0036580483
        %v3080 = vmul.f32 %v3075, %v3079
        %v3081 = vadd.f32 %v3080, 0.05243302
        %v3082 = vmul.f32 %v3075, %v3081
        %v3083 = vadd.f32 %v3082, 0.18741608
        %v3084 = vmul.f32 %v3075, %v3083
        %v3085 = vadd.f32 %v3084, 1.1283791
        %v3086 = vmul.f32 %v2269, %v3085
        %v3087 = vmul.f32 %v3075, 3.8918573e-05
        %v3088 = vadd.f32 %v3087, 0.001143296
        %v3089 = vmul.f32 %v3075, %v3088
        %v3090 = vadd.f32 %v3089, 0.014752088
        %v3091 = vmul.f32 %v3075, %v3090
        %v3092 = vadd.f32 %v3091, 0.112945676
        %v3093 = vmul.f32 %v3075, %v3092
        %v3094 = vadd.f32 %v3093, 0.4994258
        %v3095 = vmul.f32 %v3075, %v3094
        %v3096 = vadd.f32 %v3095, 1.0
        %v3097 = vrcp.pop %v3096
        %v3098 = vmul.f32 %v3096, %v3097
        %v3099 = vsub.f32 1.0, %v3098
        %v3100 = vmul.f32 %v3097, %v3099
        %v3101 = vadd.f32 %v3097, %v3100
        %vm3102 = vweird.f32 %v3096
        %vm3103 = vweird.f32 %v3097
        %vm3104 = vmor %vm3102, %vm3103
        %v3105 = vsel %vm3104, %v3097, %v3101
        %v3106 = vand.u32 2147483647, %v3096
        %vm3107 = vcmp.eq.f32.partialorder %v3106, 8.507059e+37
        %v3108 = vand.u32 %v3096, 2147483648
        %v3109 = vor.u32 1.1754944e-38, %v3108
        %v3110 = vsel %vm3107, %v3109, %v3105
        %v3111 = vmul.f32 %v3086, %v3110
        %v3112 = vmin.f32 %v3111, 1.0
        %v3113 = vmax.f32 %v3112, -1.0
        %v3114 = vmul.f32 %v2270, %v2270
        %v3115 = vmin.f32 16.0, %v3114
        %v3116 = vmul.f32 %v3115, 2.1237322e-06
        %v3117 = vadd.f32 %v3116, 0.00028619796
        %v3118 = vmul.f32 %v3115, %v3117
        %v3119 = vadd.f32 %v3118, 0.0036580483
        %v3120 = vmul.f32 %v3115, %v3119
        %v3121 = vadd.f32 %v3120, 0.05243302
        %v3122 = vmul.f32 %v3115, %v3121
        %v3123 = vadd.f32 %v3122, 0.18741608
        %v3124 = vmul.f32 %v3115, %v3123
        %v3125 = vadd.f32 %v3124, 1.1283791
        %v3126 = vmul.f32 %v2270, %v3125
        %v3127 = vmul.f32 %v3115, 3.8918573e-05
        %v3128 = vadd.f32 %v3127, 0.001143296
        %v3129 = vmul.f32 %v3115, %v3128
        %v3130 = vadd.f32 %v3129, 0.014752088
        %v3131 = vmul.f32 %v3115, %v3130
        %v3132 = vadd.f32 %v3131, 0.112945676
        %v3133 = vmul.f32 %v3115, %v3132
        %v3134 = vadd.f32 %v3133, 0.4994258
        %v3135 = vmul.f32 %v3115, %v3134
        %v3136 = vadd.f32 %v3135, 1.0
        %v3137 = vrcp.pop %v3136
        %v3138 = vmul.f32 %v3136, %v3137
        %v3139 = vsub.f32 1.0, %v3138
        %v3140 = vmul.f32 %v3137, %v3139
        %v3141 = vadd.f32 %v3137, %v3140
        %vm3142 = vweird.f32 %v3136
        %vm3143 = vweird.f32 %v3137
        %vm3144 = vmor %vm3142, %vm3143
        %v3145 = vsel %vm3144, %v3137, %v3141
        %v3146 = vand.u32 2147483647, %v3136
        %vm3147 = vcmp.eq.f32.partialorder %v3146, 8.507059e+37
        %v3148 = vand.u32 %v3136, 2147483648
        %v3149 = vor.u32 1.1754944e-38, %v3148
        %v3150 = vsel %vm3147, %v3149, %v3145
        %v3151 = vmul.f32 %v3126, %v3150
        %v3152 = vmin.f32 %v3151, 1.0
        %v3153 = vmax.f32 %v3152, -1.0
        %v3154 = vmul.f32 %v2271, %v2271
        %v3155 = vmin.f32 16.0, %v3154
        %v3156 = vmul.f32 %v3155, 2.1237322e-06
        %v3157 = vadd.f32 %v3156, 0.00028619796
        %v3158 = vmul.f32 %v3155, %v3157
        %v3159 = vadd.f32 %v3158, 0.0036580483
        %v3160 = vmul.f32 %v3155, %v3159
        %v3161 = vadd.f32 %v3160, 0.05243302
        %v3162 = vmul.f32 %v3155, %v3161
        %v3163 = vadd.f32 %v3162, 0.18741608
        %v3164 = vmul.f32 %v3155, %v3163
        %v3165 = vadd.f32 %v3164, 1.1283791
        %v3166 = vmul.f32 %v2271, %v3165
        %v3167 = vmul.f32 %v3155, 3.8918573e-05
        %v3168 = vadd.f32 %v3167, 0.001143296
        %v3169 = vmul.f32 %v3155, %v3168
        %v3170 = vadd.f32 %v3169, 0.014752088
        %v3171 = vmul.f32 %v3155, %v3170
        %v3172 = vadd.f32 %v3171, 0.112945676
        %v3173 = vmul.f32 %v3155, %v3172
        %v3174 = vadd.f32 %v3173, 0.4994258
        %v3175 = vmul.f32 %v3155, %v3174
        %v3176 = vadd.f32 %v3175, 1.0
        %v3177 = vrcp.pop %v3176
        %v3178 = vmul.f32 %v3176, %v3177
        %v3179 = vsub.f32 1.0, %v3178
        %v3180 = vmul.f32 %v3177, %v3179
        %v3181 = vadd.f32 %v3177, %v3180
        %vm3182 = vweird.f32 %v3176
        %vm3183 = vweird.f32 %v3177
        %vm3184 = vmor %vm3182, %vm3183
        %v3185 = vsel %vm3184, %v3177, %v3181
        %v3186 = vand.u32 2147483647, %v3176
        %vm3187 = vcmp.eq.f32.partialorder %v3186, 8.507059e+37
        %v3188 = vand.u32 %v3176, 2147483648
        %v3189 = vor.u32 1.1754944e-38, %v3188
        %v3190 = vsel %vm3187, %v3189, %v3185
        %v3191 = vmul.f32 %v3166, %v3190
        %v3192 = vmin.f32 %v3191, 1.0
        %v3193 = vmax.f32 %v3192, -1.0
        %v3194 = vmul.f32 %v2272, %v2272
        %v3195 = vmin.f32 16.0, %v3194
        %v3196 = vmul.f32 %v3195, 2.1237322e-06
        %v3197 = vadd.f32 %v3196, 0.00028619796
        %v3198 = vmul.f32 %v3195, %v3197
        %v3199 = vadd.f32 %v3198, 0.0036580483
        %v3200 = vmul.f32 %v3195, %v3199
        %v3201 = vadd.f32 %v3200, 0.05243302
        %v3202 = vmul.f32 %v3195, %v3201
        %v3203 = vadd.f32 %v3202, 0.18741608
        %v3204 = vmul.f32 %v3195, %v3203
        %v3205 = vadd.f32 %v3204, 1.1283791
        %v3206 = vmul.f32 %v2272, %v3205
        %v3207 = vmul.f32 %v3195, 3.8918573e-05
        %v3208 = vadd.f32 %v3207, 0.001143296
        %v3209 = vmul.f32 %v3195, %v3208
        %v3210 = vadd.f32 %v3209, 0.014752088
        %v3211 = vmul.f32 %v3195, %v3210
        %v3212 = vadd.f32 %v3211, 0.112945676
        %v3213 = vmul.f32 %v3195, %v3212
        %v3214 = vadd.f32 %v3213, 0.4994258
        %v3215 = vmul.f32 %v3195, %v3214
        %v3216 = vadd.f32 %v3215, 1.0
        %v3217 = vrcp.pop %v3216
        %v3218 = vmul.f32 %v3216, %v3217
        %v3219 = vsub.f32 1.0, %v3218
        %v3220 = vmul.f32 %v3217, %v3219
        %v3221 = vadd.f32 %v3217, %v3220
        %vm3222 = vweird.f32 %v3216
        %vm3223 = vweird.f32 %v3217
        %vm3224 = vmor %vm3222, %vm3223
        %v3225 = vsel %vm3224, %v3217, %v3221
        %v3226 = vand.u32 2147483647, %v3216
        %vm3227 = vcmp.eq.f32.partialorder %v3226, 8.507059e+37
        %v3228 = vand.u32 %v3216, 2147483648
        %v3229 = vor.u32 1.1754944e-38, %v3228
        %v3230 = vsel %vm3227, %v3229, %v3225
        %v3231 = vmul.f32 %v3206, %v3230
        %v3232 = vmin.f32 %v3231, 1.0
        %v3233 = vmax.f32 %v3232, -1.0
        %v3234 = vmul.f32 %v2273, %v2273
        %v3235 = vmin.f32 16.0, %v3234
        %v3236 = vmul.f32 %v3235, 2.1237322e-06
        %v3237 = vadd.f32 %v3236, 0.00028619796
        %v3238 = vmul.f32 %v3235, %v3237
        %v3239 = vadd.f32 %v3238, 0.0036580483
        %v3240 = vmul.f32 %v3235, %v3239
        %v3241 = vadd.f32 %v3240, 0.05243302
        %v3242 = vmul.f32 %v3235, %v3241
        %v3243 = vadd.f32 %v3242, 0.18741608
        %v3244 = vmul.f32 %v3235, %v3243
        %v3245 = vadd.f32 %v3244, 1.1283791
        %v3246 = vmul.f32 %v2273, %v3245
        %v3247 = vmul.f32 %v3235, 3.8918573e-05
        %v3248 = vadd.f32 %v3247, 0.001143296
        %v3249 = vmul.f32 %v3235, %v3248
        %v3250 = vadd.f32 %v3249, 0.014752088
        %v3251 = vmul.f32 %v3235, %v3250
        %v3252 = vadd.f32 %v3251, 0.112945676
        %v3253 = vmul.f32 %v3235, %v3252
        %v3254 = vadd.f32 %v3253, 0.4994258
        %v3255 = vmul.f32 %v3235, %v3254
        %v3256 = vadd.f32 %v3255, 1.0
        %v3257 = vrcp.pop %v3256
        %v3258 = vmul.f32 %v3256, %v3257
        %v3259 = vsub.f32 1.0, %v3258
        %v3260 = vmul.f32 %v3257, %v3259
        %v3261 = vadd.f32 %v3257, %v3260
        %vm3262 = vweird.f32 %v3256
        %vm3263 = vweird.f32 %v3257
        %vm3264 = vmor %vm3262, %vm3263
        %v3265 = vsel %vm3264, %v3257, %v3261
        %v3266 = vand.u32 2147483647, %v3256
        %vm3267 = vcmp.eq.f32.partialorder %v3266, 8.507059e+37
        %v3268 = vand.u32 %v3256, 2147483648
        %v3269 = vor.u32 1.1754944e-38, %v3268
        %v3270 = vsel %vm3267, %v3269, %v3265
        %v3271 = vmul.f32 %v3246, %v3270
        %v3272 = vmin.f32 %v3271, 1.0
        %v3273 = vmax.f32 %v3272, -1.0
        %v3274 = vmul.f32 %v2274, %v2274
        %v3275 = vmin.f32 16.0, %v3274
        %v3276 = vmul.f32 %v3275, 2.1237322e-06
        %v3277 = vadd.f32 %v3276, 0.00028619796
        %v3278 = vmul.f32 %v3275, %v3277
        %v3279 = vadd.f32 %v3278, 0.0036580483
        %v3280 = vmul.f32 %v3275, %v3279
        %v3281 = vadd.f32 %v3280, 0.05243302
        %v3282 = vmul.f32 %v3275, %v3281
        %v3283 = vadd.f32 %v3282, 0.18741608
        %v3284 = vmul.f32 %v3275, %v3283
        %v3285 = vadd.f32 %v3284, 1.1283791
        %v3286 = vmul.f32 %v2274, %v3285
        %v3287 = vmul.f32 %v3275, 3.8918573e-05
        %v3288 = vadd.f32 %v3287, 0.001143296
        %v3289 = vmul.f32 %v3275, %v3288
        %v3290 = vadd.f32 %v3289, 0.014752088
        %v3291 = vmul.f32 %v3275, %v3290
        %v3292 = vadd.f32 %v3291, 0.112945676
        %v3293 = vmul.f32 %v3275, %v3292
        %v3294 = vadd.f32 %v3293, 0.4994258
        %v3295 = vmul.f32 %v3275, %v3294
        %v3296 = vadd.f32 %v3295, 1.0
        %v3297 = vrcp.pop %v3296
        %v3298 = vmul.f32 %v3296, %v3297
        %v3299 = vsub.f32 1.0, %v3298
        %v3300 = vmul.f32 %v3297, %v3299
        %v3301 = vadd.f32 %v3297, %v3300
        %vm3302 = vweird.f32 %v3296
        %vm3303 = vweird.f32 %v3297
        %vm3304 = vmor %vm3302, %vm3303
        %v3305 = vsel %vm3304, %v3297, %v3301
        %v3306 = vand.u32 2147483647, %v3296
        %vm3307 = vcmp.eq.f32.partialorder %v3306, 8.507059e+37
        %v3308 = vand.u32 %v3296, 2147483648
        %v3309 = vor.u32 1.1754944e-38, %v3308
        %v3310 = vsel %vm3307, %v3309, %v3305
        %v3311 = vmul.f32 %v3286, %v3310
        %v3312 = vmin.f32 %v3311, 1.0
        %v3313 = vmax.f32 %v3312, -1.0
        %v3314 = vmul.f32 %v2275, %v2275
        %v3315 = vmin.f32 16.0, %v3314
        %v3316 = vmul.f32 %v3315, 2.1237322e-06
        %v3317 = vadd.f32 %v3316, 0.00028619796
        %v3318 = vmul.f32 %v3315, %v3317
        %v3319 = vadd.f32 %v3318, 0.0036580483
        %v3320 = vmul.f32 %v3315, %v3319
        %v3321 = vadd.f32 %v3320, 0.05243302
        %v3322 = vmul.f32 %v3315, %v3321
        %v3323 = vadd.f32 %v3322, 0.18741608
        %v3324 = vmul.f32 %v3315, %v3323
        %v3325 = vadd.f32 %v3324, 1.1283791
        %v3326 = vmul.f32 %v2275, %v3325
        %v3327 = vmul.f32 %v3315, 3.8918573e-05
        %v3328 = vadd.f32 %v3327, 0.001143296
        %v3329 = vmul.f32 %v3315, %v3328
        %v3330 = vadd.f32 %v3329, 0.014752088
        %v3331 = vmul.f32 %v3315, %v3330
        %v3332 = vadd.f32 %v3331, 0.112945676
        %v3333 = vmul.f32 %v3315, %v3332
        %v3334 = vadd.f32 %v3333, 0.4994258
        %v3335 = vmul.f32 %v3315, %v3334
        %v3336 = vadd.f32 %v3335, 1.0
        %v3337 = vrcp.pop %v3336
        %v3338 = vmul.f32 %v3336, %v3337
        %v3339 = vsub.f32 1.0, %v3338
        %v3340 = vmul.f32 %v3337, %v3339
        %v3341 = vadd.f32 %v3337, %v3340
        %vm3342 = vweird.f32 %v3336
        %vm3343 = vweird.f32 %v3337
        %vm3344 = vmor %vm3342, %vm3343
        %v3345 = vsel %vm3344, %v3337, %v3341
        %v3346 = vand.u32 2147483647, %v3336
        %vm3347 = vcmp.eq.f32.partialorder %v3346, 8.507059e+37
        %v3348 = vand.u32 %v3336, 2147483648
        %v3349 = vor.u32 1.1754944e-38, %v3348
        %v3350 = vsel %vm3347, %v3349, %v3345
        %v3351 = vmul.f32 %v3326, %v3350
        %v3352 = vmin.f32 %v3351, 1.0
        %v3353 = vmax.f32 %v3352, -1.0
        %v3354 = vmul.f32 %v2276, %v2276
        %v3355 = vmin.f32 16.0, %v3354
        %v3356 = vmul.f32 %v3355, 2.1237322e-06
        %v3357 = vadd.f32 %v3356, 0.00028619796
        %v3358 = vmul.f32 %v3355, %v3357
        %v3359 = vadd.f32 %v3358, 0.0036580483
        %v3360 = vmul.f32 %v3355, %v3359
        %v3361 = vadd.f32 %v3360, 0.05243302
        %v3362 = vmul.f32 %v3355, %v3361
        %v3363 = vadd.f32 %v3362, 0.18741608
        %v3364 = vmul.f32 %v3355, %v3363
        %v3365 = vadd.f32 %v3364, 1.1283791
        %v3366 = vmul.f32 %v2276, %v3365
        %v3367 = vmul.f32 %v3355, 3.8918573e-05
        %v3368 = vadd.f32 %v3367, 0.001143296
        %v3369 = vmul.f32 %v3355, %v3368
        %v3370 = vadd.f32 %v3369, 0.014752088
        %v3371 = vmul.f32 %v3355, %v3370
        %v3372 = vadd.f32 %v3371, 0.112945676
        %v3373 = vmul.f32 %v3355, %v3372
        %v3374 = vadd.f32 %v3373, 0.4994258
        %v3375 = vmul.f32 %v3355, %v3374
        %v3376 = vadd.f32 %v3375, 1.0
        %v3377 = vrcp.pop %v3376
        %v3378 = vmul.f32 %v3376, %v3377
        %v3379 = vsub.f32 1.0, %v3378
        %v3380 = vmul.f32 %v3377, %v3379
        %v3381 = vadd.f32 %v3377, %v3380
        %vm3382 = vweird.f32 %v3376
        %vm3383 = vweird.f32 %v3377
        %vm3384 = vmor %vm3382, %vm3383
        %v3385 = vsel %vm3384, %v3377, %v3381
        %v3386 = vand.u32 2147483647, %v3376
        %vm3387 = vcmp.eq.f32.partialorder %v3386, 8.507059e+37
        %v3388 = vand.u32 %v3376, 2147483648
        %v3389 = vor.u32 1.1754944e-38, %v3388
        %v3390 = vsel %vm3387, %v3389, %v3385
        %v3391 = vmul.f32 %v3366, %v3390
        %v3392 = vmin.f32 %v3391, 1.0
        %v3393 = vmax.f32 %v3392, -1.0
        %v3394 = vmul.f32 %v2277, %v2277
        %v3395 = vmin.f32 16.0, %v3394
        %v3396 = vmul.f32 %v3395, 2.1237322e-06
        %v3397 = vadd.f32 %v3396, 0.00028619796
        %v3398 = vmul.f32 %v3395, %v3397
        %v3399 = vadd.f32 %v3398, 0.0036580483
        %v3400 = vmul.f32 %v3395, %v3399
        %v3401 = vadd.f32 %v3400, 0.05243302
        %v3402 = vmul.f32 %v3395, %v3401
        %v3403 = vadd.f32 %v3402, 0.18741608
        %v3404 = vmul.f32 %v3395, %v3403
        %v3405 = vadd.f32 %v3404, 1.1283791
        %v3406 = vmul.f32 %v2277, %v3405
        %v3407 = vmul.f32 %v3395, 3.8918573e-05
        %v3408 = vadd.f32 %v3407, 0.001143296
        %v3409 = vmul.f32 %v3395, %v3408
        %v3410 = vadd.f32 %v3409, 0.014752088
        %v3411 = vmul.f32 %v3395, %v3410
        %v3412 = vadd.f32 %v3411, 0.112945676
        %v3413 = vmul.f32 %v3395, %v3412
        %v3414 = vadd.f32 %v3413, 0.4994258
        %v3415 = vmul.f32 %v3395, %v3414
        %v3416 = vadd.f32 %v3415, 1.0
        %v3417 = vrcp.pop %v3416
        %v3418 = vmul.f32 %v3416, %v3417
        %v3419 = vsub.f32 1.0, %v3418
        %v3420 = vmul.f32 %v3417, %v3419
        %v3421 = vadd.f32 %v3417, %v3420
        %vm3422 = vweird.f32 %v3416
        %vm3423 = vweird.f32 %v3417
        %vm3424 = vmor %vm3422, %vm3423
        %v3425 = vsel %vm3424, %v3417, %v3421
        %v3426 = vand.u32 2147483647, %v3416
        %vm3427 = vcmp.eq.f32.partialorder %v3426, 8.507059e+37
        %v3428 = vand.u32 %v3416, 2147483648
        %v3429 = vor.u32 1.1754944e-38, %v3428
        %v3430 = vsel %vm3427, %v3429, %v3425
        %v3431 = vmul.f32 %v3406, %v3430
        %v3432 = vmin.f32 %v3431, 1.0
        %v3433 = vmax.f32 %v3432, -1.0
        %v3434 = vmul.f32 %v2278, %v2278
        %v3435 = vmin.f32 16.0, %v3434
        %v3436 = vmul.f32 %v3435, 2.1237322e-06
        %v3437 = vadd.f32 %v3436, 0.00028619796
        %v3438 = vmul.f32 %v3435, %v3437
        %v3439 = vadd.f32 %v3438, 0.0036580483
        %v3440 = vmul.f32 %v3435, %v3439
        %v3441 = vadd.f32 %v3440, 0.05243302
        %v3442 = vmul.f32 %v3435, %v3441
        %v3443 = vadd.f32 %v3442, 0.18741608
        %v3444 = vmul.f32 %v3435, %v3443
        %v3445 = vadd.f32 %v3444, 1.1283791
        %v3446 = vmul.f32 %v2278, %v3445
        %v3447 = vmul.f32 %v3435, 3.8918573e-05
        %v3448 = vadd.f32 %v3447, 0.001143296
        %v3449 = vmul.f32 %v3435, %v3448
        %v3450 = vadd.f32 %v3449, 0.014752088
        %v3451 = vmul.f32 %v3435, %v3450
        %v3452 = vadd.f32 %v3451, 0.112945676
        %v3453 = vmul.f32 %v3435, %v3452
        %v3454 = vadd.f32 %v3453, 0.4994258
        %v3455 = vmul.f32 %v3435, %v3454
        %v3456 = vadd.f32 %v3455, 1.0
        %v3457 = vrcp.pop %v3456
        %v3458 = vmul.f32 %v3456, %v3457
        %v3459 = vsub.f32 1.0, %v3458
        %v3460 = vmul.f32 %v3457, %v3459
        %v3461 = vadd.f32 %v3457, %v3460
        %vm3462 = vweird.f32 %v3456
        %vm3463 = vweird.f32 %v3457
        %vm3464 = vmor %vm3462, %vm3463
        %v3465 = vsel %vm3464, %v3457, %v3461
        %v3466 = vand.u32 2147483647, %v3456
        %vm3467 = vcmp.eq.f32.partialorder %v3466, 8.507059e+37
        %v3468 = vand.u32 %v3456, 2147483648
        %v3469 = vor.u32 1.1754944e-38, %v3468
        %v3470 = vsel %vm3467, %v3469, %v3465
        %v3471 = vmul.f32 %v3446, %v3470
        %v3472 = vmin.f32 %v3471, 1.0
        %v3473 = vmax.f32 %v3472, -1.0
        %v3474 = vmul.f32 %v2279, %v2279
        %v3475 = vmin.f32 16.0, %v3474
        %v3476 = vmul.f32 %v3475, 2.1237322e-06
        %v3477 = vadd.f32 %v3476, 0.00028619796
        %v3478 = vmul.f32 %v3475, %v3477
        %v3479 = vadd.f32 %v3478, 0.0036580483
        %v3480 = vmul.f32 %v3475, %v3479
        %v3481 = vadd.f32 %v3480, 0.05243302
        %v3482 = vmul.f32 %v3475, %v3481
        %v3483 = vadd.f32 %v3482, 0.18741608
        %v3484 = vmul.f32 %v3475, %v3483
        %v3485 = vadd.f32 %v3484, 1.1283791
        %v3486 = vmul.f32 %v2279, %v3485
        %v3487 = vmul.f32 %v3475, 3.8918573e-05
        %v3488 = vadd.f32 %v3487, 0.001143296
        %v3489 = vmul.f32 %v3475, %v3488
        %v3490 = vadd.f32 %v3489, 0.014752088
        %v3491 = vmul.f32 %v3475, %v3490
        %v3492 = vadd.f32 %v3491, 0.112945676
        %v3493 = vmul.f32 %v3475, %v3492
        %v3494 = vadd.f32 %v3493, 0.4994258
        %v3495 = vmul.f32 %v3475, %v3494
        %v3496 = vadd.f32 %v3495, 1.0
        %v3497 = vrcp.pop %v3496
        %v3498 = vmul.f32 %v3496, %v3497
        %v3499 = vsub.f32 1.0, %v3498
        %v3500 = vmul.f32 %v3497, %v3499
        %v3501 = vadd.f32 %v3497, %v3500
        %vm3502 = vweird.f32 %v3496
        %vm3503 = vweird.f32 %v3497
        %vm3504 = vmor %vm3502, %vm3503
        %v3505 = vsel %vm3504, %v3497, %v3501
        %v3506 = vand.u32 2147483647, %v3496
        %vm3507 = vcmp.eq.f32.partialorder %v3506, 8.507059e+37
        %v3508 = vand.u32 %v3496, 2147483648
        %v3509 = vor.u32 1.1754944e-38, %v3508
        %v3510 = vsel %vm3507, %v3509, %v3505
        %v3511 = vmul.f32 %v3486, %v3510
        %v3512 = vmin.f32 %v3511, 1.0
        %v3513 = vmax.f32 %v3512, -1.0
        %v3514 = vmul.f32 %v2280, %v2280
        %v3515 = vmin.f32 16.0, %v3514
        %v3516 = vmul.f32 %v3515, 2.1237322e-06
        %v3517 = vadd.f32 %v3516, 0.00028619796
        %v3518 = vmul.f32 %v3515, %v3517
        %v3519 = vadd.f32 %v3518, 0.0036580483
        %v3520 = vmul.f32 %v3515, %v3519
        %v3521 = vadd.f32 %v3520, 0.05243302
        %v3522 = vmul.f32 %v3515, %v3521
        %v3523 = vadd.f32 %v3522, 0.18741608
        %v3524 = vmul.f32 %v3515, %v3523
        %v3525 = vadd.f32 %v3524, 1.1283791
        %v3526 = vmul.f32 %v2280, %v3525
        %v3527 = vmul.f32 %v3515, 3.8918573e-05
        %v3528 = vadd.f32 %v3527, 0.001143296
        %v3529 = vmul.f32 %v3515, %v3528
        %v3530 = vadd.f32 %v3529, 0.014752088
        %v3531 = vmul.f32 %v3515, %v3530
        %v3532 = vadd.f32 %v3531, 0.112945676
        %v3533 = vmul.f32 %v3515, %v3532
        %v3534 = vadd.f32 %v3533, 0.4994258
        %v3535 = vmul.f32 %v3515, %v3534
        %v3536 = vadd.f32 %v3535, 1.0
        %v3537 = vrcp.pop %v3536
        %v3538 = vmul.f32 %v3536, %v3537
        %v3539 = vsub.f32 1.0, %v3538
        %v3540 = vmul.f32 %v3537, %v3539
        %v3541 = vadd.f32 %v3537, %v3540
        %vm3542 = vweird.f32 %v3536
        %vm3543 = vweird.f32 %v3537
        %vm3544 = vmor %vm3542, %vm3543
        %v3545 = vsel %vm3544, %v3537, %v3541
        %v3546 = vand.u32 2147483647, %v3536
        %vm3547 = vcmp.eq.f32.partialorder %v3546, 8.507059e+37
        %v3548 = vand.u32 %v3536, 2147483648
        %v3549 = vor.u32 1.1754944e-38, %v3548
        %v3550 = vsel %vm3547, %v3549, %v3545
        %v3551 = vmul.f32 %v3526, %v3550
        %v3552 = vmin.f32 %v3551, 1.0
        %v3553 = vmax.f32 %v3552, -1.0
        %v3554 = vmul.f32 %v2281, %v2281
        %v3555 = vmin.f32 16.0, %v3554
        %v3556 = vmul.f32 %v3555, 2.1237322e-06
        %v3557 = vadd.f32 %v3556, 0.00028619796
        %v3558 = vmul.f32 %v3555, %v3557
        %v3559 = vadd.f32 %v3558, 0.0036580483
        %v3560 = vmul.f32 %v3555, %v3559
        %v3561 = vadd.f32 %v3560, 0.05243302
        %v3562 = vmul.f32 %v3555, %v3561
        %v3563 = vadd.f32 %v3562, 0.18741608
        %v3564 = vmul.f32 %v3555, %v3563
        %v3565 = vadd.f32 %v3564, 1.1283791
        %v3566 = vmul.f32 %v2281, %v3565
        %v3567 = vmul.f32 %v3555, 3.8918573e-05
        %v3568 = vadd.f32 %v3567, 0.001143296
        %v3569 = vmul.f32 %v3555, %v3568
        %v3570 = vadd.f32 %v3569, 0.014752088
        %v3571 = vmul.f32 %v3555, %v3570
        %v3572 = vadd.f32 %v3571, 0.112945676
        %v3573 = vmul.f32 %v3555, %v3572
        %v3574 = vadd.f32 %v3573, 0.4994258
        %v3575 = vmul.f32 %v3555, %v3574
        %v3576 = vadd.f32 %v3575, 1.0
        %v3577 = vrcp.pop %v3576
        %v3578 = vmul.f32 %v3576, %v3577
        %v3579 = vsub.f32 1.0, %v3578
        %v3580 = vmul.f32 %v3577, %v3579
        %v3581 = vadd.f32 %v3577, %v3580
        %vm3582 = vweird.f32 %v3576
        %vm3583 = vweird.f32 %v3577
        %vm3584 = vmor %vm3582, %vm3583
        %v3585 = vsel %vm3584, %v3577, %v3581
        %v3586 = vand.u32 2147483647, %v3576
        %vm3587 = vcmp.eq.f32.partialorder %v3586, 8.507059e+37
        %v3588 = vand.u32 %v3576, 2147483648
        %v3589 = vor.u32 1.1754944e-38, %v3588
        %v3590 = vsel %vm3587, %v3589, %v3585
        %v3591 = vmul.f32 %v3566, %v3590
        %v3592 = vmin.f32 %v3591, 1.0
        %v3593 = vmax.f32 %v3592, -1.0
        %v3594 = vmul.f32 %v2282, %v2282
        %v3595 = vmin.f32 16.0, %v3594
        %v3596 = vmul.f32 %v3595, 2.1237322e-06
        %v3597 = vadd.f32 %v3596, 0.00028619796
        %v3598 = vmul.f32 %v3595, %v3597
        %v3599 = vadd.f32 %v3598, 0.0036580483
        %v3600 = vmul.f32 %v3595, %v3599
        %v3601 = vadd.f32 %v3600, 0.05243302
        %v3602 = vmul.f32 %v3595, %v3601
        %v3603 = vadd.f32 %v3602, 0.18741608
        %v3604 = vmul.f32 %v3595, %v3603
        %v3605 = vadd.f32 %v3604, 1.1283791
        %v3606 = vmul.f32 %v2282, %v3605
        %v3607 = vmul.f32 %v3595, 3.8918573e-05
        %v3608 = vadd.f32 %v3607, 0.001143296
        %v3609 = vmul.f32 %v3595, %v3608
        %v3610 = vadd.f32 %v3609, 0.014752088
        %v3611 = vmul.f32 %v3595, %v3610
        %v3612 = vadd.f32 %v3611, 0.112945676
        %v3613 = vmul.f32 %v3595, %v3612
        %v3614 = vadd.f32 %v3613, 0.4994258
        %v3615 = vmul.f32 %v3595, %v3614
        %v3616 = vadd.f32 %v3615, 1.0
        %v3617 = vrcp.pop %v3616
        %v3618 = vmul.f32 %v3616, %v3617
        %v3619 = vsub.f32 1.0, %v3618
        %v3620 = vmul.f32 %v3617, %v3619
        %v3621 = vadd.f32 %v3617, %v3620
        %vm3622 = vweird.f32 %v3616
        %vm3623 = vweird.f32 %v3617
        %vm3624 = vmor %vm3622, %vm3623
        %v3625 = vsel %vm3624, %v3617, %v3621
        %v3626 = vand.u32 2147483647, %v3616
        %vm3627 = vcmp.eq.f32.partialorder %v3626, 8.507059e+37
        %v3628 = vand.u32 %v3616, 2147483648
        %v3629 = vor.u32 1.1754944e-38, %v3628
        %v3630 = vsel %vm3627, %v3629, %v3625
        %v3631 = vmul.f32 %v3606, %v3630
        %v3632 = vmin.f32 %v3631, 1.0
        %v3633 = vmax.f32 %v3632, -1.0
        %v3634 = vmul.f32 %v2283, %v2283
        %v3635 = vmin.f32 16.0, %v3634
        %v3636 = vmul.f32 %v3635, 2.1237322e-06
        %v3637 = vadd.f32 %v3636, 0.00028619796
        %v3638 = vmul.f32 %v3635, %v3637
        %v3639 = vadd.f32 %v3638, 0.0036580483
        %v3640 = vmul.f32 %v3635, %v3639
        %v3641 = vadd.f32 %v3640, 0.05243302
        %v3642 = vmul.f32 %v3635, %v3641
        %v3643 = vadd.f32 %v3642, 0.18741608
        %v3644 = vmul.f32 %v3635, %v3643
        %v3645 = vadd.f32 %v3644, 1.1283791
        %v3646 = vmul.f32 %v2283, %v3645
        %v3647 = vmul.f32 %v3635, 3.8918573e-05
        %v3648 = vadd.f32 %v3647, 0.001143296
        %v3649 = vmul.f32 %v3635, %v3648
        %v3650 = vadd.f32 %v3649, 0.014752088
        %v3651 = vmul.f32 %v3635, %v3650
        %v3652 = vadd.f32 %v3651, 0.112945676
        %v3653 = vmul.f32 %v3635, %v3652
        %v3654 = vadd.f32 %v3653, 0.4994258
        %v3655 = vmul.f32 %v3635, %v3654
        %v3656 = vadd.f32 %v3655, 1.0
        %v3657 = vrcp.pop %v3656
        %v3658 = vmul.f32 %v3656, %v3657
        %v3659 = vsub.f32 1.0, %v3658
        %v3660 = vmul.f32 %v3657, %v3659
        %v3661 = vadd.f32 %v3657, %v3660
        %vm3662 = vweird.f32 %v3656
        %vm3663 = vweird.f32 %v3657
        %vm3664 = vmor %vm3662, %vm3663
        %v3665 = vsel %vm3664, %v3657, %v3661
        %v3666 = vand.u32 2147483647, %v3656
        %vm3667 = vcmp.eq.f32.partialorder %v3666, 8.507059e+37
        %v3668 = vand.u32 %v3656, 2147483648
        %v3669 = vor.u32 1.1754944e-38, %v3668
        %v3670 = vsel %vm3667, %v3669, %v3665
        %v3671 = vmul.f32 %v3646, %v3670
        %v3672 = vmin.f32 %v3671, 1.0
        %v3673 = vmax.f32 %v3672, -1.0
        %v3674 = vmul.f32 %v2284, %v2284
        %v3675 = vmin.f32 16.0, %v3674
        %v3676 = vmul.f32 %v3675, 2.1237322e-06
        %v3677 = vadd.f32 %v3676, 0.00028619796
        %v3678 = vmul.f32 %v3675, %v3677
        %v3679 = vadd.f32 %v3678, 0.0036580483
        %v3680 = vmul.f32 %v3675, %v3679
        %v3681 = vadd.f32 %v3680, 0.05243302
        %v3682 = vmul.f32 %v3675, %v3681
        %v3683 = vadd.f32 %v3682, 0.18741608
        %v3684 = vmul.f32 %v3675, %v3683
        %v3685 = vadd.f32 %v3684, 1.1283791
        %v3686 = vmul.f32 %v2284, %v3685
        %v3687 = vmul.f32 %v3675, 3.8918573e-05
        %v3688 = vadd.f32 %v3687, 0.001143296
        %v3689 = vmul.f32 %v3675, %v3688
        %v3690 = vadd.f32 %v3689, 0.014752088
        %v3691 = vmul.f32 %v3675, %v3690
        %v3692 = vadd.f32 %v3691, 0.112945676
        %v3693 = vmul.f32 %v3675, %v3692
        %v3694 = vadd.f32 %v3693, 0.4994258
        %v3695 = vmul.f32 %v3675, %v3694
        %v3696 = vadd.f32 %v3695, 1.0
        %v3697 = vrcp.pop %v3696
        %v3698 = vmul.f32 %v3696, %v3697
        %v3699 = vsub.f32 1.0, %v3698
        %v3700 = vmul.f32 %v3697, %v3699
        %v3701 = vadd.f32 %v3697, %v3700
        %vm3702 = vweird.f32 %v3696
        %vm3703 = vweird.f32 %v3697
        %vm3704 = vmor %vm3702, %vm3703
        %v3705 = vsel %vm3704, %v3697, %v3701
        %v3706 = vand.u32 2147483647, %v3696
        %vm3707 = vcmp.eq.f32.partialorder %v3706, 8.507059e+37
        %v3708 = vand.u32 %v3696, 2147483648
        %v3709 = vor.u32 1.1754944e-38, %v3708
        %v3710 = vsel %vm3707, %v3709, %v3705
        %v3711 = vmul.f32 %v3686, %v3710
        %v3712 = vmin.f32 %v3711, 1.0
        %v3713 = vmax.f32 %v3712, -1.0
        %v3714 = vmul.f32 %v2285, %v2285
        %v3715 = vmin.f32 16.0, %v3714
        %v3716 = vmul.f32 %v3715, 2.1237322e-06
        %v3717 = vadd.f32 %v3716, 0.00028619796
        %v3718 = vmul.f32 %v3715, %v3717
        %v3719 = vadd.f32 %v3718, 0.0036580483
        %v3720 = vmul.f32 %v3715, %v3719
        %v3721 = vadd.f32 %v3720, 0.05243302
        %v3722 = vmul.f32 %v3715, %v3721
        %v3723 = vadd.f32 %v3722, 0.18741608
        %v3724 = vmul.f32 %v3715, %v3723
        %v3725 = vadd.f32 %v3724, 1.1283791
        %v3726 = vmul.f32 %v2285, %v3725
        %v3727 = vmul.f32 %v3715, 3.8918573e-05
        %v3728 = vadd.f32 %v3727, 0.001143296
        %v3729 = vmul.f32 %v3715, %v3728
        %v3730 = vadd.f32 %v3729, 0.014752088
        %v3731 = vmul.f32 %v3715, %v3730
        %v3732 = vadd.f32 %v3731, 0.112945676
        %v3733 = vmul.f32 %v3715, %v3732
        %v3734 = vadd.f32 %v3733, 0.4994258
        %v3735 = vmul.f32 %v3715, %v3734
        %v3736 = vadd.f32 %v3735, 1.0
        %v3737 = vrcp.pop %v3736
        %v3738 = vmul.f32 %v3736, %v3737
        %v3739 = vsub.f32 1.0, %v3738
        %v3740 = vmul.f32 %v3737, %v3739
        %v3741 = vadd.f32 %v3737, %v3740
        %vm3742 = vweird.f32 %v3736
        %vm3743 = vweird.f32 %v3737
        %vm3744 = vmor %vm3742, %vm3743
        %v3745 = vsel %vm3744, %v3737, %v3741
        %v3746 = vand.u32 2147483647, %v3736
        %vm3747 = vcmp.eq.f32.partialorder %v3746, 8.507059e+37
        %v3748 = vand.u32 %v3736, 2147483648
        %v3749 = vor.u32 1.1754944e-38, %v3748
        %v3750 = vsel %vm3747, %v3749, %v3745
        %v3751 = vmul.f32 %v3726, %v3750
        %v3752 = vmin.f32 %v3751, 1.0
        %v3753 = vmax.f32 %v3752, -1.0
        %v3754 = vmul.f32 %v2286, %v2286
        %v3755 = vmin.f32 16.0, %v3754
        %v3756 = vmul.f32 %v3755, 2.1237322e-06
        %v3757 = vadd.f32 %v3756, 0.00028619796
        %v3758 = vmul.f32 %v3755, %v3757
        %v3759 = vadd.f32 %v3758, 0.0036580483
        %v3760 = vmul.f32 %v3755, %v3759
        %v3761 = vadd.f32 %v3760, 0.05243302
        %v3762 = vmul.f32 %v3755, %v3761
        %v3763 = vadd.f32 %v3762, 0.18741608
        %v3764 = vmul.f32 %v3755, %v3763
        %v3765 = vadd.f32 %v3764, 1.1283791
        %v3766 = vmul.f32 %v2286, %v3765
        %v3767 = vmul.f32 %v3755, 3.8918573e-05
        %v3768 = vadd.f32 %v3767, 0.001143296
        %v3769 = vmul.f32 %v3755, %v3768
        %v3770 = vadd.f32 %v3769, 0.014752088
        %v3771 = vmul.f32 %v3755, %v3770
        %v3772 = vadd.f32 %v3771, 0.112945676
        %v3773 = vmul.f32 %v3755, %v3772
        %v3774 = vadd.f32 %v3773, 0.4994258
        %v3775 = vmul.f32 %v3755, %v3774
        %v3776 = vadd.f32 %v3775, 1.0
        %v3777 = vrcp.pop %v3776
        %v3778 = vmul.f32 %v3776, %v3777
        %v3779 = vsub.f32 1.0, %v3778
        %v3780 = vmul.f32 %v3777, %v3779
        %v3781 = vadd.f32 %v3777, %v3780
        %vm3782 = vweird.f32 %v3776
        %vm3783 = vweird.f32 %v3777
        %vm3784 = vmor %vm3782, %vm3783
        %v3785 = vsel %vm3784, %v3777, %v3781
        %v3786 = vand.u32 2147483647, %v3776
        %vm3787 = vcmp.eq.f32.partialorder %v3786, 8.507059e+37
        %v3788 = vand.u32 %v3776, 2147483648
        %v3789 = vor.u32 1.1754944e-38, %v3788
        %v3790 = vsel %vm3787, %v3789, %v3785
        %v3791 = vmul.f32 %v3766, %v3790
        %v3792 = vmin.f32 %v3791, 1.0
        %v3793 = vmax.f32 %v3792, -1.0
        %v3794 = vmul.f32 %v2287, %v2287
        %v3795 = vmin.f32 16.0, %v3794
        %v3796 = vmul.f32 %v3795, 2.1237322e-06
        %v3797 = vadd.f32 %v3796, 0.00028619796
        %v3798 = vmul.f32 %v3795, %v3797
        %v3799 = vadd.f32 %v3798, 0.0036580483
        %v3800 = vmul.f32 %v3795, %v3799
        %v3801 = vadd.f32 %v3800, 0.05243302
        %v3802 = vmul.f32 %v3795, %v3801
        %v3803 = vadd.f32 %v3802, 0.18741608
        %v3804 = vmul.f32 %v3795, %v3803
        %v3805 = vadd.f32 %v3804, 1.1283791
        %v3806 = vmul.f32 %v2287, %v3805
        %v3807 = vmul.f32 %v3795, 3.8918573e-05
        %v3808 = vadd.f32 %v3807, 0.001143296
        %v3809 = vmul.f32 %v3795, %v3808
        %v3810 = vadd.f32 %v3809, 0.014752088
        %v3811 = vmul.f32 %v3795, %v3810
        %v3812 = vadd.f32 %v3811, 0.112945676
        %v3813 = vmul.f32 %v3795, %v3812
        %v3814 = vadd.f32 %v3813, 0.4994258
        %v3815 = vmul.f32 %v3795, %v3814
        %v3816 = vadd.f32 %v3815, 1.0
        %v3817 = vrcp.pop %v3816
        %v3818 = vmul.f32 %v3816, %v3817
        %v3819 = vsub.f32 1.0, %v3818
        %v3820 = vmul.f32 %v3817, %v3819
        %v3821 = vadd.f32 %v3817, %v3820
        %vm3822 = vweird.f32 %v3816
        %vm3823 = vweird.f32 %v3817
        %vm3824 = vmor %vm3822, %vm3823
        %v3825 = vsel %vm3824, %v3817, %v3821
        %v3826 = vand.u32 2147483647, %v3816
        %vm3827 = vcmp.eq.f32.partialorder %v3826, 8.507059e+37
        %v3828 = vand.u32 %v3816, 2147483648
        %v3829 = vor.u32 1.1754944e-38, %v3828
        %v3830 = vsel %vm3827, %v3829, %v3825
        %v3831 = vmul.f32 %v3806, %v3830
        %v3832 = vmin.f32 %v3831, 1.0
        %v3833 = vmax.f32 %v3832, -1.0
        %v3834 = vmul.f32 %v2288, %v2288
        %v3835 = vmin.f32 16.0, %v3834
        %v3836 = vmul.f32 %v3835, 2.1237322e-06
        %v3837 = vadd.f32 %v3836, 0.00028619796
        %v3838 = vmul.f32 %v3835, %v3837
        %v3839 = vadd.f32 %v3838, 0.0036580483
        %v3840 = vmul.f32 %v3835, %v3839
        %v3841 = vadd.f32 %v3840, 0.05243302
        %v3842 = vmul.f32 %v3835, %v3841
        %v3843 = vadd.f32 %v3842, 0.18741608
        %v3844 = vmul.f32 %v3835, %v3843
        %v3845 = vadd.f32 %v3844, 1.1283791
        %v3846 = vmul.f32 %v2288, %v3845
        %v3847 = vmul.f32 %v3835, 3.8918573e-05
        %v3848 = vadd.f32 %v3847, 0.001143296
        %v3849 = vmul.f32 %v3835, %v3848
        %v3850 = vadd.f32 %v3849, 0.014752088
        %v3851 = vmul.f32 %v3835, %v3850
        %v3852 = vadd.f32 %v3851, 0.112945676
        %v3853 = vmul.f32 %v3835, %v3852
        %v3854 = vadd.f32 %v3853, 0.4994258
        %v3855 = vmul.f32 %v3835, %v3854
        %v3856 = vadd.f32 %v3855, 1.0
        %v3857 = vrcp.pop %v3856
        %v3858 = vmul.f32 %v3856, %v3857
        %v3859 = vsub.f32 1.0, %v3858
        %v3860 = vmul.f32 %v3857, %v3859
        %v3861 = vadd.f32 %v3857, %v3860
        %vm3862 = vweird.f32 %v3856
        %vm3863 = vweird.f32 %v3857
        %vm3864 = vmor %vm3862, %vm3863
        %v3865 = vsel %vm3864, %v3857, %v3861
        %v3866 = vand.u32 2147483647, %v3856
        %vm3867 = vcmp.eq.f32.partialorder %v3866, 8.507059e+37
        %v3868 = vand.u32 %v3856, 2147483648
        %v3869 = vor.u32 1.1754944e-38, %v3868
        %v3870 = vsel %vm3867, %v3869, %v3865
        %v3871 = vmul.f32 %v3846, %v3870
        %v3872 = vmin.f32 %v3871, 1.0
        %v3873 = vmax.f32 %v3872, -1.0
        %v3874 = vmul.f32 %v2289, %v2289
        %v3875 = vmin.f32 16.0, %v3874
        %v3876 = vmul.f32 %v3875, 2.1237322e-06
        %v3877 = vadd.f32 %v3876, 0.00028619796
        %v3878 = vmul.f32 %v3875, %v3877
        %v3879 = vadd.f32 %v3878, 0.0036580483
        %v3880 = vmul.f32 %v3875, %v3879
        %v3881 = vadd.f32 %v3880, 0.05243302
        %v3882 = vmul.f32 %v3875, %v3881
        %v3883 = vadd.f32 %v3882, 0.18741608
        %v3884 = vmul.f32 %v3875, %v3883
        %v3885 = vadd.f32 %v3884, 1.1283791
        %v3886 = vmul.f32 %v2289, %v3885
        %v3887 = vmul.f32 %v3875, 3.8918573e-05
        %v3888 = vadd.f32 %v3887, 0.001143296
        %v3889 = vmul.f32 %v3875, %v3888
        %v3890 = vadd.f32 %v3889, 0.014752088
        %v3891 = vmul.f32 %v3875, %v3890
        %v3892 = vadd.f32 %v3891, 0.112945676
        %v3893 = vmul.f32 %v3875, %v3892
        %v3894 = vadd.f32 %v3893, 0.4994258
        %v3895 = vmul.f32 %v3875, %v3894
        %v3896 = vadd.f32 %v3895, 1.0
        %v3897 = vrcp.pop %v3896
        %v3898 = vmul.f32 %v3896, %v3897
        %v3899 = vsub.f32 1.0, %v3898
        %v3900 = vmul.f32 %v3897, %v3899
        %v3901 = vadd.f32 %v3897, %v3900
        %vm3902 = vweird.f32 %v3896
        %vm3903 = vweird.f32 %v3897
        %vm3904 = vmor %vm3902, %vm3903
        %v3905 = vsel %vm3904, %v3897, %v3901
        %v3906 = vand.u32 2147483647, %v3896
        %vm3907 = vcmp.eq.f32.partialorder %v3906, 8.507059e+37
        %v3908 = vand.u32 %v3896, 2147483648
        %v3909 = vor.u32 1.1754944e-38, %v3908
        %v3910 = vsel %vm3907, %v3909, %v3905
        %v3911 = vmul.f32 %v3886, %v3910
        %v3912 = vmin.f32 %v3911, 1.0
        %v3913 = vmax.f32 %v3912, -1.0
        %v3914 = vmul.f32 %v2290, %v2290
        %v3915 = vmin.f32 16.0, %v3914
        %v3916 = vmul.f32 %v3915, 2.1237322e-06
        %v3917 = vadd.f32 %v3916, 0.00028619796
        %v3918 = vmul.f32 %v3915, %v3917
        %v3919 = vadd.f32 %v3918, 0.0036580483
        %v3920 = vmul.f32 %v3915, %v3919
        %v3921 = vadd.f32 %v3920, 0.05243302
        %v3922 = vmul.f32 %v3915, %v3921
        %v3923 = vadd.f32 %v3922, 0.18741608
        %v3924 = vmul.f32 %v3915, %v3923
        %v3925 = vadd.f32 %v3924, 1.1283791
        %v3926 = vmul.f32 %v2290, %v3925
        %v3927 = vmul.f32 %v3915, 3.8918573e-05
        %v3928 = vadd.f32 %v3927, 0.001143296
        %v3929 = vmul.f32 %v3915, %v3928
        %v3930 = vadd.f32 %v3929, 0.014752088
        %v3931 = vmul.f32 %v3915, %v3930
        %v3932 = vadd.f32 %v3931, 0.112945676
        %v3933 = vmul.f32 %v3915, %v3932
        %v3934 = vadd.f32 %v3933, 0.4994258
        %v3935 = vmul.f32 %v3915, %v3934
        %v3936 = vadd.f32 %v3935, 1.0
        %v3937 = vrcp.pop %v3936
        %v3938 = vmul.f32 %v3936, %v3937
        %v3939 = vsub.f32 1.0, %v3938
        %v3940 = vmul.f32 %v3937, %v3939
        %v3941 = vadd.f32 %v3937, %v3940
        %vm3942 = vweird.f32 %v3936
        %vm3943 = vweird.f32 %v3937
        %vm3944 = vmor %vm3942, %vm3943
        %v3945 = vsel %vm3944, %v3937, %v3941
        %v3946 = vand.u32 2147483647, %v3936
        %vm3947 = vcmp.eq.f32.partialorder %v3946, 8.507059e+37
        %v3948 = vand.u32 %v3936, 2147483648
        %v3949 = vor.u32 1.1754944e-38, %v3948
        %v3950 = vsel %vm3947, %v3949, %v3945
        %v3951 = vmul.f32 %v3926, %v3950
        %v3952 = vmin.f32 %v3951, 1.0
        %v3953 = vmax.f32 %v3952, -1.0
        %v3954 = vmul.f32 %v2291, %v2291
        %v3955 = vmin.f32 16.0, %v3954
        %v3956 = vmul.f32 %v3955, 2.1237322e-06
        %v3957 = vadd.f32 %v3956, 0.00028619796
        %v3958 = vmul.f32 %v3955, %v3957
        %v3959 = vadd.f32 %v3958, 0.0036580483
        %v3960 = vmul.f32 %v3955, %v3959
        %v3961 = vadd.f32 %v3960, 0.05243302
        %v3962 = vmul.f32 %v3955, %v3961
        %v3963 = vadd.f32 %v3962, 0.18741608
        %v3964 = vmul.f32 %v3955, %v3963
        %v3965 = vadd.f32 %v3964, 1.1283791
        %v3966 = vmul.f32 %v2291, %v3965
        %v3967 = vmul.f32 %v3955, 3.8918573e-05
        %v3968 = vadd.f32 %v3967, 0.001143296
        %v3969 = vmul.f32 %v3955, %v3968
        %v3970 = vadd.f32 %v3969, 0.014752088
        %v3971 = vmul.f32 %v3955, %v3970
        %v3972 = vadd.f32 %v3971, 0.112945676
        %v3973 = vmul.f32 %v3955, %v3972
        %v3974 = vadd.f32 %v3973, 0.4994258
        %v3975 = vmul.f32 %v3955, %v3974
        %v3976 = vadd.f32 %v3975, 1.0
        %v3977 = vrcp.pop %v3976
        %v3978 = vmul.f32 %v3976, %v3977
        %v3979 = vsub.f32 1.0, %v3978
        %v3980 = vmul.f32 %v3977, %v3979
        %v3981 = vadd.f32 %v3977, %v3980
        %vm3982 = vweird.f32 %v3976
        %vm3983 = vweird.f32 %v3977
        %vm3984 = vmor %vm3982, %vm3983
        %v3985 = vsel %vm3984, %v3977, %v3981
        %v3986 = vand.u32 2147483647, %v3976
        %vm3987 = vcmp.eq.f32.partialorder %v3986, 8.507059e+37
        %v3988 = vand.u32 %v3976, 2147483648
        %v3989 = vor.u32 1.1754944e-38, %v3988
        %v3990 = vsel %vm3987, %v3989, %v3985
        %v3991 = vmul.f32 %v3966, %v3990
        %v3992 = vmin.f32 %v3991, 1.0
        %v3993 = vmax.f32 %v3992, -1.0
        %v3994 = vmul.f32 %v2292, %v2292
        %v3995 = vmin.f32 16.0, %v3994
        %v3996 = vmul.f32 %v3995, 2.1237322e-06
        %v3997 = vadd.f32 %v3996, 0.00028619796
        %v3998 = vmul.f32 %v3995, %v3997
        %v3999 = vadd.f32 %v3998, 0.0036580483
        %v4000 = vmul.f32 %v3995, %v3999
        %v4001 = vadd.f32 %v4000, 0.05243302
        %v4002 = vmul.f32 %v3995, %v4001
        %v4003 = vadd.f32 %v4002, 0.18741608
        %v4004 = vmul.f32 %v3995, %v4003
        %v4005 = vadd.f32 %v4004, 1.1283791
        %v4006 = vmul.f32 %v2292, %v4005
        %v4007 = vmul.f32 %v3995, 3.8918573e-05
        %v4008 = vadd.f32 %v4007, 0.001143296
        %v4009 = vmul.f32 %v3995, %v4008
        %v4010 = vadd.f32 %v4009, 0.014752088
        %v4011 = vmul.f32 %v3995, %v4010
        %v4012 = vadd.f32 %v4011, 0.112945676
        %v4013 = vmul.f32 %v3995, %v4012
        %v4014 = vadd.f32 %v4013, 0.4994258
        %v4015 = vmul.f32 %v3995, %v4014
        %v4016 = vadd.f32 %v4015, 1.0
        %v4017 = vrcp.pop %v4016
        %v4018 = vmul.f32 %v4016, %v4017
        %v4019 = vsub.f32 1.0, %v4018
        %v4020 = vmul.f32 %v4017, %v4019
        %v4021 = vadd.f32 %v4017, %v4020
        %vm4022 = vweird.f32 %v4016
        %vm4023 = vweird.f32 %v4017
        %vm4024 = vmor %vm4022, %vm4023
        %v4025 = vsel %vm4024, %v4017, %v4021
        %v4026 = vand.u32 2147483647, %v4016
        %vm4027 = vcmp.eq.f32.partialorder %v4026, 8.507059e+37
        %v4028 = vand.u32 %v4016, 2147483648
        %v4029 = vor.u32 1.1754944e-38, %v4028
        %v4030 = vsel %vm4027, %v4029, %v4025
        %v4031 = vmul.f32 %v4006, %v4030
        %v4032 = vmin.f32 %v4031, 1.0
        %v4033 = vmax.f32 %v4032, -1.0
        %v4034 = vmul.f32 %v2293, %v2293
        %v4035 = vmin.f32 16.0, %v4034
        %v4036 = vmul.f32 %v4035, 2.1237322e-06
        %v4037 = vadd.f32 %v4036, 0.00028619796
        %v4038 = vmul.f32 %v4035, %v4037
        %v4039 = vadd.f32 %v4038, 0.0036580483
        %v4040 = vmul.f32 %v4035, %v4039
        %v4041 = vadd.f32 %v4040, 0.05243302
        %v4042 = vmul.f32 %v4035, %v4041
        %v4043 = vadd.f32 %v4042, 0.18741608
        %v4044 = vmul.f32 %v4035, %v4043
        %v4045 = vadd.f32 %v4044, 1.1283791
        %v4046 = vmul.f32 %v2293, %v4045
        %v4047 = vmul.f32 %v4035, 3.8918573e-05
        %v4048 = vadd.f32 %v4047, 0.001143296
        %v4049 = vmul.f32 %v4035, %v4048
        %v4050 = vadd.f32 %v4049, 0.014752088
        %v4051 = vmul.f32 %v4035, %v4050
        %v4052 = vadd.f32 %v4051, 0.112945676
        %v4053 = vmul.f32 %v4035, %v4052
        %v4054 = vadd.f32 %v4053, 0.4994258
        %v4055 = vmul.f32 %v4035, %v4054
        %v4056 = vadd.f32 %v4055, 1.0
        %v4057 = vrcp.pop %v4056
        %v4058 = vmul.f32 %v4056, %v4057
        %v4059 = vsub.f32 1.0, %v4058
        %v4060 = vmul.f32 %v4057, %v4059
        %v4061 = vadd.f32 %v4057, %v4060
        %vm4062 = vweird.f32 %v4056
        %vm4063 = vweird.f32 %v4057
        %vm4064 = vmor %vm4062, %vm4063
        %v4065 = vsel %vm4064, %v4057, %v4061
        %v4066 = vand.u32 2147483647, %v4056
        %vm4067 = vcmp.eq.f32.partialorder %v4066, 8.507059e+37
        %v4068 = vand.u32 %v4056, 2147483648
        %v4069 = vor.u32 1.1754944e-38, %v4068
        %v4070 = vsel %vm4067, %v4069, %v4065
        %v4071 = vmul.f32 %v4046, %v4070
        %v4072 = vmin.f32 %v4071, 1.0
        %v4073 = vmax.f32 %v4072, -1.0
        %v4074 = vmul.f32 %v2294, %v2294
        %v4075 = vmin.f32 16.0, %v4074
        %v4076 = vmul.f32 %v4075, 2.1237322e-06
        %v4077 = vadd.f32 %v4076, 0.00028619796
        %v4078 = vmul.f32 %v4075, %v4077
        %v4079 = vadd.f32 %v4078, 0.0036580483
        %v4080 = vmul.f32 %v4075, %v4079
        %v4081 = vadd.f32 %v4080, 0.05243302
        %v4082 = vmul.f32 %v4075, %v4081
        %v4083 = vadd.f32 %v4082, 0.18741608
        %v4084 = vmul.f32 %v4075, %v4083
        %v4085 = vadd.f32 %v4084, 1.1283791
        %v4086 = vmul.f32 %v2294, %v4085
        %v4087 = vmul.f32 %v4075, 3.8918573e-05
        %v4088 = vadd.f32 %v4087, 0.001143296
        %v4089 = vmul.f32 %v4075, %v4088
        %v4090 = vadd.f32 %v4089, 0.014752088
        %v4091 = vmul.f32 %v4075, %v4090
        %v4092 = vadd.f32 %v4091, 0.112945676
        %v4093 = vmul.f32 %v4075, %v4092
        %v4094 = vadd.f32 %v4093, 0.4994258
        %v4095 = vmul.f32 %v4075, %v4094
        %v4096 = vadd.f32 %v4095, 1.0
        %v4097 = vrcp.pop %v4096
        %v4098 = vmul.f32 %v4096, %v4097
        %v4099 = vsub.f32 1.0, %v4098
        %v4100 = vmul.f32 %v4097, %v4099
        %v4101 = vadd.f32 %v4097, %v4100
        %vm4102 = vweird.f32 %v4096
        %vm4103 = vweird.f32 %v4097
        %vm4104 = vmor %vm4102, %vm4103
        %v4105 = vsel %vm4104, %v4097, %v4101
        %v4106 = vand.u32 2147483647, %v4096
        %vm4107 = vcmp.eq.f32.partialorder %v4106, 8.507059e+37
        %v4108 = vand.u32 %v4096, 2147483648
        %v4109 = vor.u32 1.1754944e-38, %v4108
        %v4110 = vsel %vm4107, %v4109, %v4105
        %v4111 = vmul.f32 %v4086, %v4110
        %v4112 = vmin.f32 %v4111, 1.0
        %v4113 = vmax.f32 %v4112, -1.0
        %v4114 = vmul.f32 %v2295, %v2295
        %v4115 = vmin.f32 16.0, %v4114
        %v4116 = vmul.f32 %v4115, 2.1237322e-06
        %v4117 = vadd.f32 %v4116, 0.00028619796
        %v4118 = vmul.f32 %v4115, %v4117
        %v4119 = vadd.f32 %v4118, 0.0036580483
        %v4120 = vmul.f32 %v4115, %v4119
        %v4121 = vadd.f32 %v4120, 0.05243302
        %v4122 = vmul.f32 %v4115, %v4121
        %v4123 = vadd.f32 %v4122, 0.18741608
        %v4124 = vmul.f32 %v4115, %v4123
        %v4125 = vadd.f32 %v4124, 1.1283791
        %v4126 = vmul.f32 %v2295, %v4125
        %v4127 = vmul.f32 %v4115, 3.8918573e-05
        %v4128 = vadd.f32 %v4127, 0.001143296
        %v4129 = vmul.f32 %v4115, %v4128
        %v4130 = vadd.f32 %v4129, 0.014752088
        %v4131 = vmul.f32 %v4115, %v4130
        %v4132 = vadd.f32 %v4131, 0.112945676
        %v4133 = vmul.f32 %v4115, %v4132
        %v4134 = vadd.f32 %v4133, 0.4994258
        %v4135 = vmul.f32 %v4115, %v4134
        %v4136 = vadd.f32 %v4135, 1.0
        %v4137 = vrcp.pop %v4136
        %v4138 = vmul.f32 %v4136, %v4137
        %v4139 = vsub.f32 1.0, %v4138
        %v4140 = vmul.f32 %v4137, %v4139
        %v4141 = vadd.f32 %v4137, %v4140
        %vm4142 = vweird.f32 %v4136
        %vm4143 = vweird.f32 %v4137
        %vm4144 = vmor %vm4142, %vm4143
        %v4145 = vsel %vm4144, %v4137, %v4141
        %v4146 = vand.u32 2147483647, %v4136
        %vm4147 = vcmp.eq.f32.partialorder %v4146, 8.507059e+37
        %v4148 = vand.u32 %v4136, 2147483648
        %v4149 = vor.u32 1.1754944e-38, %v4148
        %v4150 = vsel %vm4147, %v4149, %v4145
        %v4151 = vmul.f32 %v4126, %v4150
        %v4152 = vmin.f32 %v4151, 1.0
        %v4153 = vmax.f32 %v4152, -1.0
        %v4154 = vmul.f32 %v2296, %v2296
        %v4155 = vmin.f32 16.0, %v4154
        %v4156 = vmul.f32 %v4155, 2.1237322e-06
        %v4157 = vadd.f32 %v4156, 0.00028619796
        %v4158 = vmul.f32 %v4155, %v4157
        %v4159 = vadd.f32 %v4158, 0.0036580483
        %v4160 = vmul.f32 %v4155, %v4159
        %v4161 = vadd.f32 %v4160, 0.05243302
        %v4162 = vmul.f32 %v4155, %v4161
        %v4163 = vadd.f32 %v4162, 0.18741608
        %v4164 = vmul.f32 %v4155, %v4163
        %v4165 = vadd.f32 %v4164, 1.1283791
        %v4166 = vmul.f32 %v2296, %v4165
        %v4167 = vmul.f32 %v4155, 3.8918573e-05
        %v4168 = vadd.f32 %v4167, 0.001143296
        %v4169 = vmul.f32 %v4155, %v4168
        %v4170 = vadd.f32 %v4169, 0.014752088
        %v4171 = vmul.f32 %v4155, %v4170
        %v4172 = vadd.f32 %v4171, 0.112945676
        %v4173 = vmul.f32 %v4155, %v4172
        %v4174 = vadd.f32 %v4173, 0.4994258
        %v4175 = vmul.f32 %v4155, %v4174
        %v4176 = vadd.f32 %v4175, 1.0
        %v4177 = vrcp.pop %v4176
        %v4178 = vmul.f32 %v4176, %v4177
        %v4179 = vsub.f32 1.0, %v4178
        %v4180 = vmul.f32 %v4177, %v4179
        %v4181 = vadd.f32 %v4177, %v4180
        %vm4182 = vweird.f32 %v4176
        %vm4183 = vweird.f32 %v4177
        %vm4184 = vmor %vm4182, %vm4183
        %v4185 = vsel %vm4184, %v4177, %v4181
        %v4186 = vand.u32 2147483647, %v4176
        %vm4187 = vcmp.eq.f32.partialorder %v4186, 8.507059e+37
        %v4188 = vand.u32 %v4176, 2147483648
        %v4189 = vor.u32 1.1754944e-38, %v4188
        %v4190 = vsel %vm4187, %v4189, %v4185
        %v4191 = vmul.f32 %v4166, %v4190
        %v4192 = vmin.f32 %v4191, 1.0
        %v4193 = vmax.f32 %v4192, -1.0
        %v4194 = vmul.f32 %v2297, %v2297
        %v4195 = vmin.f32 16.0, %v4194
        %v4196 = vmul.f32 %v4195, 2.1237322e-06
        %v4197 = vadd.f32 %v4196, 0.00028619796
        %v4198 = vmul.f32 %v4195, %v4197
        %v4199 = vadd.f32 %v4198, 0.0036580483
        %v4200 = vmul.f32 %v4195, %v4199
        %v4201 = vadd.f32 %v4200, 0.05243302
        %v4202 = vmul.f32 %v4195, %v4201
        %v4203 = vadd.f32 %v4202, 0.18741608
        %v4204 = vmul.f32 %v4195, %v4203
        %v4205 = vadd.f32 %v4204, 1.1283791
        %v4206 = vmul.f32 %v2297, %v4205
        %v4207 = vmul.f32 %v4195, 3.8918573e-05
        %v4208 = vadd.f32 %v4207, 0.001143296
        %v4209 = vmul.f32 %v4195, %v4208
        %v4210 = vadd.f32 %v4209, 0.014752088
        %v4211 = vmul.f32 %v4195, %v4210
        %v4212 = vadd.f32 %v4211, 0.112945676
        %v4213 = vmul.f32 %v4195, %v4212
        %v4214 = vadd.f32 %v4213, 0.4994258
        %v4215 = vmul.f32 %v4195, %v4214
        %v4216 = vadd.f32 %v4215, 1.0
        %v4217 = vrcp.pop %v4216
        %v4218 = vmul.f32 %v4216, %v4217
        %v4219 = vsub.f32 1.0, %v4218
        %v4220 = vmul.f32 %v4217, %v4219
        %v4221 = vadd.f32 %v4217, %v4220
        %vm4222 = vweird.f32 %v4216
        %vm4223 = vweird.f32 %v4217
        %vm4224 = vmor %vm4222, %vm4223
        %v4225 = vsel %vm4224, %v4217, %v4221
        %v4226 = vand.u32 2147483647, %v4216
        %vm4227 = vcmp.eq.f32.partialorder %v4226, 8.507059e+37
        %v4228 = vand.u32 %v4216, 2147483648
        %v4229 = vor.u32 1.1754944e-38, %v4228
        %v4230 = vsel %vm4227, %v4229, %v4225
        %v4231 = vmul.f32 %v4206, %v4230
        %v4232 = vmin.f32 %v4231, 1.0
        %v4233 = vmax.f32 %v4232, -1.0
        %v4234 = vmul.f32 %v2298, %v2298
        %v4235 = vmin.f32 16.0, %v4234
        %v4236 = vmul.f32 %v4235, 2.1237322e-06
        %v4237 = vadd.f32 %v4236, 0.00028619796
        %v4238 = vmul.f32 %v4235, %v4237
        %v4239 = vadd.f32 %v4238, 0.0036580483
        %v4240 = vmul.f32 %v4235, %v4239
        %v4241 = vadd.f32 %v4240, 0.05243302
        %v4242 = vmul.f32 %v4235, %v4241
        %v4243 = vadd.f32 %v4242, 0.18741608
        %v4244 = vmul.f32 %v4235, %v4243
        %v4245 = vadd.f32 %v4244, 1.1283791
        %v4246 = vmul.f32 %v2298, %v4245
        %v4247 = vmul.f32 %v4235, 3.8918573e-05
        %v4248 = vadd.f32 %v4247, 0.001143296
        %v4249 = vmul.f32 %v4235, %v4248
        %v4250 = vadd.f32 %v4249, 0.014752088
        %v4251 = vmul.f32 %v4235, %v4250
        %v4252 = vadd.f32 %v4251, 0.112945676
        %v4253 = vmul.f32 %v4235, %v4252
        %v4254 = vadd.f32 %v4253, 0.4994258
        %v4255 = vmul.f32 %v4235, %v4254
        %v4256 = vadd.f32 %v4255, 1.0
        %v4257 = vrcp.pop %v4256
        %v4258 = vmul.f32 %v4256, %v4257
        %v4259 = vsub.f32 1.0, %v4258
        %v4260 = vmul.f32 %v4257, %v4259
        %v4261 = vadd.f32 %v4257, %v4260
        %vm4262 = vweird.f32 %v4256
        %vm4263 = vweird.f32 %v4257
        %vm4264 = vmor %vm4262, %vm4263
        %v4265 = vsel %vm4264, %v4257, %v4261
        %v4266 = vand.u32 2147483647, %v4256
        %vm4267 = vcmp.eq.f32.partialorder %v4266, 8.507059e+37
        %v4268 = vand.u32 %v4256, 2147483648
        %v4269 = vor.u32 1.1754944e-38, %v4268
        %v4270 = vsel %vm4267, %v4269, %v4265
        %v4271 = vmul.f32 %v4246, %v4270
        %v4272 = vmin.f32 %v4271, 1.0
        %v4273 = vmax.f32 %v4272, -1.0
        %v4274 = vmul.f32 %v2299, %v2299
        %v4275 = vmin.f32 16.0, %v4274
        %v4276 = vmul.f32 %v4275, 2.1237322e-06
        %v4277 = vadd.f32 %v4276, 0.00028619796
        %v4278 = vmul.f32 %v4275, %v4277
        %v4279 = vadd.f32 %v4278, 0.0036580483
        %v4280 = vmul.f32 %v4275, %v4279
        %v4281 = vadd.f32 %v4280, 0.05243302
        %v4282 = vmul.f32 %v4275, %v4281
        %v4283 = vadd.f32 %v4282, 0.18741608
        %v4284 = vmul.f32 %v4275, %v4283
        %v4285 = vadd.f32 %v4284, 1.1283791
        %v4286 = vmul.f32 %v2299, %v4285
        %v4287 = vmul.f32 %v4275, 3.8918573e-05
        %v4288 = vadd.f32 %v4287, 0.001143296
        %v4289 = vmul.f32 %v4275, %v4288
        %v4290 = vadd.f32 %v4289, 0.014752088
        %v4291 = vmul.f32 %v4275, %v4290
        %v4292 = vadd.f32 %v4291, 0.112945676
        %v4293 = vmul.f32 %v4275, %v4292
        %v4294 = vadd.f32 %v4293, 0.4994258
        %v4295 = vmul.f32 %v4275, %v4294
        %v4296 = vadd.f32 %v4295, 1.0
        %v4297 = vrcp.pop %v4296
        %v4298 = vmul.f32 %v4296, %v4297
        %v4299 = vsub.f32 1.0, %v4298
        %v4300 = vmul.f32 %v4297, %v4299
        %v4301 = vadd.f32 %v4297, %v4300
        %vm4302 = vweird.f32 %v4296
        %vm4303 = vweird.f32 %v4297
        %vm4304 = vmor %vm4302, %vm4303
        %v4305 = vsel %vm4304, %v4297, %v4301
        %v4306 = vand.u32 2147483647, %v4296
        %vm4307 = vcmp.eq.f32.partialorder %v4306, 8.507059e+37
        %v4308 = vand.u32 %v4296, 2147483648
        %v4309 = vor.u32 1.1754944e-38, %v4308
        %v4310 = vsel %vm4307, %v4309, %v4305
        %v4311 = vmul.f32 %v4286, %v4310
        %v4312 = vmin.f32 %v4311, 1.0
        %v4313 = vmax.f32 %v4312, -1.0
        %v4314 = vmul.f32 %v2300, %v2300
        %v4315 = vmin.f32 16.0, %v4314
        %v4316 = vmul.f32 %v4315, 2.1237322e-06
        %v4317 = vadd.f32 %v4316, 0.00028619796
        %v4318 = vmul.f32 %v4315, %v4317
        %v4319 = vadd.f32 %v4318, 0.0036580483
        %v4320 = vmul.f32 %v4315, %v4319
        %v4321 = vadd.f32 %v4320, 0.05243302
        %v4322 = vmul.f32 %v4315, %v4321
        %v4323 = vadd.f32 %v4322, 0.18741608
        %v4324 = vmul.f32 %v4315, %v4323
        %v4325 = vadd.f32 %v4324, 1.1283791
        %v4326 = vmul.f32 %v2300, %v4325
        %v4327 = vmul.f32 %v4315, 3.8918573e-05
        %v4328 = vadd.f32 %v4327, 0.001143296
        %v4329 = vmul.f32 %v4315, %v4328
        %v4330 = vadd.f32 %v4329, 0.014752088
        %v4331 = vmul.f32 %v4315, %v4330
        %v4332 = vadd.f32 %v4331, 0.112945676
        %v4333 = vmul.f32 %v4315, %v4332
        %v4334 = vadd.f32 %v4333, 0.4994258
        %v4335 = vmul.f32 %v4315, %v4334
        %v4336 = vadd.f32 %v4335, 1.0
        %v4337 = vrcp.pop %v4336
        %v4338 = vmul.f32 %v4336, %v4337
        %v4339 = vsub.f32 1.0, %v4338
        %v4340 = vmul.f32 %v4337, %v4339
        %v4341 = vadd.f32 %v4337, %v4340
        %vm4342 = vweird.f32 %v4336
        %vm4343 = vweird.f32 %v4337
        %vm4344 = vmor %vm4342, %vm4343
        %v4345 = vsel %vm4344, %v4337, %v4341
        %v4346 = vand.u32 2147483647, %v4336
        %vm4347 = vcmp.eq.f32.partialorder %v4346, 8.507059e+37
        %v4348 = vand.u32 %v4336, 2147483648
        %v4349 = vor.u32 1.1754944e-38, %v4348
        %v4350 = vsel %vm4347, %v4349, %v4345
        %v4351 = vmul.f32 %v4326, %v4350
        %v4352 = vmin.f32 %v4351, 1.0
        %v4353 = vmax.f32 %v4352, -1.0
        %v4354 = vmul.f32 %v2301, %v2301
        %v4355 = vmin.f32 16.0, %v4354
        %v4356 = vmul.f32 %v4355, 2.1237322e-06
        %v4357 = vadd.f32 %v4356, 0.00028619796
        %v4358 = vmul.f32 %v4355, %v4357
        %v4359 = vadd.f32 %v4358, 0.0036580483
        %v4360 = vmul.f32 %v4355, %v4359
        %v4361 = vadd.f32 %v4360, 0.05243302
        %v4362 = vmul.f32 %v4355, %v4361
        %v4363 = vadd.f32 %v4362, 0.18741608
        %v4364 = vmul.f32 %v4355, %v4363
        %v4365 = vadd.f32 %v4364, 1.1283791
        %v4366 = vmul.f32 %v2301, %v4365
        %v4367 = vmul.f32 %v4355, 3.8918573e-05
        %v4368 = vadd.f32 %v4367, 0.001143296
        %v4369 = vmul.f32 %v4355, %v4368
        %v4370 = vadd.f32 %v4369, 0.014752088
        %v4371 = vmul.f32 %v4355, %v4370
        %v4372 = vadd.f32 %v4371, 0.112945676
        %v4373 = vmul.f32 %v4355, %v4372
        %v4374 = vadd.f32 %v4373, 0.4994258
        %v4375 = vmul.f32 %v4355, %v4374
        %v4376 = vadd.f32 %v4375, 1.0
        %v4377 = vrcp.pop %v4376
        %v4378 = vmul.f32 %v4376, %v4377
        %v4379 = vsub.f32 1.0, %v4378
        %v4380 = vmul.f32 %v4377, %v4379
        %v4381 = vadd.f32 %v4377, %v4380
        %vm4382 = vweird.f32 %v4376
        %vm4383 = vweird.f32 %v4377
        %vm4384 = vmor %vm4382, %vm4383
        %v4385 = vsel %vm4384, %v4377, %v4381
        %v4386 = vand.u32 2147483647, %v4376
        %vm4387 = vcmp.eq.f32.partialorder %v4386, 8.507059e+37
        %v4388 = vand.u32 %v4376, 2147483648
        %v4389 = vor.u32 1.1754944e-38, %v4388
        %v4390 = vsel %vm4387, %v4389, %v4385
        %v4391 = vmul.f32 %v4366, %v4390
        %v4392 = vmin.f32 %v4391, 1.0
        %v4393 = vmax.f32 %v4392, -1.0
        %v4394 = vmul.f32 %v2302, %v2302
        %v4395 = vmin.f32 16.0, %v4394
        %v4396 = vmul.f32 %v4395, 2.1237322e-06
        %v4397 = vadd.f32 %v4396, 0.00028619796
        %v4398 = vmul.f32 %v4395, %v4397
        %v4399 = vadd.f32 %v4398, 0.0036580483
        %v4400 = vmul.f32 %v4395, %v4399
        %v4401 = vadd.f32 %v4400, 0.05243302
        %v4402 = vmul.f32 %v4395, %v4401
        %v4403 = vadd.f32 %v4402, 0.18741608
        %v4404 = vmul.f32 %v4395, %v4403
        %v4405 = vadd.f32 %v4404, 1.1283791
        %v4406 = vmul.f32 %v2302, %v4405
        %v4407 = vmul.f32 %v4395, 3.8918573e-05
        %v4408 = vadd.f32 %v4407, 0.001143296
        %v4409 = vmul.f32 %v4395, %v4408
        %v4410 = vadd.f32 %v4409, 0.014752088
        %v4411 = vmul.f32 %v4395, %v4410
        %v4412 = vadd.f32 %v4411, 0.112945676
        %v4413 = vmul.f32 %v4395, %v4412
        %v4414 = vadd.f32 %v4413, 0.4994258
        %v4415 = vmul.f32 %v4395, %v4414
        %v4416 = vadd.f32 %v4415, 1.0
        %v4417 = vrcp.pop %v4416
        %v4418 = vmul.f32 %v4416, %v4417
        %v4419 = vsub.f32 1.0, %v4418
        %v4420 = vmul.f32 %v4417, %v4419
        %v4421 = vadd.f32 %v4417, %v4420
        %vm4422 = vweird.f32 %v4416
        %vm4423 = vweird.f32 %v4417
        %vm4424 = vmor %vm4422, %vm4423
        %v4425 = vsel %vm4424, %v4417, %v4421
        %v4426 = vand.u32 2147483647, %v4416
        %vm4427 = vcmp.eq.f32.partialorder %v4426, 8.507059e+37
        %v4428 = vand.u32 %v4416, 2147483648
        %v4429 = vor.u32 1.1754944e-38, %v4428
        %v4430 = vsel %vm4427, %v4429, %v4425
        %v4431 = vmul.f32 %v4406, %v4430
        %v4432 = vmin.f32 %v4431, 1.0
        %v4433 = vmax.f32 %v4432, -1.0
        %v4434 = vmul.f32 %v2303, %v2303
        %v4435 = vmin.f32 16.0, %v4434
        %v4436 = vmul.f32 %v4435, 2.1237322e-06
        %v4437 = vadd.f32 %v4436, 0.00028619796
        %v4438 = vmul.f32 %v4435, %v4437
        %v4439 = vadd.f32 %v4438, 0.0036580483
        %v4440 = vmul.f32 %v4435, %v4439
        %v4441 = vadd.f32 %v4440, 0.05243302
        %v4442 = vmul.f32 %v4435, %v4441
        %v4443 = vadd.f32 %v4442, 0.18741608
        %v4444 = vmul.f32 %v4435, %v4443
        %v4445 = vadd.f32 %v4444, 1.1283791
        %v4446 = vmul.f32 %v2303, %v4445
        %v4447 = vmul.f32 %v4435, 3.8918573e-05
        %v4448 = vadd.f32 %v4447, 0.001143296
        %v4449 = vmul.f32 %v4435, %v4448
        %v4450 = vadd.f32 %v4449, 0.014752088
        %v4451 = vmul.f32 %v4435, %v4450
        %v4452 = vadd.f32 %v4451, 0.112945676
        %v4453 = vmul.f32 %v4435, %v4452
        %v4454 = vadd.f32 %v4453, 0.4994258
        %v4455 = vmul.f32 %v4435, %v4454
        %v4456 = vadd.f32 %v4455, 1.0
        %v4457 = vrcp.pop %v4456
        %v4458 = vmul.f32 %v4456, %v4457
        %v4459 = vsub.f32 1.0, %v4458
        %v4460 = vmul.f32 %v4457, %v4459
        %v4461 = vadd.f32 %v4457, %v4460
        %vm4462 = vweird.f32 %v4456
        %vm4463 = vweird.f32 %v4457
        %vm4464 = vmor %vm4462, %vm4463
        %v4465 = vsel %vm4464, %v4457, %v4461
        %v4466 = vand.u32 2147483647, %v4456
        %vm4467 = vcmp.eq.f32.partialorder %v4466, 8.507059e+37
        %v4468 = vand.u32 %v4456, 2147483648
        %v4469 = vor.u32 1.1754944e-38, %v4468
        %v4470 = vsel %vm4467, %v4469, %v4465
        %v4471 = vmul.f32 %v4446, %v4470
        %v4472 = vmin.f32 %v4471, 1.0
        %v4473 = vmax.f32 %v4472, -1.0
        %v4474 = vmul.f32 %v2304, %v2304
        %v4475 = vmin.f32 16.0, %v4474
        %v4476 = vmul.f32 %v4475, 2.1237322e-06
        %v4477 = vadd.f32 %v4476, 0.00028619796
        %v4478 = vmul.f32 %v4475, %v4477
        %v4479 = vadd.f32 %v4478, 0.0036580483
        %v4480 = vmul.f32 %v4475, %v4479
        %v4481 = vadd.f32 %v4480, 0.05243302
        %v4482 = vmul.f32 %v4475, %v4481
        %v4483 = vadd.f32 %v4482, 0.18741608
        %v4484 = vmul.f32 %v4475, %v4483
        %v4485 = vadd.f32 %v4484, 1.1283791
        %v4486 = vmul.f32 %v2304, %v4485
        %v4487 = vmul.f32 %v4475, 3.8918573e-05
        %v4488 = vadd.f32 %v4487, 0.001143296
        %v4489 = vmul.f32 %v4475, %v4488
        %v4490 = vadd.f32 %v4489, 0.014752088
        %v4491 = vmul.f32 %v4475, %v4490
        %v4492 = vadd.f32 %v4491, 0.112945676
        %v4493 = vmul.f32 %v4475, %v4492
        %v4494 = vadd.f32 %v4493, 0.4994258
        %v4495 = vmul.f32 %v4475, %v4494
        %v4496 = vadd.f32 %v4495, 1.0
        %v4497 = vrcp.pop %v4496
        %v4498 = vmul.f32 %v4496, %v4497
        %v4499 = vsub.f32 1.0, %v4498
        %v4500 = vmul.f32 %v4497, %v4499
        %v4501 = vadd.f32 %v4497, %v4500
        %vm4502 = vweird.f32 %v4496
        %vm4503 = vweird.f32 %v4497
        %vm4504 = vmor %vm4502, %vm4503
        %v4505 = vsel %vm4504, %v4497, %v4501
        %v4506 = vand.u32 2147483647, %v4496
        %vm4507 = vcmp.eq.f32.partialorder %v4506, 8.507059e+37
        %v4508 = vand.u32 %v4496, 2147483648
        %v4509 = vor.u32 1.1754944e-38, %v4508
        %v4510 = vsel %vm4507, %v4509, %v4505
        %v4511 = vmul.f32 %v4486, %v4510
        %v4512 = vmin.f32 %v4511, 1.0
        %v4513 = vmax.f32 %v4512, -1.0
        %v4514 = vmul.f32 %v2305, %v2305
        %v4515 = vmin.f32 16.0, %v4514
        %v4516 = vmul.f32 %v4515, 2.1237322e-06
        %v4517 = vadd.f32 %v4516, 0.00028619796
        %v4518 = vmul.f32 %v4515, %v4517
        %v4519 = vadd.f32 %v4518, 0.0036580483
        %v4520 = vmul.f32 %v4515, %v4519
        %v4521 = vadd.f32 %v4520, 0.05243302
        %v4522 = vmul.f32 %v4515, %v4521
        %v4523 = vadd.f32 %v4522, 0.18741608
        %v4524 = vmul.f32 %v4515, %v4523
        %v4525 = vadd.f32 %v4524, 1.1283791
        %v4526 = vmul.f32 %v2305, %v4525
        %v4527 = vmul.f32 %v4515, 3.8918573e-05
        %v4528 = vadd.f32 %v4527, 0.001143296
        %v4529 = vmul.f32 %v4515, %v4528
        %v4530 = vadd.f32 %v4529, 0.014752088
        %v4531 = vmul.f32 %v4515, %v4530
        %v4532 = vadd.f32 %v4531, 0.112945676
        %v4533 = vmul.f32 %v4515, %v4532
        %v4534 = vadd.f32 %v4533, 0.4994258
        %v4535 = vmul.f32 %v4515, %v4534
        %v4536 = vadd.f32 %v4535, 1.0
        %v4537 = vrcp.pop %v4536
        %v4538 = vmul.f32 %v4536, %v4537
        %v4539 = vsub.f32 1.0, %v4538
        %v4540 = vmul.f32 %v4537, %v4539
        %v4541 = vadd.f32 %v4537, %v4540
        %vm4542 = vweird.f32 %v4536
        %vm4543 = vweird.f32 %v4537
        %vm4544 = vmor %vm4542, %vm4543
        %v4545 = vsel %vm4544, %v4537, %v4541
        %v4546 = vand.u32 2147483647, %v4536
        %vm4547 = vcmp.eq.f32.partialorder %v4546, 8.507059e+37
        %v4548 = vand.u32 %v4536, 2147483648
        %v4549 = vor.u32 1.1754944e-38, %v4548
        %v4550 = vsel %vm4547, %v4549, %v4545
        %v4551 = vmul.f32 %v4526, %v4550
        %v4552 = vmin.f32 %v4551, 1.0
        %v4553 = vmax.f32 %v4552, -1.0
        %v4554 = vmul.f32 %v2306, %v2306
        %v4555 = vmin.f32 16.0, %v4554
        %v4556 = vmul.f32 %v4555, 2.1237322e-06
        %v4557 = vadd.f32 %v4556, 0.00028619796
        %v4558 = vmul.f32 %v4555, %v4557
        %v4559 = vadd.f32 %v4558, 0.0036580483
        %v4560 = vmul.f32 %v4555, %v4559
        %v4561 = vadd.f32 %v4560, 0.05243302
        %v4562 = vmul.f32 %v4555, %v4561
        %v4563 = vadd.f32 %v4562, 0.18741608
        %v4564 = vmul.f32 %v4555, %v4563
        %v4565 = vadd.f32 %v4564, 1.1283791
        %v4566 = vmul.f32 %v2306, %v4565
        %v4567 = vmul.f32 %v4555, 3.8918573e-05
        %v4568 = vadd.f32 %v4567, 0.001143296
        %v4569 = vmul.f32 %v4555, %v4568
        %v4570 = vadd.f32 %v4569, 0.014752088
        %v4571 = vmul.f32 %v4555, %v4570
        %v4572 = vadd.f32 %v4571, 0.112945676
        %v4573 = vmul.f32 %v4555, %v4572
        %v4574 = vadd.f32 %v4573, 0.4994258
        %v4575 = vmul.f32 %v4555, %v4574
        %v4576 = vadd.f32 %v4575, 1.0
        %v4577 = vrcp.pop %v4576
        %v4578 = vmul.f32 %v4576, %v4577
        %v4579 = vsub.f32 1.0, %v4578
        %v4580 = vmul.f32 %v4577, %v4579
        %v4581 = vadd.f32 %v4577, %v4580
        %vm4582 = vweird.f32 %v4576
        %vm4583 = vweird.f32 %v4577
        %vm4584 = vmor %vm4582, %vm4583
        %v4585 = vsel %vm4584, %v4577, %v4581
        %v4586 = vand.u32 2147483647, %v4576
        %vm4587 = vcmp.eq.f32.partialorder %v4586, 8.507059e+37
        %v4588 = vand.u32 %v4576, 2147483648
        %v4589 = vor.u32 1.1754944e-38, %v4588
        %v4590 = vsel %vm4587, %v4589, %v4585
        %v4591 = vmul.f32 %v4566, %v4590
        %v4592 = vmin.f32 %v4591, 1.0
        %v4593 = vmax.f32 %v4592, -1.0
        %v4594 = vmul.f32 %v2307, %v2307
        %v4595 = vmin.f32 16.0, %v4594
        %v4596 = vmul.f32 %v4595, 2.1237322e-06
        %v4597 = vadd.f32 %v4596, 0.00028619796
        %v4598 = vmul.f32 %v4595, %v4597
        %v4599 = vadd.f32 %v4598, 0.0036580483
        %v4600 = vmul.f32 %v4595, %v4599
        %v4601 = vadd.f32 %v4600, 0.05243302
        %v4602 = vmul.f32 %v4595, %v4601
        %v4603 = vadd.f32 %v4602, 0.18741608
        %v4604 = vmul.f32 %v4595, %v4603
        %v4605 = vadd.f32 %v4604, 1.1283791
        %v4606 = vmul.f32 %v2307, %v4605
        %v4607 = vmul.f32 %v4595, 3.8918573e-05
        %v4608 = vadd.f32 %v4607, 0.001143296
        %v4609 = vmul.f32 %v4595, %v4608
        %v4610 = vadd.f32 %v4609, 0.014752088
        %v4611 = vmul.f32 %v4595, %v4610
        %v4612 = vadd.f32 %v4611, 0.112945676
        %v4613 = vmul.f32 %v4595, %v4612
        %v4614 = vadd.f32 %v4613, 0.4994258
        %v4615 = vmul.f32 %v4595, %v4614
        %v4616 = vadd.f32 %v4615, 1.0
        %v4617 = vrcp.pop %v4616
        %v4618 = vmul.f32 %v4616, %v4617
        %v4619 = vsub.f32 1.0, %v4618
        %v4620 = vmul.f32 %v4617, %v4619
        %v4621 = vadd.f32 %v4617, %v4620
        %vm4622 = vweird.f32 %v4616
        %vm4623 = vweird.f32 %v4617
        %vm4624 = vmor %vm4622, %vm4623
        %v4625 = vsel %vm4624, %v4617, %v4621
        %v4626 = vand.u32 2147483647, %v4616
        %vm4627 = vcmp.eq.f32.partialorder %v4626, 8.507059e+37
        %v4628 = vand.u32 %v4616, 2147483648
        %v4629 = vor.u32 1.1754944e-38, %v4628
        %v4630 = vsel %vm4627, %v4629, %v4625
        %v4631 = vmul.f32 %v4606, %v4630
        %v4632 = vmin.f32 %v4631, 1.0
        %v4633 = vmax.f32 %v4632, -1.0
        %v4634 = vmul.f32 %v2308, %v2308
        %v4635 = vmin.f32 16.0, %v4634
        %v4636 = vmul.f32 %v4635, 2.1237322e-06
        %v4637 = vadd.f32 %v4636, 0.00028619796
        %v4638 = vmul.f32 %v4635, %v4637
        %v4639 = vadd.f32 %v4638, 0.0036580483
        %v4640 = vmul.f32 %v4635, %v4639
        %v4641 = vadd.f32 %v4640, 0.05243302
        %v4642 = vmul.f32 %v4635, %v4641
        %v4643 = vadd.f32 %v4642, 0.18741608
        %v4644 = vmul.f32 %v4635, %v4643
        %v4645 = vadd.f32 %v4644, 1.1283791
        %v4646 = vmul.f32 %v2308, %v4645
        %v4647 = vmul.f32 %v4635, 3.8918573e-05
        %v4648 = vadd.f32 %v4647, 0.001143296
        %v4649 = vmul.f32 %v4635, %v4648
        %v4650 = vadd.f32 %v4649, 0.014752088
        %v4651 = vmul.f32 %v4635, %v4650
        %v4652 = vadd.f32 %v4651, 0.112945676
        %v4653 = vmul.f32 %v4635, %v4652
        %v4654 = vadd.f32 %v4653, 0.4994258
        %v4655 = vmul.f32 %v4635, %v4654
        %v4656 = vadd.f32 %v4655, 1.0
        %v4657 = vrcp.pop %v4656
        %v4658 = vmul.f32 %v4656, %v4657
        %v4659 = vsub.f32 1.0, %v4658
        %v4660 = vmul.f32 %v4657, %v4659
        %v4661 = vadd.f32 %v4657, %v4660
        %vm4662 = vweird.f32 %v4656
        %vm4663 = vweird.f32 %v4657
        %vm4664 = vmor %vm4662, %vm4663
        %v4665 = vsel %vm4664, %v4657, %v4661
        %v4666 = vand.u32 2147483647, %v4656
        %vm4667 = vcmp.eq.f32.partialorder %v4666, 8.507059e+37
        %v4668 = vand.u32 %v4656, 2147483648
        %v4669 = vor.u32 1.1754944e-38, %v4668
        %v4670 = vsel %vm4667, %v4669, %v4665
        %v4671 = vmul.f32 %v4646, %v4670
        %v4672 = vmin.f32 %v4671, 1.0
        %v4673 = vmax.f32 %v4672, -1.0
        %v4674 = vmul.f32 %v2309, %v2309
        %v4675 = vmin.f32 16.0, %v4674
        %v4676 = vmul.f32 %v4675, 2.1237322e-06
        %v4677 = vadd.f32 %v4676, 0.00028619796
        %v4678 = vmul.f32 %v4675, %v4677
        %v4679 = vadd.f32 %v4678, 0.0036580483
        %v4680 = vmul.f32 %v4675, %v4679
        %v4681 = vadd.f32 %v4680, 0.05243302
        %v4682 = vmul.f32 %v4675, %v4681
        %v4683 = vadd.f32 %v4682, 0.18741608
        %v4684 = vmul.f32 %v4675, %v4683
        %v4685 = vadd.f32 %v4684, 1.1283791
        %v4686 = vmul.f32 %v2309, %v4685
        %v4687 = vmul.f32 %v4675, 3.8918573e-05
        %v4688 = vadd.f32 %v4687, 0.001143296
        %v4689 = vmul.f32 %v4675, %v4688
        %v4690 = vadd.f32 %v4689, 0.014752088
        %v4691 = vmul.f32 %v4675, %v4690
        %v4692 = vadd.f32 %v4691, 0.112945676
        %v4693 = vmul.f32 %v4675, %v4692
        %v4694 = vadd.f32 %v4693, 0.4994258
        %v4695 = vmul.f32 %v4675, %v4694
        %v4696 = vadd.f32 %v4695, 1.0
        %v4697 = vrcp.pop %v4696
        %v4698 = vmul.f32 %v4696, %v4697
        %v4699 = vsub.f32 1.0, %v4698
        %v4700 = vmul.f32 %v4697, %v4699
        %v4701 = vadd.f32 %v4697, %v4700
        %vm4702 = vweird.f32 %v4696
        %vm4703 = vweird.f32 %v4697
        %vm4704 = vmor %vm4702, %vm4703
        %v4705 = vsel %vm4704, %v4697, %v4701
        %v4706 = vand.u32 2147483647, %v4696
        %vm4707 = vcmp.eq.f32.partialorder %v4706, 8.507059e+37
        %v4708 = vand.u32 %v4696, 2147483648
        %v4709 = vor.u32 1.1754944e-38, %v4708
        %v4710 = vsel %vm4707, %v4709, %v4705
        %v4711 = vmul.f32 %v4686, %v4710
        %v4712 = vmin.f32 %v4711, 1.0
        %v4713 = vmax.f32 %v4712, -1.0
        %v4714 = vmul.f32 %v2310, %v2310
        %v4715 = vmin.f32 16.0, %v4714
        %v4716 = vmul.f32 %v4715, 2.1237322e-06
        %v4717 = vadd.f32 %v4716, 0.00028619796
        %v4718 = vmul.f32 %v4715, %v4717
        %v4719 = vadd.f32 %v4718, 0.0036580483
        %v4720 = vmul.f32 %v4715, %v4719
        %v4721 = vadd.f32 %v4720, 0.05243302
        %v4722 = vmul.f32 %v4715, %v4721
        %v4723 = vadd.f32 %v4722, 0.18741608
        %v4724 = vmul.f32 %v4715, %v4723
        %v4725 = vadd.f32 %v4724, 1.1283791
        %v4726 = vmul.f32 %v2310, %v4725
        %v4727 = vmul.f32 %v4715, 3.8918573e-05
        %v4728 = vadd.f32 %v4727, 0.001143296
        %v4729 = vmul.f32 %v4715, %v4728
        %v4730 = vadd.f32 %v4729, 0.014752088
        %v4731 = vmul.f32 %v4715, %v4730
        %v4732 = vadd.f32 %v4731, 0.112945676
        %v4733 = vmul.f32 %v4715, %v4732
        %v4734 = vadd.f32 %v4733, 0.4994258
        %v4735 = vmul.f32 %v4715, %v4734
        %v4736 = vadd.f32 %v4735, 1.0
        %v4737 = vrcp.pop %v4736
        %v4738 = vmul.f32 %v4736, %v4737
        %v4739 = vsub.f32 1.0, %v4738
        %v4740 = vmul.f32 %v4737, %v4739
        %v4741 = vadd.f32 %v4737, %v4740
        %vm4742 = vweird.f32 %v4736
        %vm4743 = vweird.f32 %v4737
        %vm4744 = vmor %vm4742, %vm4743
        %v4745 = vsel %vm4744, %v4737, %v4741
        %v4746 = vand.u32 2147483647, %v4736
        %vm4747 = vcmp.eq.f32.partialorder %v4746, 8.507059e+37
        %v4748 = vand.u32 %v4736, 2147483648
        %v4749 = vor.u32 1.1754944e-38, %v4748
        %v4750 = vsel %vm4747, %v4749, %v4745
        %v4751 = vmul.f32 %v4726, %v4750
        %v4752 = vmin.f32 %v4751, 1.0
        %v4753 = vmax.f32 %v4752, -1.0
        %v4754 = vmul.f32 %v2311, %v2311
        %v4755 = vmin.f32 16.0, %v4754
        %v4756 = vmul.f32 %v4755, 2.1237322e-06
        %v4757 = vadd.f32 %v4756, 0.00028619796
        %v4758 = vmul.f32 %v4755, %v4757
        %v4759 = vadd.f32 %v4758, 0.0036580483
        %v4760 = vmul.f32 %v4755, %v4759
        %v4761 = vadd.f32 %v4760, 0.05243302
        %v4762 = vmul.f32 %v4755, %v4761
        %v4763 = vadd.f32 %v4762, 0.18741608
        %v4764 = vmul.f32 %v4755, %v4763
        %v4765 = vadd.f32 %v4764, 1.1283791
        %v4766 = vmul.f32 %v2311, %v4765
        %v4767 = vmul.f32 %v4755, 3.8918573e-05
        %v4768 = vadd.f32 %v4767, 0.001143296
        %v4769 = vmul.f32 %v4755, %v4768
        %v4770 = vadd.f32 %v4769, 0.014752088
        %v4771 = vmul.f32 %v4755, %v4770
        %v4772 = vadd.f32 %v4771, 0.112945676
        %v4773 = vmul.f32 %v4755, %v4772
        %v4774 = vadd.f32 %v4773, 0.4994258
        %v4775 = vmul.f32 %v4755, %v4774
        %v4776 = vadd.f32 %v4775, 1.0
        %v4777 = vrcp.pop %v4776
        %v4778 = vmul.f32 %v4776, %v4777
        %v4779 = vsub.f32 1.0, %v4778
        %v4780 = vmul.f32 %v4777, %v4779
        %v4781 = vadd.f32 %v4777, %v4780
        %vm4782 = vweird.f32 %v4776
        %vm4783 = vweird.f32 %v4777
        %vm4784 = vmor %vm4782, %vm4783
        %v4785 = vsel %vm4784, %v4777, %v4781
        %v4786 = vand.u32 2147483647, %v4776
        %vm4787 = vcmp.eq.f32.partialorder %v4786, 8.507059e+37
        %v4788 = vand.u32 %v4776, 2147483648
        %v4789 = vor.u32 1.1754944e-38, %v4788
        %v4790 = vsel %vm4787, %v4789, %v4785
        %v4791 = vmul.f32 %v4766, %v4790
        %v4792 = vmin.f32 %v4791, 1.0
        %v4793 = vmax.f32 %v4792, -1.0
        %v4794 = vmul.f32 %v2312, %v2312
        %v4795 = vmin.f32 16.0, %v4794
        %v4796 = vmul.f32 %v4795, 2.1237322e-06
        %v4797 = vadd.f32 %v4796, 0.00028619796
        %v4798 = vmul.f32 %v4795, %v4797
        %v4799 = vadd.f32 %v4798, 0.0036580483
        %v4800 = vmul.f32 %v4795, %v4799
        %v4801 = vadd.f32 %v4800, 0.05243302
        %v4802 = vmul.f32 %v4795, %v4801
        %v4803 = vadd.f32 %v4802, 0.18741608
        %v4804 = vmul.f32 %v4795, %v4803
        %v4805 = vadd.f32 %v4804, 1.1283791
        %v4806 = vmul.f32 %v2312, %v4805
        %v4807 = vmul.f32 %v4795, 3.8918573e-05
        %v4808 = vadd.f32 %v4807, 0.001143296
        %v4809 = vmul.f32 %v4795, %v4808
        %v4810 = vadd.f32 %v4809, 0.014752088
        %v4811 = vmul.f32 %v4795, %v4810
        %v4812 = vadd.f32 %v4811, 0.112945676
        %v4813 = vmul.f32 %v4795, %v4812
        %v4814 = vadd.f32 %v4813, 0.4994258
        %v4815 = vmul.f32 %v4795, %v4814
        %v4816 = vadd.f32 %v4815, 1.0
        %v4817 = vrcp.pop %v4816
        %v4818 = vmul.f32 %v4816, %v4817
        %v4819 = vsub.f32 1.0, %v4818
        %v4820 = vmul.f32 %v4817, %v4819
        %v4821 = vadd.f32 %v4817, %v4820
        %vm4822 = vweird.f32 %v4816
        %vm4823 = vweird.f32 %v4817
        %vm4824 = vmor %vm4822, %vm4823
        %v4825 = vsel %vm4824, %v4817, %v4821
        %v4826 = vand.u32 2147483647, %v4816
        %vm4827 = vcmp.eq.f32.partialorder %v4826, 8.507059e+37
        %v4828 = vand.u32 %v4816, 2147483648
        %v4829 = vor.u32 1.1754944e-38, %v4828
        %v4830 = vsel %vm4827, %v4829, %v4825
        %v4831 = vmul.f32 %v4806, %v4830
        %v4832 = vmin.f32 %v4831, 1.0
        %v4833 = vmax.f32 %v4832, -1.0
        %v4834 = vmul.f32 %v2313, %v2313
        %v4835 = vmin.f32 16.0, %v4834
        %v4836 = vmul.f32 %v4835, 2.1237322e-06
        %v4837 = vadd.f32 %v4836, 0.00028619796
        %v4838 = vmul.f32 %v4835, %v4837
        %v4839 = vadd.f32 %v4838, 0.0036580483
        %v4840 = vmul.f32 %v4835, %v4839
        %v4841 = vadd.f32 %v4840, 0.05243302
        %v4842 = vmul.f32 %v4835, %v4841
        %v4843 = vadd.f32 %v4842, 0.18741608
        %v4844 = vmul.f32 %v4835, %v4843
        %v4845 = vadd.f32 %v4844, 1.1283791
        %v4846 = vmul.f32 %v2313, %v4845
        %v4847 = vmul.f32 %v4835, 3.8918573e-05
        %v4848 = vadd.f32 %v4847, 0.001143296
        %v4849 = vmul.f32 %v4835, %v4848
        %v4850 = vadd.f32 %v4849, 0.014752088
        %v4851 = vmul.f32 %v4835, %v4850
        %v4852 = vadd.f32 %v4851, 0.112945676
        %v4853 = vmul.f32 %v4835, %v4852
        %v4854 = vadd.f32 %v4853, 0.4994258
        %v4855 = vmul.f32 %v4835, %v4854
        %v4856 = vadd.f32 %v4855, 1.0
        %v4857 = vrcp.pop %v4856
        %v4858 = vmul.f32 %v4856, %v4857
        %v4859 = vsub.f32 1.0, %v4858
        %v4860 = vmul.f32 %v4857, %v4859
        %v4861 = vadd.f32 %v4857, %v4860
        %vm4862 = vweird.f32 %v4856
        %vm4863 = vweird.f32 %v4857
        %vm4864 = vmor %vm4862, %vm4863
        %v4865 = vsel %vm4864, %v4857, %v4861
        %v4866 = vand.u32 2147483647, %v4856
        %vm4867 = vcmp.eq.f32.partialorder %v4866, 8.507059e+37
        %v4868 = vand.u32 %v4856, 2147483648
        %v4869 = vor.u32 1.1754944e-38, %v4868
        %v4870 = vsel %vm4867, %v4869, %v4865
        %v4871 = vmul.f32 %v4846, %v4870
        %v4872 = vmin.f32 %v4871, 1.0
        %v4873 = vmax.f32 %v4872, -1.0
        %v4874 = vadd.f32 %v2353, 1.0
        %v4875 = vadd.f32 %v2393, 1.0
        %v4876 = vadd.f32 %v2433, 1.0
        %v4877 = vadd.f32 %v2473, 1.0
        %v4878 = vadd.f32 %v2513, 1.0
        %v4879 = vadd.f32 %v2553, 1.0
        %v4880 = vadd.f32 %v2593, 1.0
        %v4881 = vadd.f32 %v2633, 1.0
        %v4882 = vadd.f32 %v2673, 1.0
        %v4883 = vadd.f32 %v2713, 1.0
        %v4884 = vadd.f32 %v2753, 1.0
        %v4885 = vadd.f32 %v2793, 1.0
        %v4886 = vadd.f32 %v2833, 1.0
        %v4887 = vadd.f32 %v2873, 1.0
        %v4888 = vadd.f32 %v2913, 1.0
        %v4889 = vadd.f32 %v2953, 1.0
        %v4890 = vadd.f32 %v2993, 1.0
        %v4891 = vadd.f32 %v3033, 1.0
        %v4892 = vadd.f32 %v3073, 1.0
        %v4893 = vadd.f32 %v3113, 1.0
        %v4894 = vadd.f32 %v3153, 1.0
        %v4895 = vadd.f32 %v3193, 1.0
        %v4896 = vadd.f32 %v3233, 1.0
        %v4897 = vadd.f32 %v3273, 1.0
        %v4898 = vadd.f32 %v3313, 1.0
        %v4899 = vadd.f32 %v3353, 1.0
        %v4900 = vadd.f32 %v3393, 1.0
        %v4901 = vadd.f32 %v3433, 1.0
        %v4902 = vadd.f32 %v3473, 1.0
        %v4903 = vadd.f32 %v3513, 1.0
        %v4904 = vadd.f32 %v3553, 1.0
        %v4905 = vadd.f32 %v3593, 1.0
        %v4906 = vadd.f32 %v3633, 1.0
        %v4907 = vadd.f32 %v3673, 1.0
        %v4908 = vadd.f32 %v3713, 1.0
        %v4909 = vadd.f32 %v3753, 1.0
        %v4910 = vadd.f32 %v3793, 1.0
        %v4911 = vadd.f32 %v3833, 1.0
        %v4912 = vadd.f32 %v3873, 1.0
        %v4913 = vadd.f32 %v3913, 1.0
        %v4914 = vadd.f32 %v3953, 1.0
        %v4915 = vadd.f32 %v3993, 1.0
        %v4916 = vadd.f32 %v4033, 1.0
        %v4917 = vadd.f32 %v4073, 1.0
        %v4918 = vadd.f32 %v4113, 1.0
        %v4919 = vadd.f32 %v4153, 1.0
        %v4920 = vadd.f32 %v4193, 1.0
        %v4921 = vadd.f32 %v4233, 1.0
        %v4922 = vadd.f32 %v4273, 1.0
        %v4923 = vadd.f32 %v4313, 1.0
        %v4924 = vadd.f32 %v4353, 1.0
        %v4925 = vadd.f32 %v4393, 1.0
        %v4926 = vadd.f32 %v4433, 1.0
        %v4927 = vadd.f32 %v4473, 1.0
        %v4928 = vadd.f32 %v4513, 1.0
        %v4929 = vadd.f32 %v4553, 1.0
        %v4930 = vadd.f32 %v4593, 1.0
        %v4931 = vadd.f32 %v4633, 1.0
        %v4932 = vadd.f32 %v4673, 1.0
        %v4933 = vadd.f32 %v4713, 1.0
        %v4934 = vadd.f32 %v4753, 1.0
        %v4935 = vadd.f32 %v4793, 1.0
        %v4936 = vadd.f32 %v4833, 1.0
        %v4937 = vadd.f32 %v4873, 1.0
        %v4938 = vmul.f32 %v2186, %v4874
        %v4939 = vmul.f32 %v2187, %v4875
        %v4940 = vmul.f32 %v2188, %v4876
        %v4941 = vmul.f32 %v2189, %v4877
        %v4942 = vmul.f32 %v2190, %v4878
        %v4943 = vmul.f32 %v2191, %v4879
        %v4944 = vmul.f32 %v2192, %v4880
        %v4945 = vmul.f32 %v2193, %v4881
        %v4946 = vmul.f32 %v2194, %v4882
        %v4947 = vmul.f32 %v2195, %v4883
        %v4948 = vmul.f32 %v2196, %v4884
        %v4949 = vmul.f32 %v2197, %v4885
        %v4950 = vmul.f32 %v2198, %v4886
        %v4951 = vmul.f32 %v2199, %v4887
        %v4952 = vmul.f32 %v2200, %v4888
        %v4953 = vmul.f32 %v2201, %v4889
        %v4954 = vmul.f32 %v2202, %v4890
        %v4955 = vmul.f32 %v2203, %v4891
        %v4956 = vmul.f32 %v2204, %v4892
        %v4957 = vmul.f32 %v2205, %v4893
        %v4958 = vmul.f32 %v2206, %v4894
        %v4959 = vmul.f32 %v2207, %v4895
        %v4960 = vmul.f32 %v2208, %v4896
        %v4961 = vmul.f32 %v2209, %v4897
        %v4962 = vmul.f32 %v2210, %v4898
        %v4963 = vmul.f32 %v2211, %v4899
        %v4964 = vmul.f32 %v2212, %v4900
        %v4965 = vmul.f32 %v2213, %v4901
        %v4966 = vmul.f32 %v2214, %v4902
        %v4967 = vmul.f32 %v2215, %v4903
        %v4968 = vmul.f32 %v2216, %v4904
        %v4969 = vmul.f32 %v2217, %v4905
        %v4970 = vmul.f32 %v2218, %v4906
        %v4971 = vmul.f32 %v2219, %v4907
        %v4972 = vmul.f32 %v2220, %v4908
        %v4973 = vmul.f32 %v2221, %v4909
        %v4974 = vmul.f32 %v2222, %v4910
        %v4975 = vmul.f32 %v2223, %v4911
        %v4976 = vmul.f32 %v2224, %v4912
        %v4977 = vmul.f32 %v2225, %v4913
        %v4978 = vmul.f32 %v2226, %v4914
        %v4979 = vmul.f32 %v2227, %v4915
        %v4980 = vmul.f32 %v2228, %v4916
        %v4981 = vmul.f32 %v2229, %v4917
        %v4982 = vmul.f32 %v2230, %v4918
        %v4983 = vmul.f32 %v2231, %v4919
        %v4984 = vmul.f32 %v2232, %v4920
        %v4985 = vmul.f32 %v2233, %v4921
        %v4986 = vmul.f32 %v2234, %v4922
        %v4987 = vmul.f32 %v2235, %v4923
        %v4988 = vmul.f32 %v2236, %v4924
        %v4989 = vmul.f32 %v2237, %v4925
        %v4990 = vmul.f32 %v2238, %v4926
        %v4991 = vmul.f32 %v2239, %v4927
        %v4992 = vmul.f32 %v2240, %v4928
        %v4993 = vmul.f32 %v2241, %v4929
        %v4994 = vmul.f32 %v2242, %v4930
        %v4995 = vmul.f32 %v2243, %v4931
        %v4996 = vmul.f32 %v2244, %v4932
        %v4997 = vmul.f32 %v2245, %v4933
        %v4998 = vmul.f32 %v2246, %v4934
        %v4999 = vmul.f32 %v2247, %v4935
        %v5000 = vmul.f32 %v2248, %v4936
        %v5001 = vmul.f32 %v2249, %v4937
        %v5002 = vpack.c.bf16 %v4942, %v4938
        %v5003 = vpack.c.bf16 %v4943, %v4939
        %v5004 = vpack.c.bf16 %v4944, %v4940
        %v5005 = vpack.c.bf16 %v4945, %v4941
        %v5006 = vpack.c.bf16 %v4950, %v4946
        %v5007 = vpack.c.bf16 %v4951, %v4947
        %v5008 = vpack.c.bf16 %v4952, %v4948
        %v5009 = vpack.c.bf16 %v4953, %v4949
        %v5010 = vpack.c.bf16 %v4958, %v4954
        %v5011 = vpack.c.bf16 %v4959, %v4955
        %v5012 = vpack.c.bf16 %v4960, %v4956
        %v5013 = vpack.c.bf16 %v4961, %v4957
        %v5014 = vpack.c.bf16 %v4966, %v4962
        %v5015 = vpack.c.bf16 %v4967, %v4963
        %v5016 = vpack.c.bf16 %v4968, %v4964
        %v5017 = vpack.c.bf16 %v4969, %v4965
        %v5018 = vpack.c.bf16 %v4974, %v4970
        %v5019 = vpack.c.bf16 %v4975, %v4971
        %v5020 = vpack.c.bf16 %v4976, %v4972
        %v5021 = vpack.c.bf16 %v4977, %v4973
        %v5022 = vpack.c.bf16 %v4982, %v4978
        %v5023 = vpack.c.bf16 %v4983, %v4979
        %v5024 = vpack.c.bf16 %v4984, %v4980
        %v5025 = vpack.c.bf16 %v4985, %v4981
        %v5026 = vpack.c.bf16 %v4990, %v4986
        %v5027 = vpack.c.bf16 %v4991, %v4987
        %v5028 = vpack.c.bf16 %v4992, %v4988
        %v5029 = vpack.c.bf16 %v4993, %v4989
        %v5030 = vpack.c.bf16 %v4998, %v4994
        %v5031 = vpack.c.bf16 %v4999, %v4995
        %v5032 = vpack.c.bf16 %v5000, %v4996
        %v5033 = vpack.c.bf16 %v5001, %v4997
        %v5034 = vld [vmem:[%s665] sm:$0xf]
        %v5035 = vld [vmem:[%s665 + $0x4] sm:$0xf]
        %v5036 = vld [vmem:[%s665 + $0x8] sm:$0xf]
        %v5037 = vld [vmem:[%s665 + $0xc] sm:$0xf]
        %v5038 = vld [vmem:[%s665 + $0x10] sm:$0xf]
        %v5039 = vld [vmem:[%s665 + $0x14] sm:$0xf]
        %v5040 = vld [vmem:[%s665 + $0x18] sm:$0xf]
        %v5041 = vld [vmem:[%s665 + $0x1c] sm:$0xf]
        %v5042 = vld [vmem:[%s665 + $0x20] sm:$0xf]
        %v5043 = vld [vmem:[%s665 + $0x24] sm:$0xf]
        %v5044 = vld [vmem:[%s665 + $0x28] sm:$0xf]
        %v5045 = vld [vmem:[%s665 + $0x2c] sm:$0xf]
        %v5046 = vld [vmem:[%s665 + $0x30] sm:$0xf]
        %v5047 = vld [vmem:[%s665 + $0x34] sm:$0xf]
        %v5048 = vld [vmem:[%s665 + $0x38] sm:$0xf]
        %v5049 = vld [vmem:[%s665 + $0x3c] sm:$0xf]
        %v5050 = vld [vmem:[%s665 + $0x40] sm:$0xf]
        %v5051 = vld [vmem:[%s665 + $0x44] sm:$0xf]
        %v5052 = vld [vmem:[%s665 + $0x48] sm:$0xf]
        %v5053 = vld [vmem:[%s665 + $0x4c] sm:$0xf]
        %v5054 = vld [vmem:[%s665 + $0x50] sm:$0xf]
        %v5055 = vld [vmem:[%s665 + $0x54] sm:$0xf]
        %v5056 = vld [vmem:[%s665 + $0x58] sm:$0xf]
        %v5057 = vld [vmem:[%s665 + $0x5c] sm:$0xf]
        %v5058 = vld [vmem:[%s665 + $0x60] sm:$0xf]
        %v5059 = vld [vmem:[%s665 + $0x64] sm:$0xf]
        %v5060 = vld [vmem:[%s665 + $0x68] sm:$0xf]
        %v5061 = vld [vmem:[%s665 + $0x6c] sm:$0xf]
        %v5062 = vld [vmem:[%s665 + $0x70] sm:$0xf]
        %v5063 = vld [vmem:[%s665 + $0x74] sm:$0xf]
        %v5064 = vld [vmem:[%s665 + $0x78] sm:$0xf]
        %v5065 = vld [vmem:[%s665 + $0x7c] sm:$0xf]
        %v5066 = vld [vmem:[%s665 + $0x80] sm:$0xf]
        %v5067 = vld [vmem:[%s665 + $0x84] sm:$0xf]
        %v5068 = vld [vmem:[%s665 + $0x88] sm:$0xf]
        %v5069 = vld [vmem:[%s665 + $0x8c] sm:$0xf]
        %v5070 = vld [vmem:[%s665 + $0x90] sm:$0xf]
        %v5071 = vld [vmem:[%s665 + $0x94] sm:$0xf]
        %v5072 = vld [vmem:[%s665 + $0x98] sm:$0xf]
        %v5073 = vld [vmem:[%s665 + $0x9c] sm:$0xf]
        %v5074 = vld [vmem:[%s665 + $0xa0] sm:$0xf]
        %v5075 = vld [vmem:[%s665 + $0xa4] sm:$0xf]
        %v5076 = vld [vmem:[%s665 + $0xa8] sm:$0xf]
        %v5077 = vld [vmem:[%s665 + $0xac] sm:$0xf]
        %v5078 = vld [vmem:[%s665 + $0xb0] sm:$0xf]
        %v5079 = vld [vmem:[%s665 + $0xb4] sm:$0xf]
        %v5080 = vld [vmem:[%s665 + $0xb8] sm:$0xf]
        %v5081 = vld [vmem:[%s665 + $0xbc] sm:$0xf]
        %v5082 = vld [vmem:[%s665 + $0xc0] sm:$0xf]
        %v5083 = vld [vmem:[%s665 + $0xc4] sm:$0xf]
        %v5084 = vld [vmem:[%s665 + $0xc8] sm:$0xf]
        %v5085 = vld [vmem:[%s665 + $0xcc] sm:$0xf]
        %v5086 = vld [vmem:[%s665 + $0xd0] sm:$0xf]
        %v5087 = vld [vmem:[%s665 + $0xd4] sm:$0xf]
        %v5088 = vld [vmem:[%s665 + $0xd8] sm:$0xf]
        %v5089 = vld [vmem:[%s665 + $0xdc] sm:$0xf]
        %v5090 = vld [vmem:[%s665 + $0xe0] sm:$0xf]
        %v5091 = vld [vmem:[%s665 + $0xe4] sm:$0xf]
        %v5092 = vld [vmem:[%s665 + $0xe8] sm:$0xf]
        %v5093 = vld [vmem:[%s665 + $0xec] sm:$0xf]
        %v5094 = vld [vmem:[%s665 + $0xf0] sm:$0xf]
        %v5095 = vld [vmem:[%s665 + $0xf4] sm:$0xf]
        %v5096 = vld [vmem:[%s665 + $0xf8] sm:$0xf]
        %v5097 = vld [vmem:[%s665 + $0xfc] sm:$0xf]
        %v5098 = vld [vmem:[%s749] sm:$0x1]
        %v5100 = vperm.slane %v5098, 0
        %v5166 = vunpack.c.l.b16 %v5034
        %v5167 = vunpack.c.l.b16 %v5035
        %v5168 = vunpack.c.l.b16 %v5036
        %v5169 = vunpack.c.l.b16 %v5037
        %v5170 = vunpack.c.l.b16 %v5038
        %v5171 = vunpack.c.l.b16 %v5039
        %v5172 = vunpack.c.l.b16 %v5040
        %v5173 = vunpack.c.l.b16 %v5041
        %v5174 = vunpack.c.l.b16 %v5042
        %v5175 = vunpack.c.l.b16 %v5043
        %v5176 = vunpack.c.l.b16 %v5044
        %v5177 = vunpack.c.l.b16 %v5045
        %v5178 = vunpack.c.l.b16 %v5046
        %v5179 = vunpack.c.l.b16 %v5047
        %v5180 = vunpack.c.l.b16 %v5048
        %v5181 = vunpack.c.l.b16 %v5049
        %v5182 = vunpack.c.l.b16 %v5050
        %v5183 = vunpack.c.l.b16 %v5051
        %v5184 = vunpack.c.l.b16 %v5052
        %v5185 = vunpack.c.l.b16 %v5053
        %v5186 = vunpack.c.l.b16 %v5054
        %v5187 = vunpack.c.l.b16 %v5055
        %v5188 = vunpack.c.l.b16 %v5056
        %v5189 = vunpack.c.l.b16 %v5057
        %v5190 = vunpack.c.l.b16 %v5058
        %v5191 = vunpack.c.l.b16 %v5059
        %v5192 = vunpack.c.l.b16 %v5060
        %v5193 = vunpack.c.l.b16 %v5061
        %v5194 = vunpack.c.l.b16 %v5062
        %v5195 = vunpack.c.l.b16 %v5063
        %v5196 = vunpack.c.l.b16 %v5064
        %v5197 = vunpack.c.l.b16 %v5065
        %v5198 = vunpack.c.l.b16 %v5066
        %v5199 = vunpack.c.l.b16 %v5067
        %v5200 = vunpack.c.l.b16 %v5068
        %v5201 = vunpack.c.l.b16 %v5069
        %v5202 = vunpack.c.l.b16 %v5070
        %v5203 = vunpack.c.l.b16 %v5071
        %v5204 = vunpack.c.l.b16 %v5072
        %v5205 = vunpack.c.l.b16 %v5073
        %v5206 = vunpack.c.l.b16 %v5074
        %v5207 = vunpack.c.l.b16 %v5075
        %v5208 = vunpack.c.l.b16 %v5076
        %v5209 = vunpack.c.l.b16 %v5077
        %v5210 = vunpack.c.l.b16 %v5078
        %v5211 = vunpack.c.l.b16 %v5079
        %v5212 = vunpack.c.l.b16 %v5080
        %v5213 = vunpack.c.l.b16 %v5081
        %v5214 = vunpack.c.l.b16 %v5082
        %v5215 = vunpack.c.l.b16 %v5083
        %v5216 = vunpack.c.l.b16 %v5084
        %v5217 = vunpack.c.l.b16 %v5085
        %v5218 = vunpack.c.l.b16 %v5086
        %v5219 = vunpack.c.l.b16 %v5087
        %v5220 = vunpack.c.l.b16 %v5088
        %v5221 = vunpack.c.l.b16 %v5089
        %v5222 = vunpack.c.l.b16 %v5090
        %v5223 = vunpack.c.l.b16 %v5091
        %v5224 = vunpack.c.l.b16 %v5092
        %v5225 = vunpack.c.l.b16 %v5093
        %v5226 = vunpack.c.l.b16 %v5094
        %v5227 = vunpack.c.l.b16 %v5095
        %v5228 = vunpack.c.l.b16 %v5096
        %v5229 = vunpack.c.l.b16 %v5097
        %v5230 = vpack.c.b16 %v5167, %v5166
        %v5231 = vpack.c.b16 %v5169, %v5168
        %v5232 = vpack.c.b16 %v5171, %v5170
        %v5233 = vpack.c.b16 %v5173, %v5172
        %v5234 = vpack.c.b16 %v5175, %v5174
        %v5235 = vpack.c.b16 %v5177, %v5176
        %v5236 = vpack.c.b16 %v5179, %v5178
        %v5237 = vpack.c.b16 %v5181, %v5180
        %v5238 = vpack.c.b16 %v5183, %v5182
        %v5239 = vpack.c.b16 %v5185, %v5184
        %v5240 = vpack.c.b16 %v5187, %v5186
        %v5241 = vpack.c.b16 %v5189, %v5188
        %v5242 = vpack.c.b16 %v5191, %v5190
        %v5243 = vpack.c.b16 %v5193, %v5192
        %v5244 = vpack.c.b16 %v5195, %v5194
        %v5245 = vpack.c.b16 %v5197, %v5196
        %v5246 = vpack.c.b16 %v5199, %v5198
        %v5247 = vpack.c.b16 %v5201, %v5200
        %v5248 = vpack.c.b16 %v5203, %v5202
        %v5249 = vpack.c.b16 %v5205, %v5204
        %v5250 = vpack.c.b16 %v5207, %v5206
        %v5251 = vpack.c.b16 %v5209, %v5208
        %v5252 = vpack.c.b16 %v5211, %v5210
        %v5253 = vpack.c.b16 %v5213, %v5212
        %v5254 = vpack.c.b16 %v5215, %v5214
        %v5255 = vpack.c.b16 %v5217, %v5216
        %v5256 = vpack.c.b16 %v5219, %v5218
        %v5257 = vpack.c.b16 %v5221, %v5220
        %v5258 = vpack.c.b16 %v5223, %v5222
        %v5259 = vpack.c.b16 %v5225, %v5224
        %v5260 = vpack.c.b16 %v5227, %v5226
        %v5261 = vpack.c.b16 %v5229, %v5228
        %5294 = vmatpush.bf16.msra.mxu0 %v5237
        %5295 = vmatpush.bf16.msra.mxu0 %v5236
        %5296 = vmatpush.bf16.msra.mxu0 %v5235
        %5297 = vmatpush.bf16.msra.mxu0 %v5234
        %5298 = vmatpush.bf16.msra.mxu0 %v5233
        %5299 = vmatpush.bf16.msra.mxu0 %v5232
        %5300 = vmatpush.bf16.msra.mxu0 %v5231
        %5301 = vmatpush.bf16.msra.mxu0 %v5230
        %5302 = vmatmul.bf16.gmra.mxu0 %v5002
        %v5303 = vpop.f32.mrf.mxu0
        %v5304 = vadd.f32 %v5100, %v5303
        %v5305 = vpop.f32.mrf.mxu0
        %v5306 = vadd.f32 %v5100, %v5305
        %5307 = vmatmul.bf16.gmra.mxu0 %v5006
        %v5308 = vpop.f32.mrf.mxu0
        %v5309 = vadd.f32 %v5100, %v5308
        %v5310 = vpop.f32.mrf.mxu0
        %v5311 = vadd.f32 %v5100, %v5310
        %5312 = vmatmul.bf16.gmra.mxu0 %v5010
        %v5313 = vpop.f32.mrf.mxu0
        %v5314 = vadd.f32 %v5100, %v5313
        %v5315 = vpop.f32.mrf.mxu0
        %v5316 = vadd.f32 %v5100, %v5315
        %5317 = vmatmul.bf16.gmra.mxu0 %v5014
        %v5318 = vpop.f32.mrf.mxu0
        %v5319 = vadd.f32 %v5100, %v5318
        %v5320 = vpop.f32.mrf.mxu0
        %v5321 = vadd.f32 %v5100, %v5320
        %5322 = vmatmul.bf16.gmra.mxu0 %v5018
        %v5323 = vpop.f32.mrf.mxu0
        %v5324 = vadd.f32 %v5100, %v5323
        %v5325 = vpop.f32.mrf.mxu0
        %v5326 = vadd.f32 %v5100, %v5325
        %5327 = vmatmul.bf16.gmra.mxu0 %v5022
        %v5328 = vpop.f32.mrf.mxu0
        %v5329 = vadd.f32 %v5100, %v5328
        %v5330 = vpop.f32.mrf.mxu0
        %v5331 = vadd.f32 %v5100, %v5330
        %5332 = vmatmul.bf16.gmra.mxu0 %v5026
        %v5333 = vpop.f32.mrf.mxu0
        %v5334 = vadd.f32 %v5100, %v5333
        %v5335 = vpop.f32.mrf.mxu0
        %v5336 = vadd.f32 %v5100, %v5335
        %5337 = vmatmul.bf16.gmra.mxu0 %v5030
        %v5338 = vpop.f32.mrf.mxu0
        %v5339 = vadd.f32 %v5100, %v5338
        %v5340 = vpop.f32.mrf.mxu0
        %v5341 = vadd.f32 %v5100, %v5340
        %5342 = vdwg.mxu0
        %5343 = vmatpush.bf16.msra.mxu0 %v5245
        %5344 = vmatpush.bf16.msra.mxu0 %v5244
        %5345 = vmatpush.bf16.msra.mxu0 %v5243
        %5346 = vmatpush.bf16.msra.mxu0 %v5242
        %5347 = vmatpush.bf16.msra.mxu0 %v5241
        %5348 = vmatpush.bf16.msra.mxu0 %v5240
        %5349 = vmatpush.bf16.msra.mxu0 %v5239
        %5350 = vmatpush.bf16.msra.mxu0 %v5238
        %5351 = vmatmul.bf16.gmra.mxu0 %v5003
        %v5352 = vpop.f32.mrf.mxu0
        %v5353 = vadd.f32 %v5304, %v5352
        %v5354 = vpop.f32.mrf.mxu0
        %v5355 = vadd.f32 %v5306, %v5354
        %5356 = vmatmul.bf16.gmra.mxu0 %v5007
        %v5357 = vpop.f32.mrf.mxu0
        %v5358 = vadd.f32 %v5309, %v5357
        %v5359 = vpop.f32.mrf.mxu0
        %v5360 = vadd.f32 %v5311, %v5359
        %5361 = vmatmul.bf16.gmra.mxu0 %v5011
        %v5362 = vpop.f32.mrf.mxu0
        %v5363 = vadd.f32 %v5314, %v5362
        %v5364 = vpop.f32.mrf.mxu0
        %v5365 = vadd.f32 %v5316, %v5364
        %5366 = vmatmul.bf16.gmra.mxu0 %v5015
        %v5367 = vpop.f32.mrf.mxu0
        %v5368 = vadd.f32 %v5319, %v5367
        %v5369 = vpop.f32.mrf.mxu0
        %v5370 = vadd.f32 %v5321, %v5369
        %5371 = vmatmul.bf16.gmra.mxu0 %v5019
        %v5372 = vpop.f32.mrf.mxu0
        %v5373 = vadd.f32 %v5324, %v5372
        %v5374 = vpop.f32.mrf.mxu0
        %v5375 = vadd.f32 %v5326, %v5374
        %5376 = vmatmul.bf16.gmra.mxu0 %v5023
        %v5377 = vpop.f32.mrf.mxu0
        %v5378 = vadd.f32 %v5329, %v5377
        %v5379 = vpop.f32.mrf.mxu0
        %v5380 = vadd.f32 %v5331, %v5379
        %5381 = vmatmul.bf16.gmra.mxu0 %v5027
        %v5382 = vpop.f32.mrf.mxu0
        %v5383 = vadd.f32 %v5334, %v5382
        %v5384 = vpop.f32.mrf.mxu0
        %v5385 = vadd.f32 %v5336, %v5384
        %5386 = vmatmul.bf16.gmra.mxu0 %v5031
        %v5387 = vpop.f32.mrf.mxu0
        %v5388 = vadd.f32 %v5339, %v5387
        %v5389 = vpop.f32.mrf.mxu0
        %v5390 = vadd.f32 %v5341, %v5389
        %5391 = vdwg.mxu0
        %5392 = vmatpush.bf16.msra.mxu0 %v5253
        %5393 = vmatpush.bf16.msra.mxu0 %v5252
        %5394 = vmatpush.bf16.msra.mxu0 %v5251
        %5395 = vmatpush.bf16.msra.mxu0 %v5250
        %5396 = vmatpush.bf16.msra.mxu0 %v5249
        %5397 = vmatpush.bf16.msra.mxu0 %v5248
        %5398 = vmatpush.bf16.msra.mxu0 %v5247
        %5399 = vmatpush.bf16.msra.mxu0 %v5246
        %5400 = vmatmul.bf16.gmra.mxu0 %v5004
        %v5401 = vpop.f32.mrf.mxu0
        %v5402 = vadd.f32 %v5353, %v5401
        %v5403 = vpop.f32.mrf.mxu0
        %v5404 = vadd.f32 %v5355, %v5403
        %5405 = vmatmul.bf16.gmra.mxu0 %v5008
        %v5406 = vpop.f32.mrf.mxu0
        %v5407 = vadd.f32 %v5358, %v5406
        %v5408 = vpop.f32.mrf.mxu0
        %v5409 = vadd.f32 %v5360, %v5408
        %5410 = vmatmul.bf16.gmra.mxu0 %v5012
        %v5411 = vpop.f32.mrf.mxu0
        %v5412 = vadd.f32 %v5363, %v5411
        %v5413 = vpop.f32.mrf.mxu0
        %v5414 = vadd.f32 %v5365, %v5413
        %5415 = vmatmul.bf16.gmra.mxu0 %v5016
        %v5416 = vpop.f32.mrf.mxu0
        %v5417 = vadd.f32 %v5368, %v5416
        %v5418 = vpop.f32.mrf.mxu0
        %v5419 = vadd.f32 %v5370, %v5418
        %5420 = vmatmul.bf16.gmra.mxu0 %v5020
        %v5421 = vpop.f32.mrf.mxu0
        %v5422 = vadd.f32 %v5373, %v5421
        %v5423 = vpop.f32.mrf.mxu0
        %v5424 = vadd.f32 %v5375, %v5423
        %5425 = vmatmul.bf16.gmra.mxu0 %v5024
        %v5426 = vpop.f32.mrf.mxu0
        %v5427 = vadd.f32 %v5378, %v5426
        %v5428 = vpop.f32.mrf.mxu0
        %v5429 = vadd.f32 %v5380, %v5428
        %5430 = vmatmul.bf16.gmra.mxu0 %v5028
        %v5431 = vpop.f32.mrf.mxu0
        %v5432 = vadd.f32 %v5383, %v5431
        %v5433 = vpop.f32.mrf.mxu0
        %v5434 = vadd.f32 %v5385, %v5433
        %5435 = vmatmul.bf16.gmra.mxu0 %v5032
        %v5436 = vpop.f32.mrf.mxu0
        %v5437 = vadd.f32 %v5388, %v5436
        %v5438 = vpop.f32.mrf.mxu0
        %v5439 = vadd.f32 %v5390, %v5438
        %5440 = vdwg.mxu0
        %5441 = vmatpush.bf16.msra.mxu0 %v5261
        %5442 = vmatpush.bf16.msra.mxu0 %v5260
        %5443 = vmatpush.bf16.msra.mxu0 %v5259
        %5444 = vmatpush.bf16.msra.mxu0 %v5258
        %5445 = vmatpush.bf16.msra.mxu0 %v5257
        %5446 = vmatpush.bf16.msra.mxu0 %v5256
        %5447 = vmatpush.bf16.msra.mxu0 %v5255
        %5448 = vmatpush.bf16.msra.mxu0 %v5254
        %5449 = vmatmul.bf16.gmra.mxu0 %v5005
        %v5450 = vpop.f32.mrf.mxu0
        %v5451 = vadd.f32 %v5402, %v5450
        %v5452 = vpop.f32.mrf.mxu0
        %v5453 = vadd.f32 %v5404, %v5452
        %5454 = vmatmul.bf16.gmra.mxu0 %v5009
        %v5455 = vpop.f32.mrf.mxu0
        %v5456 = vadd.f32 %v5407, %v5455
        %v5457 = vpop.f32.mrf.mxu0
        %v5458 = vadd.f32 %v5409, %v5457
        %5459 = vmatmul.bf16.gmra.mxu0 %v5013
        %v5460 = vpop.f32.mrf.mxu0
        %v5461 = vadd.f32 %v5412, %v5460
        %v5462 = vpop.f32.mrf.mxu0
        %v5463 = vadd.f32 %v5414, %v5462
        %5464 = vmatmul.bf16.gmra.mxu0 %v5017
        %v5465 = vpop.f32.mrf.mxu0
        %v5466 = vadd.f32 %v5417, %v5465
        %v5467 = vpop.f32.mrf.mxu0
        %v5468 = vadd.f32 %v5419, %v5467
        %5469 = vmatmul.bf16.gmra.mxu0 %v5021
        %v5470 = vpop.f32.mrf.mxu0
        %v5471 = vadd.f32 %v5422, %v5470
        %v5472 = vpop.f32.mrf.mxu0
        %v5473 = vadd.f32 %v5424, %v5472
        %5474 = vmatmul.bf16.gmra.mxu0 %v5025
        %v5475 = vpop.f32.mrf.mxu0
        %v5476 = vadd.f32 %v5427, %v5475
        %v5477 = vpop.f32.mrf.mxu0
        %v5478 = vadd.f32 %v5429, %v5477
        %5479 = vmatmul.bf16.gmra.mxu0 %v5029
        %v5480 = vpop.f32.mrf.mxu0
        %v5481 = vadd.f32 %v5432, %v5480
        %v5482 = vpop.f32.mrf.mxu0
        %v5483 = vadd.f32 %v5434, %v5482
        %5484 = vmatmul.bf16.gmra.mxu0 %v5033
        %v5485 = vpop.f32.mrf.mxu0
        %v5486 = vadd.f32 %v5437, %v5485
        %v5487 = vpop.f32.mrf.mxu0
        %v5488 = vadd.f32 %v5439, %v5487
        %5489 = vdwg.mxu0
        %v5490 = vmul.f32 %v5451, 0.5
        %v5491 = vmul.f32 %v5453, 0.5
        %v5492 = vmul.f32 %v5456, 0.5
        %v5493 = vmul.f32 %v5458, 0.5
        %v5494 = vmul.f32 %v5461, 0.5
        %v5495 = vmul.f32 %v5463, 0.5
        %v5496 = vmul.f32 %v5466, 0.5
        %v5497 = vmul.f32 %v5468, 0.5
        %v5498 = vmul.f32 %v5471, 0.5
        %v5499 = vmul.f32 %v5473, 0.5
        %v5500 = vmul.f32 %v5476, 0.5
        %v5501 = vmul.f32 %v5478, 0.5
        %v5502 = vmul.f32 %v5481, 0.5
        %v5503 = vmul.f32 %v5483, 0.5
        %v5504 = vmul.f32 %v5486, 0.5
        %v5505 = vmul.f32 %v5488, 0.5
        %v5506 = vmul.f32 %v5451, 0.70710677
        %v5507 = vmul.f32 %v5453, 0.70710677
        %v5508 = vmul.f32 %v5456, 0.70710677
        %v5509 = vmul.f32 %v5458, 0.70710677
        %v5510 = vmul.f32 %v5461, 0.70710677
        %v5511 = vmul.f32 %v5463, 0.70710677
        %v5512 = vmul.f32 %v5466, 0.70710677
        %v5513 = vmul.f32 %v5468, 0.70710677
        %v5514 = vmul.f32 %v5471, 0.70710677
        %v5515 = vmul.f32 %v5473, 0.70710677
        %v5516 = vmul.f32 %v5476, 0.70710677
        %v5517 = vmul.f32 %v5478, 0.70710677
        %v5518 = vmul.f32 %v5481, 0.70710677
        %v5519 = vmul.f32 %v5483, 0.70710677
        %v5520 = vmul.f32 %v5486, 0.70710677
        %v5521 = vmul.f32 %v5488, 0.70710677
        %v5522 = vmul.f32 %v5506, %v5506
        %v5523 = vmin.f32 16.0, %v5522
        %v5524 = vmul.f32 %v5523, 2.1237322e-06
        %v5525 = vadd.f32 %v5524, 0.00028619796
        %v5526 = vmul.f32 %v5523, %v5525
        %v5527 = vadd.f32 %v5526, 0.0036580483
        %v5528 = vmul.f32 %v5523, %v5527
        %v5529 = vadd.f32 %v5528, 0.05243302
        %v5530 = vmul.f32 %v5523, %v5529
        %v5531 = vadd.f32 %v5530, 0.18741608
        %v5532 = vmul.f32 %v5523, %v5531
        %v5533 = vadd.f32 %v5532, 1.1283791
        %v5534 = vmul.f32 %v5506, %v5533
        %v5535 = vmul.f32 %v5523, 3.8918573e-05
        %v5536 = vadd.f32 %v5535, 0.001143296
        %v5537 = vmul.f32 %v5523, %v5536
        %v5538 = vadd.f32 %v5537, 0.014752088
        %v5539 = vmul.f32 %v5523, %v5538
        %v5540 = vadd.f32 %v5539, 0.112945676
        %v5541 = vmul.f32 %v5523, %v5540
        %v5542 = vadd.f32 %v5541, 0.4994258
        %v5543 = vmul.f32 %v5523, %v5542
        %v5544 = vadd.f32 %v5543, 1.0
        %v5545 = vrcp.pop %v5544
        %v5546 = vmul.f32 %v5544, %v5545
        %v5547 = vsub.f32 1.0, %v5546
        %v5548 = vmul.f32 %v5545, %v5547
        %v5549 = vadd.f32 %v5545, %v5548
        %vm5550 = vweird.f32 %v5544
        %vm5551 = vweird.f32 %v5545
        %vm5552 = vmor %vm5550, %vm5551
        %v5553 = vsel %vm5552, %v5545, %v5549
        %v5554 = vand.u32 2147483647, %v5544
        %vm5555 = vcmp.eq.f32.partialorder %v5554, 8.507059e+37
        %v5556 = vand.u32 %v5544, 2147483648
        %v5557 = vor.u32 1.1754944e-38, %v5556
        %v5558 = vsel %vm5555, %v5557, %v5553
        %v5559 = vmul.f32 %v5534, %v5558
        %v5560 = vmin.f32 %v5559, 1.0
        %v5561 = vmax.f32 %v5560, -1.0
        %v5562 = vmul.f32 %v5507, %v5507
        %v5563 = vmin.f32 16.0, %v5562
        %v5564 = vmul.f32 %v5563, 2.1237322e-06
        %v5565 = vadd.f32 %v5564, 0.00028619796
        %v5566 = vmul.f32 %v5563, %v5565
        %v5567 = vadd.f32 %v5566, 0.0036580483
        %v5568 = vmul.f32 %v5563, %v5567
        %v5569 = vadd.f32 %v5568, 0.05243302
        %v5570 = vmul.f32 %v5563, %v5569
        %v5571 = vadd.f32 %v5570, 0.18741608
        %v5572 = vmul.f32 %v5563, %v5571
        %v5573 = vadd.f32 %v5572, 1.1283791
        %v5574 = vmul.f32 %v5507, %v5573
        %v5575 = vmul.f32 %v5563, 3.8918573e-05
        %v5576 = vadd.f32 %v5575, 0.001143296
        %v5577 = vmul.f32 %v5563, %v5576
        %v5578 = vadd.f32 %v5577, 0.014752088
        %v5579 = vmul.f32 %v5563, %v5578
        %v5580 = vadd.f32 %v5579, 0.112945676
        %v5581 = vmul.f32 %v5563, %v5580
        %v5582 = vadd.f32 %v5581, 0.4994258
        %v5583 = vmul.f32 %v5563, %v5582
        %v5584 = vadd.f32 %v5583, 1.0
        %v5585 = vrcp.pop %v5584
        %v5586 = vmul.f32 %v5584, %v5585
        %v5587 = vsub.f32 1.0, %v5586
        %v5588 = vmul.f32 %v5585, %v5587
        %v5589 = vadd.f32 %v5585, %v5588
        %vm5590 = vweird.f32 %v5584
        %vm5591 = vweird.f32 %v5585
        %vm5592 = vmor %vm5590, %vm5591
        %v5593 = vsel %vm5592, %v5585, %v5589
        %v5594 = vand.u32 2147483647, %v5584
        %vm5595 = vcmp.eq.f32.partialorder %v5594, 8.507059e+37
        %v5596 = vand.u32 %v5584, 2147483648
        %v5597 = vor.u32 1.1754944e-38, %v5596
        %v5598 = vsel %vm5595, %v5597, %v5593
        %v5599 = vmul.f32 %v5574, %v5598
        %v5600 = vmin.f32 %v5599, 1.0
        %v5601 = vmax.f32 %v5600, -1.0
        %v5602 = vmul.f32 %v5508, %v5508
        %v5603 = vmin.f32 16.0, %v5602
        %v5604 = vmul.f32 %v5603, 2.1237322e-06
        %v5605 = vadd.f32 %v5604, 0.00028619796
        %v5606 = vmul.f32 %v5603, %v5605
        %v5607 = vadd.f32 %v5606, 0.0036580483
        %v5608 = vmul.f32 %v5603, %v5607
        %v5609 = vadd.f32 %v5608, 0.05243302
        %v5610 = vmul.f32 %v5603, %v5609
        %v5611 = vadd.f32 %v5610, 0.18741608
        %v5612 = vmul.f32 %v5603, %v5611
        %v5613 = vadd.f32 %v5612, 1.1283791
        %v5614 = vmul.f32 %v5508, %v5613
        %v5615 = vmul.f32 %v5603, 3.8918573e-05
        %v5616 = vadd.f32 %v5615, 0.001143296
        %v5617 = vmul.f32 %v5603, %v5616
        %v5618 = vadd.f32 %v5617, 0.014752088
        %v5619 = vmul.f32 %v5603, %v5618
        %v5620 = vadd.f32 %v5619, 0.112945676
        %v5621 = vmul.f32 %v5603, %v5620
        %v5622 = vadd.f32 %v5621, 0.4994258
        %v5623 = vmul.f32 %v5603, %v5622
        %v5624 = vadd.f32 %v5623, 1.0
        %v5625 = vrcp.pop %v5624
        %v5626 = vmul.f32 %v5624, %v5625
        %v5627 = vsub.f32 1.0, %v5626
        %v5628 = vmul.f32 %v5625, %v5627
        %v5629 = vadd.f32 %v5625, %v5628
        %vm5630 = vweird.f32 %v5624
        %vm5631 = vweird.f32 %v5625
        %vm5632 = vmor %vm5630, %vm5631
        %v5633 = vsel %vm5632, %v5625, %v5629
        %v5634 = vand.u32 2147483647, %v5624
        %vm5635 = vcmp.eq.f32.partialorder %v5634, 8.507059e+37
        %v5636 = vand.u32 %v5624, 2147483648
        %v5637 = vor.u32 1.1754944e-38, %v5636
        %v5638 = vsel %vm5635, %v5637, %v5633
        %v5639 = vmul.f32 %v5614, %v5638
        %v5640 = vmin.f32 %v5639, 1.0
        %v5641 = vmax.f32 %v5640, -1.0
        %v5642 = vmul.f32 %v5509, %v5509
        %v5643 = vmin.f32 16.0, %v5642
        %v5644 = vmul.f32 %v5643, 2.1237322e-06
        %v5645 = vadd.f32 %v5644, 0.00028619796
        %v5646 = vmul.f32 %v5643, %v5645
        %v5647 = vadd.f32 %v5646, 0.0036580483
        %v5648 = vmul.f32 %v5643, %v5647
        %v5649 = vadd.f32 %v5648, 0.05243302
        %v5650 = vmul.f32 %v5643, %v5649
        %v5651 = vadd.f32 %v5650, 0.18741608
        %v5652 = vmul.f32 %v5643, %v5651
        %v5653 = vadd.f32 %v5652, 1.1283791
        %v5654 = vmul.f32 %v5509, %v5653
        %v5655 = vmul.f32 %v5643, 3.8918573e-05
        %v5656 = vadd.f32 %v5655, 0.001143296
        %v5657 = vmul.f32 %v5643, %v5656
        %v5658 = vadd.f32 %v5657, 0.014752088
        %v5659 = vmul.f32 %v5643, %v5658
        %v5660 = vadd.f32 %v5659, 0.112945676
        %v5661 = vmul.f32 %v5643, %v5660
        %v5662 = vadd.f32 %v5661, 0.4994258
        %v5663 = vmul.f32 %v5643, %v5662
        %v5664 = vadd.f32 %v5663, 1.0
        %v5665 = vrcp.pop %v5664
        %v5666 = vmul.f32 %v5664, %v5665
        %v5667 = vsub.f32 1.0, %v5666
        %v5668 = vmul.f32 %v5665, %v5667
        %v5669 = vadd.f32 %v5665, %v5668
        %vm5670 = vweird.f32 %v5664
        %vm5671 = vweird.f32 %v5665
        %vm5672 = vmor %vm5670, %vm5671
        %v5673 = vsel %vm5672, %v5665, %v5669
        %v5674 = vand.u32 2147483647, %v5664
        %vm5675 = vcmp.eq.f32.partialorder %v5674, 8.507059e+37
        %v5676 = vand.u32 %v5664, 2147483648
        %v5677 = vor.u32 1.1754944e-38, %v5676
        %v5678 = vsel %vm5675, %v5677, %v5673
        %v5679 = vmul.f32 %v5654, %v5678
        %v5680 = vmin.f32 %v5679, 1.0
        %v5681 = vmax.f32 %v5680, -1.0
        %v5682 = vmul.f32 %v5510, %v5510
        %v5683 = vmin.f32 16.0, %v5682
        %v5684 = vmul.f32 %v5683, 2.1237322e-06
        %v5685 = vadd.f32 %v5684, 0.00028619796
        %v5686 = vmul.f32 %v5683, %v5685
        %v5687 = vadd.f32 %v5686, 0.0036580483
        %v5688 = vmul.f32 %v5683, %v5687
        %v5689 = vadd.f32 %v5688, 0.05243302
        %v5690 = vmul.f32 %v5683, %v5689
        %v5691 = vadd.f32 %v5690, 0.18741608
        %v5692 = vmul.f32 %v5683, %v5691
        %v5693 = vadd.f32 %v5692, 1.1283791
        %v5694 = vmul.f32 %v5510, %v5693
        %v5695 = vmul.f32 %v5683, 3.8918573e-05
        %v5696 = vadd.f32 %v5695, 0.001143296
        %v5697 = vmul.f32 %v5683, %v5696
        %v5698 = vadd.f32 %v5697, 0.014752088
        %v5699 = vmul.f32 %v5683, %v5698
        %v5700 = vadd.f32 %v5699, 0.112945676
        %v5701 = vmul.f32 %v5683, %v5700
        %v5702 = vadd.f32 %v5701, 0.4994258
        %v5703 = vmul.f32 %v5683, %v5702
        %v5704 = vadd.f32 %v5703, 1.0
        %v5705 = vrcp.pop %v5704
        %v5706 = vmul.f32 %v5704, %v5705
        %v5707 = vsub.f32 1.0, %v5706
        %v5708 = vmul.f32 %v5705, %v5707
        %v5709 = vadd.f32 %v5705, %v5708
        %vm5710 = vweird.f32 %v5704
        %vm5711 = vweird.f32 %v5705
        %vm5712 = vmor %vm5710, %vm5711
        %v5713 = vsel %vm5712, %v5705, %v5709
        %v5714 = vand.u32 2147483647, %v5704
        %vm5715 = vcmp.eq.f32.partialorder %v5714, 8.507059e+37
        %v5716 = vand.u32 %v5704, 2147483648
        %v5717 = vor.u32 1.1754944e-38, %v5716
        %v5718 = vsel %vm5715, %v5717, %v5713
        %v5719 = vmul.f32 %v5694, %v5718
        %v5720 = vmin.f32 %v5719, 1.0
        %v5721 = vmax.f32 %v5720, -1.0
        %v5722 = vmul.f32 %v5511, %v5511
        %v5723 = vmin.f32 16.0, %v5722
        %v5724 = vmul.f32 %v5723, 2.1237322e-06
        %v5725 = vadd.f32 %v5724, 0.00028619796
        %v5726 = vmul.f32 %v5723, %v5725
        %v5727 = vadd.f32 %v5726, 0.0036580483
        %v5728 = vmul.f32 %v5723, %v5727
        %v5729 = vadd.f32 %v5728, 0.05243302
        %v5730 = vmul.f32 %v5723, %v5729
        %v5731 = vadd.f32 %v5730, 0.18741608
        %v5732 = vmul.f32 %v5723, %v5731
        %v5733 = vadd.f32 %v5732, 1.1283791
        %v5734 = vmul.f32 %v5511, %v5733
        %v5735 = vmul.f32 %v5723, 3.8918573e-05
        %v5736 = vadd.f32 %v5735, 0.001143296
        %v5737 = vmul.f32 %v5723, %v5736
        %v5738 = vadd.f32 %v5737, 0.014752088
        %v5739 = vmul.f32 %v5723, %v5738
        %v5740 = vadd.f32 %v5739, 0.112945676
        %v5741 = vmul.f32 %v5723, %v5740
        %v5742 = vadd.f32 %v5741, 0.4994258
        %v5743 = vmul.f32 %v5723, %v5742
        %v5744 = vadd.f32 %v5743, 1.0
        %v5745 = vrcp.pop %v5744
        %v5746 = vmul.f32 %v5744, %v5745
        %v5747 = vsub.f32 1.0, %v5746
        %v5748 = vmul.f32 %v5745, %v5747
        %v5749 = vadd.f32 %v5745, %v5748
        %vm5750 = vweird.f32 %v5744
        %vm5751 = vweird.f32 %v5745
        %vm5752 = vmor %vm5750, %vm5751
        %v5753 = vsel %vm5752, %v5745, %v5749
        %v5754 = vand.u32 2147483647, %v5744
        %vm5755 = vcmp.eq.f32.partialorder %v5754, 8.507059e+37
        %v5756 = vand.u32 %v5744, 2147483648
        %v5757 = vor.u32 1.1754944e-38, %v5756
        %v5758 = vsel %vm5755, %v5757, %v5753
        %v5759 = vmul.f32 %v5734, %v5758
        %v5760 = vmin.f32 %v5759, 1.0
        %v5761 = vmax.f32 %v5760, -1.0
        %v5762 = vmul.f32 %v5512, %v5512
        %v5763 = vmin.f32 16.0, %v5762
        %v5764 = vmul.f32 %v5763, 2.1237322e-06
        %v5765 = vadd.f32 %v5764, 0.00028619796
        %v5766 = vmul.f32 %v5763, %v5765
        %v5767 = vadd.f32 %v5766, 0.0036580483
        %v5768 = vmul.f32 %v5763, %v5767
        %v5769 = vadd.f32 %v5768, 0.05243302
        %v5770 = vmul.f32 %v5763, %v5769
        %v5771 = vadd.f32 %v5770, 0.18741608
        %v5772 = vmul.f32 %v5763, %v5771
        %v5773 = vadd.f32 %v5772, 1.1283791
        %v5774 = vmul.f32 %v5512, %v5773
        %v5775 = vmul.f32 %v5763, 3.8918573e-05
        %v5776 = vadd.f32 %v5775, 0.001143296
        %v5777 = vmul.f32 %v5763, %v5776
        %v5778 = vadd.f32 %v5777, 0.014752088
        %v5779 = vmul.f32 %v5763, %v5778
        %v5780 = vadd.f32 %v5779, 0.112945676
        %v5781 = vmul.f32 %v5763, %v5780
        %v5782 = vadd.f32 %v5781, 0.4994258
        %v5783 = vmul.f32 %v5763, %v5782
        %v5784 = vadd.f32 %v5783, 1.0
        %v5785 = vrcp.pop %v5784
        %v5786 = vmul.f32 %v5784, %v5785
        %v5787 = vsub.f32 1.0, %v5786
        %v5788 = vmul.f32 %v5785, %v5787
        %v5789 = vadd.f32 %v5785, %v5788
        %vm5790 = vweird.f32 %v5784
        %vm5791 = vweird.f32 %v5785
        %vm5792 = vmor %vm5790, %vm5791
        %v5793 = vsel %vm5792, %v5785, %v5789
        %v5794 = vand.u32 2147483647, %v5784
        %vm5795 = vcmp.eq.f32.partialorder %v5794, 8.507059e+37
        %v5796 = vand.u32 %v5784, 2147483648
        %v5797 = vor.u32 1.1754944e-38, %v5796
        %v5798 = vsel %vm5795, %v5797, %v5793
        %v5799 = vmul.f32 %v5774, %v5798
        %v5800 = vmin.f32 %v5799, 1.0
        %v5801 = vmax.f32 %v5800, -1.0
        %v5802 = vmul.f32 %v5513, %v5513
        %v5803 = vmin.f32 16.0, %v5802
        %v5804 = vmul.f32 %v5803, 2.1237322e-06
        %v5805 = vadd.f32 %v5804, 0.00028619796
        %v5806 = vmul.f32 %v5803, %v5805
        %v5807 = vadd.f32 %v5806, 0.0036580483
        %v5808 = vmul.f32 %v5803, %v5807
        %v5809 = vadd.f32 %v5808, 0.05243302
        %v5810 = vmul.f32 %v5803, %v5809
        %v5811 = vadd.f32 %v5810, 0.18741608
        %v5812 = vmul.f32 %v5803, %v5811
        %v5813 = vadd.f32 %v5812, 1.1283791
        %v5814 = vmul.f32 %v5513, %v5813
        %v5815 = vmul.f32 %v5803, 3.8918573e-05
        %v5816 = vadd.f32 %v5815, 0.001143296
        %v5817 = vmul.f32 %v5803, %v5816
        %v5818 = vadd.f32 %v5817, 0.014752088
        %v5819 = vmul.f32 %v5803, %v5818
        %v5820 = vadd.f32 %v5819, 0.112945676
        %v5821 = vmul.f32 %v5803, %v5820
        %v5822 = vadd.f32 %v5821, 0.4994258
        %v5823 = vmul.f32 %v5803, %v5822
        %v5824 = vadd.f32 %v5823, 1.0
        %v5825 = vrcp.pop %v5824
        %v5826 = vmul.f32 %v5824, %v5825
        %v5827 = vsub.f32 1.0, %v5826
        %v5828 = vmul.f32 %v5825, %v5827
        %v5829 = vadd.f32 %v5825, %v5828
        %vm5830 = vweird.f32 %v5824
        %vm5831 = vweird.f32 %v5825
        %vm5832 = vmor %vm5830, %vm5831
        %v5833 = vsel %vm5832, %v5825, %v5829
        %v5834 = vand.u32 2147483647, %v5824
        %vm5835 = vcmp.eq.f32.partialorder %v5834, 8.507059e+37
        %v5836 = vand.u32 %v5824, 2147483648
        %v5837 = vor.u32 1.1754944e-38, %v5836
        %v5838 = vsel %vm5835, %v5837, %v5833
        %v5839 = vmul.f32 %v5814, %v5838
        %v5840 = vmin.f32 %v5839, 1.0
        %v5841 = vmax.f32 %v5840, -1.0
        %v5842 = vmul.f32 %v5514, %v5514
        %v5843 = vmin.f32 16.0, %v5842
        %v5844 = vmul.f32 %v5843, 2.1237322e-06
        %v5845 = vadd.f32 %v5844, 0.00028619796
        %v5846 = vmul.f32 %v5843, %v5845
        %v5847 = vadd.f32 %v5846, 0.0036580483
        %v5848 = vmul.f32 %v5843, %v5847
        %v5849 = vadd.f32 %v5848, 0.05243302
        %v5850 = vmul.f32 %v5843, %v5849
        %v5851 = vadd.f32 %v5850, 0.18741608
        %v5852 = vmul.f32 %v5843, %v5851
        %v5853 = vadd.f32 %v5852, 1.1283791
        %v5854 = vmul.f32 %v5514, %v5853
        %v5855 = vmul.f32 %v5843, 3.8918573e-05
        %v5856 = vadd.f32 %v5855, 0.001143296
        %v5857 = vmul.f32 %v5843, %v5856
        %v5858 = vadd.f32 %v5857, 0.014752088
        %v5859 = vmul.f32 %v5843, %v5858
        %v5860 = vadd.f32 %v5859, 0.112945676
        %v5861 = vmul.f32 %v5843, %v5860
        %v5862 = vadd.f32 %v5861, 0.4994258
        %v5863 = vmul.f32 %v5843, %v5862
        %v5864 = vadd.f32 %v5863, 1.0
        %v5865 = vrcp.pop %v5864
        %v5866 = vmul.f32 %v5864, %v5865
        %v5867 = vsub.f32 1.0, %v5866
        %v5868 = vmul.f32 %v5865, %v5867
        %v5869 = vadd.f32 %v5865, %v5868
        %vm5870 = vweird.f32 %v5864
        %vm5871 = vweird.f32 %v5865
        %vm5872 = vmor %vm5870, %vm5871
        %v5873 = vsel %vm5872, %v5865, %v5869
        %v5874 = vand.u32 2147483647, %v5864
        %vm5875 = vcmp.eq.f32.partialorder %v5874, 8.507059e+37
        %v5876 = vand.u32 %v5864, 2147483648
        %v5877 = vor.u32 1.1754944e-38, %v5876
        %v5878 = vsel %vm5875, %v5877, %v5873
        %v5879 = vmul.f32 %v5854, %v5878
        %v5880 = vmin.f32 %v5879, 1.0
        %v5881 = vmax.f32 %v5880, -1.0
        %v5882 = vmul.f32 %v5515, %v5515
        %v5883 = vmin.f32 16.0, %v5882
        %v5884 = vmul.f32 %v5883, 2.1237322e-06
        %v5885 = vadd.f32 %v5884, 0.00028619796
        %v5886 = vmul.f32 %v5883, %v5885
        %v5887 = vadd.f32 %v5886, 0.0036580483
        %v5888 = vmul.f32 %v5883, %v5887
        %v5889 = vadd.f32 %v5888, 0.05243302
        %v5890 = vmul.f32 %v5883, %v5889
        %v5891 = vadd.f32 %v5890, 0.18741608
        %v5892 = vmul.f32 %v5883, %v5891
        %v5893 = vadd.f32 %v5892, 1.1283791
        %v5894 = vmul.f32 %v5515, %v5893
        %v5895 = vmul.f32 %v5883, 3.8918573e-05
        %v5896 = vadd.f32 %v5895, 0.001143296
        %v5897 = vmul.f32 %v5883, %v5896
        %v5898 = vadd.f32 %v5897, 0.014752088
        %v5899 = vmul.f32 %v5883, %v5898
        %v5900 = vadd.f32 %v5899, 0.112945676
        %v5901 = vmul.f32 %v5883, %v5900
        %v5902 = vadd.f32 %v5901, 0.4994258
        %v5903 = vmul.f32 %v5883, %v5902
        %v5904 = vadd.f32 %v5903, 1.0
        %v5905 = vrcp.pop %v5904
        %v5906 = vmul.f32 %v5904, %v5905
        %v5907 = vsub.f32 1.0, %v5906
        %v5908 = vmul.f32 %v5905, %v5907
        %v5909 = vadd.f32 %v5905, %v5908
        %vm5910 = vweird.f32 %v5904
        %vm5911 = vweird.f32 %v5905
        %vm5912 = vmor %vm5910, %vm5911
        %v5913 = vsel %vm5912, %v5905, %v5909
        %v5914 = vand.u32 2147483647, %v5904
        %vm5915 = vcmp.eq.f32.partialorder %v5914, 8.507059e+37
        %v5916 = vand.u32 %v5904, 2147483648
        %v5917 = vor.u32 1.1754944e-38, %v5916
        %v5918 = vsel %vm5915, %v5917, %v5913
        %v5919 = vmul.f32 %v5894, %v5918
        %v5920 = vmin.f32 %v5919, 1.0
        %v5921 = vmax.f32 %v5920, -1.0
        %v5922 = vmul.f32 %v5516, %v5516
        %v5923 = vmin.f32 16.0, %v5922
        %v5924 = vmul.f32 %v5923, 2.1237322e-06
        %v5925 = vadd.f32 %v5924, 0.00028619796
        %v5926 = vmul.f32 %v5923, %v5925
        %v5927 = vadd.f32 %v5926, 0.0036580483
        %v5928 = vmul.f32 %v5923, %v5927
        %v5929 = vadd.f32 %v5928, 0.05243302
        %v5930 = vmul.f32 %v5923, %v5929
        %v5931 = vadd.f32 %v5930, 0.18741608
        %v5932 = vmul.f32 %v5923, %v5931
        %v5933 = vadd.f32 %v5932, 1.1283791
        %v5934 = vmul.f32 %v5516, %v5933
        %v5935 = vmul.f32 %v5923, 3.8918573e-05
        %v5936 = vadd.f32 %v5935, 0.001143296
        %v5937 = vmul.f32 %v5923, %v5936
        %v5938 = vadd.f32 %v5937, 0.014752088
        %v5939 = vmul.f32 %v5923, %v5938
        %v5940 = vadd.f32 %v5939, 0.112945676
        %v5941 = vmul.f32 %v5923, %v5940
        %v5942 = vadd.f32 %v5941, 0.4994258
        %v5943 = vmul.f32 %v5923, %v5942
        %v5944 = vadd.f32 %v5943, 1.0
        %v5945 = vrcp.pop %v5944
        %v5946 = vmul.f32 %v5944, %v5945
        %v5947 = vsub.f32 1.0, %v5946
        %v5948 = vmul.f32 %v5945, %v5947
        %v5949 = vadd.f32 %v5945, %v5948
        %vm5950 = vweird.f32 %v5944
        %vm5951 = vweird.f32 %v5945
        %vm5952 = vmor %vm5950, %vm5951
        %v5953 = vsel %vm5952, %v5945, %v5949
        %v5954 = vand.u32 2147483647, %v5944
        %vm5955 = vcmp.eq.f32.partialorder %v5954, 8.507059e+37
        %v5956 = vand.u32 %v5944, 2147483648
        %v5957 = vor.u32 1.1754944e-38, %v5956
        %v5958 = vsel %vm5955, %v5957, %v5953
        %v5959 = vmul.f32 %v5934, %v5958
        %v5960 = vmin.f32 %v5959, 1.0
        %v5961 = vmax.f32 %v5960, -1.0
        %v5962 = vmul.f32 %v5517, %v5517
        %v5963 = vmin.f32 16.0, %v5962
        %v5964 = vmul.f32 %v5963, 2.1237322e-06
        %v5965 = vadd.f32 %v5964, 0.00028619796
        %v5966 = vmul.f32 %v5963, %v5965
        %v5967 = vadd.f32 %v5966, 0.0036580483
        %v5968 = vmul.f32 %v5963, %v5967
        %v5969 = vadd.f32 %v5968, 0.05243302
        %v5970 = vmul.f32 %v5963, %v5969
        %v5971 = vadd.f32 %v5970, 0.18741608
        %v5972 = vmul.f32 %v5963, %v5971
        %v5973 = vadd.f32 %v5972, 1.1283791
        %v5974 = vmul.f32 %v5517, %v5973
        %v5975 = vmul.f32 %v5963, 3.8918573e-05
        %v5976 = vadd.f32 %v5975, 0.001143296
        %v5977 = vmul.f32 %v5963, %v5976
        %v5978 = vadd.f32 %v5977, 0.014752088
        %v5979 = vmul.f32 %v5963, %v5978
        %v5980 = vadd.f32 %v5979, 0.112945676
        %v5981 = vmul.f32 %v5963, %v5980
        %v5982 = vadd.f32 %v5981, 0.4994258
        %v5983 = vmul.f32 %v5963, %v5982
        %v5984 = vadd.f32 %v5983, 1.0
        %v5985 = vrcp.pop %v5984
        %v5986 = vmul.f32 %v5984, %v5985
        %v5987 = vsub.f32 1.0, %v5986
        %v5988 = vmul.f32 %v5985, %v5987
        %v5989 = vadd.f32 %v5985, %v5988
        %vm5990 = vweird.f32 %v5984
        %vm5991 = vweird.f32 %v5985
        %vm5992 = vmor %vm5990, %vm5991
        %v5993 = vsel %vm5992, %v5985, %v5989
        %v5994 = vand.u32 2147483647, %v5984
        %vm5995 = vcmp.eq.f32.partialorder %v5994, 8.507059e+37
        %v5996 = vand.u32 %v5984, 2147483648
        %v5997 = vor.u32 1.1754944e-38, %v5996
        %v5998 = vsel %vm5995, %v5997, %v5993
        %v5999 = vmul.f32 %v5974, %v5998
        %v6000 = vmin.f32 %v5999, 1.0
        %v6001 = vmax.f32 %v6000, -1.0
        %v6002 = vmul.f32 %v5518, %v5518
        %v6003 = vmin.f32 16.0, %v6002
        %v6004 = vmul.f32 %v6003, 2.1237322e-06
        %v6005 = vadd.f32 %v6004, 0.00028619796
        %v6006 = vmul.f32 %v6003, %v6005
        %v6007 = vadd.f32 %v6006, 0.0036580483
        %v6008 = vmul.f32 %v6003, %v6007
        %v6009 = vadd.f32 %v6008, 0.05243302
        %v6010 = vmul.f32 %v6003, %v6009
        %v6011 = vadd.f32 %v6010, 0.18741608
        %v6012 = vmul.f32 %v6003, %v6011
        %v6013 = vadd.f32 %v6012, 1.1283791
        %v6014 = vmul.f32 %v5518, %v6013
        %v6015 = vmul.f32 %v6003, 3.8918573e-05
        %v6016 = vadd.f32 %v6015, 0.001143296
        %v6017 = vmul.f32 %v6003, %v6016
        %v6018 = vadd.f32 %v6017, 0.014752088
        %v6019 = vmul.f32 %v6003, %v6018
        %v6020 = vadd.f32 %v6019, 0.112945676
        %v6021 = vmul.f32 %v6003, %v6020
        %v6022 = vadd.f32 %v6021, 0.4994258
        %v6023 = vmul.f32 %v6003, %v6022
        %v6024 = vadd.f32 %v6023, 1.0
        %v6025 = vrcp.pop %v6024
        %v6026 = vmul.f32 %v6024, %v6025
        %v6027 = vsub.f32 1.0, %v6026
        %v6028 = vmul.f32 %v6025, %v6027
        %v6029 = vadd.f32 %v6025, %v6028
        %vm6030 = vweird.f32 %v6024
        %vm6031 = vweird.f32 %v6025
        %vm6032 = vmor %vm6030, %vm6031
        %v6033 = vsel %vm6032, %v6025, %v6029
        %v6034 = vand.u32 2147483647, %v6024
        %vm6035 = vcmp.eq.f32.partialorder %v6034, 8.507059e+37
        %v6036 = vand.u32 %v6024, 2147483648
        %v6037 = vor.u32 1.1754944e-38, %v6036
        %v6038 = vsel %vm6035, %v6037, %v6033
        %v6039 = vmul.f32 %v6014, %v6038
        %v6040 = vmin.f32 %v6039, 1.0
        %v6041 = vmax.f32 %v6040, -1.0
        %v6042 = vmul.f32 %v5519, %v5519
        %v6043 = vmin.f32 16.0, %v6042
        %v6044 = vmul.f32 %v6043, 2.1237322e-06
        %v6045 = vadd.f32 %v6044, 0.00028619796
        %v6046 = vmul.f32 %v6043, %v6045
        %v6047 = vadd.f32 %v6046, 0.0036580483
        %v6048 = vmul.f32 %v6043, %v6047
        %v6049 = vadd.f32 %v6048, 0.05243302
        %v6050 = vmul.f32 %v6043, %v6049
        %v6051 = vadd.f32 %v6050, 0.18741608
        %v6052 = vmul.f32 %v6043, %v6051
        %v6053 = vadd.f32 %v6052, 1.1283791
        %v6054 = vmul.f32 %v5519, %v6053
        %v6055 = vmul.f32 %v6043, 3.8918573e-05
        %v6056 = vadd.f32 %v6055, 0.001143296
        %v6057 = vmul.f32 %v6043, %v6056
        %v6058 = vadd.f32 %v6057, 0.014752088
        %v6059 = vmul.f32 %v6043, %v6058
        %v6060 = vadd.f32 %v6059, 0.112945676
        %v6061 = vmul.f32 %v6043, %v6060
        %v6062 = vadd.f32 %v6061, 0.4994258
        %v6063 = vmul.f32 %v6043, %v6062
        %v6064 = vadd.f32 %v6063, 1.0
        %v6065 = vrcp.pop %v6064
        %v6066 = vmul.f32 %v6064, %v6065
        %v6067 = vsub.f32 1.0, %v6066
        %v6068 = vmul.f32 %v6065, %v6067
        %v6069 = vadd.f32 %v6065, %v6068
        %vm6070 = vweird.f32 %v6064
        %vm6071 = vweird.f32 %v6065
        %vm6072 = vmor %vm6070, %vm6071
        %v6073 = vsel %vm6072, %v6065, %v6069
        %v6074 = vand.u32 2147483647, %v6064
        %vm6075 = vcmp.eq.f32.partialorder %v6074, 8.507059e+37
        %v6076 = vand.u32 %v6064, 2147483648
        %v6077 = vor.u32 1.1754944e-38, %v6076
        %v6078 = vsel %vm6075, %v6077, %v6073
        %v6079 = vmul.f32 %v6054, %v6078
        %v6080 = vmin.f32 %v6079, 1.0
        %v6081 = vmax.f32 %v6080, -1.0
        %v6082 = vmul.f32 %v5520, %v5520
        %v6083 = vmin.f32 16.0, %v6082
        %v6084 = vmul.f32 %v6083, 2.1237322e-06
        %v6085 = vadd.f32 %v6084, 0.00028619796
        %v6086 = vmul.f32 %v6083, %v6085
        %v6087 = vadd.f32 %v6086, 0.0036580483
        %v6088 = vmul.f32 %v6083, %v6087
        %v6089 = vadd.f32 %v6088, 0.05243302
        %v6090 = vmul.f32 %v6083, %v6089
        %v6091 = vadd.f32 %v6090, 0.18741608
        %v6092 = vmul.f32 %v6083, %v6091
        %v6093 = vadd.f32 %v6092, 1.1283791
        %v6094 = vmul.f32 %v5520, %v6093
        %v6095 = vmul.f32 %v6083, 3.8918573e-05
        %v6096 = vadd.f32 %v6095, 0.001143296
        %v6097 = vmul.f32 %v6083, %v6096
        %v6098 = vadd.f32 %v6097, 0.014752088
        %v6099 = vmul.f32 %v6083, %v6098
        %v6100 = vadd.f32 %v6099, 0.112945676
        %v6101 = vmul.f32 %v6083, %v6100
        %v6102 = vadd.f32 %v6101, 0.4994258
        %v6103 = vmul.f32 %v6083, %v6102
        %v6104 = vadd.f32 %v6103, 1.0
        %v6105 = vrcp.pop %v6104
        %v6106 = vmul.f32 %v6104, %v6105
        %v6107 = vsub.f32 1.0, %v6106
        %v6108 = vmul.f32 %v6105, %v6107
        %v6109 = vadd.f32 %v6105, %v6108
        %vm6110 = vweird.f32 %v6104
        %vm6111 = vweird.f32 %v6105
        %vm6112 = vmor %vm6110, %vm6111
        %v6113 = vsel %vm6112, %v6105, %v6109
        %v6114 = vand.u32 2147483647, %v6104
        %vm6115 = vcmp.eq.f32.partialorder %v6114, 8.507059e+37
        %v6116 = vand.u32 %v6104, 2147483648
        %v6117 = vor.u32 1.1754944e-38, %v6116
        %v6118 = vsel %vm6115, %v6117, %v6113
        %v6119 = vmul.f32 %v6094, %v6118
        %v6120 = vmin.f32 %v6119, 1.0
        %v6121 = vmax.f32 %v6120, -1.0
        %v6122 = vmul.f32 %v5521, %v5521
        %v6123 = vmin.f32 16.0, %v6122
        %v6124 = vmul.f32 %v6123, 2.1237322e-06
        %v6125 = vadd.f32 %v6124, 0.00028619796
        %v6126 = vmul.f32 %v6123, %v6125
        %v6127 = vadd.f32 %v6126, 0.0036580483
        %v6128 = vmul.f32 %v6123, %v6127
        %v6129 = vadd.f32 %v6128, 0.05243302
        %v6130 = vmul.f32 %v6123, %v6129
        %v6131 = vadd.f32 %v6130, 0.18741608
        %v6132 = vmul.f32 %v6123, %v6131
        %v6133 = vadd.f32 %v6132, 1.1283791
        %v6134 = vmul.f32 %v5521, %v6133
        %v6135 = vmul.f32 %v6123, 3.8918573e-05
        %v6136 = vadd.f32 %v6135, 0.001143296
        %v6137 = vmul.f32 %v6123, %v6136
        %v6138 = vadd.f32 %v6137, 0.014752088
        %v6139 = vmul.f32 %v6123, %v6138
        %v6140 = vadd.f32 %v6139, 0.112945676
        %v6141 = vmul.f32 %v6123, %v6140
        %v6142 = vadd.f32 %v6141, 0.4994258
        %v6143 = vmul.f32 %v6123, %v6142
        %v6144 = vadd.f32 %v6143, 1.0
        %v6145 = vrcp.pop %v6144
        %v6146 = vmul.f32 %v6144, %v6145
        %v6147 = vsub.f32 1.0, %v6146
        %v6148 = vmul.f32 %v6145, %v6147
        %v6149 = vadd.f32 %v6145, %v6148
        %vm6150 = vweird.f32 %v6144
        %vm6151 = vweird.f32 %v6145
        %vm6152 = vmor %vm6150, %vm6151
        %v6153 = vsel %vm6152, %v6145, %v6149
        %v6154 = vand.u32 2147483647, %v6144
        %vm6155 = vcmp.eq.f32.partialorder %v6154, 8.507059e+37
        %v6156 = vand.u32 %v6144, 2147483648
        %v6157 = vor.u32 1.1754944e-38, %v6156
        %v6158 = vsel %vm6155, %v6157, %v6153
        %v6159 = vmul.f32 %v6134, %v6158
        %v6160 = vmin.f32 %v6159, 1.0
        %v6161 = vmax.f32 %v6160, -1.0
        %v6162 = vadd.f32 %v5561, 1.0
        %v6163 = vadd.f32 %v5601, 1.0
        %v6164 = vadd.f32 %v5641, 1.0
        %v6165 = vadd.f32 %v5681, 1.0
        %v6166 = vadd.f32 %v5721, 1.0
        %v6167 = vadd.f32 %v5761, 1.0
        %v6168 = vadd.f32 %v5801, 1.0
        %v6169 = vadd.f32 %v5841, 1.0
        %v6170 = vadd.f32 %v5881, 1.0
        %v6171 = vadd.f32 %v5921, 1.0
        %v6172 = vadd.f32 %v5961, 1.0
        %v6173 = vadd.f32 %v6001, 1.0
        %v6174 = vadd.f32 %v6041, 1.0
        %v6175 = vadd.f32 %v6081, 1.0
        %v6176 = vadd.f32 %v6121, 1.0
        %v6177 = vadd.f32 %v6161, 1.0
        %v6178 = vmul.f32 %v5490, %v6162
        %v6179 = vmul.f32 %v5491, %v6163
        %v6180 = vmul.f32 %v5492, %v6164
        %v6181 = vmul.f32 %v5493, %v6165
        %v6182 = vmul.f32 %v5494, %v6166
        %v6183 = vmul.f32 %v5495, %v6167
        %v6184 = vmul.f32 %v5496, %v6168
        %v6185 = vmul.f32 %v5497, %v6169
        %v6186 = vmul.f32 %v5498, %v6170
        %v6187 = vmul.f32 %v5499, %v6171
        %v6188 = vmul.f32 %v5500, %v6172
        %v6189 = vmul.f32 %v5501, %v6173
        %v6190 = vmul.f32 %v5502, %v6174
        %v6191 = vmul.f32 %v5503, %v6175
        %v6192 = vmul.f32 %v5504, %v6176
        %v6193 = vmul.f32 %v5505, %v6177
        %v6194 = vadd.f32 %v6178, %v1372
        %v6195 = vadd.f32 %v6179, %v1373
        %v6196 = vadd.f32 %v6180, %v1374
        %v6197 = vadd.f32 %v6181, %v1375
        %v6198 = vadd.f32 %v6182, %v1376
        %v6199 = vadd.f32 %v6183, %v1377
        %v6200 = vadd.f32 %v6184, %v1378
        %v6201 = vadd.f32 %v6185, %v1379
        %v6202 = vadd.f32 %v6186, %v1380
        %v6203 = vadd.f32 %v6187, %v1381
        %v6204 = vadd.f32 %v6188, %v1382
        %v6205 = vadd.f32 %v6189, %v1383
        %v6206 = vadd.f32 %v6190, %v1384
        %v6207 = vadd.f32 %v6191, %v1385
        %v6208 = vadd.f32 %v6192, %v1386
        %v6209 = vadd.f32 %v6193, %v1387
        %6210 = vst [vmem:[#allocation2] sm:$0xff] %v6194
        %6211 = vst [vmem:[#allocation2 + $0x8] sm:$0xff] %v6195
        %6212 = vst [vmem:[#allocation2 + $0x10] sm:$0xff] %v6196
        %6213 = vst [vmem:[#allocation2 + $0x18] sm:$0xff] %v6197
        %6214 = vst [vmem:[#allocation2 + $0x20] sm:$0xff] %v6198
        %6215 = vst [vmem:[#allocation2 + $0x28] sm:$0xff] %v6199
        %6216 = vst [vmem:[#allocation2 + $0x30] sm:$0xff] %v6200
        %6217 = vst [vmem:[#allocation2 + $0x38] sm:$0xff] %v6201
        %6218 = vst [vmem:[#allocation2 + $0x40] sm:$0xff] %v6202
        %6219 = vst [vmem:[#allocation2 + $0x48] sm:$0xff] %v6203
        %6220 = vst [vmem:[#allocation2 + $0x50] sm:$0xff] %v6204
        %6221 = vst [vmem:[#allocation2 + $0x58] sm:$0xff] %v6205
        %6222 = vst [vmem:[#allocation2 + $0x60] sm:$0xff] %v6206
        %6223 = vst [vmem:[#allocation2 + $0x68] sm:$0xff] %v6207
        %6224 = vst [vmem:[#allocation2 + $0x70] sm:$0xff] %v6208
        %6225 = vst [vmem:[#allocation2 + $0x78] sm:$0xff] %v6209
        %s6226 = sld [smem:[#allocation5 + %s58]]
        %p6227 = scmp.eq.s32.totalorder %s6226, 1
        // Predicated region
        $region105: #{tpu_custom_call.1} parent=63 // pred_check
          %p6228 = pneg %p6227
        $region106: #{tpu_custom_call.1} parent=63 // pred_check_branch
          %6230 = sbr.rel (%p6228) target = $region108
        $region107: #{tpu_custom_call.1} parent=63 // pred_region
          %6231 = vst [vmem:[%s742] sm:$0xff] %v6194
          %6232 = vst [vmem:[%s742 + $0x8] sm:$0xff] %v6195
          %6233 = vst [vmem:[%s742 + $0x10] sm:$0xff] %v6196
          %6234 = vst [vmem:[%s742 + $0x18] sm:$0xff] %v6197
          %6235 = vst [vmem:[%s742 + $0x20] sm:$0xff] %v6198
          %6236 = vst [vmem:[%s742 + $0x28] sm:$0xff] %v6199
          %6237 = vst [vmem:[%s742 + $0x30] sm:$0xff] %v6200
          %6238 = vst [vmem:[%s742 + $0x38] sm:$0xff] %v6201
          %6239 = vst [vmem:[%s742 + $0x40] sm:$0xff] %v6202
          %6240 = vst [vmem:[%s742 + $0x48] sm:$0xff] %v6203
          %6241 = vst [vmem:[%s742 + $0x50] sm:$0xff] %v6204
          %6242 = vst [vmem:[%s742 + $0x58] sm:$0xff] %v6205
          %6243 = vst [vmem:[%s742 + $0x60] sm:$0xff] %v6206
          %6244 = vst [vmem:[%s742 + $0x68] sm:$0xff] %v6207
          %6245 = vst [vmem:[%s742 + $0x70] sm:$0xff] %v6208
          %6246 = vst [vmem:[%s742 + $0x78] sm:$0xff] %v6209
        $region108: #{tpu_custom_call.1} parent=63 // pred_fallthru
          _
        %s6247 = sand.u32 %s363, 1
        %s6248 = scalar_lea.sflag [#allocation8], %s6247
        %s6249 = sand.u32 %s363, 1
        %s6250 = smul.addr %s6249, 128
        %s6251 = scalar_lea.vmem [#allocation21], %s6250
        // Predicated region
        $region109: #{tpu_custom_call.1} parent=63 // pred_check
          %p6252 = pneg %p373
        $region110: #{tpu_custom_call.1} parent=63 // pred_check_branch
          %6254 = sbr.rel (%p6252) target = $region112
        $region111: #{tpu_custom_call.1} parent=63 // pred_region
          %s6255 = sld [smem:[#allocation4 + %s58]]
          %s6256 = smul.u32 16, %s57
          %6258 = vsyncadd %s6248, 0
          %s6259 = smul.addr %s6255, 16
          %s6260 = sadd.s32 %s6256, %s6259
          %s6261 = smul.addr %s6260, 8
          %s6262 = scalar_lea.hbm %s13, %s6261
          %s6263 = sshll.u32 %s6251, 4
          %s6264 = int_to_ptr.vmem [resolvable:$true] %s6263
          %s6265 = sshll.u32 %s6262, 4
          %s6266 = int_to_ptr.hbm [resolvable:$true] %s6265
          %6271 = dma.vmem_to_hbm [thread:$0]  %s6264, 2048, %s6266, %s6248, 128, 128, 8
        $region112: #{tpu_custom_call.1} parent=63 // pred_fallthru
          _
      $region64: #{tpu_custom_call.1} parent=5 // pred_fallthru
        _
      %p6272 = scmp.le.s32.totalorder 2, %s48
      // Predicated region
      $region113: #{tpu_custom_call.1} parent=5 // pred_check
        %p6273 = pneg %p6272
      $region114: #{tpu_custom_call.1} parent=5 // pred_check_branch
        %6275 = sbr.rel (%p6273) target = $region116
      $region115: #{tpu_custom_call.1} parent=5 // pred_region
        %s6276 = ssub.s32 %s48, 2
        // Predicated region
        $region117: #{tpu_custom_call.1} parent=115 // pred_check
          %p6277 = pneg %p379
        $region118: #{tpu_custom_call.1} parent=115 // pred_check_branch
          %6279 = sbr.rel (%p6277) target = $region120
        $region119: #{tpu_custom_call.1} parent=115 // pred_region
          %s6280 = sand.u32 %s364, 1
          %s6281 = scalar_lea.sflag [#allocation8], %s6280
          %s6282 = sand.u32 %s364, 1
          %s6283 = smul.addr %s6282, 128
          %s6284 = scalar_lea.vmem [#allocation21], %s6283
          %6286 = dma.done %s6281, 2048
        $region120: #{tpu_custom_call.1} parent=115 // pred_fallthru
          _
      $region116: #{tpu_custom_call.1} parent=5 // pred_fallthru
        _
    $region6: #{tpu_custom_call.1} parent=1 // loop_footer
      %s52 = sadd.s32 1, %s48
    $region7: #{tpu_custom_call.1} parent=1 // loop_footer_branch
      %47 = sbr.rel target = $region3
    $region8: #{tpu_custom_call.1} parent=1 // loop_exit
      _
    %6287 = vsyncpa [#allocation7], 1
    %s6288 = scalar_lea.sflag [#allocation7], 1
    %6289 = vsyncpa %s6288, 1
    %6290 = vsyncpa [#allocation10], 1
    %s6291 = scalar_lea.sflag [#allocation10], 1
    %6292 = vsyncpa %s6291, 1
    %6293 = vsyncpa [#allocation13], 1
    %s6294 = scalar_lea.sflag [#allocation13], 1
    %6295 = vsyncpa %s6294, 1
    %6296 = vsyncpa [#allocation16], 1
    %s6297 = scalar_lea.sflag [#allocation16], 1
    %6298 = vsyncpa %s6297, 1
    %6299 = vsyncpa [#allocation19], 1
    %s6300 = scalar_lea.sflag [#allocation19], 1
    %6301 = vsyncpa %s6300, 1
    %6302 = vsyncpa [#allocation8], 1
    %s6303 = scalar_lea.sflag [#allocation8], 1
    %6304 = vsyncpa %s6303, 1

</llo_original>
